<compile_context>
chip_gen: v7x
topology: tpu7x:2x2x1
jax: 0.10.0
libtpu: 0.0.40
codegen_flags: <defaults>
</compile_context>

<pallas_src>
import math

import jax
import jax.numpy as jnp
from jax.experimental import pallas as pl

# ----------------------------- config ---------------------------------------
VOCAB = 100
HIDDEN = 32
N_LAYERS = 2
N_HEADS = 2
HEAD_DIM = HIDDEN // N_HEADS
INTERMEDIATE = 64
MAX_POS = 40
NUM_LABELS = 2
PAD_ID = 1
LN_EPS = 1e-5
NEG_BIAS = -1e9
MAX_NBR = 4
ALPHA = 10.0
NUM_STEPS = 2

# Adam hyper-params as in torch.optim.Adam([w], lr=1, weight_decay=2e-05)
ADAM_LR = 1.0
ADAM_B1 = 0.9
ADAM_B2 = 0.999
ADAM_EPS = 1e-8
ADAM_WD = 2e-5


# ----------------------------- packed-weight layout --------------------------
def _build_layout():
    """Static row layout of the single packed f32 weight buffer.

    Every tensor starts at an 8-aligned row so all in-kernel reads are
    sublane-aligned static slices (zero-cost views).
    """
    offs = {}
    row = 0

    def add(name, nr, nc):
        nonlocal row
        offs[name] = (row, nr, nc)
        row += ((nr + 7) // 8) * 8

    add("emb_ln_g", 1, HIDDEN)
    add("emb_ln_b", 1, HIDDEN)
    for l in range(N_LAYERS):
        for p in range(3 * N_HEADS):           # p = type*N_HEADS + head (q,k,v)
            add(f"qkv_w_{l}_{p}", HIDDEN, HEAD_DIM)
            add(f"qkv_b_{l}_{p}", 1, HEAD_DIM)
        for hh in range(N_HEADS):
            add(f"ao_w_{l}_{hh}", HEAD_DIM, HIDDEN)
        add(f"ao_b_{l}", 1, HIDDEN)
        add(f"aln_g_{l}", 1, HIDDEN)
        add(f"aln_b_{l}", 1, HIDDEN)
        add(f"i_w_{l}", HIDDEN, INTERMEDIATE)
        add(f"i_b_{l}", 1, INTERMEDIATE)
        add(f"o_w_{l}", INTERMEDIATE, HIDDEN)
        add(f"o_b_{l}", 1, HIDDEN)
        add(f"oln_g_{l}", 1, HIDDEN)
        add(f"oln_b_{l}", 1, HIDDEN)
    add("cls_dw", HIDDEN, HIDDEN)
    add("cls_db", 1, HIDDEN)
    add("cls_ow", HIDDEN, NUM_LABELS)
    add("cls_ob", 1, NUM_LABELS)
    return offs, row


W_OFFS, W_ROWS = _build_layout()
W_COLS = 128                                   # lane-width aligned


def _W(wref, name):
    r, nr, nc = W_OFFS[name]
    return wref[r:r + nr, 0:nc]                # static slice -> load


def pack_weight_buffer(params):
    """Pack every weight tensor into one contiguous (W_ROWS, 128) f32 buffer
    (head-major q/k/v and attention-output weights) -> single input DMA."""
    tensors = {
        "emb_ln_g": params["emb_ln_g"].reshape(1, HIDDEN),
        "emb_ln_b": params["emb_ln_b"].reshape(1, HIDDEN),
        "cls_dw": params["cls_dense_w"],
        "cls_db": params["cls_dense_b"].reshape(1, HIDDEN),
        "cls_ow": params["cls_out_w"],
        "cls_ob": params["cls_out_b"].reshape(1, NUM_LABELS),
    }
    for l, lyr in enumerate(params["layers"]):
        w_by_type = (lyr["q_w"], lyr["k_w"], lyr["v_w"])
        b_by_type = (lyr["q_b"], lyr["k_b"], lyr["v_b"])
        for p in range(3 * N_HEADS):
            t, hh = divmod(p, N_HEADS)
            c = hh * HEAD_DIM
            tensors[f"qkv_w_{l}_{p}"] = w_by_type[t][:, c:c + HEAD_DIM]
            tensors[f"qkv_b_{l}_{p}"] = b_by_type[t][c:c + HEAD_DIM].reshape(1, HEAD_DIM)
        for hh in range(N_HEADS):
            tensors[f"ao_w_{l}_{hh}"] = lyr["ao_w"][hh * HEAD_DIM:(hh + 1) * HEAD_DIM, :]
        tensors[f"ao_b_{l}"] = lyr["ao_b"].reshape(1, HIDDEN)
        tensors[f"aln_g_{l}"] = lyr["aln_g"].reshape(1, HIDDEN)
        tensors[f"aln_b_{l}"] = lyr["aln_b"].reshape(1, HIDDEN)
        tensors[f"i_w_{l}"] = lyr["i_w"]
        tensors[f"i_b_{l}"] = lyr["i_b"].reshape(1, INTERMEDIATE)
        tensors[f"o_w_{l}"] = lyr["o_w"]
        tensors[f"o_b_{l}"] = lyr["o_b"].reshape(1, HIDDEN)
        tensors[f"oln_g_{l}"] = lyr["oln_g"].reshape(1, HIDDEN)
        tensors[f"oln_b_{l}"] = lyr["oln_b"].reshape(1, HIDDEN)

    buf = jnp.zeros((W_ROWS, W_COLS), jnp.float32)
    for name, (r, nr, nc) in W_OFFS.items():
        buf = buf.at[r:r + nr, :nc].set(tensors[name].astype(jnp.float32))
    return buf


# ----------------------------- shared math helpers ---------------------------
def _ln_rows(x, g, b):
    mu = jnp.mean(x, axis=-1, keepdims=True)
    var = jnp.mean((x - mu) ** 2, axis=-1, keepdims=True)
    return (x - mu) * jax.lax.rsqrt(var + LN_EPS) * g + b


def _gelu(x):
    # TODO(synk): tanh-approx GELU instead of the exact-erf "gelu" of HF Roberta
    # (max abs err ~1e-3); keeps the transcendental on the EUP slot.  The same
    # approximation is used in the pure-JAX gradient mirror for consistency.
    c = math.sqrt(2.0 / math.pi)
    return 0.5 * x * (1.0 + jnp.tanh(c * (x + 0.044715 * x * x * x)))


# ----------------------------- fused forward (in-kernel body) ----------------
def _encoder_classifier(e2d, bias, wref, B, T):
    """emb-LN -> N_LAYERS transformer layers -> classification head.

    Runs entirely inside a Pallas kernel with no VMEM scratch: activations are
    (B*T, <=64) f32 values held in vregs.  `bias` is the (B*T, B*T)
    block-diagonal additive attention mask.  Returns per-row logits
    (B*T, NUM_LABELS); the wrapper keeps the CLS rows.
    """
    h = _ln_rows(e2d, _W(wref, "emb_ln_g"), _W(wref, "emb_ln_b"))
    inv_sqrt_d = 1.0 / math.sqrt(HEAD_DIM)
    for l in range(N_LAYERS):
        attn = None
        for hh in range(N_HEADS):
            q = (jnp.dot(h, _W(wref, f"qkv_w_{l}_{hh}"),
                         preferred_element_type=jnp.float32)
                 + _W(wref, f"qkv_b_{l}_{hh}"))
            k = (jnp.dot(h, _W(wref, f"qkv_w_{l}_{N_HEADS + hh}"),
                         preferred_element_type=jnp.float32)
                 + _W(wref, f"qkv_b_{l}_{N_HEADS + hh}"))
            v = (jnp.dot(h, _W(wref, f"qkv_w_{l}_{2 * N_HEADS + hh}"),
                         preferred_element_type=jnp.float32)
                 + _W(wref, f"qkv_b_{l}_{2 * N_HEADS + hh}"))
            s = jax.lax.dot_general(q, k, (((1,), (1,)), ((), ())),
                                    preferred_element_type=jnp.float32)
            s = s * inv_sqrt_d + bias
            s = s - jnp.max(s, axis=-1, keepdims=True)
            p = jnp.exp(s)
            p = p * pl.reciprocal(jnp.sum(p, axis=-1, keepdims=True), approx=True)
            ctx_h = jnp.dot(p, v, preferred_element_type=jnp.float32)
            proj = jnp.dot(ctx_h, _W(wref, f"ao_w_{l}_{hh}"),
                           preferred_element_type=jnp.float32)
            attn = proj if attn is None else attn + proj
        attn = attn + _W(wref, f"ao_b_{l}")
        h = _ln_rows(attn + h, _W(wref, f"aln_g_{l}"), _W(wref, f"aln_b_{l}"))
        inter = _gelu(jnp.dot(h, _W(wref, f"i_w_{l}"),
                              preferred_element_type=jnp.float32)
                      + _W(wref, f"i_b_{l}"))
        ffn = (jnp.dot(inter, _W(wref, f"o_w_{l}"),
                       preferred_element_type=jnp.float32)
               + _W(wref, f"o_b_{l}"))
        h = _ln_rows(ffn + h, _W(wref, f"oln_g_{l}"), _W(wref, f"oln_b_{l}"))
    # Classification head applied to every (resident) row; the wrapper keeps
    # only the CLS rows.  Avoids any in-kernel row gather / selection matmul.
    # TODO(synk): dropout in RobertaClassificationHead omitted (deterministic).
    x = jnp.tanh(jnp.dot(h, _W(wref, "cls_dw"),
                         preferred_element_type=jnp.float32)
                 + _W(wref, "cls_db"))
    return (jnp.dot(x, _W(wref, "cls_ow"),
                    preferred_element_type=jnp.float32)
            + _W(wref, "cls_ob"))


def pallas_forward_clean(e2d, bias_full, wbuf, B, T):
    """Whole clean forward (emb-LN + encoder + classifier) in one pallas_call."""
    def kernel(e_ref, bias_ref, wbuf_ref, out_ref):
        out_ref[...] = _encoder_classifier(e_ref[...], bias_ref[...],
                                           wbuf_ref, B, T)

    return pl.pallas_call(
        kernel,
        out_shape=jax.ShapeDtypeStruct((B * T, NUM_LABELS), jnp.float32),
    )(e2d, bias_full, wbuf)


def pallas_forward_adv(nbr_e, w2d, mask2d, base2d, bias_full, wbuf, B, T):
    """Adversarial forward in one pallas_call: the ASCC neighbor-softmax
    weighted embedding is built in-kernel, then emb-LN + encoder + classifier."""
    n_nbr = nbr_e.shape[0]

    def kernel(nbr_ref, wv_ref, msk_ref, base_ref, bias_ref, wbuf_ref, out_ref):
        wv = wv_ref[...]                                   # (B*T, N)
        msk = msk_ref[...]                                 # (B*T, N) in {0,1}
        w_after = msk * wv + (1.0 - msk) * (-999.0)        # matches reference
        w_after = w_after - jnp.max(w_after, axis=1, keepdims=True)
        pexp = jnp.exp(w_after)
        coef = pexp * pl.reciprocal(jnp.sum(pexp, axis=1, keepdims=True),
                                    approx=True) * msk
        e = base_ref[...]                                  # pos + type embeds
        for n in range(n_nbr):
            e = e + coef[:, n:n + 1] * nbr_ref[n]
        out_ref[...] = _encoder_classifier(e, bias_ref[...], wbuf_ref, B, T)

    return pl.pallas_call(
        kernel,
        out_shape=jax.ShapeDtypeStruct((B * T, NUM_LABELS), jnp.float32),
    )(nbr_e, w2d, mask2d, base2d, bias_full, wbuf)


# ----------------------- plain-JAX mirror (for autodiff only) ---------------
def _jnp_forward(e2d, bias_full, params, B, T):
    h = _ln_rows(e2d, params["emb_ln_g"], params["emb_ln_b"])
    inv_sqrt_d = 1.0 / math.sqrt(HEAD_DIM)
    for lyr in params["layers"]:
        attn = 0.0
        for hh in range(N_HEADS):
            c = hh * HEAD_DIM
            q = h @ lyr["q_w"][:, c:c + HEAD_DIM] + lyr["q_b"][c:c + HEAD_DIM]
            k = h @ lyr["k_w"][:, c:c + HEAD_DIM] + lyr["k_b"][c:c + HEAD_DIM]
            v = h @ lyr["v_w"][:, c:c + HEAD_DIM] + lyr["v_b"][c:c + HEAD_DIM]
            s = (q @ k.T) * inv_sqrt_d + bias_full
            p = jax.nn.softmax(s, axis=-1)
            attn = attn + (p @ v) @ lyr["ao_w"][c:c + HEAD_DIM, :]
        attn = attn + lyr["ao_b"]
        h = _ln_rows(attn + h, lyr["aln_g"], lyr["aln_b"])
        inter = _gelu(h @ lyr["i_w"] + lyr["i_b"])
        h = _ln_rows(inter @ lyr["o_w"] + lyr["o_b"] + h,
                     lyr["oln_g"], lyr["oln_b"])
    x = h.reshape(B, T, HIDDEN)[:, 0, :]
    x = jnp.tanh(x @ params["cls_dense_w"] + params["cls_dense_b"])
    return x @ params["cls_out_w"] + params["cls_out_b"]


# ----------------------------- embeddings ------------------------------------
def clean_embeddings_2d(params, input_ids):
    mask_pad = (input_ids != PAD_ID).astype(jnp.int32)
    pos_ids = jnp.cumsum(mask_pad, axis=1) * mask_pad + PAD_ID
    e = (params["word_emb"][input_ids] + params["pos_emb"][pos_ids]
         + params["type_emb"][0][None, None, :])
    return e.reshape(-1, HIDDEN)


def adv_base_2d(params, B, T):
    # inputs_embeds path of RobertaEmbeddings: position ids are a plain
    # arange(pad+1, T+pad+1), not pad-aware (matches the HF reference).
    pos_ids = jnp.arange(PAD_ID + 1, T + PAD_ID + 1)
    base = params["pos_emb"][pos_ids] + params["type_emb"][0][None, :]   # (T, H)
    return jnp.tile(base, (B, 1))                                        # (B*T, H)


# ----------------------------- ASCC forward ---------------------------------
def ascc_forward(params, nbrs, input_ids, attn_mask, w_key):
    B, T = input_ids.shape
    N = nbrs.shape[1]

    wbuf = pack_weight_buffer(params)

    # block-diagonal additive attention bias (query i may attend key j iff same
    # sequence and key j is not padding) -- built ONCE, shared by every layer
    # and by both the clean and adversarial forwards.
    seq_of = jnp.arange(B * T) // T
    key_valid = attn_mask.reshape(-1) > 0
    bias_full = jnp.where((seq_of[:, None] == seq_of[None, :]) & key_valid[None, :],
                          0.0, NEG_BIAS).astype(jnp.float32)             # (B*T, B*T)

    # nn.init.kaiming_normal_ on (B, T, N, 1): fan_in = T*N, gain = sqrt(2)
    std = math.sqrt(2.0 / (T * N))
    w2d = (jax.random.normal(w_key, (B, T, N), jnp.float32) * std).reshape(B * T, N)

    nbr_ids = nbrs[input_ids]                                            # (B, T, N)
    mask2d = (nbr_ids != 0).reshape(B * T, N).astype(jnp.float32)
    nbr_e = params["word_emb"][nbr_ids].reshape(B * T, N, HIDDEN).transpose(1, 0, 2)

    e_clean = clean_embeddings_2d(params, input_ids)
    base_adv = adv_base_2d(params, B, T)

    # clean forward: one fused Pallas kernel. (The PyTorch module recomputes
    # this after the w-loop, but the result has no dependence on w and dropout
    # is disabled, so the redundant second clean forward is dropped.)
    clean_full = pallas_forward_clean(e_clean, bias_full, wbuf, B, T)
    clean_logits = clean_full.reshape(B, T, NUM_LABELS)[:, 0, :]
    clean_probs = jax.nn.softmax(jax.lax.stop_gradient(clean_logits), axis=1)

    def adv_objective(w_var):
        # pure-JAX mirror of the fused Pallas forward, used only for d(loss)/dw.
        # TODO(synk): no fused Pallas backward (custom_vjp) yet.
        w_after = mask2d * w_var + (1.0 - mask2d) * (-999.0)
        p = jax.nn.softmax(w_after, axis=1)
        embed_adv = jnp.einsum("mn,nmh->mh", p * mask2d, nbr_e)
        adv_logits_m = _jnp_forward(embed_adv + base_adv, bias_full, params, B, T)
        log_p_adv = jax.nn.log_softmax(adv_logits_m, axis=1)
        kl = jnp.sum(clean_probs * (jnp.log(clean_probs) - log_p_adv))
        adv_loss = -kl
        log_sm = jax.nn.log_softmax(w_after, axis=1)
        loss_sparse = jnp.mean(jnp.sum(-p * mask2d * log_sm, axis=1))
        return adv_loss + ALPHA * loss_sparse

    grad_fn = jax.grad(adv_objective)

    # Adam on w in plain jnp (fused by XLA into the step); matches
    # torch.optim.Adam([w], lr=1, weight_decay=2e-05).
    m_state = jnp.zeros_like(w2d)
    v_state = jnp.zeros_like(w2d)
    for step in range(1, NUM_STEPS + 1):
        g = grad_fn(w2d) + ADAM_WD * w2d
        m_state = ADAM_B1 * m_state + (1.0 - ADAM_B1) * g
        v_state = ADAM_B2 * v_state + (1.0 - ADAM_B2) * g * g
        m_hat = m_state / (1.0 - ADAM_B1 ** step)
        v_hat = v_state / (1.0 - ADAM_B2 ** step)
        w2d = w2d - ADAM_LR * m_hat / (jnp.sqrt(v_hat) + ADAM_EPS)

    # adversarial forward: one fused Pallas kernel (neighbor-softmax embedding
    # + emb-LN + encoder + classifier).
    adv_full = pallas_forward_adv(nbr_e, w2d, mask2d, base_adv, bias_full,
                                  wbuf, B, T)
    adv_logits = adv_full.reshape(B, T, NUM_LABELS)[:, 0, :]
    return clean_logits, adv_logits


# ----------------------------- parameters -----------------------------------
def init_params(key):
    def nrm(k, shape, scale=0.02):
        return jax.random.normal(k, shape, jnp.float32) * scale

    keys = iter(jax.random.split(key, 8 + 10 * N_LAYERS))
    params = {
        "word_emb": nrm(next(keys), (VOCAB, HIDDEN)),
        "pos_emb": nrm(next(keys), (MAX_POS, HIDDEN)),
        "type_emb": nrm(next(keys), (1, HIDDEN)),
        "emb_ln_g": jnp.ones((HIDDEN,), jnp.float32),
        "emb_ln_b": jnp.zeros((HIDDEN,), jnp.float32),
        "cls_dense_w": nrm(next(keys), (HIDDEN, HIDDEN)),
        "cls_dense_b": jnp.zeros((HIDDEN,), jnp.float32),
        "cls_out_w": nrm(next(keys), (HIDDEN, NUM_LABELS)),
        "cls_out_b": jnp.zeros((NUM_LABELS,), jnp.float32),
        "layers": [],
    }
    for _ in range(N_LAYERS):
        lyr = {
            "q_w": nrm(next(keys), (HIDDEN, HIDDEN)),
            "q_b": jnp.zeros((HIDDEN,), jnp.float32),
            "k_w": nrm(next(keys), (HIDDEN, HIDDEN)),
            "k_b": jnp.zeros((HIDDEN,), jnp.float32),
            "v_w": nrm(next(keys), (HIDDEN, HIDDEN)),
            "v_b": jnp.zeros((HIDDEN,), jnp.float32),
            "ao_w": nrm(next(keys), (HIDDEN, HIDDEN)),
            "ao_b": jnp.zeros((HIDDEN,), jnp.float32),
            "aln_g": jnp.ones((HIDDEN,), jnp.float32),
            "aln_b": jnp.zeros((HIDDEN,), jnp.float32),
            "i_w": nrm(next(keys), (HIDDEN, INTERMEDIATE)),
            "i_b": jnp.zeros((INTERMEDIATE,), jnp.float32),
            "o_w": nrm(next(keys), (INTERMEDIATE, HIDDEN)),
            "o_b": jnp.zeros((HIDDEN,), jnp.float32),
            "oln_g": jnp.ones((HIDDEN,), jnp.float32),
            "oln_b": jnp.zeros((HIDDEN,), jnp.float32),
        }
        params["layers"].append(lyr)
    return params


# ----------------------------- main ------------------------------------------
if __name__ == "__main__":
    key = jax.random.PRNGKey(0)
    k_param, k_nbr, k_ids, k_w = jax.random.split(key, 4)

    params = init_params(k_param)

    # synthetic neighbor table (build_nbrs normally reads a json file)
    # TODO(synk): file-based neighbor vocabulary build replaced by synthetic table.
    nbr_rest = jax.random.randint(k_nbr, (VOCAB, MAX_NBR - 1), 0, VOCAB)
    nbrs = jnp.concatenate(
        [jnp.arange(VOCAB, dtype=jnp.int32)[:, None], nbr_rest.astype(jnp.int32)],
        axis=1,
    )

    B, T = 2, 8
    input_ids = jax.random.randint(k_ids, (B, T), 2, VOCAB).astype(jnp.int32)
    input_ids = input_ids.at[1, T - 1].set(PAD_ID)
    attn_mask = (input_ids != PAD_ID).astype(jnp.float32)

    fwd = jax.jit(ascc_forward)
    clean_logits, adv_logits = fwd(params, nbrs, input_ids, attn_mask, k_w)
    jax.block_until_ready((clean_logits, adv_logits))

    assert clean_logits.shape == (B, NUM_LABELS)
    assert adv_logits.shape == (B, NUM_LABELS)
    assert bool(jnp.all(jnp.isfinite(clean_logits)))
    assert bool(jnp.all(jnp.isfinite(adv_logits)))
    print("KERNEL_OK")
</pallas_src>

<mosaic_0001>
module attributes {stable_mosaic.version = 11 : i64} {
  func.func @kernel(%arg0: memref<16x32xf32, #tpu.memory_space<vmem>>, %arg1: memref<16x16xf32, #tpu.memory_space<vmem>>, %arg2: memref<944x128xf32, #tpu.memory_space<vmem>>, %arg3: memref<16x2xf32, #tpu.memory_space<vmem>>) attributes {dimension_semantics = [], scalar_prefetch = 0 : i64, scratch_operands = 0 : i64, tpu.core_type = #tpu.core_type<tc>} {
    %c0 = arith.constant 0 : index
    %c0_0 = arith.constant 0 : index
    %0 = vector.load %arg0[%c0, %c0_0] : memref<16x32xf32, #tpu.memory_space<vmem>>, vector<16x32xf32>
    %c0_1 = arith.constant 0 : index
    %c0_2 = arith.constant 0 : index
    %1 = vector.load %arg1[%c0_1, %c0_2] : memref<16x16xf32, #tpu.memory_space<vmem>>, vector<16x16xf32>
    %c0_3 = arith.constant 0 : index
    %c0_4 = arith.constant 0 : index
    %2 = vector.load %arg2[%c0_3, %c0_4] : memref<944x128xf32, #tpu.memory_space<vmem>>, vector<1x32xf32>
    %c8 = arith.constant 8 : index
    %c0_5 = arith.constant 0 : index
    %3 = vector.load %arg2[%c8, %c0_5] : memref<944x128xf32, #tpu.memory_space<vmem>>, vector<1x32xf32>
    %cst = arith.constant dense<0.000000e+00> : vector<16xf32>
    %4 = vector.multi_reduction <add>, %0, %cst [1] : vector<16x32xf32> to vector<16xf32>
    %5 = vector.shape_cast %4 : vector<16xf32> to vector<16x1xf32>
    %cst_6 = arith.constant 3.200000e+01 : f32
    %6 = vector.broadcast %cst_6 : f32 to vector<16x1xf32>
    %7 = arith.divf %5, %6 : vector<16x1xf32>
    %8 = vector.broadcast %7 : vector<16x1xf32> to vector<16x32xf32>
    %9 = arith.subf %0, %8 : vector<16x32xf32>
    %10 = arith.mulf %9, %9 : vector<16x32xf32>
    %cst_7 = arith.constant dense<0.000000e+00> : vector<16xf32>
    %11 = vector.multi_reduction <add>, %10, %cst_7 [1] : vector<16x32xf32> to vector<16xf32>
    %12 = vector.shape_cast %11 : vector<16xf32> to vector<16x1xf32>
    %cst_8 = arith.constant 3.200000e+01 : f32
    %13 = vector.broadcast %cst_8 : f32 to vector<16x1xf32>
    %14 = arith.divf %12, %13 : vector<16x1xf32>
    %15 = vector.broadcast %7 : vector<16x1xf32> to vector<16x32xf32>
    %16 = arith.subf %0, %15 : vector<16x32xf32>
    %cst_9 = arith.constant 9.99999974E-6 : f32
    %17 = vector.broadcast %cst_9 : f32 to vector<16x1xf32>
    %18 = arith.addf %14, %17 : vector<16x1xf32>
    %19 = math.rsqrt %18 : vector<16x1xf32>
    %20 = vector.broadcast %19 : vector<16x1xf32> to vector<16x32xf32>
    %21 = arith.mulf %16, %20 : vector<16x32xf32>
    %22 = vector.broadcast %2 : vector<1x32xf32> to vector<16x32xf32>
    %23 = arith.mulf %21, %22 : vector<16x32xf32>
    %24 = vector.broadcast %3 : vector<1x32xf32> to vector<16x32xf32>
    %25 = arith.addf %23, %24 : vector<16x32xf32>
    %c16 = arith.constant 16 : index
    %c0_10 = arith.constant 0 : index
    %26 = vector.load %arg2[%c16, %c0_10] : memref<944x128xf32, #tpu.memory_space<vmem>>, vector<32x16xf32>
    %cst_11 = arith.constant dense<0.000000e+00> : vector<16x16xf32>
    %27 = tpu.matmul %25, %26, %cst_11 {dimension_numbers = #tpu.dot_dimension_numbers<[1], [0], [0], [1], [0, 0, 1, 1], [], []>} : vector<16x32xf32>, vector<32x16xf32>, vector<16x16xf32> -> vector<16x16xf32>
    %c48 = arith.constant 48 : index
    %c0_12 = arith.constant 0 : index
    %28 = vector.load %arg2[%c48, %c0_12] : memref<944x128xf32, #tpu.memory_space<vmem>>, vector<1x16xf32>
    %29 = vector.broadcast %28 : vector<1x16xf32> to vector<16x16xf32>
    %30 = arith.addf %27, %29 : vector<16x16xf32>
    %c96 = arith.constant 96 : index
    %c0_13 = arith.constant 0 : index
    %31 = vector.load %arg2[%c96, %c0_13] : memref<944x128xf32, #tpu.memory_space<vmem>>, vector<32x16xf32>
    %cst_14 = arith.constant dense<0.000000e+00> : vector<16x16xf32>
    %32 = tpu.matmul %25, %31, %cst_14 {dimension_numbers = #tpu.dot_dimension_numbers<[1], [0], [0], [1], [0, 0, 1, 1], [], []>} : vector<16x32xf32>, vector<32x16xf32>, vector<16x16xf32> -> vector<16x16xf32>
    %c128 = arith.constant 128 : index
    %c0_15 = arith.constant 0 : index
    %33 = vector.load %arg2[%c128, %c0_15] : memref<944x128xf32, #tpu.memory_space<vmem>>, vector<1x16xf32>
    %34 = vector.broadcast %33 : vector<1x16xf32> to vector<16x16xf32>
    %35 = arith.addf %32, %34 : vector<16x16xf32>
    %c176 = arith.constant 176 : index
    %c0_16 = arith.constant 0 : index
    %36 = vector.load %arg2[%c176, %c0_16] : memref<944x128xf32, #tpu.memory_space<vmem>>, vector<32x16xf32>
    %cst_17 = arith.constant dense<0.000000e+00> : vector<16x16xf32>
    %37 = tpu.matmul %25, %36, %cst_17 {dimension_numbers = #tpu.dot_dimension_numbers<[1], [0], [0], [1], [0, 0, 1, 1], [], []>} : vector<16x32xf32>, vector<32x16xf32>, vector<16x16xf32> -> vector<16x16xf32>
    %c208 = arith.constant 208 : index
    %c0_18 = arith.constant 0 : index
    %38 = vector.load %arg2[%c208, %c0_18] : memref<944x128xf32, #tpu.memory_space<vmem>>, vector<1x16xf32>
    %39 = vector.broadcast %38 : vector<1x16xf32> to vector<16x16xf32>
    %40 = arith.addf %37, %39 : vector<16x16xf32>
    %cst_19 = arith.constant dense<0.000000e+00> : vector<16x16xf32>
    %41 = tpu.matmul %30, %35, %cst_19 {dimension_numbers = #tpu.dot_dimension_numbers<[1], [1], [0], [0], [0, 0, 1, 0], [], []>} : vector<16x16xf32>, vector<16x16xf32>, vector<16x16xf32> -> vector<16x16xf32>
    %cst_20 = arith.constant 2.500000e-01 : f32
    %42 = vector.broadcast %cst_20 : f32 to vector<16x16xf32>
    %43 = arith.mulf %41, %42 : vector<16x16xf32>
    %44 = arith.addf %43, %1 : vector<16x16xf32>
    %cst_21 = arith.constant dense<0xFF800000> : vector<16xf32>
    %45 = vector.multi_reduction <maximumf>, %44, %cst_21 [1] : vector<16x16xf32> to vector<16xf32>
    %46 = vector.shape_cast %45 : vector<16xf32> to vector<16x1xf32>
    %47 = vector.broadcast %46 : vector<16x1xf32> to vector<16x16xf32>
    %48 = arith.subf %44, %47 : vector<16x16xf32>
    %49 = math.exp %48 : vector<16x16xf32>
    %cst_22 = arith.constant dense<0.000000e+00> : vector<16xf32>
    %50 = vector.multi_reduction <add>, %49, %cst_22 [1] : vector<16x16xf32> to vector<16xf32>
    %51 = vector.shape_cast %50 : vector<16xf32> to vector<16x1xf32>
    %52 = tpu.reciprocal %51 {approx = true} : vector<16x1xf32> -> vector<16x1xf32>
    %53 = vector.broadcast %52 : vector<16x1xf32> to vector<16x16xf32>
    %54 = arith.mulf %49, %53 : vector<16x16xf32>
    %cst_23 = arith.constant dense<0.000000e+00> : vector<16x16xf32>
    %55 = tpu.matmul %54, %40, %cst_23 {dimension_numbers = #tpu.dot_dimension_numbers<[1], [0], [0], [1], [0, 0, 1, 1], [], []>} : vector<16x16xf32>, vector<16x16xf32>, vector<16x16xf32> -> vector<16x16xf32>
    %c256 = arith.constant 256 : index
    %c0_24 = arith.constant 0 : index
    %56 = vector.load %arg2[%c256, %c0_24] : memref<944x128xf32, #tpu.memory_space<vmem>>, vector<16x32xf32>
    %cst_25 = arith.constant dense<0.000000e+00> : vector<16x32xf32>
    %57 = tpu.matmul %55, %56, %cst_25 {dimension_numbers = #tpu.dot_dimension_numbers<[1], [0], [0], [1], [0, 0, 1, 1], [], []>} : vector<16x16xf32>, vector<16x32xf32>, vector<16x32xf32> -> vector<16x32xf32>
    %c56 = arith.constant 56 : index
    %c0_26 = arith.constant 0 : index
    %58 = vector.load %arg2[%c56, %c0_26] : memref<944x128xf32, #tpu.memory_space<vmem>>, vector<32x16xf32>
    %cst_27 = arith.constant dense<0.000000e+00> : vector<16x16xf32>
    %59 = tpu.matmul %25, %58, %cst_27 {dimension_numbers = #tpu.dot_dimension_numbers<[1], [0], [0], [1], [0, 0, 1, 1], [], []>} : vector<16x32xf32>, vector<32x16xf32>, vector<16x16xf32> -> vector<16x16xf32>
    %c88 = arith.constant 88 : index
    %c0_28 = arith.constant 0 : index
    %60 = vector.load %arg2[%c88, %c0_28] : memref<944x128xf32, #tpu.memory_space<vmem>>, vector<1x16xf32>
    %61 = vector.broadcast %60 : vector<1x16xf32> to vector<16x16xf32>
    %62 = arith.addf %59, %61 : vector<16x16xf32>
    %c136 = arith.constant 136 : index
    %c0_29 = arith.constant 0 : index
    %63 = vector.load %arg2[%c136, %c0_29] : memref<944x128xf32, #tpu.memory_space<vmem>>, vector<32x16xf32>
    %cst_30 = arith.constant dense<0.000000e+00> : vector<16x16xf32>
    %64 = tpu.matmul %25, %63, %cst_30 {dimension_numbers = #tpu.dot_dimension_numbers<[1], [0], [0], [1], [0, 0, 1, 1], [], []>} : vector<16x32xf32>, vector<32x16xf32>, vector<16x16xf32> -> vector<16x16xf32>
    %c168 = arith.constant 168 : index
    %c0_31 = arith.constant 0 : index
    %65 = vector.load %arg2[%c168, %c0_31] : memref<944x128xf32, #tpu.memory_space<vmem>>, vector<1x16xf32>
    %66 = vector.broadcast %65 : vector<1x16xf32> to vector<16x16xf32>
    %67 = arith.addf %64, %66 : vector<16x16xf32>
    %c216 = arith.constant 216 : index
    %c0_32 = arith.constant 0 : index
    %68 = vector.load %arg2[%c216, %c0_32] : memref<944x128xf32, #tpu.memory_space<vmem>>, vector<32x16xf32>
    %cst_33 = arith.constant dense<0.000000e+00> : vector<16x16xf32>
    %69 = tpu.matmul %25, %68, %cst_33 {dimension_numbers = #tpu.dot_dimension_numbers<[1], [0], [0], [1], [0, 0, 1, 1], [], []>} : vector<16x32xf32>, vector<32x16xf32>, vector<16x16xf32> -> vector<16x16xf32>
    %c248 = arith.constant 248 : index
    %c0_34 = arith.constant 0 : index
    %70 = vector.load %arg2[%c248, %c0_34] : memref<944x128xf32, #tpu.memory_space<vmem>>, vector<1x16xf32>
    %71 = vector.broadcast %70 : vector<1x16xf32> to vector<16x16xf32>
    %72 = arith.addf %69, %71 : vector<16x16xf32>
    %cst_35 = arith.constant dense<0.000000e+00> : vector<16x16xf32>
    %73 = tpu.matmul %62, %67, %cst_35 {dimension_numbers = #tpu.dot_dimension_numbers<[1], [1], [0], [0], [0, 0, 1, 0], [], []>} : vector<16x16xf32>, vector<16x16xf32>, vector<16x16xf32> -> vector<16x16xf32>
    %cst_36 = arith.constant 2.500000e-01 : f32
    %74 = vector.broadcast %cst_36 : f32 to vector<16x16xf32>
    %75 = arith.mulf %73, %74 : vector<16x16xf32>
    %76 = arith.addf %75, %1 : vector<16x16xf32>
    %cst_37 = arith.constant dense<0xFF800000> : vector<16xf32>
    %77 = vector.multi_reduction <maximumf>, %76, %cst_37 [1] : vector<16x16xf32> to vector<16xf32>
    %78 = vector.shape_cast %77 : vector<16xf32> to vector<16x1xf32>
    %79 = vector.broadcast %78 : vector<16x1xf32> to vector<16x16xf32>
    %80 = arith.subf %76, %79 : vector<16x16xf32>
    %81 = math.exp %80 : vector<16x16xf32>
    %cst_38 = arith.constant dense<0.000000e+00> : vector<16xf32>
    %82 = vector.multi_reduction <add>, %81, %cst_38 [1] : vector<16x16xf32> to vector<16xf32>
    %83 = vector.shape_cast %82 : vector<16xf32> to vector<16x1xf32>
    %84 = tpu.reciprocal %83 {approx = true} : vector<16x1xf32> -> vector<16x1xf32>
    %85 = vector.broadcast %84 : vector<16x1xf32> to vector<16x16xf32>
    %86 = arith.mulf %81, %85 : vector<16x16xf32>
    %cst_39 = arith.constant dense<0.000000e+00> : vector<16x16xf32>
    %87 = tpu.matmul %86, %72, %cst_39 {dimension_numbers = #tpu.dot_dimension_numbers<[1], [0], [0], [1], [0, 0, 1, 1], [], []>} : vector<16x16xf32>, vector<16x16xf32>, vector<16x16xf32> -> vector<16x16xf32>
    %c272 = arith.constant 272 : index
    %c0_40 = arith.constant 0 : index
    %88 = vector.load %arg2[%c272, %c0_40] : memref<944x128xf32, #tpu.memory_space<vmem>>, vector<16x32xf32>
    %cst_41 = arith.constant dense<0.000000e+00> : vector<16x32xf32>
    %89 = tpu.matmul %87, %88, %cst_41 {dimension_numbers = #tpu.dot_dimension_numbers<[1], [0], [0], [1], [0, 0, 1, 1], [], []>} : vector<16x16xf32>, vector<16x32xf32>, vector<16x32xf32> -> vector<16x32xf32>
    %90 = arith.addf %57, %89 : vector<16x32xf32>
    %c288 = arith.constant 288 : index
    %c0_42 = arith.constant 0 : index
    %91 = vector.load %arg2[%c288, %c0_42] : memref<944x128xf32, #tpu.memory_space<vmem>>, vector<1x32xf32>
    %92 = vector.broadcast %91 : vector<1x32xf32> to vector<16x32xf32>
    %93 = arith.addf %90, %92 : vector<16x32xf32>
    %94 = arith.addf %93, %25 : vector<16x32xf32>
    %c296 = arith.constant 296 : index
    %c0_43 = arith.constant 0 : index
    %95 = vector.load %arg2[%c296, %c0_43] : memref<944x128xf32, #tpu.memory_space<vmem>>, vector<1x32xf32>
    %c304 = arith.constant 304 : index
    %c0_44 = arith.constant 0 : index
    %96 = vector.load %arg2[%c304, %c0_44] : memref<944x128xf32, #tpu.memory_space<vmem>>, vector<1x32xf32>
    %cst_45 = arith.constant dense<0.000000e+00> : vector<16xf32>
    %97 = vector.multi_reduction <add>, %94, %cst_45 [1] : vector<16x32xf32> to vector<16xf32>
    %98 = vector.shape_cast %97 : vector<16xf32> to vector<16x1xf32>
    %cst_46 = arith.constant 3.200000e+01 : f32
    %99 = vector.broadcast %cst_46 : f32 to vector<16x1xf32>
    %100 = arith.divf %98, %99 : vector<16x1xf32>
    %101 = vector.broadcast %100 : vector<16x1xf32> to vector<16x32xf32>
    %102 = arith.subf %94, %101 : vector<16x32xf32>
    %103 = arith.mulf %102, %102 : vector<16x32xf32>
    %cst_47 = arith.constant dense<0.000000e+00> : vector<16xf32>
    %104 = vector.multi_reduction <add>, %103, %cst_47 [1] : vector<16x32xf32> to vector<16xf32>
    %105 = vector.shape_cast %104 : vector<16xf32> to vector<16x1xf32>
    %cst_48 = arith.constant 3.200000e+01 : f32
    %106 = vector.broadcast %cst_48 : f32 to vector<16x1xf32>
    %107 = arith.divf %105, %106 : vector<16x1xf32>
    %108 = vector.broadcast %100 : vector<16x1xf32> to vector<16x32xf32>
    %109 = arith.subf %94, %108 : vector<16x32xf32>
    %cst_49 = arith.constant 9.99999974E-6 : f32
    %110 = vector.broadcast %cst_49 : f32 to vector<16x1xf32>
    %111 = arith.addf %107, %110 : vector<16x1xf32>
    %112 = math.rsqrt %111 : vector<16x1xf32>
    %113 = vector.broadcast %112 : vector<16x1xf32> to vector<16x32xf32>
    %114 = arith.mulf %109, %113 : vector<16x32xf32>
    %115 = vector.broadcast %95 : vector<1x32xf32> to vector<16x32xf32>
    %116 = arith.mulf %114, %115 : vector<16x32xf32>
    %117 = vector.broadcast %96 : vector<1x32xf32> to vector<16x32xf32>
    %118 = arith.addf %116, %117 : vector<16x32xf32>
    %c312 = arith.constant 312 : index
    %c0_50 = arith.constant 0 : index
    %119 = vector.load %arg2[%c312, %c0_50] : memref<944x128xf32, #tpu.memory_space<vmem>>, vector<32x64xf32>
    %cst_51 = arith.constant dense<0.000000e+00> : vector<16x64xf32>
    %120 = tpu.matmul %118, %119, %cst_51 {dimension_numbers = #tpu.dot_dimension_numbers<[1], [0], [0], [1], [0, 0, 1, 1], [], []>} : vector<16x32xf32>, vector<32x64xf32>, vector<16x64xf32> -> vector<16x64xf32>
    %c344 = arith.constant 344 : index
    %c0_52 = arith.constant 0 : index
    %121 = vector.load %arg2[%c344, %c0_52] : memref<944x128xf32, #tpu.memory_space<vmem>>, vector<1x64xf32>
    %122 = vector.broadcast %121 : vector<1x64xf32> to vector<16x64xf32>
    %123 = arith.addf %120, %122 : vector<16x64xf32>
    %cst_53 = arith.constant 5.000000e-01 : f32
    %124 = vector.broadcast %cst_53 : f32 to vector<16x64xf32>
    %125 = arith.mulf %124, %123 : vector<16x64xf32>
    %cst_54 = arith.constant 4.471500e-02 : f32
    %126 = vector.broadcast %cst_54 : f32 to vector<16x64xf32>
    %127 = arith.mulf %126, %123 : vector<16x64xf32>
    %128 = arith.mulf %127, %123 : vector<16x64xf32>
    %129 = arith.mulf %128, %123 : vector<16x64xf32>
    %130 = arith.addf %123, %129 : vector<16x64xf32>
    %cst_55 = arith.constant 0.797884583 : f32
    %131 = vector.broadcast %cst_55 : f32 to vector<16x64xf32>
    %132 = arith.mulf %131, %130 : vector<16x64xf32>
    %133 = math.tanh %132 : vector<16x64xf32>
    %cst_56 = arith.constant 1.000000e+00 : f32
    %134 = vector.broadcast %cst_56 : f32 to vector<16x64xf32>
    %135 = arith.addf %134, %133 : vector<16x64xf32>
    %136 = arith.mulf %125, %135 : vector<16x64xf32>
    %c352 = arith.constant 352 : index
    %c0_57 = arith.constant 0 : index
    %137 = vector.load %arg2[%c352, %c0_57] : memref<944x128xf32, #tpu.memory_space<vmem>>, vector<64x32xf32>
    %cst_58 = arith.constant dense<0.000000e+00> : vector<16x32xf32>
    %138 = tpu.matmul %136, %137, %cst_58 {dimension_numbers = #tpu.dot_dimension_numbers<[1], [0], [0], [1], [0, 0, 1, 1], [], []>} : vector<16x64xf32>, vector<64x32xf32>, vector<16x32xf32> -> vector<16x32xf32>
    %c416 = arith.constant 416 : index
    %c0_59 = arith.constant 0 : index
    %139 = vector.load %arg2[%c416, %c0_59] : memref<944x128xf32, #tpu.memory_space<vmem>>, vector<1x32xf32>
    %140 = vector.broadcast %139 : vector<1x32xf32> to vector<16x32xf32>
    %141 = arith.addf %138, %140 : vector<16x32xf32>
    %142 = arith.addf %141, %118 : vector<16x32xf32>
    %c424 = arith.constant 424 : index
    %c0_60 = arith.constant 0 : index
    %143 = vector.load %arg2[%c424, %c0_60] : memref<944x128xf32, #tpu.memory_space<vmem>>, vector<1x32xf32>
    %c432 = arith.constant 432 : index
    %c0_61 = arith.constant 0 : index
    %144 = vector.load %arg2[%c432, %c0_61] : memref<944x128xf32, #tpu.memory_space<vmem>>, vector<1x32xf32>
    %cst_62 = arith.constant dense<0.000000e+00> : vector<16xf32>
    %145 = vector.multi_reduction <add>, %142, %cst_62 [1] : vector<16x32xf32> to vector<16xf32>
    %146 = vector.shape_cast %145 : vector<16xf32> to vector<16x1xf32>
    %cst_63 = arith.constant 3.200000e+01 : f32
    %147 = vector.broadcast %cst_63 : f32 to vector<16x1xf32>
    %148 = arith.divf %146, %147 : vector<16x1xf32>
    %149 = vector.broadcast %148 : vector<16x1xf32> to vector<16x32xf32>
    %150 = arith.subf %142, %149 : vector<16x32xf32>
    %151 = arith.mulf %150, %150 : vector<16x32xf32>
    %cst_64 = arith.constant dense<0.000000e+00> : vector<16xf32>
    %152 = vector.multi_reduction <add>, %151, %cst_64 [1] : vector<16x32xf32> to vector<16xf32>
    %153 = vector.shape_cast %152 : vector<16xf32> to vector<16x1xf32>
    %cst_65 = arith.constant 3.200000e+01 : f32
    %154 = vector.broadcast %cst_65 : f32 to vector<16x1xf32>
    %155 = arith.divf %153, %154 : vector<16x1xf32>
    %156 = vector.broadcast %148 : vector<16x1xf32> to vector<16x32xf32>
    %157 = arith.subf %142, %156 : vector<16x32xf32>
    %cst_66 = arith.constant 9.99999974E-6 : f32
    %158 = vector.broadcast %cst_66 : f32 to vector<16x1xf32>
    %159 = arith.addf %155, %158 : vector<16x1xf32>
    %160 = math.rsqrt %159 : vector<16x1xf32>
    %161 = vector.broadcast %160 : vector<16x1xf32> to vector<16x32xf32>
    %162 = arith.mulf %157, %161 : vector<16x32xf32>
    %163 = vector.broadcast %143 : vector<1x32xf32> to vector<16x32xf32>
    %164 = arith.mulf %162, %163 : vector<16x32xf32>
    %165 = vector.broadcast %144 : vector<1x32xf32> to vector<16x32xf32>
    %166 = arith.addf %164, %165 : vector<16x32xf32>
    %c440 = arith.constant 440 : index
    %c0_67 = arith.constant 0 : index
    %167 = vector.load %arg2[%c440, %c0_67] : memref<944x128xf32, #tpu.memory_space<vmem>>, vector<32x16xf32>
    %cst_68 = arith.constant dense<0.000000e+00> : vector<16x16xf32>
    %168 = tpu.matmul %166, %167, %cst_68 {dimension_numbers = #tpu.dot_dimension_numbers<[1], [0], [0], [1], [0, 0, 1, 1], [], []>} : vector<16x32xf32>, vector<32x16xf32>, vector<16x16xf32> -> vector<16x16xf32>
    %c472 = arith.constant 472 : index
    %c0_69 = arith.constant 0 : index
    %169 = vector.load %arg2[%c472, %c0_69] : memref<944x128xf32, #tpu.memory_space<vmem>>, vector<1x16xf32>
    %170 = vector.broadcast %169 : vector<1x16xf32> to vector<16x16xf32>
    %171 = arith.addf %168, %170 : vector<16x16xf32>
    %c520 = arith.constant 520 : index
    %c0_70 = arith.constant 0 : index
    %172 = vector.load %arg2[%c520, %c0_70] : memref<944x128xf32, #tpu.memory_space<vmem>>, vector<32x16xf32>
    %cst_71 = arith.constant dense<0.000000e+00> : vector<16x16xf32>
    %173 = tpu.matmul %166, %172, %cst_71 {dimension_numbers = #tpu.dot_dimension_numbers<[1], [0], [0], [1], [0, 0, 1, 1], [], []>} : vector<16x32xf32>, vector<32x16xf32>, vector<16x16xf32> -> vector<16x16xf32>
    %c552 = arith.constant 552 : index
    %c0_72 = arith.constant 0 : index
    %174 = vector.load %arg2[%c552, %c0_72] : memref<944x128xf32, #tpu.memory_space<vmem>>, vector<1x16xf32>
    %175 = vector.broadcast %174 : vector<1x16xf32> to vector<16x16xf32>
    %176 = arith.addf %173, %175 : vector<16x16xf32>
    %c600 = arith.constant 600 : index
    %c0_73 = arith.constant 0 : index
    %177 = vector.load %arg2[%c600, %c0_73] : memref<944x128xf32, #tpu.memory_space<vmem>>, vector<32x16xf32>
    %cst_74 = arith.constant dense<0.000000e+00> : vector<16x16xf32>
    %178 = tpu.matmul %166, %177, %cst_74 {dimension_numbers = #tpu.dot_dimension_numbers<[1], [0], [0], [1], [0, 0, 1, 1], [], []>} : vector<16x32xf32>, vector<32x16xf32>, vector<16x16xf32> -> vector<16x16xf32>
    %c632 = arith.constant 632 : index
    %c0_75 = arith.constant 0 : index
    %179 = vector.load %arg2[%c632, %c0_75] : memref<944x128xf32, #tpu.memory_space<vmem>>, vector<1x16xf32>
    %180 = vector.broadcast %179 : vector<1x16xf32> to vector<16x16xf32>
    %181 = arith.addf %178, %180 : vector<16x16xf32>
    %cst_76 = arith.constant dense<0.000000e+00> : vector<16x16xf32>
    %182 = tpu.matmul %171, %176, %cst_76 {dimension_numbers = #tpu.dot_dimension_numbers<[1], [1], [0], [0], [0, 0, 1, 0], [], []>} : vector<16x16xf32>, vector<16x16xf32>, vector<16x16xf32> -> vector<16x16xf32>
    %cst_77 = arith.constant 2.500000e-01 : f32
    %183 = vector.broadcast %cst_77 : f32 to vector<16x16xf32>
    %184 = arith.mulf %182, %183 : vector<16x16xf32>
    %185 = arith.addf %184, %1 : vector<16x16xf32>
    %cst_78 = arith.constant dense<0xFF800000> : vector<16xf32>
    %186 = vector.multi_reduction <maximumf>, %185, %cst_78 [1] : vector<16x16xf32> to vector<16xf32>
    %187 = vector.shape_cast %186 : vector<16xf32> to vector<16x1xf32>
    %188 = vector.broadcast %187 : vector<16x1xf32> to vector<16x16xf32>
    %189 = arith.subf %185, %188 : vector<16x16xf32>
    %190 = math.exp %189 : vector<16x16xf32>
    %cst_79 = arith.constant dense<0.000000e+00> : vector<16xf32>
    %191 = vector.multi_reduction <add>, %190, %cst_79 [1] : vector<16x16xf32> to vector<16xf32>
    %192 = vector.shape_cast %191 : vector<16xf32> to vector<16x1xf32>
    %193 = tpu.reciprocal %192 {approx = true} : vector<16x1xf32> -> vector<16x1xf32>
    %194 = vector.broadcast %193 : vector<16x1xf32> to vector<16x16xf32>
    %195 = arith.mulf %190, %194 : vector<16x16xf32>
    %cst_80 = arith.constant dense<0.000000e+00> : vector<16x16xf32>
    %196 = tpu.matmul %195, %181, %cst_80 {dimension_numbers = #tpu.dot_dimension_numbers<[1], [0], [0], [1], [0, 0, 1, 1], [], []>} : vector<16x16xf32>, vector<16x16xf32>, vector<16x16xf32> -> vector<16x16xf32>
    %c680 = arith.constant 680 : index
    %c0_81 = arith.constant 0 : index
    %197 = vector.load %arg2[%c680, %c0_81] : memref<944x128xf32, #tpu.memory_space<vmem>>, vector<16x32xf32>
    %cst_82 = arith.constant dense<0.000000e+00> : vector<16x32xf32>
    %198 = tpu.matmul %196, %197, %cst_82 {dimension_numbers = #tpu.dot_dimension_numbers<[1], [0], [0], [1], [0, 0, 1, 1], [], []>} : vector<16x16xf32>, vector<16x32xf32>, vector<16x32xf32> -> vector<16x32xf32>
    %c480 = arith.constant 480 : index
    %c0_83 = arith.constant 0 : index
    %199 = vector.load %arg2[%c480, %c0_83] : memref<944x128xf32, #tpu.memory_space<vmem>>, vector<32x16xf32>
    %cst_84 = arith.constant dense<0.000000e+00> : vector<16x16xf32>
    %200 = tpu.matmul %166, %199, %cst_84 {dimension_numbers = #tpu.dot_dimension_numbers<[1], [0], [0], [1], [0, 0, 1, 1], [], []>} : vector<16x32xf32>, vector<32x16xf32>, vector<16x16xf32> -> vector<16x16xf32>
    %c512 = arith.constant 512 : index
    %c0_85 = arith.constant 0 : index
    %201 = vector.load %arg2[%c512, %c0_85] : memref<944x128xf32, #tpu.memory_space<vmem>>, vector<1x16xf32>
    %202 = vector.broadcast %201 : vector<1x16xf32> to vector<16x16xf32>
    %203 = arith.addf %200, %202 : vector<16x16xf32>
    %c560 = arith.constant 560 : index
    %c0_86 = arith.constant 0 : index
    %204 = vector.load %arg2[%c560, %c0_86] : memref<944x128xf32, #tpu.memory_space<vmem>>, vector<32x16xf32>
    %cst_87 = arith.constant dense<0.000000e+00> : vector<16x16xf32>
    %205 = tpu.matmul %166, %204, %cst_87 {dimension_numbers = #tpu.dot_dimension_numbers<[1], [0], [0], [1], [0, 0, 1, 1], [], []>} : vector<16x32xf32>, vector<32x16xf32>, vector<16x16xf32> -> vector<16x16xf32>
    %c592 = arith.constant 592 : index
    %c0_88 = arith.constant 0 : index
    %206 = vector.load %arg2[%c592, %c0_88] : memref<944x128xf32, #tpu.memory_space<vmem>>, vector<1x16xf32>
    %207 = vector.broadcast %206 : vector<1x16xf32> to vector<16x16xf32>
    %208 = arith.addf %205, %207 : vector<16x16xf32>
    %c640 = arith.constant 640 : index
    %c0_89 = arith.constant 0 : index
    %209 = vector.load %arg2[%c640, %c0_89] : memref<944x128xf32, #tpu.memory_space<vmem>>, vector<32x16xf32>
    %cst_90 = arith.constant dense<0.000000e+00> : vector<16x16xf32>
    %210 = tpu.matmul %166, %209, %cst_90 {dimension_numbers = #tpu.dot_dimension_numbers<[1], [0], [0], [1], [0, 0, 1, 1], [], []>} : vector<16x32xf32>, vector<32x16xf32>, vector<16x16xf32> -> vector<16x16xf32>
    %c672 = arith.constant 672 : index
    %c0_91 = arith.constant 0 : index
    %211 = vector.load %arg2[%c672, %c0_91] : memref<944x128xf32, #tpu.memory_space<vmem>>, vector<1x16xf32>
    %212 = vector.broadcast %211 : vector<1x16xf32> to vector<16x16xf32>
    %213 = arith.addf %210, %212 : vector<16x16xf32>
    %cst_92 = arith.constant dense<0.000000e+00> : vector<16x16xf32>
    %214 = tpu.matmul %203, %208, %cst_92 {dimension_numbers = #tpu.dot_dimension_numbers<[1], [1], [0], [0], [0, 0, 1, 0], [], []>} : vector<16x16xf32>, vector<16x16xf32>, vector<16x16xf32> -> vector<16x16xf32>
    %cst_93 = arith.constant 2.500000e-01 : f32
    %215 = vector.broadcast %cst_93 : f32 to vector<16x16xf32>
    %216 = arith.mulf %214, %215 : vector<16x16xf32>
    %217 = arith.addf %216, %1 : vector<16x16xf32>
    %cst_94 = arith.constant dense<0xFF800000> : vector<16xf32>
    %218 = vector.multi_reduction <maximumf>, %217, %cst_94 [1] : vector<16x16xf32> to vector<16xf32>
    %219 = vector.shape_cast %218 : vector<16xf32> to vector<16x1xf32>
    %220 = vector.broadcast %219 : vector<16x1xf32> to vector<16x16xf32>
    %221 = arith.subf %217, %220 : vector<16x16xf32>
    %222 = math.exp %221 : vector<16x16xf32>
    %cst_95 = arith.constant dense<0.000000e+00> : vector<16xf32>
    %223 = vector.multi_reduction <add>, %222, %cst_95 [1] : vector<16x16xf32> to vector<16xf32>
    %224 = vector.shape_cast %223 : vector<16xf32> to vector<16x1xf32>
    %225 = tpu.reciprocal %224 {approx = true} : vector<16x1xf32> -> vector<16x1xf32>
    %226 = vector.broadcast %225 : vector<16x1xf32> to vector<16x16xf32>
    %227 = arith.mulf %222, %226 : vector<16x16xf32>
    %cst_96 = arith.constant dense<0.000000e+00> : vector<16x16xf32>
    %228 = tpu.matmul %227, %213, %cst_96 {dimension_numbers = #tpu.dot_dimension_numbers<[1], [0], [0], [1], [0, 0, 1, 1], [], []>} : vector<16x16xf32>, vector<16x16xf32>, vector<16x16xf32> -> vector<16x16xf32>
    %c696 = arith.constant 696 : index
    %c0_97 = arith.constant 0 : index
    %229 = vector.load %arg2[%c696, %c0_97] : memref<944x128xf32, #tpu.memory_space<vmem>>, vector<16x32xf32>
    %cst_98 = arith.constant dense<0.000000e+00> : vector<16x32xf32>
    %230 = tpu.matmul %228, %229, %cst_98 {dimension_numbers = #tpu.dot_dimension_numbers<[1], [0], [0], [1], [0, 0, 1, 1], [], []>} : vector<16x16xf32>, vector<16x32xf32>, vector<16x32xf32> -> vector<16x32xf32>
    %231 = arith.addf %198, %230 : vector<16x32xf32>
    %c712 = arith.constant 712 : index
    %c0_99 = arith.constant 0 : index
    %232 = vector.load %arg2[%c712, %c0_99] : memref<944x128xf32, #tpu.memory_space<vmem>>, vector<1x32xf32>
    %233 = vector.broadcast %232 : vector<1x32xf32> to vector<16x32xf32>
    %234 = arith.addf %231, %233 : vector<16x32xf32>
    %235 = arith.addf %234, %166 : vector<16x32xf32>
    %c720 = arith.constant 720 : index
    %c0_100 = arith.constant 0 : index
    %236 = vector.load %arg2[%c720, %c0_100] : memref<944x128xf32, #tpu.memory_space<vmem>>, vector<1x32xf32>
    %c728 = arith.constant 728 : index
    %c0_101 = arith.constant 0 : index
    %237 = vector.load %arg2[%c728, %c0_101] : memref<944x128xf32, #tpu.memory_space<vmem>>, vector<1x32xf32>
    %cst_102 = arith.constant dense<0.000000e+00> : vector<16xf32>
    %238 = vector.multi_reduction <add>, %235, %cst_102 [1] : vector<16x32xf32> to vector<16xf32>
    %239 = vector.shape_cast %238 : vector<16xf32> to vector<16x1xf32>
    %cst_103 = arith.constant 3.200000e+01 : f32
    %240 = vector.broadcast %cst_103 : f32 to vector<16x1xf32>
    %241 = arith.divf %239, %240 : vector<16x1xf32>
    %242 = vector.broadcast %241 : vector<16x1xf32> to vector<16x32xf32>
    %243 = arith.subf %235, %242 : vector<16x32xf32>
    %244 = arith.mulf %243, %243 : vector<16x32xf32>
    %cst_104 = arith.constant dense<0.000000e+00> : vector<16xf32>
    %245 = vector.multi_reduction <add>, %244, %cst_104 [1] : vector<16x32xf32> to vector<16xf32>
    %246 = vector.shape_cast %245 : vector<16xf32> to vector<16x1xf32>
    %cst_105 = arith.constant 3.200000e+01 : f32
    %247 = vector.broadcast %cst_105 : f32 to vector<16x1xf32>
    %248 = arith.divf %246, %247 : vector<16x1xf32>
    %249 = vector.broadcast %241 : vector<16x1xf32> to vector<16x32xf32>
    %250 = arith.subf %235, %249 : vector<16x32xf32>
    %cst_106 = arith.constant 9.99999974E-6 : f32
    %251 = vector.broadcast %cst_106 : f32 to vector<16x1xf32>
    %252 = arith.addf %248, %251 : vector<16x1xf32>
    %253 = math.rsqrt %252 : vector<16x1xf32>
    %254 = vector.broadcast %253 : vector<16x1xf32> to vector<16x32xf32>
    %255 = arith.mulf %250, %254 : vector<16x32xf32>
    %256 = vector.broadcast %236 : vector<1x32xf32> to vector<16x32xf32>
    %257 = arith.mulf %255, %256 : vector<16x32xf32>
    %258 = vector.broadcast %237 : vector<1x32xf32> to vector<16x32xf32>
    %259 = arith.addf %257, %258 : vector<16x32xf32>
    %c736 = arith.constant 736 : index
    %c0_107 = arith.constant 0 : index
    %260 = vector.load %arg2[%c736, %c0_107] : memref<944x128xf32, #tpu.memory_space<vmem>>, vector<32x64xf32>
    %cst_108 = arith.constant dense<0.000000e+00> : vector<16x64xf32>
    %261 = tpu.matmul %259, %260, %cst_108 {dimension_numbers = #tpu.dot_dimension_numbers<[1], [0], [0], [1], [0, 0, 1, 1], [], []>} : vector<16x32xf32>, vector<32x64xf32>, vector<16x64xf32> -> vector<16x64xf32>
    %c768 = arith.constant 768 : index
    %c0_109 = arith.constant 0 : index
    %262 = vector.load %arg2[%c768, %c0_109] : memref<944x128xf32, #tpu.memory_space<vmem>>, vector<1x64xf32>
    %263 = vector.broadcast %262 : vector<1x64xf32> to vector<16x64xf32>
    %264 = arith.addf %261, %263 : vector<16x64xf32>
    %cst_110 = arith.constant 5.000000e-01 : f32
    %265 = vector.broadcast %cst_110 : f32 to vector<16x64xf32>
    %266 = arith.mulf %265, %264 : vector<16x64xf32>
    %cst_111 = arith.constant 4.471500e-02 : f32
    %267 = vector.broadcast %cst_111 : f32 to vector<16x64xf32>
    %268 = arith.mulf %267, %264 : vector<16x64xf32>
    %269 = arith.mulf %268, %264 : vector<16x64xf32>
    %270 = arith.mulf %269, %264 : vector<16x64xf32>
    %271 = arith.addf %264, %270 : vector<16x64xf32>
    %cst_112 = arith.constant 0.797884583 : f32
    %272 = vector.broadcast %cst_112 : f32 to vector<16x64xf32>
    %273 = arith.mulf %272, %271 : vector<16x64xf32>
    %274 = math.tanh %273 : vector<16x64xf32>
    %cst_113 = arith.constant 1.000000e+00 : f32
    %275 = vector.broadcast %cst_113 : f32 to vector<16x64xf32>
    %276 = arith.addf %275, %274 : vector<16x64xf32>
    %277 = arith.mulf %266, %276 : vector<16x64xf32>
    %c776 = arith.constant 776 : index
    %c0_114 = arith.constant 0 : index
    %278 = vector.load %arg2[%c776, %c0_114] : memref<944x128xf32, #tpu.memory_space<vmem>>, vector<64x32xf32>
    %cst_115 = arith.constant dense<0.000000e+00> : vector<16x32xf32>
    %279 = tpu.matmul %277, %278, %cst_115 {dimension_numbers = #tpu.dot_dimension_numbers<[1], [0], [0], [1], [0, 0, 1, 1], [], []>} : vector<16x64xf32>, vector<64x32xf32>, vector<16x32xf32> -> vector<16x32xf32>
    %c840 = arith.constant 840 : index
    %c0_116 = arith.constant 0 : index
    %280 = vector.load %arg2[%c840, %c0_116] : memref<944x128xf32, #tpu.memory_space<vmem>>, vector<1x32xf32>
    %281 = vector.broadcast %280 : vector<1x32xf32> to vector<16x32xf32>
    %282 = arith.addf %279, %281 : vector<16x32xf32>
    %283 = arith.addf %282, %259 : vector<16x32xf32>
    %c848 = arith.constant 848 : index
    %c0_117 = arith.constant 0 : index
    %284 = vector.load %arg2[%c848, %c0_117] : memref<944x128xf32, #tpu.memory_space<vmem>>, vector<1x32xf32>
    %c856 = arith.constant 856 : index
    %c0_118 = arith.constant 0 : index
    %285 = vector.load %arg2[%c856, %c0_118] : memref<944x128xf32, #tpu.memory_space<vmem>>, vector<1x32xf32>
    %cst_119 = arith.constant dense<0.000000e+00> : vector<16xf32>
    %286 = vector.multi_reduction <add>, %283, %cst_119 [1] : vector<16x32xf32> to vector<16xf32>
    %287 = vector.shape_cast %286 : vector<16xf32> to vector<16x1xf32>
    %cst_120 = arith.constant 3.200000e+01 : f32
    %288 = vector.broadcast %cst_120 : f32 to vector<16x1xf32>
    %289 = arith.divf %287, %288 : vector<16x1xf32>
    %290 = vector.broadcast %289 : vector<16x1xf32> to vector<16x32xf32>
    %291 = arith.subf %283, %290 : vector<16x32xf32>
    %292 = arith.mulf %291, %291 : vector<16x32xf32>
    %cst_121 = arith.constant dense<0.000000e+00> : vector<16xf32>
    %293 = vector.multi_reduction <add>, %292, %cst_121 [1] : vector<16x32xf32> to vector<16xf32>
    %294 = vector.shape_cast %293 : vector<16xf32> to vector<16x1xf32>
    %cst_122 = arith.constant 3.200000e+01 : f32
    %295 = vector.broadcast %cst_122 : f32 to vector<16x1xf32>
    %296 = arith.divf %294, %295 : vector<16x1xf32>
    %297 = vector.broadcast %289 : vector<16x1xf32> to vector<16x32xf32>
    %298 = arith.subf %283, %297 : vector<16x32xf32>
    %cst_123 = arith.constant 9.99999974E-6 : f32
    %299 = vector.broadcast %cst_123 : f32 to vector<16x1xf32>
    %300 = arith.addf %296, %299 : vector<16x1xf32>
    %301 = math.rsqrt %300 : vector<16x1xf32>
    %302 = vector.broadcast %301 : vector<16x1xf32> to vector<16x32xf32>
    %303 = arith.mulf %298, %302 : vector<16x32xf32>
    %304 = vector.broadcast %284 : vector<1x32xf32> to vector<16x32xf32>
    %305 = arith.mulf %303, %304 : vector<16x32xf32>
    %306 = vector.broadcast %285 : vector<1x32xf32> to vector<16x32xf32>
    %307 = arith.addf %305, %306 : vector<16x32xf32>
    %c864 = arith.constant 864 : index
    %c0_124 = arith.constant 0 : index
    %308 = vector.load %arg2[%c864, %c0_124] : memref<944x128xf32, #tpu.memory_space<vmem>>, vector<32x32xf32>
    %cst_125 = arith.constant dense<0.000000e+00> : vector<16x32xf32>
    %309 = tpu.matmul %307, %308, %cst_125 {dimension_numbers = #tpu.dot_dimension_numbers<[1], [0], [0], [1], [0, 0, 1, 1], [], []>} : vector<16x32xf32>, vector<32x32xf32>, vector<16x32xf32> -> vector<16x32xf32>
    %c896 = arith.constant 896 : index
    %c0_126 = arith.constant 0 : index
    %310 = vector.load %arg2[%c896, %c0_126] : memref<944x128xf32, #tpu.memory_space<vmem>>, vector<1x32xf32>
    %311 = vector.broadcast %310 : vector<1x32xf32> to vector<16x32xf32>
    %312 = arith.addf %309, %311 : vector<16x32xf32>
    %313 = math.tanh %312 : vector<16x32xf32>
    %c904 = arith.constant 904 : index
    %c0_127 = arith.constant 0 : index
    %314 = vector.load %arg2[%c904, %c0_127] : memref<944x128xf32, #tpu.memory_space<vmem>>, vector<32x2xf32>
    %cst_128 = arith.constant dense<0.000000e+00> : vector<16x2xf32>
    %315 = tpu.matmul %313, %314, %cst_128 {dimension_numbers = #tpu.dot_dimension_numbers<[1], [0], [0], [1], [0, 0, 1, 1], [], []>} : vector<16x32xf32>, vector<32x2xf32>, vector<16x2xf32> -> vector<16x2xf32>
    %c936 = arith.constant 936 : index
    %c0_129 = arith.constant 0 : index
    %316 = vector.load %arg2[%c936, %c0_129] : memref<944x128xf32, #tpu.memory_space<vmem>>, vector<1x2xf32>
    %317 = vector.broadcast %316 : vector<1x2xf32> to vector<16x2xf32>
    %318 = arith.addf %315, %317 : vector<16x2xf32>
    %c0_130 = arith.constant 0 : index
    %c0_131 = arith.constant 0 : index
    %319 = vector.load %arg3[%c0_130, %c0_131] : memref<16x2xf32, #tpu.memory_space<vmem>>, vector<16x2xf32>
    tpu.vector_store %arg3[%c0_130, %c0_131], %318 {strides = array<i32>} : memref<16x2xf32, #tpu.memory_space<vmem>>, vector<16x2xf32>,
    return
  }
}

module attributes {stable_mosaic.version = 11 : i64} {
  func.func @kernel(%arg0: memref<4x16x32xf32, #tpu.memory_space<vmem>>, %arg1: memref<16x4xf32, #tpu.memory_space<vmem>>, %arg2: memref<16x4xf32, #tpu.memory_space<vmem>>, %arg3: memref<16x32xf32, #tpu.memory_space<vmem>>, %arg4: memref<16x16xf32, #tpu.memory_space<vmem>>, %arg5: memref<944x128xf32, #tpu.memory_space<vmem>>, %arg6: memref<16x2xf32, #tpu.memory_space<vmem>>) attributes {dimension_semantics = [], scalar_prefetch = 0 : i64, scratch_operands = 0 : i64, tpu.core_type = #tpu.core_type<tc>} {
    %c0 = arith.constant 0 : index
    %c0_0 = arith.constant 0 : index
    %0 = vector.load %arg1[%c0, %c0_0] : memref<16x4xf32, #tpu.memory_space<vmem>>, vector<16x4xf32>
    %c0_1 = arith.constant 0 : index
    %c0_2 = arith.constant 0 : index
    %1 = vector.load %arg2[%c0_1, %c0_2] : memref<16x4xf32, #tpu.memory_space<vmem>>, vector<16x4xf32>
    %2 = arith.mulf %1, %0 : vector<16x4xf32>
    %cst = arith.constant 1.000000e+00 : f32
    %3 = vector.broadcast %cst : f32 to vector<16x4xf32>
    %4 = arith.subf %3, %1 : vector<16x4xf32>
    %cst_3 = arith.constant -9.990000e+02 : f32
    %5 = vector.broadcast %cst_3 : f32 to vector<16x4xf32>
    %6 = arith.mulf %4, %5 : vector<16x4xf32>
    %7 = arith.addf %2, %6 : vector<16x4xf32>
    %cst_4 = arith.constant dense<0xFF800000> : vector<16xf32>
    %8 = vector.multi_reduction <maximumf>, %7, %cst_4 [1] : vector<16x4xf32> to vector<16xf32>
    %9 = vector.shape_cast %8 : vector<16xf32> to vector<16x1xf32>
    %10 = vector.broadcast %9 : vector<16x1xf32> to vector<16x4xf32>
    %11 = arith.subf %7, %10 : vector<16x4xf32>
    %12 = math.exp %11 : vector<16x4xf32>
    %cst_5 = arith.constant dense<0.000000e+00> : vector<16xf32>
    %13 = vector.multi_reduction <add>, %12, %cst_5 [1] : vector<16x4xf32> to vector<16xf32>
    %14 = vector.shape_cast %13 : vector<16xf32> to vector<16x1xf32>
    %15 = tpu.reciprocal %14 {approx = true} : vector<16x1xf32> -> vector<16x1xf32>
    %16 = vector.broadcast %15 : vector<16x1xf32> to vector<16x4xf32>
    %17 = arith.mulf %12, %16 : vector<16x4xf32>
    %18 = arith.mulf %17, %1 : vector<16x4xf32>
    %c0_6 = arith.constant 0 : index
    %c0_7 = arith.constant 0 : index
    %19 = vector.load %arg3[%c0_6, %c0_7] : memref<16x32xf32, #tpu.memory_space<vmem>>, vector<16x32xf32>
    %20 = vector.extract_strided_slice %18 {offsets = [0, 0], sizes = [16, 1], strides = [1, 1]} : vector<16x4xf32> to vector<16x1xf32>
    %c0_8 = arith.constant 0 : index
    %c0_9 = arith.constant 0 : index
    %c0_10 = arith.constant 0 : index
    %21 = vector.load %arg0[%c0_8, %c0_9, %c0_10] : memref<4x16x32xf32, #tpu.memory_space<vmem>>, vector<1x16x32xf32>
    %22 = vector.shape_cast %21 : vector<1x16x32xf32> to vector<16x32xf32>
    %23 = vector.broadcast %20 : vector<16x1xf32> to vector<16x32xf32>
    %24 = arith.mulf %23, %22 : vector<16x32xf32>
    %25 = arith.addf %19, %24 : vector<16x32xf32>
    %26 = vector.extract_strided_slice %18 {offsets = [0, 1], sizes = [16, 1], strides = [1, 1]} : vector<16x4xf32> to vector<16x1xf32>
    %c1 = arith.constant 1 : index
    %c0_11 = arith.constant 0 : index
    %c0_12 = arith.constant 0 : index
    %27 = vector.load %arg0[%c1, %c0_11, %c0_12] : memref<4x16x32xf32, #tpu.memory_space<vmem>>, vector<1x16x32xf32>
    %28 = vector.shape_cast %27 : vector<1x16x32xf32> to vector<16x32xf32>
    %29 = vector.broadcast %26 : vector<16x1xf32> to vector<16x32xf32>
    %30 = arith.mulf %29, %28 : vector<16x32xf32>
    %31 = arith.addf %25, %30 : vector<16x32xf32>
    %32 = vector.extract_strided_slice %18 {offsets = [0, 2], sizes = [16, 1], strides = [1, 1]} : vector<16x4xf32> to vector<16x1xf32>
    %c2 = arith.constant 2 : index
    %c0_13 = arith.constant 0 : index
    %c0_14 = arith.constant 0 : index
    %33 = vector.load %arg0[%c2, %c0_13, %c0_14] : memref<4x16x32xf32, #tpu.memory_space<vmem>>, vector<1x16x32xf32>
    %34 = vector.shape_cast %33 : vector<1x16x32xf32> to vector<16x32xf32>
    %35 = vector.broadcast %32 : vector<16x1xf32> to vector<16x32xf32>
    %36 = arith.mulf %35, %34 : vector<16x32xf32>
    %37 = arith.addf %31, %36 : vector<16x32xf32>
    %38 = vector.extract_strided_slice %18 {offsets = [0, 3], sizes = [16, 1], strides = [1, 1]} : vector<16x4xf32> to vector<16x1xf32>
    %c3 = arith.constant 3 : index
    %c0_15 = arith.constant 0 : index
    %c0_16 = arith.constant 0 : index
    %39 = vector.load %arg0[%c3, %c0_15, %c0_16] : memref<4x16x32xf32, #tpu.memory_space<vmem>>, vector<1x16x32xf32>
    %40 = vector.shape_cast %39 : vector<1x16x32xf32> to vector<16x32xf32>
    %41 = vector.broadcast %38 : vector<16x1xf32> to vector<16x32xf32>
    %42 = arith.mulf %41, %40 : vector<16x32xf32>
    %43 = arith.addf %37, %42 : vector<16x32xf32>
    %c0_17 = arith.constant 0 : index
    %c0_18 = arith.constant 0 : index
    %44 = vector.load %arg4[%c0_17, %c0_18] : memref<16x16xf32, #tpu.memory_space<vmem>>, vector<16x16xf32>
    %c0_19 = arith.constant 0 : index
    %c0_20 = arith.constant 0 : index
    %45 = vector.load %arg5[%c0_19, %c0_20] : memref<944x128xf32, #tpu.memory_space<vmem>>, vector<1x32xf32>
    %c8 = arith.constant 8 : index
    %c0_21 = arith.constant 0 : index
    %46 = vector.load %arg5[%c8, %c0_21] : memref<944x128xf32, #tpu.memory_space<vmem>>, vector<1x32xf32>
    %cst_22 = arith.constant dense<0.000000e+00> : vector<16xf32>
    %47 = vector.multi_reduction <add>, %43, %cst_22 [1] : vector<16x32xf32> to vector<16xf32>
    %48 = vector.shape_cast %47 : vector<16xf32> to vector<16x1xf32>
    %cst_23 = arith.constant 3.200000e+01 : f32
    %49 = vector.broadcast %cst_23 : f32 to vector<16x1xf32>
    %50 = arith.divf %48, %49 : vector<16x1xf32>
    %51 = vector.broadcast %50 : vector<16x1xf32> to vector<16x32xf32>
    %52 = arith.subf %43, %51 : vector<16x32xf32>
    %53 = arith.mulf %52, %52 : vector<16x32xf32>
    %cst_24 = arith.constant dense<0.000000e+00> : vector<16xf32>
    %54 = vector.multi_reduction <add>, %53, %cst_24 [1] : vector<16x32xf32> to vector<16xf32>
    %55 = vector.shape_cast %54 : vector<16xf32> to vector<16x1xf32>
    %cst_25 = arith.constant 3.200000e+01 : f32
    %56 = vector.broadcast %cst_25 : f32 to vector<16x1xf32>
    %57 = arith.divf %55, %56 : vector<16x1xf32>
    %58 = vector.broadcast %50 : vector<16x1xf32> to vector<16x32xf32>
    %59 = arith.subf %43, %58 : vector<16x32xf32>
    %cst_26 = arith.constant 9.99999974E-6 : f32
    %60 = vector.broadcast %cst_26 : f32 to vector<16x1xf32>
    %61 = arith.addf %57, %60 : vector<16x1xf32>
    %62 = math.rsqrt %61 : vector<16x1xf32>
    %63 = vector.broadcast %62 : vector<16x1xf32> to vector<16x32xf32>
    %64 = arith.mulf %59, %63 : vector<16x32xf32>
    %65 = vector.broadcast %45 : vector<1x32xf32> to vector<16x32xf32>
    %66 = arith.mulf %64, %65 : vector<16x32xf32>
    %67 = vector.broadcast %46 : vector<1x32xf32> to vector<16x32xf32>
    %68 = arith.addf %66, %67 : vector<16x32xf32>
    %c16 = arith.constant 16 : index
    %c0_27 = arith.constant 0 : index
    %69 = vector.load %arg5[%c16, %c0_27] : memref<944x128xf32, #tpu.memory_space<vmem>>, vector<32x16xf32>
    %cst_28 = arith.constant dense<0.000000e+00> : vector<16x16xf32>
    %70 = tpu.matmul %68, %69, %cst_28 {dimension_numbers = #tpu.dot_dimension_numbers<[1], [0], [0], [1], [0, 0, 1, 1], [], []>} : vector<16x32xf32>, vector<32x16xf32>, vector<16x16xf32> -> vector<16x16xf32>
    %c48 = arith.constant 48 : index
    %c0_29 = arith.constant 0 : index
    %71 = vector.load %arg5[%c48, %c0_29] : memref<944x128xf32, #tpu.memory_space<vmem>>, vector<1x16xf32>
    %72 = vector.broadcast %71 : vector<1x16xf32> to vector<16x16xf32>
    %73 = arith.addf %70, %72 : vector<16x16xf32>
    %c96 = arith.constant 96 : index
    %c0_30 = arith.constant 0 : index
    %74 = vector.load %arg5[%c96, %c0_30] : memref<944x128xf32, #tpu.memory_space<vmem>>, vector<32x16xf32>
    %cst_31 = arith.constant dense<0.000000e+00> : vector<16x16xf32>
    %75 = tpu.matmul %68, %74, %cst_31 {dimension_numbers = #tpu.dot_dimension_numbers<[1], [0], [0], [1], [0, 0, 1, 1], [], []>} : vector<16x32xf32>, vector<32x16xf32>, vector<16x16xf32> -> vector<16x16xf32>
    %c128 = arith.constant 128 : index
    %c0_32 = arith.constant 0 : index
    %76 = vector.load %arg5[%c128, %c0_32] : memref<944x128xf32, #tpu.memory_space<vmem>>, vector<1x16xf32>
    %77 = vector.broadcast %76 : vector<1x16xf32> to vector<16x16xf32>
    %78 = arith.addf %75, %77 : vector<16x16xf32>
    %c176 = arith.constant 176 : index
    %c0_33 = arith.constant 0 : index
    %79 = vector.load %arg5[%c176, %c0_33] : memref<944x128xf32, #tpu.memory_space<vmem>>, vector<32x16xf32>
    %cst_34 = arith.constant dense<0.000000e+00> : vector<16x16xf32>
    %80 = tpu.matmul %68, %79, %cst_34 {dimension_numbers = #tpu.dot_dimension_numbers<[1], [0], [0], [1], [0, 0, 1, 1], [], []>} : vector<16x32xf32>, vector<32x16xf32>, vector<16x16xf32> -> vector<16x16xf32>
    %c208 = arith.constant 208 : index
    %c0_35 = arith.constant 0 : index
    %81 = vector.load %arg5[%c208, %c0_35] : memref<944x128xf32, #tpu.memory_space<vmem>>, vector<1x16xf32>
    %82 = vector.broadcast %81 : vector<1x16xf32> to vector<16x16xf32>
    %83 = arith.addf %80, %82 : vector<16x16xf32>
    %cst_36 = arith.constant dense<0.000000e+00> : vector<16x16xf32>
    %84 = tpu.matmul %73, %78, %cst_36 {dimension_numbers = #tpu.dot_dimension_numbers<[1], [1], [0], [0], [0, 0, 1, 0], [], []>} : vector<16x16xf32>, vector<16x16xf32>, vector<16x16xf32> -> vector<16x16xf32>
    %cst_37 = arith.constant 2.500000e-01 : f32
    %85 = vector.broadcast %cst_37 : f32 to vector<16x16xf32>
    %86 = arith.mulf %84, %85 : vector<16x16xf32>
    %87 = arith.addf %86, %44 : vector<16x16xf32>
    %cst_38 = arith.constant dense<0xFF800000> : vector<16xf32>
    %88 = vector.multi_reduction <maximumf>, %87, %cst_38 [1] : vector<16x16xf32> to vector<16xf32>
    %89 = vector.shape_cast %88 : vector<16xf32> to vector<16x1xf32>
    %90 = vector.broadcast %89 : vector<16x1xf32> to vector<16x16xf32>
    %91 = arith.subf %87, %90 : vector<16x16xf32>
    %92 = math.exp %91 : vector<16x16xf32>
    %cst_39 = arith.constant dense<0.000000e+00> : vector<16xf32>
    %93 = vector.multi_reduction <add>, %92, %cst_39 [1] : vector<16x16xf32> to vector<16xf32>
    %94 = vector.shape_cast %93 : vector<16xf32> to vector<16x1xf32>
    %95 = tpu.reciprocal %94 {approx = true} : vector<16x1xf32> -> vector<16x1xf32>
    %96 = vector.broadcast %95 : vector<16x1xf32> to vector<16x16xf32>
    %97 = arith.mulf %92, %96 : vector<16x16xf32>
    %cst_40 = arith.constant dense<0.000000e+00> : vector<16x16xf32>
    %98 = tpu.matmul %97, %83, %cst_40 {dimension_numbers = #tpu.dot_dimension_numbers<[1], [0], [0], [1], [0, 0, 1, 1], [], []>} : vector<16x16xf32>, vector<16x16xf32>, vector<16x16xf32> -> vector<16x16xf32>
    %c256 = arith.constant 256 : index
    %c0_41 = arith.constant 0 : index
    %99 = vector.load %arg5[%c256, %c0_41] : memref<944x128xf32, #tpu.memory_space<vmem>>, vector<16x32xf32>
    %cst_42 = arith.constant dense<0.000000e+00> : vector<16x32xf32>
    %100 = tpu.matmul %98, %99, %cst_42 {dimension_numbers = #tpu.dot_dimension_numbers<[1], [0], [0], [1], [0, 0, 1, 1], [], []>} : vector<16x16xf32>, vector<16x32xf32>, vector<16x32xf32> -> vector<16x32xf32>
    %c56 = arith.constant 56 : index
    %c0_43 = arith.constant 0 : index
    %101 = vector.load %arg5[%c56, %c0_43] : memref<944x128xf32, #tpu.memory_space<vmem>>, vector<32x16xf32>
    %cst_44 = arith.constant dense<0.000000e+00> : vector<16x16xf32>
    %102 = tpu.matmul %68, %101, %cst_44 {dimension_numbers = #tpu.dot_dimension_numbers<[1], [0], [0], [1], [0, 0, 1, 1], [], []>} : vector<16x32xf32>, vector<32x16xf32>, vector<16x16xf32> -> vector<16x16xf32>
    %c88 = arith.constant 88 : index
    %c0_45 = arith.constant 0 : index
    %103 = vector.load %arg5[%c88, %c0_45] : memref<944x128xf32, #tpu.memory_space<vmem>>, vector<1x16xf32>
    %104 = vector.broadcast %103 : vector<1x16xf32> to vector<16x16xf32>
    %105 = arith.addf %102, %104 : vector<16x16xf32>
    %c136 = arith.constant 136 : index
    %c0_46 = arith.constant 0 : index
    %106 = vector.load %arg5[%c136, %c0_46] : memref<944x128xf32, #tpu.memory_space<vmem>>, vector<32x16xf32>
    %cst_47 = arith.constant dense<0.000000e+00> : vector<16x16xf32>
    %107 = tpu.matmul %68, %106, %cst_47 {dimension_numbers = #tpu.dot_dimension_numbers<[1], [0], [0], [1], [0, 0, 1, 1], [], []>} : vector<16x32xf32>, vector<32x16xf32>, vector<16x16xf32> -> vector<16x16xf32>
    %c168 = arith.constant 168 : index
    %c0_48 = arith.constant 0 : index
    %108 = vector.load %arg5[%c168, %c0_48] : memref<944x128xf32, #tpu.memory_space<vmem>>, vector<1x16xf32>
    %109 = vector.broadcast %108 : vector<1x16xf32> to vector<16x16xf32>
    %110 = arith.addf %107, %109 : vector<16x16xf32>
    %c216 = arith.constant 216 : index
    %c0_49 = arith.constant 0 : index
    %111 = vector.load %arg5[%c216, %c0_49] : memref<944x128xf32, #tpu.memory_space<vmem>>, vector<32x16xf32>
    %cst_50 = arith.constant dense<0.000000e+00> : vector<16x16xf32>
    %112 = tpu.matmul %68, %111, %cst_50 {dimension_numbers = #tpu.dot_dimension_numbers<[1], [0], [0], [1], [0, 0, 1, 1], [], []>} : vector<16x32xf32>, vector<32x16xf32>, vector<16x16xf32> -> vector<16x16xf32>
    %c248 = arith.constant 248 : index
    %c0_51 = arith.constant 0 : index
    %113 = vector.load %arg5[%c248, %c0_51] : memref<944x128xf32, #tpu.memory_space<vmem>>, vector<1x16xf32>
    %114 = vector.broadcast %113 : vector<1x16xf32> to vector<16x16xf32>
    %115 = arith.addf %112, %114 : vector<16x16xf32>
    %cst_52 = arith.constant dense<0.000000e+00> : vector<16x16xf32>
    %116 = tpu.matmul %105, %110, %cst_52 {dimension_numbers = #tpu.dot_dimension_numbers<[1], [1], [0], [0], [0, 0, 1, 0], [], []>} : vector<16x16xf32>, vector<16x16xf32>, vector<16x16xf32> -> vector<16x16xf32>
    %cst_53 = arith.constant 2.500000e-01 : f32
    %117 = vector.broadcast %cst_53 : f32 to vector<16x16xf32>
    %118 = arith.mulf %116, %117 : vector<16x16xf32>
    %119 = arith.addf %118, %44 : vector<16x16xf32>
    %cst_54 = arith.constant dense<0xFF800000> : vector<16xf32>
    %120 = vector.multi_reduction <maximumf>, %119, %cst_54 [1] : vector<16x16xf32> to vector<16xf32>
    %121 = vector.shape_cast %120 : vector<16xf32> to vector<16x1xf32>
    %122 = vector.broadcast %121 : vector<16x1xf32> to vector<16x16xf32>
    %123 = arith.subf %119, %122 : vector<16x16xf32>
    %124 = math.exp %123 : vector<16x16xf32>
    %cst_55 = arith.constant dense<0.000000e+00> : vector<16xf32>
    %125 = vector.multi_reduction <add>, %124, %cst_55 [1] : vector<16x16xf32> to vector<16xf32>
    %126 = vector.shape_cast %125 : vector<16xf32> to vector<16x1xf32>
    %127 = tpu.reciprocal %126 {approx = true} : vector<16x1xf32> -> vector<16x1xf32>
    %128 = vector.broadcast %127 : vector<16x1xf32> to vector<16x16xf32>
    %129 = arith.mulf %124, %128 : vector<16x16xf32>
    %cst_56 = arith.constant dense<0.000000e+00> : vector<16x16xf32>
    %130 = tpu.matmul %129, %115, %cst_56 {dimension_numbers = #tpu.dot_dimension_numbers<[1], [0], [0], [1], [0, 0, 1, 1], [], []>} : vector<16x16xf32>, vector<16x16xf32>, vector<16x16xf32> -> vector<16x16xf32>
    %c272 = arith.constant 272 : index
    %c0_57 = arith.constant 0 : index
    %131 = vector.load %arg5[%c272, %c0_57] : memref<944x128xf32, #tpu.memory_space<vmem>>, vector<16x32xf32>
    %cst_58 = arith.constant dense<0.000000e+00> : vector<16x32xf32>
    %132 = tpu.matmul %130, %131, %cst_58 {dimension_numbers = #tpu.dot_dimension_numbers<[1], [0], [0], [1], [0, 0, 1, 1], [], []>} : vector<16x16xf32>, vector<16x32xf32>, vector<16x32xf32> -> vector<16x32xf32>
    %133 = arith.addf %100, %132 : vector<16x32xf32>
    %c288 = arith.constant 288 : index
    %c0_59 = arith.constant 0 : index
    %134 = vector.load %arg5[%c288, %c0_59] : memref<944x128xf32, #tpu.memory_space<vmem>>, vector<1x32xf32>
    %135 = vector.broadcast %134 : vector<1x32xf32> to vector<16x32xf32>
    %136 = arith.addf %133, %135 : vector<16x32xf32>
    %137 = arith.addf %136, %68 : vector<16x32xf32>
    %c296 = arith.constant 296 : index
    %c0_60 = arith.constant 0 : index
    %138 = vector.load %arg5[%c296, %c0_60] : memref<944x128xf32, #tpu.memory_space<vmem>>, vector<1x32xf32>
    %c304 = arith.constant 304 : index
    %c0_61 = arith.constant 0 : index
    %139 = vector.load %arg5[%c304, %c0_61] : memref<944x128xf32, #tpu.memory_space<vmem>>, vector<1x32xf32>
    %cst_62 = arith.constant dense<0.000000e+00> : vector<16xf32>
    %140 = vector.multi_reduction <add>, %137, %cst_62 [1] : vector<16x32xf32> to vector<16xf32>
    %141 = vector.shape_cast %140 : vector<16xf32> to vector<16x1xf32>
    %cst_63 = arith.constant 3.200000e+01 : f32
    %142 = vector.broadcast %cst_63 : f32 to vector<16x1xf32>
    %143 = arith.divf %141, %142 : vector<16x1xf32>
    %144 = vector.broadcast %143 : vector<16x1xf32> to vector<16x32xf32>
    %145 = arith.subf %137, %144 : vector<16x32xf32>
    %146 = arith.mulf %145, %145 : vector<16x32xf32>
    %cst_64 = arith.constant dense<0.000000e+00> : vector<16xf32>
    %147 = vector.multi_reduction <add>, %146, %cst_64 [1] : vector<16x32xf32> to vector<16xf32>
    %148 = vector.shape_cast %147 : vector<16xf32> to vector<16x1xf32>
    %cst_65 = arith.constant 3.200000e+01 : f32
    %149 = vector.broadcast %cst_65 : f32 to vector<16x1xf32>
    %150 = arith.divf %148, %149 : vector<16x1xf32>
    %151 = vector.broadcast %143 : vector<16x1xf32> to vector<16x32xf32>
    %152 = arith.subf %137, %151 : vector<16x32xf32>
    %cst_66 = arith.constant 9.99999974E-6 : f32
    %153 = vector.broadcast %cst_66 : f32 to vector<16x1xf32>
    %154 = arith.addf %150, %153 : vector<16x1xf32>
    %155 = math.rsqrt %154 : vector<16x1xf32>
    %156 = vector.broadcast %155 : vector<16x1xf32> to vector<16x32xf32>
    %157 = arith.mulf %152, %156 : vector<16x32xf32>
    %158 = vector.broadcast %138 : vector<1x32xf32> to vector<16x32xf32>
    %159 = arith.mulf %157, %158 : vector<16x32xf32>
    %160 = vector.broadcast %139 : vector<1x32xf32> to vector<16x32xf32>
    %161 = arith.addf %159, %160 : vector<16x32xf32>
    %c312 = arith.constant 312 : index
    %c0_67 = arith.constant 0 : index
    %162 = vector.load %arg5[%c312, %c0_67] : memref<944x128xf32, #tpu.memory_space<vmem>>, vector<32x64xf32>
    %cst_68 = arith.constant dense<0.000000e+00> : vector<16x64xf32>
    %163 = tpu.matmul %161, %162, %cst_68 {dimension_numbers = #tpu.dot_dimension_numbers<[1], [0], [0], [1], [0, 0, 1, 1], [], []>} : vector<16x32xf32>, vector<32x64xf32>, vector<16x64xf32> -> vector<16x64xf32>
    %c344 = arith.constant 344 : index
    %c0_69 = arith.constant 0 : index
    %164 = vector.load %arg5[%c344, %c0_69] : memref<944x128xf32, #tpu.memory_space<vmem>>, vector<1x64xf32>
    %165 = vector.broadcast %164 : vector<1x64xf32> to vector<16x64xf32>
    %166 = arith.addf %163, %165 : vector<16x64xf32>
    %cst_70 = arith.constant 5.000000e-01 : f32
    %167 = vector.broadcast %cst_70 : f32 to vector<16x64xf32>
    %168 = arith.mulf %167, %166 : vector<16x64xf32>
    %cst_71 = arith.constant 4.471500e-02 : f32
    %169 = vector.broadcast %cst_71 : f32 to vector<16x64xf32>
    %170 = arith.mulf %169, %166 : vector<16x64xf32>
    %171 = arith.mulf %170, %166 : vector<16x64xf32>
    %172 = arith.mulf %171, %166 : vector<16x64xf32>
    %173 = arith.addf %166, %172 : vector<16x64xf32>
    %cst_72 = arith.constant 0.797884583 : f32
    %174 = vector.broadcast %cst_72 : f32 to vector<16x64xf32>
    %175 = arith.mulf %174, %173 : vector<16x64xf32>
    %176 = math.tanh %175 : vector<16x64xf32>
    %cst_73 = arith.constant 1.000000e+00 : f32
    %177 = vector.broadcast %cst_73 : f32 to vector<16x64xf32>
    %178 = arith.addf %177, %176 : vector<16x64xf32>
    %179 = arith.mulf %168, %178 : vector<16x64xf32>
    %c352 = arith.constant 352 : index
    %c0_74 = arith.constant 0 : index
    %180 = vector.load %arg5[%c352, %c0_74] : memref<944x128xf32, #tpu.memory_space<vmem>>, vector<64x32xf32>
    %cst_75 = arith.constant dense<0.000000e+00> : vector<16x32xf32>
    %181 = tpu.matmul %179, %180, %cst_75 {dimension_numbers = #tpu.dot_dimension_numbers<[1], [0], [0], [1], [0, 0, 1, 1], [], []>} : vector<16x64xf32>, vector<64x32xf32>, vector<16x32xf32> -> vector<16x32xf32>
    %c416 = arith.constant 416 : index
    %c0_76 = arith.constant 0 : index
    %182 = vector.load %arg5[%c416, %c0_76] : memref<944x128xf32, #tpu.memory_space<vmem>>, vector<1x32xf32>
    %183 = vector.broadcast %182 : vector<1x32xf32> to vector<16x32xf32>
    %184 = arith.addf %181, %183 : vector<16x32xf32>
    %185 = arith.addf %184, %161 : vector<16x32xf32>
    %c424 = arith.constant 424 : index
    %c0_77 = arith.constant 0 : index
    %186 = vector.load %arg5[%c424, %c0_77] : memref<944x128xf32, #tpu.memory_space<vmem>>, vector<1x32xf32>
    %c432 = arith.constant 432 : index
    %c0_78 = arith.constant 0 : index
    %187 = vector.load %arg5[%c432, %c0_78] : memref<944x128xf32, #tpu.memory_space<vmem>>, vector<1x32xf32>
    %cst_79 = arith.constant dense<0.000000e+00> : vector<16xf32>
    %188 = vector.multi_reduction <add>, %185, %cst_79 [1] : vector<16x32xf32> to vector<16xf32>
    %189 = vector.shape_cast %188 : vector<16xf32> to vector<16x1xf32>
    %cst_80 = arith.constant 3.200000e+01 : f32
    %190 = vector.broadcast %cst_80 : f32 to vector<16x1xf32>
    %191 = arith.divf %189, %190 : vector<16x1xf32>
    %192 = vector.broadcast %191 : vector<16x1xf32> to vector<16x32xf32>
    %193 = arith.subf %185, %192 : vector<16x32xf32>
    %194 = arith.mulf %193, %193 : vector<16x32xf32>
    %cst_81 = arith.constant dense<0.000000e+00> : vector<16xf32>
    %195 = vector.multi_reduction <add>, %194, %cst_81 [1] : vector<16x32xf32> to vector<16xf32>
    %196 = vector.shape_cast %195 : vector<16xf32> to vector<16x1xf32>
    %cst_82 = arith.constant 3.200000e+01 : f32
    %197 = vector.broadcast %cst_82 : f32 to vector<16x1xf32>
    %198 = arith.divf %196, %197 : vector<16x1xf32>
    %199 = vector.broadcast %191 : vector<16x1xf32> to vector<16x32xf32>
    %200 = arith.subf %185, %199 : vector<16x32xf32>
    %cst_83 = arith.constant 9.99999974E-6 : f32
    %201 = vector.broadcast %cst_83 : f32 to vector<16x1xf32>
    %202 = arith.addf %198, %201 : vector<16x1xf32>
    %203 = math.rsqrt %202 : vector<16x1xf32>
    %204 = vector.broadcast %203 : vector<16x1xf32> to vector<16x32xf32>
    %205 = arith.mulf %200, %204 : vector<16x32xf32>
    %206 = vector.broadcast %186 : vector<1x32xf32> to vector<16x32xf32>
    %207 = arith.mulf %205, %206 : vector<16x32xf32>
    %208 = vector.broadcast %187 : vector<1x32xf32> to vector<16x32xf32>
    %209 = arith.addf %207, %208 : vector<16x32xf32>
    %c440 = arith.constant 440 : index
    %c0_84 = arith.constant 0 : index
    %210 = vector.load %arg5[%c440, %c0_84] : memref<944x128xf32, #tpu.memory_space<vmem>>, vector<32x16xf32>
    %cst_85 = arith.constant dense<0.000000e+00> : vector<16x16xf32>
    %211 = tpu.matmul %209, %210, %cst_85 {dimension_numbers = #tpu.dot_dimension_numbers<[1], [0], [0], [1], [0, 0, 1, 1], [], []>} : vector<16x32xf32>, vector<32x16xf32>, vector<16x16xf32> -> vector<16x16xf32>
    %c472 = arith.constant 472 : index
    %c0_86 = arith.constant 0 : index
    %212 = vector.load %arg5[%c472, %c0_86] : memref<944x128xf32, #tpu.memory_space<vmem>>, vector<1x16xf32>
    %213 = vector.broadcast %212 : vector<1x16xf32> to vector<16x16xf32>
    %214 = arith.addf %211, %213 : vector<16x16xf32>
    %c520 = arith.constant 520 : index
    %c0_87 = arith.constant 0 : index
    %215 = vector.load %arg5[%c520, %c0_87] : memref<944x128xf32, #tpu.memory_space<vmem>>, vector<32x16xf32>
    %cst_88 = arith.constant dense<0.000000e+00> : vector<16x16xf32>
    %216 = tpu.matmul %209, %215, %cst_88 {dimension_numbers = #tpu.dot_dimension_numbers<[1], [0], [0], [1], [0, 0, 1, 1], [], []>} : vector<16x32xf32>, vector<32x16xf32>, vector<16x16xf32> -> vector<16x16xf32>
    %c552 = arith.constant 552 : index
    %c0_89 = arith.constant 0 : index
    %217 = vector.load %arg5[%c552, %c0_89] : memref<944x128xf32, #tpu.memory_space<vmem>>, vector<1x16xf32>
    %218 = vector.broadcast %217 : vector<1x16xf32> to vector<16x16xf32>
    %219 = arith.addf %216, %218 : vector<16x16xf32>
    %c600 = arith.constant 600 : index
    %c0_90 = arith.constant 0 : index
    %220 = vector.load %arg5[%c600, %c0_90] : memref<944x128xf32, #tpu.memory_space<vmem>>, vector<32x16xf32>
    %cst_91 = arith.constant dense<0.000000e+00> : vector<16x16xf32>
    %221 = tpu.matmul %209, %220, %cst_91 {dimension_numbers = #tpu.dot_dimension_numbers<[1], [0], [0], [1], [0, 0, 1, 1], [], []>} : vector<16x32xf32>, vector<32x16xf32>, vector<16x16xf32> -> vector<16x16xf32>
    %c632 = arith.constant 632 : index
    %c0_92 = arith.constant 0 : index
    %222 = vector.load %arg5[%c632, %c0_92] : memref<944x128xf32, #tpu.memory_space<vmem>>, vector<1x16xf32>
    %223 = vector.broadcast %222 : vector<1x16xf32> to vector<16x16xf32>
    %224 = arith.addf %221, %223 : vector<16x16xf32>
    %cst_93 = arith.constant dense<0.000000e+00> : vector<16x16xf32>
    %225 = tpu.matmul %214, %219, %cst_93 {dimension_numbers = #tpu.dot_dimension_numbers<[1], [1], [0], [0], [0, 0, 1, 0], [], []>} : vector<16x16xf32>, vector<16x16xf32>, vector<16x16xf32> -> vector<16x16xf32>
    %cst_94 = arith.constant 2.500000e-01 : f32
    %226 = vector.broadcast %cst_94 : f32 to vector<16x16xf32>
    %227 = arith.mulf %225, %226 : vector<16x16xf32>
    %228 = arith.addf %227, %44 : vector<16x16xf32>
    %cst_95 = arith.constant dense<0xFF800000> : vector<16xf32>
    %229 = vector.multi_reduction <maximumf>, %228, %cst_95 [1] : vector<16x16xf32> to vector<16xf32>
    %230 = vector.shape_cast %229 : vector<16xf32> to vector<16x1xf32>
    %231 = vector.broadcast %230 : vector<16x1xf32> to vector<16x16xf32>
    %232 = arith.subf %228, %231 : vector<16x16xf32>
    %233 = math.exp %232 : vector<16x16xf32>
    %cst_96 = arith.constant dense<0.000000e+00> : vector<16xf32>
    %234 = vector.multi_reduction <add>, %233, %cst_96 [1] : vector<16x16xf32> to vector<16xf32>
    %235 = vector.shape_cast %234 : vector<16xf32> to vector<16x1xf32>
    %236 = tpu.reciprocal %235 {approx = true} : vector<16x1xf32> -> vector<16x1xf32>
    %237 = vector.broadcast %236 : vector<16x1xf32> to vector<16x16xf32>
    %238 = arith.mulf %233, %237 : vector<16x16xf32>
    %cst_97 = arith.constant dense<0.000000e+00> : vector<16x16xf32>
    %239 = tpu.matmul %238, %224, %cst_97 {dimension_numbers = #tpu.dot_dimension_numbers<[1], [0], [0], [1], [0, 0, 1, 1], [], []>} : vector<16x16xf32>, vector<16x16xf32>, vector<16x16xf32> -> vector<16x16xf32>
    %c680 = arith.constant 680 : index
    %c0_98 = arith.constant 0 : index
    %240 = vector.load %arg5[%c680, %c0_98] : memref<944x128xf32, #tpu.memory_space<vmem>>, vector<16x32xf32>
    %cst_99 = arith.constant dense<0.000000e+00> : vector<16x32xf32>
    %241 = tpu.matmul %239, %240, %cst_99 {dimension_numbers = #tpu.dot_dimension_numbers<[1], [0], [0], [1], [0, 0, 1, 1], [], []>} : vector<16x16xf32>, vector<16x32xf32>, vector<16x32xf32> -> vector<16x32xf32>
    %c480 = arith.constant 480 : index
    %c0_100 = arith.constant 0 : index
    %242 = vector.load %arg5[%c480, %c0_100] : memref<944x128xf32, #tpu.memory_space<vmem>>, vector<32x16xf32>
    %cst_101 = arith.constant dense<0.000000e+00> : vector<16x16xf32>
    %243 = tpu.matmul %209, %242, %cst_101 {dimension_numbers = #tpu.dot_dimension_numbers<[1], [0], [0], [1], [0, 0, 1, 1], [], []>} : vector<16x32xf32>, vector<32x16xf32>, vector<16x16xf32> -> vector<16x16xf32>
    %c512 = arith.constant 512 : index
    %c0_102 = arith.constant 0 : index
    %244 = vector.load %arg5[%c512, %c0_102] : memref<944x128xf32, #tpu.memory_space<vmem>>, vector<1x16xf32>
    %245 = vector.broadcast %244 : vector<1x16xf32> to vector<16x16xf32>
    %246 = arith.addf %243, %245 : vector<16x16xf32>
    %c560 = arith.constant 560 : index
    %c0_103 = arith.constant 0 : index
    %247 = vector.load %arg5[%c560, %c0_103] : memref<944x128xf32, #tpu.memory_space<vmem>>, vector<32x16xf32>
    %cst_104 = arith.constant dense<0.000000e+00> : vector<16x16xf32>
    %248 = tpu.matmul %209, %247, %cst_104 {dimension_numbers = #tpu.dot_dimension_numbers<[1], [0], [0], [1], [0, 0, 1, 1], [], []>} : vector<16x32xf32>, vector<32x16xf32>, vector<16x16xf32> -> vector<16x16xf32>
    %c592 = arith.constant 592 : index
    %c0_105 = arith.constant 0 : index
    %249 = vector.load %arg5[%c592, %c0_105] : memref<944x128xf32, #tpu.memory_space<vmem>>, vector<1x16xf32>
    %250 = vector.broadcast %249 : vector<1x16xf32> to vector<16x16xf32>
    %251 = arith.addf %248, %250 : vector<16x16xf32>
    %c640 = arith.constant 640 : index
    %c0_106 = arith.constant 0 : index
    %252 = vector.load %arg5[%c640, %c0_106] : memref<944x128xf32, #tpu.memory_space<vmem>>, vector<32x16xf32>
    %cst_107 = arith.constant dense<0.000000e+00> : vector<16x16xf32>
    %253 = tpu.matmul %209, %252, %cst_107 {dimension_numbers = #tpu.dot_dimension_numbers<[1], [0], [0], [1], [0, 0, 1, 1], [], []>} : vector<16x32xf32>, vector<32x16xf32>, vector<16x16xf32> -> vector<16x16xf32>
    %c672 = arith.constant 672 : index
    %c0_108 = arith.constant 0 : index
    %254 = vector.load %arg5[%c672, %c0_108] : memref<944x128xf32, #tpu.memory_space<vmem>>, vector<1x16xf32>
    %255 = vector.broadcast %254 : vector<1x16xf32> to vector<16x16xf32>
    %256 = arith.addf %253, %255 : vector<16x16xf32>
    %cst_109 = arith.constant dense<0.000000e+00> : vector<16x16xf32>
    %257 = tpu.matmul %246, %251, %cst_109 {dimension_numbers = #tpu.dot_dimension_numbers<[1], [1], [0], [0], [0, 0, 1, 0], [], []>} : vector<16x16xf32>, vector<16x16xf32>, vector<16x16xf32> -> vector<16x16xf32>
    %cst_110 = arith.constant 2.500000e-01 : f32
    %258 = vector.broadcast %cst_110 : f32 to vector<16x16xf32>
    %259 = arith.mulf %257, %258 : vector<16x16xf32>
    %260 = arith.addf %259, %44 : vector<16x16xf32>
    %cst_111 = arith.constant dense<0xFF800000> : vector<16xf32>
    %261 = vector.multi_reduction <maximumf>, %260, %cst_111 [1] : vector<16x16xf32> to vector<16xf32>
    %262 = vector.shape_cast %261 : vector<16xf32> to vector<16x1xf32>
    %263 = vector.broadcast %262 : vector<16x1xf32> to vector<16x16xf32>
    %264 = arith.subf %260, %263 : vector<16x16xf32>
    %265 = math.exp %264 : vector<16x16xf32>
    %cst_112 = arith.constant dense<0.000000e+00> : vector<16xf32>
    %266 = vector.multi_reduction <add>, %265, %cst_112 [1] : vector<16x16xf32> to vector<16xf32>
    %267 = vector.shape_cast %266 : vector<16xf32> to vector<16x1xf32>
    %268 = tpu.reciprocal %267 {approx = true} : vector<16x1xf32> -> vector<16x1xf32>
    %269 = vector.broadcast %268 : vector<16x1xf32> to vector<16x16xf32>
    %270 = arith.mulf %265, %269 : vector<16x16xf32>
    %cst_113 = arith.constant dense<0.000000e+00> : vector<16x16xf32>
    %271 = tpu.matmul %270, %256, %cst_113 {dimension_numbers = #tpu.dot_dimension_numbers<[1], [0], [0], [1], [0, 0, 1, 1], [], []>} : vector<16x16xf32>, vector<16x16xf32>, vector<16x16xf32> -> vector<16x16xf32>
    %c696 = arith.constant 696 : index
    %c0_114 = arith.constant 0 : index
    %272 = vector.load %arg5[%c696, %c0_114] : memref<944x128xf32, #tpu.memory_space<vmem>>, vector<16x32xf32>
    %cst_115 = arith.constant dense<0.000000e+00> : vector<16x32xf32>
    %273 = tpu.matmul %271, %272, %cst_115 {dimension_numbers = #tpu.dot_dimension_numbers<[1], [0], [0], [1], [0, 0, 1, 1], [], []>} : vector<16x16xf32>, vector<16x32xf32>, vector<16x32xf32> -> vector<16x32xf32>
    %274 = arith.addf %241, %273 : vector<16x32xf32>
    %c712 = arith.constant 712 : index
    %c0_116 = arith.constant 0 : index
    %275 = vector.load %arg5[%c712, %c0_116] : memref<944x128xf32, #tpu.memory_space<vmem>>, vector<1x32xf32>
    %276 = vector.broadcast %275 : vector<1x32xf32> to vector<16x32xf32>
    %277 = arith.addf %274, %276 : vector<16x32xf32>
    %278 = arith.addf %277, %209 : vector<16x32xf32>
    %c720 = arith.constant 720 : index
    %c0_117 = arith.constant 0 : index
    %279 = vector.load %arg5[%c720, %c0_117] : memref<944x128xf32, #tpu.memory_space<vmem>>, vector<1x32xf32>
    %c728 = arith.constant 728 : index
    %c0_118 = arith.constant 0 : index
    %280 = vector.load %arg5[%c728, %c0_118] : memref<944x128xf32, #tpu.memory_space<vmem>>, vector<1x32xf32>
    %cst_119 = arith.constant dense<0.000000e+00> : vector<16xf32>
    %281 = vector.multi_reduction <add>, %278, %cst_119 [1] : vector<16x32xf32> to vector<16xf32>
    %282 = vector.shape_cast %281 : vector<16xf32> to vector<16x1xf32>
    %cst_120 = arith.constant 3.200000e+01 : f32
    %283 = vector.broadcast %cst_120 : f32 to vector<16x1xf32>
    %284 = arith.divf %282, %283 : vector<16x1xf32>
    %285 = vector.broadcast %284 : vector<16x1xf32> to vector<16x32xf32>
    %286 = arith.subf %278, %285 : vector<16x32xf32>
    %287 = arith.mulf %286, %286 : vector<16x32xf32>
    %cst_121 = arith.constant dense<0.000000e+00> : vector<16xf32>
    %288 = vector.multi_reduction <add>, %287, %cst_121 [1] : vector<16x32xf32> to vector<16xf32>
    %289 = vector.shape_cast %288 : vector<16xf32> to vector<16x1xf32>
    %cst_122 = arith.constant 3.200000e+01 : f32
    %290 = vector.broadcast %cst_122 : f32 to vector<16x1xf32>
    %291 = arith.divf %289, %290 : vector<16x1xf32>
    %292 = vector.broadcast %284 : vector<16x1xf32> to vector<16x32xf32>
    %293 = arith.subf %278, %292 : vector<16x32xf32>
    %cst_123 = arith.constant 9.99999974E-6 : f32
    %294 = vector.broadcast %cst_123 : f32 to vector<16x1xf32>
    %295 = arith.addf %291, %294 : vector<16x1xf32>
    %296 = math.rsqrt %295 : vector<16x1xf32>
    %297 = vector.broadcast %296 : vector<16x1xf32> to vector<16x32xf32>
    %298 = arith.mulf %293, %297 : vector<16x32xf32>
    %299 = vector.broadcast %279 : vector<1x32xf32> to vector<16x32xf32>
    %300 = arith.mulf %298, %299 : vector<16x32xf32>
    %301 = vector.broadcast %280 : vector<1x32xf32> to vector<16x32xf32>
    %302 = arith.addf %300, %301 : vector<16x32xf32>
    %c736 = arith.constant 736 : index
    %c0_124 = arith.constant 0 : index
    %303 = vector.load %arg5[%c736, %c0_124] : memref<944x128xf32, #tpu.memory_space<vmem>>, vector<32x64xf32>
    %cst_125 = arith.constant dense<0.000000e+00> : vector<16x64xf32>
    %304 = tpu.matmul %302, %303, %cst_125 {dimension_numbers = #tpu.dot_dimension_numbers<[1], [0], [0], [1], [0, 0, 1, 1], [], []>} : vector<16x32xf32>, vector<32x64xf32>, vector<16x64xf32> -> vector<16x64xf32>
    %c768 = arith.constant 768 : index
    %c0_126 = arith.constant 0 : index
    %305 = vector.load %arg5[%c768, %c0_126] : memref<944x128xf32, #tpu.memory_space<vmem>>, vector<1x64xf32>
    %306 = vector.broadcast %305 : vector<1x64xf32> to vector<16x64xf32>
    %307 = arith.addf %304, %306 : vector<16x64xf32>
    %cst_127 = arith.constant 5.000000e-01 : f32
    %308 = vector.broadcast %cst_127 : f32 to vector<16x64xf32>
    %309 = arith.mulf %308, %307 : vector<16x64xf32>
    %cst_128 = arith.constant 4.471500e-02 : f32
    %310 = vector.broadcast %cst_128 : f32 to vector<16x64xf32>
    %311 = arith.mulf %310, %307 : vector<16x64xf32>
    %312 = arith.mulf %311, %307 : vector<16x64xf32>
    %313 = arith.mulf %312, %307 : vector<16x64xf32>
    %314 = arith.addf %307, %313 : vector<16x64xf32>
    %cst_129 = arith.constant 0.797884583 : f32
    %315 = vector.broadcast %cst_129 : f32 to vector<16x64xf32>
    %316 = arith.mulf %315, %314 : vector<16x64xf32>
    %317 = math.tanh %316 : vector<16x64xf32>
    %cst_130 = arith.constant 1.000000e+00 : f32
    %318 = vector.broadcast %cst_130 : f32 to vector<16x64xf32>
    %319 = arith.addf %318, %317 : vector<16x64xf32>
    %320 = arith.mulf %309, %319 : vector<16x64xf32>
    %c776 = arith.constant 776 : index
    %c0_131 = arith.constant 0 : index
    %321 = vector.load %arg5[%c776, %c0_131] : memref<944x128xf32, #tpu.memory_space<vmem>>, vector<64x32xf32>
    %cst_132 = arith.constant dense<0.000000e+00> : vector<16x32xf32>
    %322 = tpu.matmul %320, %321, %cst_132 {dimension_numbers = #tpu.dot_dimension_numbers<[1], [0], [0], [1], [0, 0, 1, 1], [], []>} : vector<16x64xf32>, vector<64x32xf32>, vector<16x32xf32> -> vector<16x32xf32>
    %c840 = arith.constant 840 : index
    %c0_133 = arith.constant 0 : index
    %323 = vector.load %arg5[%c840, %c0_133] : memref<944x128xf32, #tpu.memory_space<vmem>>, vector<1x32xf32>
    %324 = vector.broadcast %323 : vector<1x32xf32> to vector<16x32xf32>
    %325 = arith.addf %322, %324 : vector<16x32xf32>
    %326 = arith.addf %325, %302 : vector<16x32xf32>
    %c848 = arith.constant 848 : index
    %c0_134 = arith.constant 0 : index
    %327 = vector.load %arg5[%c848, %c0_134] : memref<944x128xf32, #tpu.memory_space<vmem>>, vector<1x32xf32>
    %c856 = arith.constant 856 : index
    %c0_135 = arith.constant 0 : index
    %328 = vector.load %arg5[%c856, %c0_135] : memref<944x128xf32, #tpu.memory_space<vmem>>, vector<1x32xf32>
    %cst_136 = arith.constant dense<0.000000e+00> : vector<16xf32>
    %329 = vector.multi_reduction <add>, %326, %cst_136 [1] : vector<16x32xf32> to vector<16xf32>
    %330 = vector.shape_cast %329 : vector<16xf32> to vector<16x1xf32>
    %cst_137 = arith.constant 3.200000e+01 : f32
    %331 = vector.broadcast %cst_137 : f32 to vector<16x1xf32>
    %332 = arith.divf %330, %331 : vector<16x1xf32>
    %333 = vector.broadcast %332 : vector<16x1xf32> to vector<16x32xf32>
    %334 = arith.subf %326, %333 : vector<16x32xf32>
    %335 = arith.mulf %334, %334 : vector<16x32xf32>
    %cst_138 = arith.constant dense<0.000000e+00> : vector<16xf32>
    %336 = vector.multi_reduction <add>, %335, %cst_138 [1] : vector<16x32xf32> to vector<16xf32>
    %337 = vector.shape_cast %336 : vector<16xf32> to vector<16x1xf32>
    %cst_139 = arith.constant 3.200000e+01 : f32
    %338 = vector.broadcast %cst_139 : f32 to vector<16x1xf32>
    %339 = arith.divf %337, %338 : vector<16x1xf32>
    %340 = vector.broadcast %332 : vector<16x1xf32> to vector<16x32xf32>
    %341 = arith.subf %326, %340 : vector<16x32xf32>
    %cst_140 = arith.constant 9.99999974E-6 : f32
    %342 = vector.broadcast %cst_140 : f32 to vector<16x1xf32>
    %343 = arith.addf %339, %342 : vector<16x1xf32>
    %344 = math.rsqrt %343 : vector<16x1xf32>
    %345 = vector.broadcast %344 : vector<16x1xf32> to vector<16x32xf32>
    %346 = arith.mulf %341, %345 : vector<16x32xf32>
    %347 = vector.broadcast %327 : vector<1x32xf32> to vector<16x32xf32>
    %348 = arith.mulf %346, %347 : vector<16x32xf32>
    %349 = vector.broadcast %328 : vector<1x32xf32> to vector<16x32xf32>
    %350 = arith.addf %348, %349 : vector<16x32xf32>
    %c864 = arith.constant 864 : index
    %c0_141 = arith.constant 0 : index
    %351 = vector.load %arg5[%c864, %c0_141] : memref<944x128xf32, #tpu.memory_space<vmem>>, vector<32x32xf32>
    %cst_142 = arith.constant dense<0.000000e+00> : vector<16x32xf32>
    %352 = tpu.matmul %350, %351, %cst_142 {dimension_numbers = #tpu.dot_dimension_numbers<[1], [0], [0], [1], [0, 0, 1, 1], [], []>} : vector<16x32xf32>, vector<32x32xf32>, vector<16x32xf32> -> vector<16x32xf32>
    %c896 = arith.constant 896 : index
    %c0_143 = arith.constant 0 : index
    %353 = vector.load %arg5[%c896, %c0_143] : memref<944x128xf32, #tpu.memory_space<vmem>>, vector<1x32xf32>
    %354 = vector.broadcast %353 : vector<1x32xf32> to vector<16x32xf32>
    %355 = arith.addf %352, %354 : vector<16x32xf32>
    %356 = math.tanh %355 : vector<16x32xf32>
    %c904 = arith.constant 904 : index
    %c0_144 = arith.constant 0 : index
    %357 = vector.load %arg5[%c904, %c0_144] : memref<944x128xf32, #tpu.memory_space<vmem>>, vector<32x2xf32>
    %cst_145 = arith.constant dense<0.000000e+00> : vector<16x2xf32>
    %358 = tpu.matmul %356, %357, %cst_145 {dimension_numbers = #tpu.dot_dimension_numbers<[1], [0], [0], [1], [0, 0, 1, 1], [], []>} : vector<16x32xf32>, vector<32x2xf32>, vector<16x2xf32> -> vector<16x2xf32>
    %c936 = arith.constant 936 : index
    %c0_146 = arith.constant 0 : index
    %359 = vector.load %arg5[%c936, %c0_146] : memref<944x128xf32, #tpu.memory_space<vmem>>, vector<1x2xf32>
    %360 = vector.broadcast %359 : vector<1x2xf32> to vector<16x2xf32>
    %361 = arith.addf %358, %360 : vector<16x2xf32>
    %c0_147 = arith.constant 0 : index
    %c0_148 = arith.constant 0 : index
    %362 = vector.load %arg6[%c0_147, %c0_148] : memref<16x2xf32, #tpu.memory_space<vmem>>, vector<16x2xf32>
    tpu.vector_store %arg6[%c0_147, %c0_148], %361 {strides = array<i32>} : memref<16x2xf32, #tpu.memory_space<vmem>>, vector<16x2xf32>,
    return
  }
}

</mosaic_0001>

<llo_original>
// kernel: div.167
$region0: #{div.167}
  %s0 = inlined_call_operand.vmem [shape: f32[2,8], index: 0, kind: input, shape index: {}]
  %s1 = inlined_call_operand.vmem [shape: f32[16], index: 1, kind: output, shape index: {}]
  $region1: #{div.167} parent=0
    #allocation0 [shape = 'u8[4096]{0}', space=vmem, size = 0x1000, scoped, tag = 'scoped mem for output reshape']
    #allocation1 [shape = 'u8[4096]{0}', space=vmem, size = 0x1000, scoped, tag = 'scoped mem for input reshape']
    %s3 = sshllo.u32 0, 2
    %v4 = vld [vmem:[%s0] sm:%s3]
    %5 = vst [vmem:[#allocation1] sm:%s3] %v4
    %v6 = vld [vmem:[#allocation1] sm:$0x1]
    %vm7 = vcmask 64512
    %8 = vst.msk [vmem:[#allocation0] sm:$0x1] %vm7, %v6
    %s9 = scalar_lea.vmem [#allocation1], 1
    %v10 = vld [vmem:[%s9] sm:$0x1]
    %11 = vrot.lane.b32.xlu0 %v10, 8
    %v12 = vpop.permute.xlu0 %11
    %vm13 = vcmask 130112
    %14 = vst.msk [vmem:[#allocation0] sm:$0x1] %vm13, %v12
    %s16 = sshllo.u32 0, 1
    %v18 = vld [vmem:[#allocation0] sm:%s16]
    %s19 = sshllo.u32 0, 1
    %20 = vst [vmem:[%s1] sm:%s19] %v18

// kernel: div.29
$region0: #{div.29}
  #allocation0 [shape = 's32[1]{0}', space=sflag, size = 0x4, scoped, tag = 'scoped memory for div.29']
  %s0 = inlined_call_operand.vmem [shape: f32[2], index: 0, kind: input, shape index: {}]
  %s1 = inlined_call_operand.vmem [shape: f32[2], index: 1, kind: input, shape index: {}]
  %s2 = inlined_call_operand.vmem [shape: f32[2], index: 2, kind: output, shape index: {}]
  %v3 = vld [vmem:[%s0] sm:$0x1]
  %v4 = vld [vmem:[%s1] sm:$0x1]
  %5 = xla_tuple %v3, %v4
  %6 = xla_tuple %5
  %v7 = vrcp.pop %v4
  %v8 = vmul.f32 %v3, %v7
  %9 = xla_tuple %v8
  %10 = vst [vmem:[%s2] sm:$0x1] %v8

// kernel: neg.15
$region0: #{neg.15}
  #allocation0 [shape = 's32[1]{0}', space=sflag, size = 0x4, scoped, tag = 'scoped memory for neg.15']
  %s0 = inlined_call_operand.vmem [shape: f32[16], index: 0, kind: input, shape index: {}]
  %s1 = inlined_call_operand.vmem [shape: f32[16], index: 1, kind: output, shape index: {}]
  %v2 = vld [vmem:[%s0] sm:$0x1]
  %3 = xla_tuple %v2
  %4 = xla_tuple %3
  %v5 = vxor.u32 %v2, 2147483648
  %6 = xla_tuple %v5
  %7 = vst [vmem:[%s1] sm:$0x1] %v5

// kernel: ascc_forward.2
$region0: #{ascc_forward.2}
  #allocation0 [shape = 'u32[]', space=smem, size = 0x4, offset = 0x4, fixed_abs, tag = 'smem constant byte address 0x4 - core index']
  #allocation1 [shape = 'u32[144,128]{1,0:T(1,128)}', space=vmem, size = 0x12000, scoped, tag = 'internal scratch']
  %s0 = inlined_call_operand.vmem [shape: f32[16,32], index: 0, kind: input, shape index: {}]
  %s1 = inlined_call_operand.vmem [shape: f32[16,16], index: 1, kind: input, shape index: {}]
  %s2 = inlined_call_operand.vmem [shape: f32[944,128], index: 2, kind: input, shape index: {}]
  %s3 = inlined_call_operand.vmem [shape: f32[16,2], index: 3, kind: output, shape index: {}]
  %s4 = sld [smem:[#allocation0]]
  $region22: #{ascc_forward.2} parent=0
    _
  %s6 = ssub.s32 1, %s4
  %s7 = scalar_select 0, %s6, %s4
  // Predicated region
  $region2: #{ascc_forward.2} parent=0 // pred_check
    _
  $region3: #{ascc_forward.2} parent=0 // pred_check_branch
    %9 = sbr.rel (0) target = $region5
  $region4: #{ascc_forward.2} parent=0 // pred_region
    _
  $region5: #{ascc_forward.2} parent=0 // pred_fallthru
    _
  // Predicated region
  $region6: #{ascc_forward.2} parent=0 // pred_check
    _
  $region7: #{ascc_forward.2} parent=0 // pred_check_branch
    %11 = sbr.rel (0) target = $region9
  $region8: #{ascc_forward.2} parent=0 // pred_region
    _
  $region9: #{ascc_forward.2} parent=0 // pred_fallthru
    _
  // Predicated region
  $region10: #{ascc_forward.2} parent=0 // pred_check
    _
  $region11: #{ascc_forward.2} parent=0 // pred_check_branch
    %13 = sbr.rel (0) target = $region13
  $region12: #{ascc_forward.2} parent=0 // pred_region
    _
  $region13: #{ascc_forward.2} parent=0 // pred_fallthru
    _
  %v14 = vld [vmem:[%s0] sm:$0xff]
  %v15 = vld [vmem:[%s0 + $0x8] sm:$0xff]
  %v16 = vld [vmem:[%s1] sm:$0xff]
  %v17 = vld [vmem:[%s1 + $0x8] sm:$0xff]
  %v18 = vld [vmem:[%s2] sm:$0x1]
  %v19 = vld [vmem:[%s2 + $0x8] sm:$0x1]
  %vm20 = vcmask 261120
  %v21 = vsel %vm20, %v14, 0.0
  %22 = vadd.xlane.f32.xlu0 %v21
  %v23 = vpop.xlane.xlu0 %22
  %v24 = vsel %vm20, %v15, 0.0
  %25 = vadd.xlane.f32.xlu0 %v24
  %v26 = vpop.xlane.xlu0 %25
  %v27 = vrcp.pop 32.0
  %v28 = vmul.f32 %v23, %v27
  %v29 = vmul.f32 %v26, %v27
  %v30 = vsub.f32 %v14, %v28
  %v31 = vsub.f32 %v15, %v29
  %v32 = vmul.f32 %v30, %v30
  %v33 = vmul.f32 %v31, %v31
  %v34 = vsel %vm20, %v32, 0.0
  %35 = vadd.xlane.f32.xlu0 %v34
  %v36 = vpop.xlane.xlu0 %35
  %v37 = vsel %vm20, %v33, 0.0
  %38 = vadd.xlane.f32.xlu0 %v37
  %v39 = vpop.xlane.xlu0 %38
  %v40 = vmul.f32 %v36, %v27
  %v41 = vmul.f32 %v39, %v27
  %v42 = vadd.f32 %v40, 1e-05
  %v43 = vadd.f32 %v41, 1e-05
  %v44 = vrsqrt.pop %v42
  %v45 = vrsqrt.pop %v43
  %v46 = vmul.f32 %v30, %v44
  %v47 = vmul.f32 %v31, %v45
  %v48 = vlaneseq
  %v49 = vshrl.u32 %v48, 7
  %v50 = vsub.s32 0, %v49
  %v51 = vrot.slane %v18, %v50
  %v52 = vmul.f32 %v46, %v51
  %v53 = vmul.f32 %v47, %v51
  %v54 = vlaneseq
  %v55 = vshrl.u32 %v54, 7
  %v56 = vsub.s32 0, %v55
  %v57 = vrot.slane %v19, %v56
  %v58 = vadd.f32 %v52, %v57
  %v59 = vadd.f32 %v53, %v57
  %v60 = vld [vmem:[%s2 + $0x10] sm:$0xff]
  %v61 = vld [vmem:[%s2 + $0x18] sm:$0xff]
  %v62 = vld [vmem:[%s2 + $0x20] sm:$0xff]
  %v63 = vld [vmem:[%s2 + $0x28] sm:$0xff]
  %v64 = vld [vmem:[%s2 + $0x30] sm:$0x1]
  %v65 = vlaneseq
  %v66 = vshrl.u32 %v65, 7
  %v67 = vsub.s32 0, %v66
  %v68 = vrot.slane %v64, %v67
  %v70 = vsel %vm20, %v58, 0
  %v73 = vsel %vm20, %v59, 0
  %75 = vmatprep.subr.mxu0 0.0
  %76 = vmatpush1.msra.mxu0 %v60
  %77 = vmatprep.subr.mxu0 0.0
  %78 = vmatpush1.msra.mxu0 %v61
  %79 = vmatprep.subr.mxu0 0.0
  %80 = vmatpush1.msra.mxu0 %v62
  %81 = vmatprep.subr.mxu0 0.0
  %82 = vmatpush1.msra.mxu0 %v63
  %83 = vmatprep.subr.mxu0 0.0
  %84 = vmatpush1.msra.mxu0 0.0
  %85 = vmatprep.subr.mxu0 0.0
  %86 = vmatpush1.msra.mxu0 0.0
  %87 = vmatprep.subr.mxu0 0.0
  %88 = vmatpush1.msra.mxu0 0.0
  %89 = vmatprep.subr.mxu0 0.0
  %90 = vmatpush1.msra.mxu0 0.0
  %91 = vmatprep.subr.mxu0 0.0
  %92 = vmatpush1.msra.mxu0 0.0
  %93 = vmatprep.subr.mxu0 0.0
  %94 = vmatpush1.msra.mxu0 0.0
  %95 = vmatprep.subr.mxu0 0.0
  %96 = vmatpush1.msra.mxu0 0.0
  %97 = vmatprep.subr.mxu0 0.0
  %98 = vmatpush1.msra.mxu0 0.0
  %99 = vmatprep.subr.mxu0 0.0
  %100 = vmatpush1.msra.mxu0 0.0
  %101 = vmatprep.subr.mxu0 0.0
  %102 = vmatpush1.msra.mxu0 0.0
  %103 = vmatprep.subr.mxu0 0.0
  %104 = vmatpush1.msra.mxu0 0.0
  %105 = vmatprep.subr.mxu0 0.0
  %106 = vmatpush1.msra.mxu0 0.0
  %107 = vmatprep.subr.mxu0 0.0
  %108 = vmatpush1.msra.mxu0 0.0
  %109 = vmatprep.subr.mxu0 0.0
  %110 = vmatpush1.msra.mxu0 0.0
  %111 = vmatprep.subr.mxu0 0.0
  %112 = vmatpush1.msra.mxu0 0.0
  %113 = vmatprep.subr.mxu0 0.0
  %114 = vmatpush1.msra.mxu0 0.0
  %115 = vmatprep.subr.mxu0 0.0
  %116 = vmatpush1.msra.mxu0 0.0
  %117 = vmatprep.subr.mxu0 0.0
  %118 = vmatpush1.msra.mxu0 0.0
  %119 = vmatprep.subr.mxu0 0.0
  %120 = vmatpush1.msra.mxu0 0.0
  %121 = vmatprep.subr.mxu0 0.0
  %122 = vmatpush1.msra.mxu0 0.0
  %123 = vmatprep.subr.mxu0 0.0
  %124 = vmatpush1.msra.mxu0 0.0
  %125 = vmatprep.subr.mxu0 0.0
  %126 = vmatpush1.msra.mxu0 0.0
  %127 = vmatprep.subr.mxu0 0.0
  %128 = vmatpush1.msra.mxu0 0.0
  %129 = vmatprep.subr.mxu0 0.0
  %130 = vmatpush1.msra.mxu0 0.0
  %131 = vmatprep.subr.mxu0 0.0
  %132 = vmatpush1.msra.mxu0 0.0
  %133 = vmatprep.subr.mxu0 0.0
  %134 = vmatpush1.msra.mxu0 0.0
  %135 = vmatprep.subr.mxu0 0.0
  %136 = vmatpush1.msra.mxu0 0.0
  %137 = vmatprep.subr.mxu0 0.0
  %138 = vmatpush1.msra.mxu0 0.0
  %139 = vmatprep.mubr.f32.mxu0 0.0
  %140 = vmatmul.mubr.f32.gmra.mrb[0].mxu0 %v70
  %v141 = vpop.f32.mrb[0].mxu0
  %v142 = vadd.f32 %v68, %v141
  %v143 = vpop.f32.mrb[0].mxu0
  %144 = vmatprep.mubr.f32.mxu0 0.0
  %145 = vmatmul.mubr.f32.gmra.mrb[0].mxu0 %v73
  %v146 = vpop.f32.mrb[0].mxu0
  %v147 = vadd.f32 %v68, %v146
  %v148 = vpop.f32.mrb[0].mxu0
  %149 = vdwg.mxu0
  %v150 = vld [vmem:[%s2 + $0x60] sm:$0xff]
  %v151 = vld [vmem:[%s2 + $0x68] sm:$0xff]
  %v152 = vld [vmem:[%s2 + $0x70] sm:$0xff]
  %v153 = vld [vmem:[%s2 + $0x78] sm:$0xff]
  %v154 = vld [vmem:[%s2 + $0x80] sm:$0x1]
  %v155 = vlaneseq
  %v156 = vshrl.u32 %v155, 7
  %v157 = vsub.s32 0, %v156
  %v158 = vrot.slane %v154, %v157
  %159 = vmatprep.subr.mxu0 0.0
  %160 = vmatpush1.msra.mxu0 %v150
  %161 = vmatprep.subr.mxu0 0.0
  %162 = vmatpush1.msra.mxu0 %v151
  %163 = vmatprep.subr.mxu0 0.0
  %164 = vmatpush1.msra.mxu0 %v152
  %165 = vmatprep.subr.mxu0 0.0
  %166 = vmatpush1.msra.mxu0 %v153
  %167 = vmatprep.subr.mxu0 0.0
  %168 = vmatpush1.msra.mxu0 0.0
  %169 = vmatprep.subr.mxu0 0.0
  %170 = vmatpush1.msra.mxu0 0.0
  %171 = vmatprep.subr.mxu0 0.0
  %172 = vmatpush1.msra.mxu0 0.0
  %173 = vmatprep.subr.mxu0 0.0
  %174 = vmatpush1.msra.mxu0 0.0
  %175 = vmatprep.subr.mxu0 0.0
  %176 = vmatpush1.msra.mxu0 0.0
  %177 = vmatprep.subr.mxu0 0.0
  %178 = vmatpush1.msra.mxu0 0.0
  %179 = vmatprep.subr.mxu0 0.0
  %180 = vmatpush1.msra.mxu0 0.0
  %181 = vmatprep.subr.mxu0 0.0
  %182 = vmatpush1.msra.mxu0 0.0
  %183 = vmatprep.subr.mxu0 0.0
  %184 = vmatpush1.msra.mxu0 0.0
  %185 = vmatprep.subr.mxu0 0.0
  %186 = vmatpush1.msra.mxu0 0.0
  %187 = vmatprep.subr.mxu0 0.0
  %188 = vmatpush1.msra.mxu0 0.0
  %189 = vmatprep.subr.mxu0 0.0
  %190 = vmatpush1.msra.mxu0 0.0
  %191 = vmatprep.subr.mxu0 0.0
  %192 = vmatpush1.msra.mxu0 0.0
  %193 = vmatprep.subr.mxu0 0.0
  %194 = vmatpush1.msra.mxu0 0.0
  %195 = vmatprep.subr.mxu0 0.0
  %196 = vmatpush1.msra.mxu0 0.0
  %197 = vmatprep.subr.mxu0 0.0
  %198 = vmatpush1.msra.mxu0 0.0
  %199 = vmatprep.subr.mxu0 0.0
  %200 = vmatpush1.msra.mxu0 0.0
  %201 = vmatprep.subr.mxu0 0.0
  %202 = vmatpush1.msra.mxu0 0.0
  %203 = vmatprep.subr.mxu0 0.0
  %204 = vmatpush1.msra.mxu0 0.0
  %205 = vmatprep.subr.mxu0 0.0
  %206 = vmatpush1.msra.mxu0 0.0
  %207 = vmatprep.subr.mxu0 0.0
  %208 = vmatpush1.msra.mxu0 0.0
  %209 = vmatprep.subr.mxu0 0.0
  %210 = vmatpush1.msra.mxu0 0.0
  %211 = vmatprep.subr.mxu0 0.0
  %212 = vmatpush1.msra.mxu0 0.0
  %213 = vmatprep.subr.mxu0 0.0
  %214 = vmatpush1.msra.mxu0 0.0
  %215 = vmatprep.subr.mxu0 0.0
  %216 = vmatpush1.msra.mxu0 0.0
  %217 = vmatprep.subr.mxu0 0.0
  %218 = vmatpush1.msra.mxu0 0.0
  %219 = vmatprep.subr.mxu0 0.0
  %220 = vmatpush1.msra.mxu0 0.0
  %221 = vmatprep.subr.mxu0 0.0
  %222 = vmatpush1.msra.mxu0 0.0
  %223 = vmatprep.mubr.f32.mxu0 0.0
  %224 = vmatmul.mubr.f32.gmra.mrb[0].mxu0 %v70
  %v225 = vpop.f32.mrb[0].mxu0
  %v226 = vadd.f32 %v158, %v225
  %v227 = vpop.f32.mrb[0].mxu0
  %228 = vmatprep.mubr.f32.mxu0 0.0
  %229 = vmatmul.mubr.f32.gmra.mrb[0].mxu0 %v73
  %v230 = vpop.f32.mrb[0].mxu0
  %v231 = vadd.f32 %v158, %v230
  %v232 = vpop.f32.mrb[0].mxu0
  %233 = vdwg.mxu0
  %v234 = vld [vmem:[%s2 + $0xb0] sm:$0xff]
  %v235 = vld [vmem:[%s2 + $0xb8] sm:$0xff]
  %v236 = vld [vmem:[%s2 + $0xc0] sm:$0xff]
  %v237 = vld [vmem:[%s2 + $0xc8] sm:$0xff]
  %v238 = vld [vmem:[%s2 + $0xd0] sm:$0x1]
  %v239 = vlaneseq
  %v240 = vshrl.u32 %v239, 7
  %v241 = vsub.s32 0, %v240
  %v242 = vrot.slane %v238, %v241
  %243 = vmatprep.subr.mxu0 0.0
  %244 = vmatpush1.msra.mxu0 %v234
  %245 = vmatprep.subr.mxu0 0.0
  %246 = vmatpush1.msra.mxu0 %v235
  %247 = vmatprep.subr.mxu0 0.0
  %248 = vmatpush1.msra.mxu0 %v236
  %249 = vmatprep.subr.mxu0 0.0
  %250 = vmatpush1.msra.mxu0 %v237
  %251 = vmatprep.subr.mxu0 0.0
  %252 = vmatpush1.msra.mxu0 0.0
  %253 = vmatprep.subr.mxu0 0.0
  %254 = vmatpush1.msra.mxu0 0.0
  %255 = vmatprep.subr.mxu0 0.0
  %256 = vmatpush1.msra.mxu0 0.0
  %257 = vmatprep.subr.mxu0 0.0
  %258 = vmatpush1.msra.mxu0 0.0
  %259 = vmatprep.subr.mxu0 0.0
  %260 = vmatpush1.msra.mxu0 0.0
  %261 = vmatprep.subr.mxu0 0.0
  %262 = vmatpush1.msra.mxu0 0.0
  %263 = vmatprep.subr.mxu0 0.0
  %264 = vmatpush1.msra.mxu0 0.0
  %265 = vmatprep.subr.mxu0 0.0
  %266 = vmatpush1.msra.mxu0 0.0
  %267 = vmatprep.subr.mxu0 0.0
  %268 = vmatpush1.msra.mxu0 0.0
  %269 = vmatprep.subr.mxu0 0.0
  %270 = vmatpush1.msra.mxu0 0.0
  %271 = vmatprep.subr.mxu0 0.0
  %272 = vmatpush1.msra.mxu0 0.0
  %273 = vmatprep.subr.mxu0 0.0
  %274 = vmatpush1.msra.mxu0 0.0
  %275 = vmatprep.subr.mxu0 0.0
  %276 = vmatpush1.msra.mxu0 0.0
  %277 = vmatprep.subr.mxu0 0.0
  %278 = vmatpush1.msra.mxu0 0.0
  %279 = vmatprep.subr.mxu0 0.0
  %280 = vmatpush1.msra.mxu0 0.0
  %281 = vmatprep.subr.mxu0 0.0
  %282 = vmatpush1.msra.mxu0 0.0
  %283 = vmatprep.subr.mxu0 0.0
  %284 = vmatpush1.msra.mxu0 0.0
  %285 = vmatprep.subr.mxu0 0.0
  %286 = vmatpush1.msra.mxu0 0.0
  %287 = vmatprep.subr.mxu0 0.0
  %288 = vmatpush1.msra.mxu0 0.0
  %289 = vmatprep.subr.mxu0 0.0
  %290 = vmatpush1.msra.mxu0 0.0
  %291 = vmatprep.subr.mxu0 0.0
  %292 = vmatpush1.msra.mxu0 0.0
  %293 = vmatprep.subr.mxu0 0.0
  %294 = vmatpush1.msra.mxu0 0.0
  %295 = vmatprep.subr.mxu0 0.0
  %296 = vmatpush1.msra.mxu0 0.0
  %297 = vmatprep.subr.mxu0 0.0
  %298 = vmatpush1.msra.mxu0 0.0
  %299 = vmatprep.subr.mxu0 0.0
  %300 = vmatpush1.msra.mxu0 0.0
  %301 = vmatprep.subr.mxu0 0.0
  %302 = vmatpush1.msra.mxu0 0.0
  %303 = vmatprep.subr.mxu0 0.0
  %304 = vmatpush1.msra.mxu0 0.0
  %305 = vmatprep.subr.mxu0 0.0
  %306 = vmatpush1.msra.mxu0 0.0
  %307 = vmatprep.mubr.f32.mxu0 0.0
  %308 = vmatmul.mubr.f32.gmra.mrb[0].mxu0 %v70
  %v309 = vpop.f32.mrb[0].mxu0
  %v310 = vadd.f32 %v242, %v309
  %v311 = vpop.f32.mrb[0].mxu0
  %312 = vmatprep.mubr.f32.mxu0 0.0
  %313 = vmatmul.mubr.f32.gmra.mrb[0].mxu0 %v73
  %v314 = vpop.f32.mrb[0].mxu0
  %v315 = vadd.f32 %v242, %v314
  %v316 = vpop.f32.mrb[0].mxu0
  %317 = vdwg.mxu0
  %vm318 = vcmask 130048
  %v320 = vsel %vm318, %v142, 0
  %v323 = vsel %vm318, %v147, 0
  %v326 = vsel %vm318, %v226, 0
  %v329 = vsel %vm318, %v231, 0
  %331 = vmatprep.subr.mxu0 0.0
  %332 = vmatpush1.xpose.msra.mxu0 %v326
  %333 = vmatprep.subr.mxu0 0.0
  %334 = vmatpush1.xpose.msra.mxu0 %v329
  %335 = vmatprep.subr.mxu0 0.0
  %336 = vmatpush1.xpose.msra.mxu0 0.0
  %337 = vmatprep.subr.mxu0 0.0
  %338 = vmatpush1.xpose.msra.mxu0 0.0
  %339 = vmatprep.subr.mxu0 0.0
  %340 = vmatpush1.xpose.msra.mxu0 0.0
  %341 = vmatprep.subr.mxu0 0.0
  %342 = vmatpush1.xpose.msra.mxu0 0.0
  %343 = vmatprep.subr.mxu0 0.0
  %344 = vmatpush1.xpose.msra.mxu0 0.0
  %345 = vmatprep.subr.mxu0 0.0
  %346 = vmatpush1.xpose.msra.mxu0 0.0
  %347 = vmatprep.subr.mxu0 0.0
  %348 = vmatpush1.xpose.msra.mxu0 0.0
  %349 = vmatprep.subr.mxu0 0.0
  %350 = vmatpush1.xpose.msra.mxu0 0.0
  %351 = vmatprep.subr.mxu0 0.0
  %352 = vmatpush1.xpose.msra.mxu0 0.0
  %353 = vmatprep.subr.mxu0 0.0
  %354 = vmatpush1.xpose.msra.mxu0 0.0
  %355 = vmatprep.subr.mxu0 0.0
  %356 = vmatpush1.xpose.msra.mxu0 0.0
  %357 = vmatprep.subr.mxu0 0.0
  %358 = vmatpush1.xpose.msra.mxu0 0.0
  %359 = vmatprep.subr.mxu0 0.0
  %360 = vmatpush1.xpose.msra.mxu0 0.0
  %361 = vmatprep.subr.mxu0 0.0
  %362 = vmatpush1.xpose.msra.mxu0 0.0
  %363 = vmatprep.subr.mxu0 0.0
  %364 = vmatpush1.xpose.msra.mxu0 0.0
  %365 = vmatprep.subr.mxu0 0.0
  %366 = vmatpush1.xpose.msra.mxu0 0.0
  %367 = vmatprep.subr.mxu0 0.0
  %368 = vmatpush1.xpose.msra.mxu0 0.0
  %369 = vmatprep.subr.mxu0 0.0
  %370 = vmatpush1.xpose.msra.mxu0 0.0
  %371 = vmatprep.subr.mxu0 0.0
  %372 = vmatpush1.xpose.msra.mxu0 0.0
  %373 = vmatprep.subr.mxu0 0.0
  %374 = vmatpush1.xpose.msra.mxu0 0.0
  %375 = vmatprep.subr.mxu0 0.0
  %376 = vmatpush1.xpose.msra.mxu0 0.0
  %377 = vmatprep.subr.mxu0 0.0
  %378 = vmatpush1.xpose.msra.mxu0 0.0
  %379 = vmatprep.subr.mxu0 0.0
  %380 = vmatpush1.xpose.msra.mxu0 0.0
  %381 = vmatprep.subr.mxu0 0.0
  %382 = vmatpush1.xpose.msra.mxu0 0.0
  %383 = vmatprep.subr.mxu0 0.0
  %384 = vmatpush1.xpose.msra.mxu0 0.0
  %385 = vmatprep.subr.mxu0 0.0
  %386 = vmatpush1.xpose.msra.mxu0 0.0
  %387 = vmatprep.subr.mxu0 0.0
  %388 = vmatpush1.xpose.msra.mxu0 0.0
  %389 = vmatprep.subr.mxu0 0.0
  %390 = vmatpush1.xpose.msra.mxu0 0.0
  %391 = vmatprep.subr.mxu0 0.0
  %392 = vmatpush1.xpose.msra.mxu0 0.0
  %393 = vmatprep.subr.mxu0 0.0
  %394 = vmatpush1.xpose.msra.mxu0 0.0
  %395 = vmatprep.mubr.f32.mxu0 0.0
  %396 = vmatmul.mubr.f32.gmra.mrb[0].mxu0 %v320
  %v397 = vpop.f32.mrb[0].mxu0
  %v398 = vadd.f32 0.0, %v397
  %v399 = vpop.f32.mrb[0].mxu0
  %400 = vmatprep.mubr.f32.mxu0 0.0
  %401 = vmatmul.mubr.f32.gmra.mrb[0].mxu0 %v323
  %v402 = vpop.f32.mrb[0].mxu0
  %v403 = vadd.f32 0.0, %v402
  %v404 = vpop.f32.mrb[0].mxu0
  %405 = vdwg.mxu0
  %v406 = vmul.f32 %v398, 0.25
  %v407 = vmul.f32 %v403, 0.25
  %v408 = vadd.f32 %v406, %v16
  %v409 = vadd.f32 %v407, %v17
  %v410 = vsel %vm318, %v408, -inf
  %411 = vmax.xlane.f32.xlu0 %v410
  %v412 = vpop.xlane.xlu0 %411
  %v413 = vsel %vm318, %v409, -inf
  %414 = vmax.xlane.f32.xlu0 %v413
  %v415 = vpop.xlane.xlu0 %414
  %v416 = vsub.f32 %v408, %v412
  %v417 = vsub.f32 %v409, %v415
  %v418 = vmul.f32 %v416, 1.442695
  %v419 = vpow.pop %v418
  %v420 = vmul.f32 %v417, 1.442695
  %v421 = vpow.pop %v420
  %v422 = vsel %vm318, %v419, 0.0
  %423 = vadd.xlane.f32.xlu0 %v422
  %v424 = vpop.xlane.xlu0 %423
  %v425 = vsel %vm318, %v421, 0.0
  %426 = vadd.xlane.f32.xlu0 %v425
  %v427 = vpop.xlane.xlu0 %426
  %v428 = vrcp.pop %v424
  %v429 = vrcp.pop %v427
  %v430 = vmul.f32 %v419, %v428
  %v431 = vmul.f32 %v421, %v429
  %v433 = vsel %vm318, %v430, 0
  %v436 = vsel %vm318, %v431, 0
  %438 = vmatprep.subr.mxu0 0.0
  %439 = vmatpush1.msra.mxu0 %v310
  %440 = vmatprep.subr.mxu0 0.0
  %441 = vmatpush1.msra.mxu0 %v315
  %442 = vmatprep.subr.mxu0 0.0
  %443 = vmatpush1.msra.mxu0 0.0
  %444 = vmatprep.subr.mxu0 0.0
  %445 = vmatpush1.msra.mxu0 0.0
  %446 = vmatprep.subr.mxu0 0.0
  %447 = vmatpush1.msra.mxu0 0.0
  %448 = vmatprep.subr.mxu0 0.0
  %449 = vmatpush1.msra.mxu0 0.0
  %450 = vmatprep.subr.mxu0 0.0
  %451 = vmatpush1.msra.mxu0 0.0
  %452 = vmatprep.subr.mxu0 0.0
  %453 = vmatpush1.msra.mxu0 0.0
  %454 = vmatprep.subr.mxu0 0.0
  %455 = vmatpush1.msra.mxu0 0.0
  %456 = vmatprep.subr.mxu0 0.0
  %457 = vmatpush1.msra.mxu0 0.0
  %458 = vmatprep.subr.mxu0 0.0
  %459 = vmatpush1.msra.mxu0 0.0
  %460 = vmatprep.subr.mxu0 0.0
  %461 = vmatpush1.msra.mxu0 0.0
  %462 = vmatprep.subr.mxu0 0.0
  %463 = vmatpush1.msra.mxu0 0.0
  %464 = vmatprep.subr.mxu0 0.0
  %465 = vmatpush1.msra.mxu0 0.0
  %466 = vmatprep.subr.mxu0 0.0
  %467 = vmatpush1.msra.mxu0 0.0
  %468 = vmatprep.subr.mxu0 0.0
  %469 = vmatpush1.msra.mxu0 0.0
  %470 = vmatprep.subr.mxu0 0.0
  %471 = vmatpush1.msra.mxu0 0.0
  %472 = vmatprep.subr.mxu0 0.0
  %473 = vmatpush1.msra.mxu0 0.0
  %474 = vmatprep.subr.mxu0 0.0
  %475 = vmatpush1.msra.mxu0 0.0
  %476 = vmatprep.subr.mxu0 0.0
  %477 = vmatpush1.msra.mxu0 0.0
  %478 = vmatprep.subr.mxu0 0.0
  %479 = vmatpush1.msra.mxu0 0.0
  %480 = vmatprep.subr.mxu0 0.0
  %481 = vmatpush1.msra.mxu0 0.0
  %482 = vmatprep.subr.mxu0 0.0
  %483 = vmatpush1.msra.mxu0 0.0
  %484 = vmatprep.subr.mxu0 0.0
  %485 = vmatpush1.msra.mxu0 0.0
  %486 = vmatprep.subr.mxu0 0.0
  %487 = vmatpush1.msra.mxu0 0.0
  %488 = vmatprep.subr.mxu0 0.0
  %489 = vmatpush1.msra.mxu0 0.0
  %490 = vmatprep.subr.mxu0 0.0
  %491 = vmatpush1.msra.mxu0 0.0
  %492 = vmatprep.subr.mxu0 0.0
  %493 = vmatpush1.msra.mxu0 0.0
  %494 = vmatprep.subr.mxu0 0.0
  %495 = vmatpush1.msra.mxu0 0.0
  %496 = vmatprep.subr.mxu0 0.0
  %497 = vmatpush1.msra.mxu0 0.0
  %498 = vmatprep.subr.mxu0 0.0
  %499 = vmatpush1.msra.mxu0 0.0
  %500 = vmatprep.subr.mxu0 0.0
  %501 = vmatpush1.msra.mxu0 0.0
  %502 = vmatprep.mubr.f32.mxu0 0.0
  %503 = vmatmul.mubr.f32.gmra.mrb[0].mxu0 %v433
  %v504 = vpop.f32.mrb[0].mxu0
  %v505 = vadd.f32 0.0, %v504
  %v506 = vpop.f32.mrb[0].mxu0
  %507 = vmatprep.mubr.f32.mxu0 0.0
  %508 = vmatmul.mubr.f32.gmra.mrb[0].mxu0 %v436
  %v509 = vpop.f32.mrb[0].mxu0
  %v510 = vadd.f32 0.0, %v509
  %v511 = vpop.f32.mrb[0].mxu0
  %512 = vdwg.mxu0
  %v513 = vld [vmem:[%s2 + $0x100] sm:$0xff]
  %v514 = vld [vmem:[%s2 + $0x108] sm:$0xff]
  %v515 = vld [vmem:[%s2 + $0x38] sm:$0xff]
  %v516 = vld [vmem:[%s2 + $0x40] sm:$0xff]
  %v517 = vld [vmem:[%s2 + $0x48] sm:$0xff]
  %v518 = vld [vmem:[%s2 + $0x50] sm:$0xff]
  %v519 = vld [vmem:[%s2 + $0x58] sm:$0x1]
  %v520 = vlaneseq
  %v521 = vshrl.u32 %v520, 7
  %v522 = vsub.s32 0, %v521
  %v523 = vrot.slane %v519, %v522
  %524 = vmatprep.subr.mxu0 0.0
  %525 = vmatpush1.msra.mxu0 %v515
  %526 = vmatprep.subr.mxu0 0.0
  %527 = vmatpush1.msra.mxu0 %v516
  %528 = vmatprep.subr.mxu0 0.0
  %529 = vmatpush1.msra.mxu0 %v517
  %530 = vmatprep.subr.mxu0 0.0
  %531 = vmatpush1.msra.mxu0 %v518
  %532 = vmatprep.subr.mxu0 0.0
  %533 = vmatpush1.msra.mxu0 0.0
  %534 = vmatprep.subr.mxu0 0.0
  %535 = vmatpush1.msra.mxu0 0.0
  %536 = vmatprep.subr.mxu0 0.0
  %537 = vmatpush1.msra.mxu0 0.0
  %538 = vmatprep.subr.mxu0 0.0
  %539 = vmatpush1.msra.mxu0 0.0
  %540 = vmatprep.subr.mxu0 0.0
  %541 = vmatpush1.msra.mxu0 0.0
  %542 = vmatprep.subr.mxu0 0.0
  %543 = vmatpush1.msra.mxu0 0.0
  %544 = vmatprep.subr.mxu0 0.0
  %545 = vmatpush1.msra.mxu0 0.0
  %546 = vmatprep.subr.mxu0 0.0
  %547 = vmatpush1.msra.mxu0 0.0
  %548 = vmatprep.subr.mxu0 0.0
  %549 = vmatpush1.msra.mxu0 0.0
  %550 = vmatprep.subr.mxu0 0.0
  %551 = vmatpush1.msra.mxu0 0.0
  %552 = vmatprep.subr.mxu0 0.0
  %553 = vmatpush1.msra.mxu0 0.0
  %554 = vmatprep.subr.mxu0 0.0
  %555 = vmatpush1.msra.mxu0 0.0
  %556 = vmatprep.subr.mxu0 0.0
  %557 = vmatpush1.msra.mxu0 0.0
  %558 = vmatprep.subr.mxu0 0.0
  %559 = vmatpush1.msra.mxu0 0.0
  %560 = vmatprep.subr.mxu0 0.0
  %561 = vmatpush1.msra.mxu0 0.0
  %562 = vmatprep.subr.mxu0 0.0
  %563 = vmatpush1.msra.mxu0 0.0
  %564 = vmatprep.subr.mxu0 0.0
  %565 = vmatpush1.msra.mxu0 0.0
  %566 = vmatprep.subr.mxu0 0.0
  %567 = vmatpush1.msra.mxu0 0.0
  %568 = vmatprep.subr.mxu0 0.0
  %569 = vmatpush1.msra.mxu0 0.0
  %570 = vmatprep.subr.mxu0 0.0
  %571 = vmatpush1.msra.mxu0 0.0
  %572 = vmatprep.subr.mxu0 0.0
  %573 = vmatpush1.msra.mxu0 0.0
  %574 = vmatprep.subr.mxu0 0.0
  %575 = vmatpush1.msra.mxu0 0.0
  %576 = vmatprep.subr.mxu0 0.0
  %577 = vmatpush1.msra.mxu0 0.0
  %578 = vmatprep.subr.mxu0 0.0
  %579 = vmatpush1.msra.mxu0 0.0
  %580 = vmatprep.subr.mxu0 0.0
  %581 = vmatpush1.msra.mxu0 0.0
  %582 = vmatprep.subr.mxu0 0.0
  %583 = vmatpush1.msra.mxu0 0.0
  %584 = vmatprep.subr.mxu0 0.0
  %585 = vmatpush1.msra.mxu0 0.0
  %586 = vmatprep.subr.mxu0 0.0
  %587 = vmatpush1.msra.mxu0 0.0
  %588 = vmatprep.mubr.f32.mxu0 0.0
  %589 = vmatmul.mubr.f32.gmra.mrb[0].mxu0 %v70
  %v590 = vpop.f32.mrb[0].mxu0
  %v591 = vadd.f32 %v523, %v590
  %v592 = vpop.f32.mrb[0].mxu0
  %593 = vmatprep.mubr.f32.mxu0 0.0
  %594 = vmatmul.mubr.f32.gmra.mrb[0].mxu0 %v73
  %v595 = vpop.f32.mrb[0].mxu0
  %v596 = vadd.f32 %v523, %v595
  %v597 = vpop.f32.mrb[0].mxu0
  %598 = vdwg.mxu0
  %v599 = vld [vmem:[%s2 + $0x88] sm:$0xff]
  %v600 = vld [vmem:[%s2 + $0x90] sm:$0xff]
  %v601 = vld [vmem:[%s2 + $0x98] sm:$0xff]
  %v602 = vld [vmem:[%s2 + $0xa0] sm:$0xff]
  %v603 = vld [vmem:[%s2 + $0xa8] sm:$0x1]
  %v604 = vlaneseq
  %v605 = vshrl.u32 %v604, 7
  %v606 = vsub.s32 0, %v605
  %v607 = vrot.slane %v603, %v606
  %608 = vmatprep.subr.mxu0 0.0
  %609 = vmatpush1.msra.mxu0 %v599
  %610 = vmatprep.subr.mxu0 0.0
  %611 = vmatpush1.msra.mxu0 %v600
  %612 = vmatprep.subr.mxu0 0.0
  %613 = vmatpush1.msra.mxu0 %v601
  %614 = vmatprep.subr.mxu0 0.0
  %615 = vmatpush1.msra.mxu0 %v602
  %616 = vmatprep.subr.mxu0 0.0
  %617 = vmatpush1.msra.mxu0 0.0
  %618 = vmatprep.subr.mxu0 0.0
  %619 = vmatpush1.msra.mxu0 0.0
  %620 = vmatprep.subr.mxu0 0.0
  %621 = vmatpush1.msra.mxu0 0.0
  %622 = vmatprep.subr.mxu0 0.0
  %623 = vmatpush1.msra.mxu0 0.0
  %624 = vmatprep.subr.mxu0 0.0
  %625 = vmatpush1.msra.mxu0 0.0
  %626 = vmatprep.subr.mxu0 0.0
  %627 = vmatpush1.msra.mxu0 0.0
  %628 = vmatprep.subr.mxu0 0.0
  %629 = vmatpush1.msra.mxu0 0.0
  %630 = vmatprep.subr.mxu0 0.0
  %631 = vmatpush1.msra.mxu0 0.0
  %632 = vmatprep.subr.mxu0 0.0
  %633 = vmatpush1.msra.mxu0 0.0
  %634 = vmatprep.subr.mxu0 0.0
  %635 = vmatpush1.msra.mxu0 0.0
  %636 = vmatprep.subr.mxu0 0.0
  %637 = vmatpush1.msra.mxu0 0.0
  %638 = vmatprep.subr.mxu0 0.0
  %639 = vmatpush1.msra.mxu0 0.0
  %640 = vmatprep.subr.mxu0 0.0
  %641 = vmatpush1.msra.mxu0 0.0
  %642 = vmatprep.subr.mxu0 0.0
  %643 = vmatpush1.msra.mxu0 0.0
  %644 = vmatprep.subr.mxu0 0.0
  %645 = vmatpush1.msra.mxu0 0.0
  %646 = vmatprep.subr.mxu0 0.0
  %647 = vmatpush1.msra.mxu0 0.0
  %648 = vmatprep.subr.mxu0 0.0
  %649 = vmatpush1.msra.mxu0 0.0
  %650 = vmatprep.subr.mxu0 0.0
  %651 = vmatpush1.msra.mxu0 0.0
  %652 = vmatprep.subr.mxu0 0.0
  %653 = vmatpush1.msra.mxu0 0.0
  %654 = vmatprep.subr.mxu0 0.0
  %655 = vmatpush1.msra.mxu0 0.0
  %656 = vmatprep.subr.mxu0 0.0
  %657 = vmatpush1.msra.mxu0 0.0
  %658 = vmatprep.subr.mxu0 0.0
  %659 = vmatpush1.msra.mxu0 0.0
  %660 = vmatprep.subr.mxu0 0.0
  %661 = vmatpush1.msra.mxu0 0.0
  %662 = vmatprep.subr.mxu0 0.0
  %663 = vmatpush1.msra.mxu0 0.0
  %664 = vmatprep.subr.mxu0 0.0
  %665 = vmatpush1.msra.mxu0 0.0
  %666 = vmatprep.subr.mxu0 0.0
  %667 = vmatpush1.msra.mxu0 0.0
  %668 = vmatprep.subr.mxu0 0.0
  %669 = vmatpush1.msra.mxu0 0.0
  %670 = vmatprep.subr.mxu0 0.0
  %671 = vmatpush1.msra.mxu0 0.0
  %672 = vmatprep.mubr.f32.mxu0 0.0
  %673 = vmatmul.mubr.f32.gmra.mrb[0].mxu0 %v70
  %v674 = vpop.f32.mrb[0].mxu0
  %v675 = vadd.f32 %v607, %v674
  %v676 = vpop.f32.mrb[0].mxu0
  %677 = vmatprep.mubr.f32.mxu0 0.0
  %678 = vmatmul.mubr.f32.gmra.mrb[0].mxu0 %v73
  %v679 = vpop.f32.mrb[0].mxu0
  %v680 = vadd.f32 %v607, %v679
  %v681 = vpop.f32.mrb[0].mxu0
  %682 = vdwg.mxu0
  %v683 = vld [vmem:[%s2 + $0xd8] sm:$0xff]
  %v684 = vld [vmem:[%s2 + $0xe0] sm:$0xff]
  %v685 = vld [vmem:[%s2 + $0xe8] sm:$0xff]
  %v686 = vld [vmem:[%s2 + $0xf0] sm:$0xff]
  %v687 = vld [vmem:[%s2 + $0xf8] sm:$0x1]
  %v688 = vlaneseq
  %v689 = vshrl.u32 %v688, 7
  %v690 = vsub.s32 0, %v689
  %v691 = vrot.slane %v687, %v690
  %692 = vmatprep.subr.mxu0 0.0
  %693 = vmatpush1.msra.mxu0 %v683
  %694 = vmatprep.subr.mxu0 0.0
  %695 = vmatpush1.msra.mxu0 %v684
  %696 = vmatprep.subr.mxu0 0.0
  %697 = vmatpush1.msra.mxu0 %v685
  %698 = vmatprep.subr.mxu0 0.0
  %699 = vmatpush1.msra.mxu0 %v686
  %700 = vmatprep.subr.mxu0 0.0
  %701 = vmatpush1.msra.mxu0 0.0
  %702 = vmatprep.subr.mxu0 0.0
  %703 = vmatpush1.msra.mxu0 0.0
  %704 = vmatprep.subr.mxu0 0.0
  %705 = vmatpush1.msra.mxu0 0.0
  %706 = vmatprep.subr.mxu0 0.0
  %707 = vmatpush1.msra.mxu0 0.0
  %708 = vmatprep.subr.mxu0 0.0
  %709 = vmatpush1.msra.mxu0 0.0
  %710 = vmatprep.subr.mxu0 0.0
  %711 = vmatpush1.msra.mxu0 0.0
  %712 = vmatprep.subr.mxu0 0.0
  %713 = vmatpush1.msra.mxu0 0.0
  %714 = vmatprep.subr.mxu0 0.0
  %715 = vmatpush1.msra.mxu0 0.0
  %716 = vmatprep.subr.mxu0 0.0
  %717 = vmatpush1.msra.mxu0 0.0
  %718 = vmatprep.subr.mxu0 0.0
  %719 = vmatpush1.msra.mxu0 0.0
  %720 = vmatprep.subr.mxu0 0.0
  %721 = vmatpush1.msra.mxu0 0.0
  %722 = vmatprep.subr.mxu0 0.0
  %723 = vmatpush1.msra.mxu0 0.0
  %724 = vmatprep.subr.mxu0 0.0
  %725 = vmatpush1.msra.mxu0 0.0
  %726 = vmatprep.subr.mxu0 0.0
  %727 = vmatpush1.msra.mxu0 0.0
  %728 = vmatprep.subr.mxu0 0.0
  %729 = vmatpush1.msra.mxu0 0.0
  %730 = vmatprep.subr.mxu0 0.0
  %731 = vmatpush1.msra.mxu0 0.0
  %732 = vmatprep.subr.mxu0 0.0
  %733 = vmatpush1.msra.mxu0 0.0
  %734 = vmatprep.subr.mxu0 0.0
  %735 = vmatpush1.msra.mxu0 0.0
  %736 = vmatprep.subr.mxu0 0.0
  %737 = vmatpush1.msra.mxu0 0.0
  %738 = vmatprep.subr.mxu0 0.0
  %739 = vmatpush1.msra.mxu0 0.0
  %740 = vmatprep.subr.mxu0 0.0
  %741 = vmatpush1.msra.mxu0 0.0
  %742 = vmatprep.subr.mxu0 0.0
  %743 = vmatpush1.msra.mxu0 0.0
  %744 = vmatprep.subr.mxu0 0.0
  %745 = vmatpush1.msra.mxu0 0.0
  %746 = vmatprep.subr.mxu0 0.0
  %747 = vmatpush1.msra.mxu0 0.0
  %748 = vmatprep.subr.mxu0 0.0
  %749 = vmatpush1.msra.mxu0 0.0
  %750 = vmatprep.subr.mxu0 0.0
  %751 = vmatpush1.msra.mxu0 0.0
  %752 = vmatprep.subr.mxu0 0.0
  %753 = vmatpush1.msra.mxu0 0.0
  %754 = vmatprep.subr.mxu0 0.0
  %755 = vmatpush1.msra.mxu0 0.0
  %756 = vmatprep.mubr.f32.mxu0 0.0
  %757 = vmatmul.mubr.f32.gmra.mrb[0].mxu0 %v70
  %v758 = vpop.f32.mrb[0].mxu0
  %v759 = vadd.f32 %v691, %v758
  %v760 = vpop.f32.mrb[0].mxu0
  %761 = vmatprep.mubr.f32.mxu0 0.0
  %762 = vmatmul.mubr.f32.gmra.mrb[0].mxu0 %v73
  %v763 = vpop.f32.mrb[0].mxu0
  %v764 = vadd.f32 %v691, %v763
  %v765 = vpop.f32.mrb[0].mxu0
  %766 = vdwg.mxu0
  %v768 = vsel %vm318, %v591, 0
  %v771 = vsel %vm318, %v596, 0
  %v774 = vsel %vm318, %v675, 0
  %v777 = vsel %vm318, %v680, 0
  %779 = vmatprep.subr.mxu0 0.0
  %780 = vmatpush1.xpose.msra.mxu0 %v774
  %781 = vmatprep.subr.mxu0 0.0
  %782 = vmatpush1.xpose.msra.mxu0 %v777
  %783 = vmatprep.subr.mxu0 0.0
  %784 = vmatpush1.xpose.msra.mxu0 0.0
  %785 = vmatprep.subr.mxu0 0.0
  %786 = vmatpush1.xpose.msra.mxu0 0.0
  %787 = vmatprep.subr.mxu0 0.0
  %788 = vmatpush1.xpose.msra.mxu0 0.0
  %789 = vmatprep.subr.mxu0 0.0
  %790 = vmatpush1.xpose.msra.mxu0 0.0
  %791 = vmatprep.subr.mxu0 0.0
  %792 = vmatpush1.xpose.msra.mxu0 0.0
  %793 = vmatprep.subr.mxu0 0.0
  %794 = vmatpush1.xpose.msra.mxu0 0.0
  %795 = vmatprep.subr.mxu0 0.0
  %796 = vmatpush1.xpose.msra.mxu0 0.0
  %797 = vmatprep.subr.mxu0 0.0
  %798 = vmatpush1.xpose.msra.mxu0 0.0
  %799 = vmatprep.subr.mxu0 0.0
  %800 = vmatpush1.xpose.msra.mxu0 0.0
  %801 = vmatprep.subr.mxu0 0.0
  %802 = vmatpush1.xpose.msra.mxu0 0.0
  %803 = vmatprep.subr.mxu0 0.0
  %804 = vmatpush1.xpose.msra.mxu0 0.0
  %805 = vmatprep.subr.mxu0 0.0
  %806 = vmatpush1.xpose.msra.mxu0 0.0
  %807 = vmatprep.subr.mxu0 0.0
  %808 = vmatpush1.xpose.msra.mxu0 0.0
  %809 = vmatprep.subr.mxu0 0.0
  %810 = vmatpush1.xpose.msra.mxu0 0.0
  %811 = vmatprep.subr.mxu0 0.0
  %812 = vmatpush1.xpose.msra.mxu0 0.0
  %813 = vmatprep.subr.mxu0 0.0
  %814 = vmatpush1.xpose.msra.mxu0 0.0
  %815 = vmatprep.subr.mxu0 0.0
  %816 = vmatpush1.xpose.msra.mxu0 0.0
  %817 = vmatprep.subr.mxu0 0.0
  %818 = vmatpush1.xpose.msra.mxu0 0.0
  %819 = vmatprep.subr.mxu0 0.0
  %820 = vmatpush1.xpose.msra.mxu0 0.0
  %821 = vmatprep.subr.mxu0 0.0
  %822 = vmatpush1.xpose.msra.mxu0 0.0
  %823 = vmatprep.subr.mxu0 0.0
  %824 = vmatpush1.xpose.msra.mxu0 0.0
  %825 = vmatprep.subr.mxu0 0.0
  %826 = vmatpush1.xpose.msra.mxu0 0.0
  %827 = vmatprep.subr.mxu0 0.0
  %828 = vmatpush1.xpose.msra.mxu0 0.0
  %829 = vmatprep.subr.mxu0 0.0
  %830 = vmatpush1.xpose.msra.mxu0 0.0
  %831 = vmatprep.subr.mxu0 0.0
  %832 = vmatpush1.xpose.msra.mxu0 0.0
  %833 = vmatprep.subr.mxu0 0.0
  %834 = vmatpush1.xpose.msra.mxu0 0.0
  %835 = vmatprep.subr.mxu0 0.0
  %836 = vmatpush1.xpose.msra.mxu0 0.0
  %837 = vmatprep.subr.mxu0 0.0
  %838 = vmatpush1.xpose.msra.mxu0 0.0
  %839 = vmatprep.subr.mxu0 0.0
  %840 = vmatpush1.xpose.msra.mxu0 0.0
  %841 = vmatprep.subr.mxu0 0.0
  %842 = vmatpush1.xpose.msra.mxu0 0.0
  %843 = vmatprep.mubr.f32.mxu0 0.0
  %844 = vmatmul.mubr.f32.gmra.mrb[0].mxu0 %v768
  %v845 = vpop.f32.mrb[0].mxu0
  %v846 = vadd.f32 0.0, %v845
  %v847 = vpop.f32.mrb[0].mxu0
  %848 = vmatprep.mubr.f32.mxu0 0.0
  %849 = vmatmul.mubr.f32.gmra.mrb[0].mxu0 %v771
  %v850 = vpop.f32.mrb[0].mxu0
  %v851 = vadd.f32 0.0, %v850
  %v852 = vpop.f32.mrb[0].mxu0
  %853 = vdwg.mxu0
  %v854 = vmul.f32 %v846, 0.25
  %v855 = vmul.f32 %v851, 0.25
  %v856 = vadd.f32 %v854, %v16
  %v857 = vadd.f32 %v855, %v17
  %v858 = vsel %vm318, %v856, -inf
  %859 = vmax.xlane.f32.xlu0 %v858
  %v860 = vpop.xlane.xlu0 %859
  %v861 = vsel %vm318, %v857, -inf
  %862 = vmax.xlane.f32.xlu0 %v861
  %v863 = vpop.xlane.xlu0 %862
  %v864 = vsub.f32 %v856, %v860
  %v865 = vsub.f32 %v857, %v863
  %v866 = vmul.f32 %v864, 1.442695
  %v867 = vpow.pop %v866
  %v868 = vmul.f32 %v865, 1.442695
  %v869 = vpow.pop %v868
  %v870 = vsel %vm318, %v867, 0.0
  %871 = vadd.xlane.f32.xlu0 %v870
  %v872 = vpop.xlane.xlu0 %871
  %v873 = vsel %vm318, %v869, 0.0
  %874 = vadd.xlane.f32.xlu0 %v873
  %v875 = vpop.xlane.xlu0 %874
  %v876 = vrcp.pop %v872
  %v877 = vrcp.pop %v875
  %v878 = vmul.f32 %v867, %v876
  %v879 = vmul.f32 %v869, %v877
  %v881 = vsel %vm318, %v878, 0
  %v884 = vsel %vm318, %v879, 0
  %886 = vmatprep.subr.mxu0 0.0
  %887 = vmatpush1.msra.mxu0 %v759
  %888 = vmatprep.subr.mxu0 0.0
  %889 = vmatpush1.msra.mxu0 %v764
  %890 = vmatprep.subr.mxu0 0.0
  %891 = vmatpush1.msra.mxu0 0.0
  %892 = vmatprep.subr.mxu0 0.0
  %893 = vmatpush1.msra.mxu0 0.0
  %894 = vmatprep.subr.mxu0 0.0
  %895 = vmatpush1.msra.mxu0 0.0
  %896 = vmatprep.subr.mxu0 0.0
  %897 = vmatpush1.msra.mxu0 0.0
  %898 = vmatprep.subr.mxu0 0.0
  %899 = vmatpush1.msra.mxu0 0.0
  %900 = vmatprep.subr.mxu0 0.0
  %901 = vmatpush1.msra.mxu0 0.0
  %902 = vmatprep.subr.mxu0 0.0
  %903 = vmatpush1.msra.mxu0 0.0
  %904 = vmatprep.subr.mxu0 0.0
  %905 = vmatpush1.msra.mxu0 0.0
  %906 = vmatprep.subr.mxu0 0.0
  %907 = vmatpush1.msra.mxu0 0.0
  %908 = vmatprep.subr.mxu0 0.0
  %909 = vmatpush1.msra.mxu0 0.0
  %910 = vmatprep.subr.mxu0 0.0
  %911 = vmatpush1.msra.mxu0 0.0
  %912 = vmatprep.subr.mxu0 0.0
  %913 = vmatpush1.msra.mxu0 0.0
  %914 = vmatprep.subr.mxu0 0.0
  %915 = vmatpush1.msra.mxu0 0.0
  %916 = vmatprep.subr.mxu0 0.0
  %917 = vmatpush1.msra.mxu0 0.0
  %918 = vmatprep.subr.mxu0 0.0
  %919 = vmatpush1.msra.mxu0 0.0
  %920 = vmatprep.subr.mxu0 0.0
  %921 = vmatpush1.msra.mxu0 0.0
  %922 = vmatprep.subr.mxu0 0.0
  %923 = vmatpush1.msra.mxu0 0.0
  %924 = vmatprep.subr.mxu0 0.0
  %925 = vmatpush1.msra.mxu0 0.0
  %926 = vmatprep.subr.mxu0 0.0
  %927 = vmatpush1.msra.mxu0 0.0
  %928 = vmatprep.subr.mxu0 0.0
  %929 = vmatpush1.msra.mxu0 0.0
  %930 = vmatprep.subr.mxu0 0.0
  %931 = vmatpush1.msra.mxu0 0.0
  %932 = vmatprep.subr.mxu0 0.0
  %933 = vmatpush1.msra.mxu0 0.0
  %934 = vmatprep.subr.mxu0 0.0
  %935 = vmatpush1.msra.mxu0 0.0
  %936 = vmatprep.subr.mxu0 0.0
  %937 = vmatpush1.msra.mxu0 0.0
  %938 = vmatprep.subr.mxu0 0.0
  %939 = vmatpush1.msra.mxu0 0.0
  %940 = vmatprep.subr.mxu0 0.0
  %941 = vmatpush1.msra.mxu0 0.0
  %942 = vmatprep.subr.mxu0 0.0
  %943 = vmatpush1.msra.mxu0 0.0
  %944 = vmatprep.subr.mxu0 0.0
  %945 = vmatpush1.msra.mxu0 0.0
  %946 = vmatprep.subr.mxu0 0.0
  %947 = vmatpush1.msra.mxu0 0.0
  %948 = vmatprep.subr.mxu0 0.0
  %949 = vmatpush1.msra.mxu0 0.0
  %950 = vmatprep.mubr.f32.mxu0 0.0
  %951 = vmatmul.mubr.f32.gmra.mrb[0].mxu0 %v881
  %v952 = vpop.f32.mrb[0].mxu0
  %v953 = vadd.f32 0.0, %v952
  %v954 = vpop.f32.mrb[0].mxu0
  %955 = vmatprep.mubr.f32.mxu0 0.0
  %956 = vmatmul.mubr.f32.gmra.mrb[0].mxu0 %v884
  %v957 = vpop.f32.mrb[0].mxu0
  %v958 = vadd.f32 0.0, %v957
  %v959 = vpop.f32.mrb[0].mxu0
  %960 = vdwg.mxu0
  %v961 = vld [vmem:[%s2 + $0x110] sm:$0xff]
  %v962 = vld [vmem:[%s2 + $0x118] sm:$0xff]
  %v964 = vsel %vm318, %v953, 0
  %v967 = vsel %vm318, %v958, 0
  %969 = vmatprep.subr.mxu0 0.0
  %970 = vmatpush1.msra.mxu0 %v961
  %971 = vmatprep.subr.mxu0 0.0
  %972 = vmatpush1.msra.mxu0 %v962
  %973 = vmatprep.subr.mxu0 0.0
  %974 = vmatpush1.msra.mxu0 0.0
  %975 = vmatprep.subr.mxu0 0.0
  %976 = vmatpush1.msra.mxu0 0.0
  %977 = vmatprep.subr.mxu0 0.0
  %978 = vmatpush1.msra.mxu0 0.0
  %979 = vmatprep.subr.mxu0 0.0
  %980 = vmatpush1.msra.mxu0 0.0
  %981 = vmatprep.subr.mxu0 0.0
  %982 = vmatpush1.msra.mxu0 0.0
  %983 = vmatprep.subr.mxu0 0.0
  %984 = vmatpush1.msra.mxu0 0.0
  %985 = vmatprep.subr.mxu0 0.0
  %986 = vmatpush1.msra.mxu0 0.0
  %987 = vmatprep.subr.mxu0 0.0
  %988 = vmatpush1.msra.mxu0 0.0
  %989 = vmatprep.subr.mxu0 0.0
  %990 = vmatpush1.msra.mxu0 0.0
  %991 = vmatprep.subr.mxu0 0.0
  %992 = vmatpush1.msra.mxu0 0.0
  %993 = vmatprep.subr.mxu0 0.0
  %994 = vmatpush1.msra.mxu0 0.0
  %995 = vmatprep.subr.mxu0 0.0
  %996 = vmatpush1.msra.mxu0 0.0
  %997 = vmatprep.subr.mxu0 0.0
  %998 = vmatpush1.msra.mxu0 0.0
  %999 = vmatprep.subr.mxu0 0.0
  %1000 = vmatpush1.msra.mxu0 0.0
  %1001 = vmatprep.subr.mxu0 0.0
  %1002 = vmatpush1.msra.mxu0 0.0
  %1003 = vmatprep.subr.mxu0 0.0
  %1004 = vmatpush1.msra.mxu0 0.0
  %1005 = vmatprep.subr.mxu0 0.0
  %1006 = vmatpush1.msra.mxu0 0.0
  %1007 = vmatprep.subr.mxu0 0.0
  %1008 = vmatpush1.msra.mxu0 0.0
  %1009 = vmatprep.subr.mxu0 0.0
  %1010 = vmatpush1.msra.mxu0 0.0
  %1011 = vmatprep.subr.mxu0 0.0
  %1012 = vmatpush1.msra.mxu0 0.0
  %1013 = vmatprep.subr.mxu0 0.0
  %1014 = vmatpush1.msra.mxu0 0.0
  %1015 = vmatprep.subr.mxu0 0.0
  %1016 = vmatpush1.msra.mxu0 0.0
  %1017 = vmatprep.subr.mxu0 0.0
  %1018 = vmatpush1.msra.mxu0 0.0
  %1019 = vmatprep.subr.mxu0 0.0
  %1020 = vmatpush1.msra.mxu0 0.0
  %1021 = vmatprep.subr.mxu0 0.0
  %1022 = vmatpush1.msra.mxu0 0.0
  %1023 = vmatprep.subr.mxu0 0.0
  %1024 = vmatpush1.msra.mxu0 0.0
  %1025 = vmatprep.subr.mxu0 0.0
  %1026 = vmatpush1.msra.mxu0 0.0
  %1027 = vmatprep.subr.mxu0 0.0
  %1028 = vmatpush1.msra.mxu0 0.0
  %1029 = vmatprep.subr.mxu0 0.0
  %1030 = vmatpush1.msra.mxu0 0.0
  %1031 = vmatprep.subr.mxu0 0.0
  %1032 = vmatpush1.msra.mxu0 0.0
  %1033 = vmatprep.mubr.f32.mxu0 0.0
  %1034 = vmatmul.mubr.f32.gmra.mrb[0].mxu0 %v964
  %v1035 = vpop.f32.mrb[0].mxu0
  %v1036 = vadd.f32 0.0, %v1035
  %v1037 = vpop.f32.mrb[0].mxu0
  %1038 = vmatprep.mubr.f32.mxu0 0.0
  %1039 = vmatmul.mubr.f32.gmra.mrb[0].mxu0 %v967
  %v1040 = vpop.f32.mrb[0].mxu0
  %v1041 = vadd.f32 0.0, %v1040
  %v1042 = vpop.f32.mrb[0].mxu0
  %1043 = vdwg.mxu0
  %v1045 = vsel %vm318, %v505, 0
  %v1048 = vsel %vm318, %v510, 0
  %1050 = vmatprep.subr.mxu0 0.0
  %1051 = vmatpush1.msra.mxu0 %v513
  %1052 = vmatprep.subr.mxu0 0.0
  %1053 = vmatpush1.msra.mxu0 %v514
  %1054 = vmatprep.subr.mxu0 0.0
  %1055 = vmatpush1.msra.mxu0 0.0
  %1056 = vmatprep.subr.mxu0 0.0
  %1057 = vmatpush1.msra.mxu0 0.0
  %1058 = vmatprep.subr.mxu0 0.0
  %1059 = vmatpush1.msra.mxu0 0.0
  %1060 = vmatprep.subr.mxu0 0.0
  %1061 = vmatpush1.msra.mxu0 0.0
  %1062 = vmatprep.subr.mxu0 0.0
  %1063 = vmatpush1.msra.mxu0 0.0
  %1064 = vmatprep.subr.mxu0 0.0
  %1065 = vmatpush1.msra.mxu0 0.0
  %1066 = vmatprep.subr.mxu0 0.0
  %1067 = vmatpush1.msra.mxu0 0.0
  %1068 = vmatprep.subr.mxu0 0.0
  %1069 = vmatpush1.msra.mxu0 0.0
  %1070 = vmatprep.subr.mxu0 0.0
  %1071 = vmatpush1.msra.mxu0 0.0
  %1072 = vmatprep.subr.mxu0 0.0
  %1073 = vmatpush1.msra.mxu0 0.0
  %1074 = vmatprep.subr.mxu0 0.0
  %1075 = vmatpush1.msra.mxu0 0.0
  %1076 = vmatprep.subr.mxu0 0.0
  %1077 = vmatpush1.msra.mxu0 0.0
  %1078 = vmatprep.subr.mxu0 0.0
  %1079 = vmatpush1.msra.mxu0 0.0
  %1080 = vmatprep.subr.mxu0 0.0
  %1081 = vmatpush1.msra.mxu0 0.0
  %1082 = vmatprep.subr.mxu0 0.0
  %1083 = vmatpush1.msra.mxu0 0.0
  %1084 = vmatprep.subr.mxu0 0.0
  %1085 = vmatpush1.msra.mxu0 0.0
  %1086 = vmatprep.subr.mxu0 0.0
  %1087 = vmatpush1.msra.mxu0 0.0
  %1088 = vmatprep.subr.mxu0 0.0
  %1089 = vmatpush1.msra.mxu0 0.0
  %1090 = vmatprep.subr.mxu0 0.0
  %1091 = vmatpush1.msra.mxu0 0.0
  %1092 = vmatprep.subr.mxu0 0.0
  %1093 = vmatpush1.msra.mxu0 0.0
  %1094 = vmatprep.subr.mxu0 0.0
  %1095 = vmatpush1.msra.mxu0 0.0
  %1096 = vmatprep.subr.mxu0 0.0
  %1097 = vmatpush1.msra.mxu0 0.0
  %1098 = vmatprep.subr.mxu0 0.0
  %1099 = vmatpush1.msra.mxu0 0.0
  %1100 = vmatprep.subr.mxu0 0.0
  %1101 = vmatpush1.msra.mxu0 0.0
  %1102 = vmatprep.subr.mxu0 0.0
  %1103 = vmatpush1.msra.mxu0 0.0
  %1104 = vmatprep.subr.mxu0 0.0
  %1105 = vmatpush1.msra.mxu0 0.0
  %1106 = vmatprep.subr.mxu0 0.0
  %1107 = vmatpush1.msra.mxu0 0.0
  %1108 = vmatprep.subr.mxu0 0.0
  %1109 = vmatpush1.msra.mxu0 0.0
  %1110 = vmatprep.subr.mxu0 0.0
  %1111 = vmatpush1.msra.mxu0 0.0
  %1112 = vmatprep.subr.mxu0 0.0
  %1113 = vmatpush1.msra.mxu0 0.0
  %1114 = vmatprep.mubr.f32.mxu0 0.0
  %1115 = vmatmul.mubr.f32.gmra.mrb[0].mxu0 %v1045
  %v1116 = vpop.f32.mrb[0].mxu0
  %v1117 = vadd.f32 %v1036, %v1116
  %v1118 = vpop.f32.mrb[0].mxu0
  %1119 = vmatprep.mubr.f32.mxu0 0.0
  %1120 = vmatmul.mubr.f32.gmra.mrb[0].mxu0 %v1048
  %v1121 = vpop.f32.mrb[0].mxu0
  %v1122 = vadd.f32 %v1041, %v1121
  %v1123 = vpop.f32.mrb[0].mxu0
  %1124 = vdwg.mxu0
  %v1125 = vld [vmem:[%s2 + $0x120] sm:$0x1]
  %v1126 = vlaneseq
  %v1127 = vshrl.u32 %v1126, 7
  %v1128 = vsub.s32 0, %v1127
  %v1129 = vrot.slane %v1125, %v1128
  %v1130 = vadd.f32 %v1117, %v1129
  %v1131 = vadd.f32 %v1122, %v1129
  %v1132 = vadd.f32 %v1130, %v58
  %v1133 = vadd.f32 %v1131, %v59
  %v1134 = vld [vmem:[%s2 + $0x128] sm:$0x1]
  %v1135 = vld [vmem:[%s2 + $0x130] sm:$0x1]
  %v1136 = vsel %vm20, %v1132, 0.0
  %1137 = vadd.xlane.f32.xlu0 %v1136
  %v1138 = vpop.xlane.xlu0 %1137
  %v1139 = vsel %vm20, %v1133, 0.0
  %1140 = vadd.xlane.f32.xlu0 %v1139
  %v1141 = vpop.xlane.xlu0 %1140
  %v1142 = vmul.f32 %v1138, %v27
  %v1143 = vmul.f32 %v1141, %v27
  %v1144 = vsub.f32 %v1132, %v1142
  %v1145 = vsub.f32 %v1133, %v1143
  %v1146 = vmul.f32 %v1144, %v1144
  %v1147 = vmul.f32 %v1145, %v1145
  %v1148 = vsel %vm20, %v1146, 0.0
  %1149 = vadd.xlane.f32.xlu0 %v1148
  %v1150 = vpop.xlane.xlu0 %1149
  %v1151 = vsel %vm20, %v1147, 0.0
  %1152 = vadd.xlane.f32.xlu0 %v1151
  %v1153 = vpop.xlane.xlu0 %1152
  %v1154 = vmul.f32 %v1150, %v27
  %v1155 = vmul.f32 %v1153, %v27
  %v1156 = vadd.f32 %v1154, 1e-05
  %v1157 = vadd.f32 %v1155, 1e-05
  %v1158 = vrsqrt.pop %v1156
  %v1159 = vrsqrt.pop %v1157
  %v1160 = vmul.f32 %v1144, %v1158
  %v1161 = vmul.f32 %v1145, %v1159
  %v1162 = vlaneseq
  %v1163 = vshrl.u32 %v1162, 7
  %v1164 = vsub.s32 0, %v1163
  %v1165 = vrot.slane %v1134, %v1164
  %v1166 = vmul.f32 %v1160, %v1165
  %v1167 = vmul.f32 %v1161, %v1165
  %v1168 = vlaneseq
  %v1169 = vshrl.u32 %v1168, 7
  %v1170 = vsub.s32 0, %v1169
  %v1171 = vrot.slane %v1135, %v1170
  %v1172 = vadd.f32 %v1166, %v1171
  %v1173 = vadd.f32 %v1167, %v1171
  %v1174 = vld [vmem:[%s2 + $0x138] sm:$0xff]
  %v1175 = vld [vmem:[%s2 + $0x140] sm:$0xff]
  %v1176 = vld [vmem:[%s2 + $0x148] sm:$0xff]
  %v1177 = vld [vmem:[%s2 + $0x150] sm:$0xff]
  %v1178 = vld [vmem:[%s2 + $0x158] sm:$0x1]
  %v1179 = vlaneseq
  %v1180 = vshrl.u32 %v1179, 7
  %v1181 = vsub.s32 0, %v1180
  %v1182 = vrot.slane %v1178, %v1181
  %v1184 = vsel %vm20, %v1172, 0
  %v1187 = vsel %vm20, %v1173, 0
  %1189 = vmatprep.subr.mxu0 0.0
  %1190 = vmatpush1.msra.mxu0 %v1174
  %1191 = vmatprep.subr.mxu0 0.0
  %1192 = vmatpush1.msra.mxu0 %v1175
  %1193 = vmatprep.subr.mxu0 0.0
  %1194 = vmatpush1.msra.mxu0 %v1176
  %1195 = vmatprep.subr.mxu0 0.0
  %1196 = vmatpush1.msra.mxu0 %v1177
  %1197 = vmatprep.subr.mxu0 0.0
  %1198 = vmatpush1.msra.mxu0 0.0
  %1199 = vmatprep.subr.mxu0 0.0
  %1200 = vmatpush1.msra.mxu0 0.0
  %1201 = vmatprep.subr.mxu0 0.0
  %1202 = vmatpush1.msra.mxu0 0.0
  %1203 = vmatprep.subr.mxu0 0.0
  %1204 = vmatpush1.msra.mxu0 0.0
  %1205 = vmatprep.subr.mxu0 0.0
  %1206 = vmatpush1.msra.mxu0 0.0
  %1207 = vmatprep.subr.mxu0 0.0
  %1208 = vmatpush1.msra.mxu0 0.0
  %1209 = vmatprep.subr.mxu0 0.0
  %1210 = vmatpush1.msra.mxu0 0.0
  %1211 = vmatprep.subr.mxu0 0.0
  %1212 = vmatpush1.msra.mxu0 0.0
  %1213 = vmatprep.subr.mxu0 0.0
  %1214 = vmatpush1.msra.mxu0 0.0
  %1215 = vmatprep.subr.mxu0 0.0
  %1216 = vmatpush1.msra.mxu0 0.0
  %1217 = vmatprep.subr.mxu0 0.0
  %1218 = vmatpush1.msra.mxu0 0.0
  %1219 = vmatprep.subr.mxu0 0.0
  %1220 = vmatpush1.msra.mxu0 0.0
  %1221 = vmatprep.subr.mxu0 0.0
  %1222 = vmatpush1.msra.mxu0 0.0
  %1223 = vmatprep.subr.mxu0 0.0
  %1224 = vmatpush1.msra.mxu0 0.0
  %1225 = vmatprep.subr.mxu0 0.0
  %1226 = vmatpush1.msra.mxu0 0.0
  %1227 = vmatprep.subr.mxu0 0.0
  %1228 = vmatpush1.msra.mxu0 0.0
  %1229 = vmatprep.subr.mxu0 0.0
  %1230 = vmatpush1.msra.mxu0 0.0
  %1231 = vmatprep.subr.mxu0 0.0
  %1232 = vmatpush1.msra.mxu0 0.0
  %1233 = vmatprep.subr.mxu0 0.0
  %1234 = vmatpush1.msra.mxu0 0.0
  %1235 = vmatprep.subr.mxu0 0.0
  %1236 = vmatpush1.msra.mxu0 0.0
  %1237 = vmatprep.subr.mxu0 0.0
  %1238 = vmatpush1.msra.mxu0 0.0
  %1239 = vmatprep.subr.mxu0 0.0
  %1240 = vmatpush1.msra.mxu0 0.0
  %1241 = vmatprep.subr.mxu0 0.0
  %1242 = vmatpush1.msra.mxu0 0.0
  %1243 = vmatprep.subr.mxu0 0.0
  %1244 = vmatpush1.msra.mxu0 0.0
  %1245 = vmatprep.subr.mxu0 0.0
  %1246 = vmatpush1.msra.mxu0 0.0
  %1247 = vmatprep.subr.mxu0 0.0
  %1248 = vmatpush1.msra.mxu0 0.0
  %1249 = vmatprep.subr.mxu0 0.0
  %1250 = vmatpush1.msra.mxu0 0.0
  %1251 = vmatprep.subr.mxu0 0.0
  %1252 = vmatpush1.msra.mxu0 0.0
  %1253 = vmatprep.mubr.f32.mxu0 0.0
  %1254 = vmatmul.mubr.f32.gmra.mrb[0].mxu0 %v1184
  %v1255 = vpop.f32.mrb[0].mxu0
  %v1256 = vadd.f32 %v1182, %v1255
  %v1257 = vpop.f32.mrb[0].mxu0
  %1258 = vmatprep.mubr.f32.mxu0 0.0
  %1259 = vmatmul.mubr.f32.gmra.mrb[0].mxu0 %v1187
  %v1260 = vpop.f32.mrb[0].mxu0
  %v1261 = vadd.f32 %v1182, %v1260
  %v1262 = vpop.f32.mrb[0].mxu0
  %1263 = vdwg.mxu0
  %v1264 = vmul.f32 %v1256, 0.5
  %v1265 = vmul.f32 %v1261, 0.5
  %v1266 = vmul.f32 %v1256, 0.044715
  %v1267 = vmul.f32 %v1261, 0.044715
  %v1268 = vmul.f32 %v1266, %v1256
  %v1269 = vmul.f32 %v1267, %v1261
  %v1270 = vmul.f32 %v1268, %v1256
  %v1271 = vmul.f32 %v1269, %v1261
  %v1272 = vadd.f32 %v1256, %v1270
  %v1273 = vadd.f32 %v1261, %v1271
  %v1274 = vmul.f32 %v1272, 0.7978846
  %v1275 = vmul.f32 %v1273, 0.7978846
  %v1276 = vtanh.pop %v1274
  %v1277 = vtanh.pop %v1275
  %v1278 = vadd.f32 %v1276, 1.0
  %v1279 = vadd.f32 %v1277, 1.0
  %v1280 = vmul.f32 %v1264, %v1278
  %v1281 = vmul.f32 %v1265, %v1279
  %v1282 = vld [vmem:[%s2 + $0x160] sm:$0xff]
  %v1283 = vld [vmem:[%s2 + $0x168] sm:$0xff]
  %v1284 = vld [vmem:[%s2 + $0x170] sm:$0xff]
  %v1285 = vld [vmem:[%s2 + $0x178] sm:$0xff]
  %v1286 = vld [vmem:[%s2 + $0x180] sm:$0xff]
  %v1287 = vld [vmem:[%s2 + $0x188] sm:$0xff]
  %v1288 = vld [vmem:[%s2 + $0x190] sm:$0xff]
  %v1289 = vld [vmem:[%s2 + $0x198] sm:$0xff]
  %v1290 = vld [vmem:[%s2 + $0x1a0] sm:$0x1]
  %v1291 = vlaneseq
  %v1292 = vshrl.u32 %v1291, 7
  %v1293 = vsub.s32 0, %v1292
  %v1294 = vrot.slane %v1290, %v1293
  %vm1295 = vcmask 523264
  %v1297 = vsel %vm1295, %v1280, 0
  %v1300 = vsel %vm1295, %v1281, 0
  %1302 = vmatprep.subr.mxu0 0.0
  %1303 = vmatpush1.msra.mxu0 %v1282
  %1304 = vmatprep.subr.mxu0 0.0
  %1305 = vmatpush1.msra.mxu0 %v1283
  %1306 = vmatprep.subr.mxu0 0.0
  %1307 = vmatpush1.msra.mxu0 %v1284
  %1308 = vmatprep.subr.mxu0 0.0
  %1309 = vmatpush1.msra.mxu0 %v1285
  %1310 = vmatprep.subr.mxu0 0.0
  %1311 = vmatpush1.msra.mxu0 %v1286
  %1312 = vmatprep.subr.mxu0 0.0
  %1313 = vmatpush1.msra.mxu0 %v1287
  %1314 = vmatprep.subr.mxu0 0.0
  %1315 = vmatpush1.msra.mxu0 %v1288
  %1316 = vmatprep.subr.mxu0 0.0
  %1317 = vmatpush1.msra.mxu0 %v1289
  %1318 = vmatprep.subr.mxu0 0.0
  %1319 = vmatpush1.msra.mxu0 0.0
  %1320 = vmatprep.subr.mxu0 0.0
  %1321 = vmatpush1.msra.mxu0 0.0
  %1322 = vmatprep.subr.mxu0 0.0
  %1323 = vmatpush1.msra.mxu0 0.0
  %1324 = vmatprep.subr.mxu0 0.0
  %1325 = vmatpush1.msra.mxu0 0.0
  %1326 = vmatprep.subr.mxu0 0.0
  %1327 = vmatpush1.msra.mxu0 0.0
  %1328 = vmatprep.subr.mxu0 0.0
  %1329 = vmatpush1.msra.mxu0 0.0
  %1330 = vmatprep.subr.mxu0 0.0
  %1331 = vmatpush1.msra.mxu0 0.0
  %1332 = vmatprep.subr.mxu0 0.0
  %1333 = vmatpush1.msra.mxu0 0.0
  %1334 = vmatprep.subr.mxu0 0.0
  %1335 = vmatpush1.msra.mxu0 0.0
  %1336 = vmatprep.subr.mxu0 0.0
  %1337 = vmatpush1.msra.mxu0 0.0
  %1338 = vmatprep.subr.mxu0 0.0
  %1339 = vmatpush1.msra.mxu0 0.0
  %1340 = vmatprep.subr.mxu0 0.0
  %1341 = vmatpush1.msra.mxu0 0.0
  %1342 = vmatprep.subr.mxu0 0.0
  %1343 = vmatpush1.msra.mxu0 0.0
  %1344 = vmatprep.subr.mxu0 0.0
  %1345 = vmatpush1.msra.mxu0 0.0
  %1346 = vmatprep.subr.mxu0 0.0
  %1347 = vmatpush1.msra.mxu0 0.0
  %1348 = vmatprep.subr.mxu0 0.0
  %1349 = vmatpush1.msra.mxu0 0.0
  %1350 = vmatprep.subr.mxu0 0.0
  %1351 = vmatpush1.msra.mxu0 0.0
  %1352 = vmatprep.subr.mxu0 0.0
  %1353 = vmatpush1.msra.mxu0 0.0
  %1354 = vmatprep.subr.mxu0 0.0
  %1355 = vmatpush1.msra.mxu0 0.0
  %1356 = vmatprep.subr.mxu0 0.0
  %1357 = vmatpush1.msra.mxu0 0.0
  %1358 = vmatprep.subr.mxu0 0.0
  %1359 = vmatpush1.msra.mxu0 0.0
  %1360 = vmatprep.subr.mxu0 0.0
  %1361 = vmatpush1.msra.mxu0 0.0
  %1362 = vmatprep.subr.mxu0 0.0
  %1363 = vmatpush1.msra.mxu0 0.0
  %1364 = vmatprep.subr.mxu0 0.0
  %1365 = vmatpush1.msra.mxu0 0.0
  %1366 = vmatprep.mubr.f32.mxu0 0.0
  %1367 = vmatmul.mubr.f32.gmra.mrb[0].mxu0 %v1297
  %v1368 = vpop.f32.mrb[0].mxu0
  %v1369 = vadd.f32 %v1294, %v1368
  %v1370 = vpop.f32.mrb[0].mxu0
  %1371 = vmatprep.mubr.f32.mxu0 0.0
  %1372 = vmatmul.mubr.f32.gmra.mrb[0].mxu0 %v1300
  %v1373 = vpop.f32.mrb[0].mxu0
  %v1374 = vadd.f32 %v1294, %v1373
  %v1375 = vpop.f32.mrb[0].mxu0
  %1376 = vdwg.mxu0
  %v1377 = vadd.f32 %v1369, %v1172
  %v1378 = vadd.f32 %v1374, %v1173
  %v1379 = vld [vmem:[%s2 + $0x1a8] sm:$0x1]
  %v1380 = vld [vmem:[%s2 + $0x1b0] sm:$0x1]
  %v1381 = vsel %vm20, %v1377, 0.0
  %1382 = vadd.xlane.f32.xlu0 %v1381
  %v1383 = vpop.xlane.xlu0 %1382
  %v1384 = vsel %vm20, %v1378, 0.0
  %1385 = vadd.xlane.f32.xlu0 %v1384
  %v1386 = vpop.xlane.xlu0 %1385
  %v1387 = vmul.f32 %v1383, %v27
  %v1388 = vmul.f32 %v1386, %v27
  %v1389 = vsub.f32 %v1377, %v1387
  %v1390 = vsub.f32 %v1378, %v1388
  %v1391 = vmul.f32 %v1389, %v1389
  %v1392 = vmul.f32 %v1390, %v1390
  %v1393 = vsel %vm20, %v1391, 0.0
  %1394 = vadd.xlane.f32.xlu0 %v1393
  %v1395 = vpop.xlane.xlu0 %1394
  %v1396 = vsel %vm20, %v1392, 0.0
  %1397 = vadd.xlane.f32.xlu0 %v1396
  %v1398 = vpop.xlane.xlu0 %1397
  %v1399 = vmul.f32 %v1395, %v27
  %v1400 = vmul.f32 %v1398, %v27
  %v1401 = vadd.f32 %v1399, 1e-05
  %v1402 = vadd.f32 %v1400, 1e-05
  %v1403 = vrsqrt.pop %v1401
  %v1404 = vrsqrt.pop %v1402
  %v1405 = vmul.f32 %v1389, %v1403
  %v1406 = vmul.f32 %v1390, %v1404
  %v1407 = vlaneseq
  %v1408 = vshrl.u32 %v1407, 7
  %v1409 = vsub.s32 0, %v1408
  %v1410 = vrot.slane %v1379, %v1409
  %v1411 = vmul.f32 %v1405, %v1410
  %v1412 = vmul.f32 %v1406, %v1410
  %v1413 = vlaneseq
  %v1414 = vshrl.u32 %v1413, 7
  %v1415 = vsub.s32 0, %v1414
  %v1416 = vrot.slane %v1380, %v1415
  %v1417 = vadd.f32 %v1411, %v1416
  %v1418 = vadd.f32 %v1412, %v1416
  %v1419 = vld [vmem:[%s2 + $0x1b8] sm:$0xff]
  %v1420 = vld [vmem:[%s2 + $0x1c0] sm:$0xff]
  %v1421 = vld [vmem:[%s2 + $0x1c8] sm:$0xff]
  %v1422 = vld [vmem:[%s2 + $0x1d0] sm:$0xff]
  %v1423 = vld [vmem:[%s2 + $0x1d8] sm:$0x1]
  %v1424 = vlaneseq
  %v1425 = vshrl.u32 %v1424, 7
  %v1426 = vsub.s32 0, %v1425
  %v1427 = vrot.slane %v1423, %v1426
  %v1429 = vsel %vm20, %v1417, 0
  %v1432 = vsel %vm20, %v1418, 0
  %1434 = vmatprep.subr.mxu0 0.0
  %1435 = vmatpush1.msra.mxu0 %v1419
  %1436 = vmatprep.subr.mxu0 0.0
  %1437 = vmatpush1.msra.mxu0 %v1420
  %1438 = vmatprep.subr.mxu0 0.0
  %1439 = vmatpush1.msra.mxu0 %v1421
  %1440 = vmatprep.subr.mxu0 0.0
  %1441 = vmatpush1.msra.mxu0 %v1422
  %1442 = vmatprep.subr.mxu0 0.0
  %1443 = vmatpush1.msra.mxu0 0.0
  %1444 = vmatprep.subr.mxu0 0.0
  %1445 = vmatpush1.msra.mxu0 0.0
  %1446 = vmatprep.subr.mxu0 0.0
  %1447 = vmatpush1.msra.mxu0 0.0
  %1448 = vmatprep.subr.mxu0 0.0
  %1449 = vmatpush1.msra.mxu0 0.0
  %1450 = vmatprep.subr.mxu0 0.0
  %1451 = vmatpush1.msra.mxu0 0.0
  %1452 = vmatprep.subr.mxu0 0.0
  %1453 = vmatpush1.msra.mxu0 0.0
  %1454 = vmatprep.subr.mxu0 0.0
  %1455 = vmatpush1.msra.mxu0 0.0
  %1456 = vmatprep.subr.mxu0 0.0
  %1457 = vmatpush1.msra.mxu0 0.0
  %1458 = vmatprep.subr.mxu0 0.0
  %1459 = vmatpush1.msra.mxu0 0.0
  %1460 = vmatprep.subr.mxu0 0.0
  %1461 = vmatpush1.msra.mxu0 0.0
  %1462 = vmatprep.subr.mxu0 0.0
  %1463 = vmatpush1.msra.mxu0 0.0
  %1464 = vmatprep.subr.mxu0 0.0
  %1465 = vmatpush1.msra.mxu0 0.0
  %1466 = vmatprep.subr.mxu0 0.0
  %1467 = vmatpush1.msra.mxu0 0.0
  %1468 = vmatprep.subr.mxu0 0.0
  %1469 = vmatpush1.msra.mxu0 0.0
  %1470 = vmatprep.subr.mxu0 0.0
  %1471 = vmatpush1.msra.mxu0 0.0
  %1472 = vmatprep.subr.mxu0 0.0
  %1473 = vmatpush1.msra.mxu0 0.0
  %1474 = vmatprep.subr.mxu0 0.0
  %1475 = vmatpush1.msra.mxu0 0.0
  %1476 = vmatprep.subr.mxu0 0.0
  %1477 = vmatpush1.msra.mxu0 0.0
  %1478 = vmatprep.subr.mxu0 0.0
  %1479 = vmatpush1.msra.mxu0 0.0
  %1480 = vmatprep.subr.mxu0 0.0
  %1481 = vmatpush1.msra.mxu0 0.0
  %1482 = vmatprep.subr.mxu0 0.0
  %1483 = vmatpush1.msra.mxu0 0.0
  %1484 = vmatprep.subr.mxu0 0.0
  %1485 = vmatpush1.msra.mxu0 0.0
  %1486 = vmatprep.subr.mxu0 0.0
  %1487 = vmatpush1.msra.mxu0 0.0
  %1488 = vmatprep.subr.mxu0 0.0
  %1489 = vmatpush1.msra.mxu0 0.0
  %1490 = vmatprep.subr.mxu0 0.0
  %1491 = vmatpush1.msra.mxu0 0.0
  %1492 = vmatprep.subr.mxu0 0.0
  %1493 = vmatpush1.msra.mxu0 0.0
  %1494 = vmatprep.subr.mxu0 0.0
  %1495 = vmatpush1.msra.mxu0 0.0
  %1496 = vmatprep.subr.mxu0 0.0
  %1497 = vmatpush1.msra.mxu0 0.0
  %1498 = vmatprep.mubr.f32.mxu0 0.0
  %1499 = vmatmul.mubr.f32.gmra.mrb[0].mxu0 %v1429
  %v1500 = vpop.f32.mrb[0].mxu0
  %v1501 = vadd.f32 %v1427, %v1500
  %v1502 = vpop.f32.mrb[0].mxu0
  %1503 = vmatprep.mubr.f32.mxu0 0.0
  %1504 = vmatmul.mubr.f32.gmra.mrb[0].mxu0 %v1432
  %v1505 = vpop.f32.mrb[0].mxu0
  %v1506 = vadd.f32 %v1427, %v1505
  %v1507 = vpop.f32.mrb[0].mxu0
  %1508 = vdwg.mxu0
  %v1509 = vld [vmem:[%s2 + $0x208] sm:$0xff]
  %v1510 = vld [vmem:[%s2 + $0x210] sm:$0xff]
  %v1511 = vld [vmem:[%s2 + $0x218] sm:$0xff]
  %v1512 = vld [vmem:[%s2 + $0x220] sm:$0xff]
  %v1513 = vld [vmem:[%s2 + $0x228] sm:$0x1]
  %v1514 = vlaneseq
  %v1515 = vshrl.u32 %v1514, 7
  %v1516 = vsub.s32 0, %v1515
  %v1517 = vrot.slane %v1513, %v1516
  %1518 = vmatprep.subr.mxu0 0.0
  %1519 = vmatpush1.msra.mxu0 %v1509
  %1520 = vmatprep.subr.mxu0 0.0
  %1521 = vmatpush1.msra.mxu0 %v1510
  %1522 = vmatprep.subr.mxu0 0.0
  %1523 = vmatpush1.msra.mxu0 %v1511
  %1524 = vmatprep.subr.mxu0 0.0
  %1525 = vmatpush1.msra.mxu0 %v1512
  %1526 = vmatprep.subr.mxu0 0.0
  %1527 = vmatpush1.msra.mxu0 0.0
  %1528 = vmatprep.subr.mxu0 0.0
  %1529 = vmatpush1.msra.mxu0 0.0
  %1530 = vmatprep.subr.mxu0 0.0
  %1531 = vmatpush1.msra.mxu0 0.0
  %1532 = vmatprep.subr.mxu0 0.0
  %1533 = vmatpush1.msra.mxu0 0.0
  %1534 = vmatprep.subr.mxu0 0.0
  %1535 = vmatpush1.msra.mxu0 0.0
  %1536 = vmatprep.subr.mxu0 0.0
  %1537 = vmatpush1.msra.mxu0 0.0
  %1538 = vmatprep.subr.mxu0 0.0
  %1539 = vmatpush1.msra.mxu0 0.0
  %1540 = vmatprep.subr.mxu0 0.0
  %1541 = vmatpush1.msra.mxu0 0.0
  %1542 = vmatprep.subr.mxu0 0.0
  %1543 = vmatpush1.msra.mxu0 0.0
  %1544 = vmatprep.subr.mxu0 0.0
  %1545 = vmatpush1.msra.mxu0 0.0
  %1546 = vmatprep.subr.mxu0 0.0
  %1547 = vmatpush1.msra.mxu0 0.0
  %1548 = vmatprep.subr.mxu0 0.0
  %1549 = vmatpush1.msra.mxu0 0.0
  %1550 = vmatprep.subr.mxu0 0.0
  %1551 = vmatpush1.msra.mxu0 0.0
  %1552 = vmatprep.subr.mxu0 0.0
  %1553 = vmatpush1.msra.mxu0 0.0
  %1554 = vmatprep.subr.mxu0 0.0
  %1555 = vmatpush1.msra.mxu0 0.0
  %1556 = vmatprep.subr.mxu0 0.0
  %1557 = vmatpush1.msra.mxu0 0.0
  %1558 = vmatprep.subr.mxu0 0.0
  %1559 = vmatpush1.msra.mxu0 0.0
  %1560 = vmatprep.subr.mxu0 0.0
  %1561 = vmatpush1.msra.mxu0 0.0
  %1562 = vmatprep.subr.mxu0 0.0
  %1563 = vmatpush1.msra.mxu0 0.0
  %1564 = vmatprep.subr.mxu0 0.0
  %1565 = vmatpush1.msra.mxu0 0.0
  %1566 = vmatprep.subr.mxu0 0.0
  %1567 = vmatpush1.msra.mxu0 0.0
  %1568 = vmatprep.subr.mxu0 0.0
  %1569 = vmatpush1.msra.mxu0 0.0
  %1570 = vmatprep.subr.mxu0 0.0
  %1571 = vmatpush1.msra.mxu0 0.0
  %1572 = vmatprep.subr.mxu0 0.0
  %1573 = vmatpush1.msra.mxu0 0.0
  %1574 = vmatprep.subr.mxu0 0.0
  %1575 = vmatpush1.msra.mxu0 0.0
  %1576 = vmatprep.subr.mxu0 0.0
  %1577 = vmatpush1.msra.mxu0 0.0
  %1578 = vmatprep.subr.mxu0 0.0
  %1579 = vmatpush1.msra.mxu0 0.0
  %1580 = vmatprep.subr.mxu0 0.0
  %1581 = vmatpush1.msra.mxu0 0.0
  %1582 = vmatprep.mubr.f32.mxu0 0.0
  %1583 = vmatmul.mubr.f32.gmra.mrb[0].mxu0 %v1429
  %v1584 = vpop.f32.mrb[0].mxu0
  %v1585 = vadd.f32 %v1517, %v1584
  %v1586 = vpop.f32.mrb[0].mxu0
  %1587 = vmatprep.mubr.f32.mxu0 0.0
  %1588 = vmatmul.mubr.f32.gmra.mrb[0].mxu0 %v1432
  %v1589 = vpop.f32.mrb[0].mxu0
  %v1590 = vadd.f32 %v1517, %v1589
  %v1591 = vpop.f32.mrb[0].mxu0
  %1592 = vdwg.mxu0
  %v1593 = vld [vmem:[%s2 + $0x258] sm:$0xff]
  %v1594 = vld [vmem:[%s2 + $0x260] sm:$0xff]
  %v1595 = vld [vmem:[%s2 + $0x268] sm:$0xff]
  %v1596 = vld [vmem:[%s2 + $0x270] sm:$0xff]
  %v1597 = vld [vmem:[%s2 + $0x278] sm:$0x1]
  %v1598 = vlaneseq
  %v1599 = vshrl.u32 %v1598, 7
  %v1600 = vsub.s32 0, %v1599
  %v1601 = vrot.slane %v1597, %v1600
  %1602 = vmatprep.subr.mxu0 0.0
  %1603 = vmatpush1.msra.mxu0 %v1593
  %1604 = vmatprep.subr.mxu0 0.0
  %1605 = vmatpush1.msra.mxu0 %v1594
  %1606 = vmatprep.subr.mxu0 0.0
  %1607 = vmatpush1.msra.mxu0 %v1595
  %1608 = vmatprep.subr.mxu0 0.0
  %1609 = vmatpush1.msra.mxu0 %v1596
  %1610 = vmatprep.subr.mxu0 0.0
  %1611 = vmatpush1.msra.mxu0 0.0
  %1612 = vmatprep.subr.mxu0 0.0
  %1613 = vmatpush1.msra.mxu0 0.0
  %1614 = vmatprep.subr.mxu0 0.0
  %1615 = vmatpush1.msra.mxu0 0.0
  %1616 = vmatprep.subr.mxu0 0.0
  %1617 = vmatpush1.msra.mxu0 0.0
  %1618 = vmatprep.subr.mxu0 0.0
  %1619 = vmatpush1.msra.mxu0 0.0
  %1620 = vmatprep.subr.mxu0 0.0
  %1621 = vmatpush1.msra.mxu0 0.0
  %1622 = vmatprep.subr.mxu0 0.0
  %1623 = vmatpush1.msra.mxu0 0.0
  %1624 = vmatprep.subr.mxu0 0.0
  %1625 = vmatpush1.msra.mxu0 0.0
  %1626 = vmatprep.subr.mxu0 0.0
  %1627 = vmatpush1.msra.mxu0 0.0
  %1628 = vmatprep.subr.mxu0 0.0
  %1629 = vmatpush1.msra.mxu0 0.0
  %1630 = vmatprep.subr.mxu0 0.0
  %1631 = vmatpush1.msra.mxu0 0.0
  %1632 = vmatprep.subr.mxu0 0.0
  %1633 = vmatpush1.msra.mxu0 0.0
  %1634 = vmatprep.subr.mxu0 0.0
  %1635 = vmatpush1.msra.mxu0 0.0
  %1636 = vmatprep.subr.mxu0 0.0
  %1637 = vmatpush1.msra.mxu0 0.0
  %1638 = vmatprep.subr.mxu0 0.0
  %1639 = vmatpush1.msra.mxu0 0.0
  %1640 = vmatprep.subr.mxu0 0.0
  %1641 = vmatpush1.msra.mxu0 0.0
  %1642 = vmatprep.subr.mxu0 0.0
  %1643 = vmatpush1.msra.mxu0 0.0
  %1644 = vmatprep.subr.mxu0 0.0
  %1645 = vmatpush1.msra.mxu0 0.0
  %1646 = vmatprep.subr.mxu0 0.0
  %1647 = vmatpush1.msra.mxu0 0.0
  %1648 = vmatprep.subr.mxu0 0.0
  %1649 = vmatpush1.msra.mxu0 0.0
  %1650 = vmatprep.subr.mxu0 0.0
  %1651 = vmatpush1.msra.mxu0 0.0
  %1652 = vmatprep.subr.mxu0 0.0
  %1653 = vmatpush1.msra.mxu0 0.0
  %1654 = vmatprep.subr.mxu0 0.0
  %1655 = vmatpush1.msra.mxu0 0.0
  %1656 = vmatprep.subr.mxu0 0.0
  %1657 = vmatpush1.msra.mxu0 0.0
  %1658 = vmatprep.subr.mxu0 0.0
  %1659 = vmatpush1.msra.mxu0 0.0
  %1660 = vmatprep.subr.mxu0 0.0
  %1661 = vmatpush1.msra.mxu0 0.0
  %1662 = vmatprep.subr.mxu0 0.0
  %1663 = vmatpush1.msra.mxu0 0.0
  %1664 = vmatprep.subr.mxu0 0.0
  %1665 = vmatpush1.msra.mxu0 0.0
  %1666 = vmatprep.mubr.f32.mxu0 0.0
  %1667 = vmatmul.mubr.f32.gmra.mrb[0].mxu0 %v1429
  %v1668 = vpop.f32.mrb[0].mxu0
  %v1669 = vadd.f32 %v1601, %v1668
  %v1670 = vpop.f32.mrb[0].mxu0
  %1671 = vmatprep.mubr.f32.mxu0 0.0
  %1672 = vmatmul.mubr.f32.gmra.mrb[0].mxu0 %v1432
  %v1673 = vpop.f32.mrb[0].mxu0
  %v1674 = vadd.f32 %v1601, %v1673
  %v1675 = vpop.f32.mrb[0].mxu0
  %1676 = vdwg.mxu0
  %v1678 = vsel %vm318, %v1501, 0
  %v1681 = vsel %vm318, %v1506, 0
  %v1684 = vsel %vm318, %v1585, 0
  %v1687 = vsel %vm318, %v1590, 0
  %1689 = vmatprep.subr.mxu0 0.0
  %1690 = vmatpush1.xpose.msra.mxu0 %v1684
  %1691 = vmatprep.subr.mxu0 0.0
  %1692 = vmatpush1.xpose.msra.mxu0 %v1687
  %1693 = vmatprep.subr.mxu0 0.0
  %1694 = vmatpush1.xpose.msra.mxu0 0.0
  %1695 = vmatprep.subr.mxu0 0.0
  %1696 = vmatpush1.xpose.msra.mxu0 0.0
  %1697 = vmatprep.subr.mxu0 0.0
  %1698 = vmatpush1.xpose.msra.mxu0 0.0
  %1699 = vmatprep.subr.mxu0 0.0
  %1700 = vmatpush1.xpose.msra.mxu0 0.0
  %1701 = vmatprep.subr.mxu0 0.0
  %1702 = vmatpush1.xpose.msra.mxu0 0.0
  %1703 = vmatprep.subr.mxu0 0.0
  %1704 = vmatpush1.xpose.msra.mxu0 0.0
  %1705 = vmatprep.subr.mxu0 0.0
  %1706 = vmatpush1.xpose.msra.mxu0 0.0
  %1707 = vmatprep.subr.mxu0 0.0
  %1708 = vmatpush1.xpose.msra.mxu0 0.0
  %1709 = vmatprep.subr.mxu0 0.0
  %1710 = vmatpush1.xpose.msra.mxu0 0.0
  %1711 = vmatprep.subr.mxu0 0.0
  %1712 = vmatpush1.xpose.msra.mxu0 0.0
  %1713 = vmatprep.subr.mxu0 0.0
  %1714 = vmatpush1.xpose.msra.mxu0 0.0
  %1715 = vmatprep.subr.mxu0 0.0
  %1716 = vmatpush1.xpose.msra.mxu0 0.0
  %1717 = vmatprep.subr.mxu0 0.0
  %1718 = vmatpush1.xpose.msra.mxu0 0.0
  %1719 = vmatprep.subr.mxu0 0.0
  %1720 = vmatpush1.xpose.msra.mxu0 0.0
  %1721 = vmatprep.subr.mxu0 0.0
  %1722 = vmatpush1.xpose.msra.mxu0 0.0
  %1723 = vmatprep.subr.mxu0 0.0
  %1724 = vmatpush1.xpose.msra.mxu0 0.0
  %1725 = vmatprep.subr.mxu0 0.0
  %1726 = vmatpush1.xpose.msra.mxu0 0.0
  %1727 = vmatprep.subr.mxu0 0.0
  %1728 = vmatpush1.xpose.msra.mxu0 0.0
  %1729 = vmatprep.subr.mxu0 0.0
  %1730 = vmatpush1.xpose.msra.mxu0 0.0
  %1731 = vmatprep.subr.mxu0 0.0
  %1732 = vmatpush1.xpose.msra.mxu0 0.0
  %1733 = vmatprep.subr.mxu0 0.0
  %1734 = vmatpush1.xpose.msra.mxu0 0.0
  %1735 = vmatprep.subr.mxu0 0.0
  %1736 = vmatpush1.xpose.msra.mxu0 0.0
  %1737 = vmatprep.subr.mxu0 0.0
  %1738 = vmatpush1.xpose.msra.mxu0 0.0
  %1739 = vmatprep.subr.mxu0 0.0
  %1740 = vmatpush1.xpose.msra.mxu0 0.0
  %1741 = vmatprep.subr.mxu0 0.0
  %1742 = vmatpush1.xpose.msra.mxu0 0.0
  %1743 = vmatprep.subr.mxu0 0.0
  %1744 = vmatpush1.xpose.msra.mxu0 0.0
  %1745 = vmatprep.subr.mxu0 0.0
  %1746 = vmatpush1.xpose.msra.mxu0 0.0
  %1747 = vmatprep.subr.mxu0 0.0
  %1748 = vmatpush1.xpose.msra.mxu0 0.0
  %1749 = vmatprep.subr.mxu0 0.0
  %1750 = vmatpush1.xpose.msra.mxu0 0.0
  %1751 = vmatprep.subr.mxu0 0.0
  %1752 = vmatpush1.xpose.msra.mxu0 0.0
  %1753 = vmatprep.mubr.f32.mxu0 0.0
  %1754 = vmatmul.mubr.f32.gmra.mrb[0].mxu0 %v1678
  %v1755 = vpop.f32.mrb[0].mxu0
  %v1756 = vadd.f32 0.0, %v1755
  %v1757 = vpop.f32.mrb[0].mxu0
  %1758 = vmatprep.mubr.f32.mxu0 0.0
  %1759 = vmatmul.mubr.f32.gmra.mrb[0].mxu0 %v1681
  %v1760 = vpop.f32.mrb[0].mxu0
  %v1761 = vadd.f32 0.0, %v1760
  %v1762 = vpop.f32.mrb[0].mxu0
  %1763 = vdwg.mxu0
  %v1764 = vmul.f32 %v1756, 0.25
  %v1765 = vmul.f32 %v1761, 0.25
  %v1766 = vadd.f32 %v1764, %v16
  %v1767 = vadd.f32 %v1765, %v17
  %v1768 = vsel %vm318, %v1766, -inf
  %1769 = vmax.xlane.f32.xlu0 %v1768
  %v1770 = vpop.xlane.xlu0 %1769
  %v1771 = vsel %vm318, %v1767, -inf
  %1772 = vmax.xlane.f32.xlu0 %v1771
  %v1773 = vpop.xlane.xlu0 %1772
  %v1774 = vsub.f32 %v1766, %v1770
  %v1775 = vsub.f32 %v1767, %v1773
  %v1776 = vmul.f32 %v1774, 1.442695
  %v1777 = vpow.pop %v1776
  %v1778 = vmul.f32 %v1775, 1.442695
  %v1779 = vpow.pop %v1778
  %v1780 = vsel %vm318, %v1777, 0.0
  %1781 = vadd.xlane.f32.xlu0 %v1780
  %v1782 = vpop.xlane.xlu0 %1781
  %v1783 = vsel %vm318, %v1779, 0.0
  %1784 = vadd.xlane.f32.xlu0 %v1783
  %v1785 = vpop.xlane.xlu0 %1784
  %v1786 = vrcp.pop %v1782
  %v1787 = vrcp.pop %v1785
  %v1788 = vmul.f32 %v1777, %v1786
  %v1789 = vmul.f32 %v1779, %v1787
  %v1791 = vsel %vm318, %v1788, 0
  %v1794 = vsel %vm318, %v1789, 0
  %1796 = vmatprep.subr.mxu0 0.0
  %1797 = vmatpush1.msra.mxu0 %v1669
  %1798 = vmatprep.subr.mxu0 0.0
  %1799 = vmatpush1.msra.mxu0 %v1674
  %1800 = vmatprep.subr.mxu0 0.0
  %1801 = vmatpush1.msra.mxu0 0.0
  %1802 = vmatprep.subr.mxu0 0.0
  %1803 = vmatpush1.msra.mxu0 0.0
  %1804 = vmatprep.subr.mxu0 0.0
  %1805 = vmatpush1.msra.mxu0 0.0
  %1806 = vmatprep.subr.mxu0 0.0
  %1807 = vmatpush1.msra.mxu0 0.0
  %1808 = vmatprep.subr.mxu0 0.0
  %1809 = vmatpush1.msra.mxu0 0.0
  %1810 = vmatprep.subr.mxu0 0.0
  %1811 = vmatpush1.msra.mxu0 0.0
  %1812 = vmatprep.subr.mxu0 0.0
  %1813 = vmatpush1.msra.mxu0 0.0
  %1814 = vmatprep.subr.mxu0 0.0
  %1815 = vmatpush1.msra.mxu0 0.0
  %1816 = vmatprep.subr.mxu0 0.0
  %1817 = vmatpush1.msra.mxu0 0.0
  %1818 = vmatprep.subr.mxu0 0.0
  %1819 = vmatpush1.msra.mxu0 0.0
  %1820 = vmatprep.subr.mxu0 0.0
  %1821 = vmatpush1.msra.mxu0 0.0
  %1822 = vmatprep.subr.mxu0 0.0
  %1823 = vmatpush1.msra.mxu0 0.0
  %1824 = vmatprep.subr.mxu0 0.0
  %1825 = vmatpush1.msra.mxu0 0.0
  %1826 = vmatprep.subr.mxu0 0.0
  %1827 = vmatpush1.msra.mxu0 0.0
  %1828 = vmatprep.subr.mxu0 0.0
  %1829 = vmatpush1.msra.mxu0 0.0
  %1830 = vmatprep.subr.mxu0 0.0
  %1831 = vmatpush1.msra.mxu0 0.0
  %1832 = vmatprep.subr.mxu0 0.0
  %1833 = vmatpush1.msra.mxu0 0.0
  %1834 = vmatprep.subr.mxu0 0.0
  %1835 = vmatpush1.msra.mxu0 0.0
  %1836 = vmatprep.subr.mxu0 0.0
  %1837 = vmatpush1.msra.mxu0 0.0
  %1838 = vmatprep.subr.mxu0 0.0
  %1839 = vmatpush1.msra.mxu0 0.0
  %1840 = vmatprep.subr.mxu0 0.0
  %1841 = vmatpush1.msra.mxu0 0.0
  %1842 = vmatprep.subr.mxu0 0.0
  %1843 = vmatpush1.msra.mxu0 0.0
  %1844 = vmatprep.subr.mxu0 0.0
  %1845 = vmatpush1.msra.mxu0 0.0
  %1846 = vmatprep.subr.mxu0 0.0
  %1847 = vmatpush1.msra.mxu0 0.0
  %1848 = vmatprep.subr.mxu0 0.0
  %1849 = vmatpush1.msra.mxu0 0.0
  %1850 = vmatprep.subr.mxu0 0.0
  %1851 = vmatpush1.msra.mxu0 0.0
  %1852 = vmatprep.subr.mxu0 0.0
  %1853 = vmatpush1.msra.mxu0 0.0
  %1854 = vmatprep.subr.mxu0 0.0
  %1855 = vmatpush1.msra.mxu0 0.0
  %1856 = vmatprep.subr.mxu0 0.0
  %1857 = vmatpush1.msra.mxu0 0.0
  %1858 = vmatprep.subr.mxu0 0.0
  %1859 = vmatpush1.msra.mxu0 0.0
  %1860 = vmatprep.mubr.f32.mxu0 0.0
  %1861 = vmatmul.mubr.f32.gmra.mrb[0].mxu0 %v1791
  %v1862 = vpop.f32.mrb[0].mxu0
  %v1863 = vadd.f32 0.0, %v1862
  %v1864 = vpop.f32.mrb[0].mxu0
  %1865 = vmatprep.mubr.f32.mxu0 0.0
  %1866 = vmatmul.mubr.f32.gmra.mrb[0].mxu0 %v1794
  %v1867 = vpop.f32.mrb[0].mxu0
  %v1868 = vadd.f32 0.0, %v1867
  %v1869 = vpop.f32.mrb[0].mxu0
  %1870 = vdwg.mxu0
  %v1871 = vld [vmem:[%s2 + $0x2a8] sm:$0xff]
  %v1872 = vld [vmem:[%s2 + $0x2b0] sm:$0xff]
  %v1873 = vld [vmem:[%s2 + $0x1e0] sm:$0xff]
  %v1874 = vld [vmem:[%s2 + $0x1e8] sm:$0xff]
  %v1875 = vld [vmem:[%s2 + $0x1f0] sm:$0xff]
  %v1876 = vld [vmem:[%s2 + $0x1f8] sm:$0xff]
  %v1877 = vld [vmem:[%s2 + $0x200] sm:$0x1]
  %v1878 = vlaneseq
  %v1879 = vshrl.u32 %v1878, 7
  %v1880 = vsub.s32 0, %v1879
  %v1881 = vrot.slane %v1877, %v1880
  %1882 = vmatprep.subr.mxu0 0.0
  %1883 = vmatpush1.msra.mxu0 %v1873
  %1884 = vmatprep.subr.mxu0 0.0
  %1885 = vmatpush1.msra.mxu0 %v1874
  %1886 = vmatprep.subr.mxu0 0.0
  %1887 = vmatpush1.msra.mxu0 %v1875
  %1888 = vmatprep.subr.mxu0 0.0
  %1889 = vmatpush1.msra.mxu0 %v1876
  %1890 = vmatprep.subr.mxu0 0.0
  %1891 = vmatpush1.msra.mxu0 0.0
  %1892 = vmatprep.subr.mxu0 0.0
  %1893 = vmatpush1.msra.mxu0 0.0
  %1894 = vmatprep.subr.mxu0 0.0
  %1895 = vmatpush1.msra.mxu0 0.0
  %1896 = vmatprep.subr.mxu0 0.0
  %1897 = vmatpush1.msra.mxu0 0.0
  %1898 = vmatprep.subr.mxu0 0.0
  %1899 = vmatpush1.msra.mxu0 0.0
  %1900 = vmatprep.subr.mxu0 0.0
  %1901 = vmatpush1.msra.mxu0 0.0
  %1902 = vmatprep.subr.mxu0 0.0
  %1903 = vmatpush1.msra.mxu0 0.0
  %1904 = vmatprep.subr.mxu0 0.0
  %1905 = vmatpush1.msra.mxu0 0.0
  %1906 = vmatprep.subr.mxu0 0.0
  %1907 = vmatpush1.msra.mxu0 0.0
  %1908 = vmatprep.subr.mxu0 0.0
  %1909 = vmatpush1.msra.mxu0 0.0
  %1910 = vmatprep.subr.mxu0 0.0
  %1911 = vmatpush1.msra.mxu0 0.0
  %1912 = vmatprep.subr.mxu0 0.0
  %1913 = vmatpush1.msra.mxu0 0.0
  %1914 = vmatprep.subr.mxu0 0.0
  %1915 = vmatpush1.msra.mxu0 0.0
  %1916 = vmatprep.subr.mxu0 0.0
  %1917 = vmatpush1.msra.mxu0 0.0
  %1918 = vmatprep.subr.mxu0 0.0
  %1919 = vmatpush1.msra.mxu0 0.0
  %1920 = vmatprep.subr.mxu0 0.0
  %1921 = vmatpush1.msra.mxu0 0.0
  %1922 = vmatprep.subr.mxu0 0.0
  %1923 = vmatpush1.msra.mxu0 0.0
  %1924 = vmatprep.subr.mxu0 0.0
  %1925 = vmatpush1.msra.mxu0 0.0
  %1926 = vmatprep.subr.mxu0 0.0
  %1927 = vmatpush1.msra.mxu0 0.0
  %1928 = vmatprep.subr.mxu0 0.0
  %1929 = vmatpush1.msra.mxu0 0.0
  %1930 = vmatprep.subr.mxu0 0.0
  %1931 = vmatpush1.msra.mxu0 0.0
  %1932 = vmatprep.subr.mxu0 0.0
  %1933 = vmatpush1.msra.mxu0 0.0
  %1934 = vmatprep.subr.mxu0 0.0
  %1935 = vmatpush1.msra.mxu0 0.0
  %1936 = vmatprep.subr.mxu0 0.0
  %1937 = vmatpush1.msra.mxu0 0.0
  %1938 = vmatprep.subr.mxu0 0.0
  %1939 = vmatpush1.msra.mxu0 0.0
  %1940 = vmatprep.subr.mxu0 0.0
  %1941 = vmatpush1.msra.mxu0 0.0
  %1942 = vmatprep.subr.mxu0 0.0
  %1943 = vmatpush1.msra.mxu0 0.0
  %1944 = vmatprep.subr.mxu0 0.0
  %1945 = vmatpush1.msra.mxu0 0.0
  %1946 = vmatprep.mubr.f32.mxu0 0.0
  %1947 = vmatmul.mubr.f32.gmra.mrb[0].mxu0 %v1429
  %v1948 = vpop.f32.mrb[0].mxu0
  %v1949 = vadd.f32 %v1881, %v1948
  %v1950 = vpop.f32.mrb[0].mxu0
  %1951 = vmatprep.mubr.f32.mxu0 0.0
  %1952 = vmatmul.mubr.f32.gmra.mrb[0].mxu0 %v1432
  %v1953 = vpop.f32.mrb[0].mxu0
  %v1954 = vadd.f32 %v1881, %v1953
  %v1955 = vpop.f32.mrb[0].mxu0
  %1956 = vdwg.mxu0
  %v1957 = vld [vmem:[%s2 + $0x230] sm:$0xff]
  %v1958 = vld [vmem:[%s2 + $0x238] sm:$0xff]
  %v1959 = vld [vmem:[%s2 + $0x240] sm:$0xff]
  %v1960 = vld [vmem:[%s2 + $0x248] sm:$0xff]
  %v1961 = vld [vmem:[%s2 + $0x250] sm:$0x1]
  %v1962 = vlaneseq
  %v1963 = vshrl.u32 %v1962, 7
  %v1964 = vsub.s32 0, %v1963
  %v1965 = vrot.slane %v1961, %v1964
  %1966 = vmatprep.subr.mxu0 0.0
  %1967 = vmatpush1.msra.mxu0 %v1957
  %1968 = vmatprep.subr.mxu0 0.0
  %1969 = vmatpush1.msra.mxu0 %v1958
  %1970 = vmatprep.subr.mxu0 0.0
  %1971 = vmatpush1.msra.mxu0 %v1959
  %1972 = vmatprep.subr.mxu0 0.0
  %1973 = vmatpush1.msra.mxu0 %v1960
  %1974 = vmatprep.subr.mxu0 0.0
  %1975 = vmatpush1.msra.mxu0 0.0
  %1976 = vmatprep.subr.mxu0 0.0
  %1977 = vmatpush1.msra.mxu0 0.0
  %1978 = vmatprep.subr.mxu0 0.0
  %1979 = vmatpush1.msra.mxu0 0.0
  %1980 = vmatprep.subr.mxu0 0.0
  %1981 = vmatpush1.msra.mxu0 0.0
  %1982 = vmatprep.subr.mxu0 0.0
  %1983 = vmatpush1.msra.mxu0 0.0
  %1984 = vmatprep.subr.mxu0 0.0
  %1985 = vmatpush1.msra.mxu0 0.0
  %1986 = vmatprep.subr.mxu0 0.0
  %1987 = vmatpush1.msra.mxu0 0.0
  %1988 = vmatprep.subr.mxu0 0.0
  %1989 = vmatpush1.msra.mxu0 0.0
  %1990 = vmatprep.subr.mxu0 0.0
  %1991 = vmatpush1.msra.mxu0 0.0
  %1992 = vmatprep.subr.mxu0 0.0
  %1993 = vmatpush1.msra.mxu0 0.0
  %1994 = vmatprep.subr.mxu0 0.0
  %1995 = vmatpush1.msra.mxu0 0.0
  %1996 = vmatprep.subr.mxu0 0.0
  %1997 = vmatpush1.msra.mxu0 0.0
  %1998 = vmatprep.subr.mxu0 0.0
  %1999 = vmatpush1.msra.mxu0 0.0
  %2000 = vmatprep.subr.mxu0 0.0
  %2001 = vmatpush1.msra.mxu0 0.0
  %2002 = vmatprep.subr.mxu0 0.0
  %2003 = vmatpush1.msra.mxu0 0.0
  %2004 = vmatprep.subr.mxu0 0.0
  %2005 = vmatpush1.msra.mxu0 0.0
  %2006 = vmatprep.subr.mxu0 0.0
  %2007 = vmatpush1.msra.mxu0 0.0
  %2008 = vmatprep.subr.mxu0 0.0
  %2009 = vmatpush1.msra.mxu0 0.0
  %2010 = vmatprep.subr.mxu0 0.0
  %2011 = vmatpush1.msra.mxu0 0.0
  %2012 = vmatprep.subr.mxu0 0.0
  %2013 = vmatpush1.msra.mxu0 0.0
  %2014 = vmatprep.subr.mxu0 0.0
  %2015 = vmatpush1.msra.mxu0 0.0
  %2016 = vmatprep.subr.mxu0 0.0
  %2017 = vmatpush1.msra.mxu0 0.0
  %2018 = vmatprep.subr.mxu0 0.0
  %2019 = vmatpush1.msra.mxu0 0.0
  %2020 = vmatprep.subr.mxu0 0.0
  %2021 = vmatpush1.msra.mxu0 0.0
  %2022 = vmatprep.subr.mxu0 0.0
  %2023 = vmatpush1.msra.mxu0 0.0
  %2024 = vmatprep.subr.mxu0 0.0
  %2025 = vmatpush1.msra.mxu0 0.0
  %2026 = vmatprep.subr.mxu0 0.0
  %2027 = vmatpush1.msra.mxu0 0.0
  %2028 = vmatprep.subr.mxu0 0.0
  %2029 = vmatpush1.msra.mxu0 0.0
  %2030 = vmatprep.mubr.f32.mxu0 0.0
  %2031 = vmatmul.mubr.f32.gmra.mrb[0].mxu0 %v1429
  %v2032 = vpop.f32.mrb[0].mxu0
  %v2033 = vadd.f32 %v1965, %v2032
  %v2034 = vpop.f32.mrb[0].mxu0
  %2035 = vmatprep.mubr.f32.mxu0 0.0
  %2036 = vmatmul.mubr.f32.gmra.mrb[0].mxu0 %v1432
  %v2037 = vpop.f32.mrb[0].mxu0
  %v2038 = vadd.f32 %v1965, %v2037
  %v2039 = vpop.f32.mrb[0].mxu0
  %2040 = vdwg.mxu0
  %v2041 = vld [vmem:[%s2 + $0x280] sm:$0xff]
  %v2042 = vld [vmem:[%s2 + $0x288] sm:$0xff]
  %v2043 = vld [vmem:[%s2 + $0x290] sm:$0xff]
  %v2044 = vld [vmem:[%s2 + $0x298] sm:$0xff]
  %v2045 = vld [vmem:[%s2 + $0x2a0] sm:$0x1]
  %v2046 = vlaneseq
  %v2047 = vshrl.u32 %v2046, 7
  %v2048 = vsub.s32 0, %v2047
  %v2049 = vrot.slane %v2045, %v2048
  %2050 = vmatprep.subr.mxu0 0.0
  %2051 = vmatpush1.msra.mxu0 %v2041
  %2052 = vmatprep.subr.mxu0 0.0
  %2053 = vmatpush1.msra.mxu0 %v2042
  %2054 = vmatprep.subr.mxu0 0.0
  %2055 = vmatpush1.msra.mxu0 %v2043
  %2056 = vmatprep.subr.mxu0 0.0
  %2057 = vmatpush1.msra.mxu0 %v2044
  %2058 = vmatprep.subr.mxu0 0.0
  %2059 = vmatpush1.msra.mxu0 0.0
  %2060 = vmatprep.subr.mxu0 0.0
  %2061 = vmatpush1.msra.mxu0 0.0
  %2062 = vmatprep.subr.mxu0 0.0
  %2063 = vmatpush1.msra.mxu0 0.0
  %2064 = vmatprep.subr.mxu0 0.0
  %2065 = vmatpush1.msra.mxu0 0.0
  %2066 = vmatprep.subr.mxu0 0.0
  %2067 = vmatpush1.msra.mxu0 0.0
  %2068 = vmatprep.subr.mxu0 0.0
  %2069 = vmatpush1.msra.mxu0 0.0
  %2070 = vmatprep.subr.mxu0 0.0
  %2071 = vmatpush1.msra.mxu0 0.0
  %2072 = vmatprep.subr.mxu0 0.0
  %2073 = vmatpush1.msra.mxu0 0.0
  %2074 = vmatprep.subr.mxu0 0.0
  %2075 = vmatpush1.msra.mxu0 0.0
  %2076 = vmatprep.subr.mxu0 0.0
  %2077 = vmatpush1.msra.mxu0 0.0
  %2078 = vmatprep.subr.mxu0 0.0
  %2079 = vmatpush1.msra.mxu0 0.0
  %2080 = vmatprep.subr.mxu0 0.0
  %2081 = vmatpush1.msra.mxu0 0.0
  %2082 = vmatprep.subr.mxu0 0.0
  %2083 = vmatpush1.msra.mxu0 0.0
  %2084 = vmatprep.subr.mxu0 0.0
  %2085 = vmatpush1.msra.mxu0 0.0
  %2086 = vmatprep.subr.mxu0 0.0
  %2087 = vmatpush1.msra.mxu0 0.0
  %2088 = vmatprep.subr.mxu0 0.0
  %2089 = vmatpush1.msra.mxu0 0.0
  %2090 = vmatprep.subr.mxu0 0.0
  %2091 = vmatpush1.msra.mxu0 0.0
  %2092 = vmatprep.subr.mxu0 0.0
  %2093 = vmatpush1.msra.mxu0 0.0
  %2094 = vmatprep.subr.mxu0 0.0
  %2095 = vmatpush1.msra.mxu0 0.0
  %2096 = vmatprep.subr.mxu0 0.0
  %2097 = vmatpush1.msra.mxu0 0.0
  %2098 = vmatprep.subr.mxu0 0.0
  %2099 = vmatpush1.msra.mxu0 0.0
  %2100 = vmatprep.subr.mxu0 0.0
  %2101 = vmatpush1.msra.mxu0 0.0
  %2102 = vmatprep.subr.mxu0 0.0
  %2103 = vmatpush1.msra.mxu0 0.0
  %2104 = vmatprep.subr.mxu0 0.0
  %2105 = vmatpush1.msra.mxu0 0.0
  %2106 = vmatprep.subr.mxu0 0.0
  %2107 = vmatpush1.msra.mxu0 0.0
  %2108 = vmatprep.subr.mxu0 0.0
  %2109 = vmatpush1.msra.mxu0 0.0
  %2110 = vmatprep.subr.mxu0 0.0
  %2111 = vmatpush1.msra.mxu0 0.0
  %2112 = vmatprep.subr.mxu0 0.0
  %2113 = vmatpush1.msra.mxu0 0.0
  %2114 = vmatprep.mubr.f32.mxu0 0.0
  %2115 = vmatmul.mubr.f32.gmra.mrb[0].mxu0 %v1429
  %v2116 = vpop.f32.mrb[0].mxu0
  %v2117 = vadd.f32 %v2049, %v2116
  %v2118 = vpop.f32.mrb[0].mxu0
  %2119 = vmatprep.mubr.f32.mxu0 0.0
  %2120 = vmatmul.mubr.f32.gmra.mrb[0].mxu0 %v1432
  %v2121 = vpop.f32.mrb[0].mxu0
  %v2122 = vadd.f32 %v2049, %v2121
  %v2123 = vpop.f32.mrb[0].mxu0
  %2124 = vdwg.mxu0
  %v2126 = vsel %vm318, %v1949, 0
  %v2129 = vsel %vm318, %v1954, 0
  %v2132 = vsel %vm318, %v2033, 0
  %v2135 = vsel %vm318, %v2038, 0
  %2137 = vmatprep.subr.mxu0 0.0
  %2138 = vmatpush1.xpose.msra.mxu0 %v2132
  %2139 = vmatprep.subr.mxu0 0.0
  %2140 = vmatpush1.xpose.msra.mxu0 %v2135
  %2141 = vmatprep.subr.mxu0 0.0
  %2142 = vmatpush1.xpose.msra.mxu0 0.0
  %2143 = vmatprep.subr.mxu0 0.0
  %2144 = vmatpush1.xpose.msra.mxu0 0.0
  %2145 = vmatprep.subr.mxu0 0.0
  %2146 = vmatpush1.xpose.msra.mxu0 0.0
  %2147 = vmatprep.subr.mxu0 0.0
  %2148 = vmatpush1.xpose.msra.mxu0 0.0
  %2149 = vmatprep.subr.mxu0 0.0
  %2150 = vmatpush1.xpose.msra.mxu0 0.0
  %2151 = vmatprep.subr.mxu0 0.0
  %2152 = vmatpush1.xpose.msra.mxu0 0.0
  %2153 = vmatprep.subr.mxu0 0.0
  %2154 = vmatpush1.xpose.msra.mxu0 0.0
  %2155 = vmatprep.subr.mxu0 0.0
  %2156 = vmatpush1.xpose.msra.mxu0 0.0
  %2157 = vmatprep.subr.mxu0 0.0
  %2158 = vmatpush1.xpose.msra.mxu0 0.0
  %2159 = vmatprep.subr.mxu0 0.0
  %2160 = vmatpush1.xpose.msra.mxu0 0.0
  %2161 = vmatprep.subr.mxu0 0.0
  %2162 = vmatpush1.xpose.msra.mxu0 0.0
  %2163 = vmatprep.subr.mxu0 0.0
  %2164 = vmatpush1.xpose.msra.mxu0 0.0
  %2165 = vmatprep.subr.mxu0 0.0
  %2166 = vmatpush1.xpose.msra.mxu0 0.0
  %2167 = vmatprep.subr.mxu0 0.0
  %2168 = vmatpush1.xpose.msra.mxu0 0.0
  %2169 = vmatprep.subr.mxu0 0.0
  %2170 = vmatpush1.xpose.msra.mxu0 0.0
  %2171 = vmatprep.subr.mxu0 0.0
  %2172 = vmatpush1.xpose.msra.mxu0 0.0
  %2173 = vmatprep.subr.mxu0 0.0
  %2174 = vmatpush1.xpose.msra.mxu0 0.0
  %2175 = vmatprep.subr.mxu0 0.0
  %2176 = vmatpush1.xpose.msra.mxu0 0.0
  %2177 = vmatprep.subr.mxu0 0.0
  %2178 = vmatpush1.xpose.msra.mxu0 0.0
  %2179 = vmatprep.subr.mxu0 0.0
  %2180 = vmatpush1.xpose.msra.mxu0 0.0
  %2181 = vmatprep.subr.mxu0 0.0
  %2182 = vmatpush1.xpose.msra.mxu0 0.0
  %2183 = vmatprep.subr.mxu0 0.0
  %2184 = vmatpush1.xpose.msra.mxu0 0.0
  %2185 = vmatprep.subr.mxu0 0.0
  %2186 = vmatpush1.xpose.msra.mxu0 0.0
  %2187 = vmatprep.subr.mxu0 0.0
  %2188 = vmatpush1.xpose.msra.mxu0 0.0
  %2189 = vmatprep.subr.mxu0 0.0
  %2190 = vmatpush1.xpose.msra.mxu0 0.0
  %2191 = vmatprep.subr.mxu0 0.0
  %2192 = vmatpush1.xpose.msra.mxu0 0.0
  %2193 = vmatprep.subr.mxu0 0.0
  %2194 = vmatpush1.xpose.msra.mxu0 0.0
  %2195 = vmatprep.subr.mxu0 0.0
  %2196 = vmatpush1.xpose.msra.mxu0 0.0
  %2197 = vmatprep.subr.mxu0 0.0
  %2198 = vmatpush1.xpose.msra.mxu0 0.0
  %2199 = vmatprep.subr.mxu0 0.0
  %2200 = vmatpush1.xpose.msra.mxu0 0.0
  %2201 = vmatprep.mubr.f32.mxu0 0.0
  %2202 = vmatmul.mubr.f32.gmra.mrb[0].mxu0 %v2126
  %v2203 = vpop.f32.mrb[0].mxu0
  %v2204 = vadd.f32 0.0, %v2203
  %v2205 = vpop.f32.mrb[0].mxu0
  %2206 = vmatprep.mubr.f32.mxu0 0.0
  %2207 = vmatmul.mubr.f32.gmra.mrb[0].mxu0 %v2129
  %v2208 = vpop.f32.mrb[0].mxu0
  %v2209 = vadd.f32 0.0, %v2208
  %v2210 = vpop.f32.mrb[0].mxu0
  %2211 = vdwg.mxu0
  %v2212 = vmul.f32 %v2204, 0.25
  %v2213 = vmul.f32 %v2209, 0.25
  %v2214 = vadd.f32 %v2212, %v16
  %v2215 = vadd.f32 %v2213, %v17
  %v2216 = vsel %vm318, %v2214, -inf
  %2217 = vmax.xlane.f32.xlu0 %v2216
  %v2218 = vpop.xlane.xlu0 %2217
  %v2219 = vsel %vm318, %v2215, -inf
  %2220 = vmax.xlane.f32.xlu0 %v2219
  %v2221 = vpop.xlane.xlu0 %2220
  %v2222 = vsub.f32 %v2214, %v2218
  %v2223 = vsub.f32 %v2215, %v2221
  %v2224 = vmul.f32 %v2222, 1.442695
  %v2225 = vpow.pop %v2224
  %v2226 = vmul.f32 %v2223, 1.442695
  %v2227 = vpow.pop %v2226
  %v2228 = vsel %vm318, %v2225, 0.0
  %2229 = vadd.xlane.f32.xlu0 %v2228
  %v2230 = vpop.xlane.xlu0 %2229
  %v2231 = vsel %vm318, %v2227, 0.0
  %2232 = vadd.xlane.f32.xlu0 %v2231
  %v2233 = vpop.xlane.xlu0 %2232
  %v2234 = vrcp.pop %v2230
  %v2235 = vrcp.pop %v2233
  %v2236 = vmul.f32 %v2225, %v2234
  %v2237 = vmul.f32 %v2227, %v2235
  %v2239 = vsel %vm318, %v2236, 0
  %v2242 = vsel %vm318, %v2237, 0
  %2244 = vmatprep.subr.mxu0 0.0
  %2245 = vmatpush1.msra.mxu0 %v2117
  %2246 = vmatprep.subr.mxu0 0.0
  %2247 = vmatpush1.msra.mxu0 %v2122
  %2248 = vmatprep.subr.mxu0 0.0
  %2249 = vmatpush1.msra.mxu0 0.0
  %2250 = vmatprep.subr.mxu0 0.0
  %2251 = vmatpush1.msra.mxu0 0.0
  %2252 = vmatprep.subr.mxu0 0.0
  %2253 = vmatpush1.msra.mxu0 0.0
  %2254 = vmatprep.subr.mxu0 0.0
  %2255 = vmatpush1.msra.mxu0 0.0
  %2256 = vmatprep.subr.mxu0 0.0
  %2257 = vmatpush1.msra.mxu0 0.0
  %2258 = vmatprep.subr.mxu0 0.0
  %2259 = vmatpush1.msra.mxu0 0.0
  %2260 = vmatprep.subr.mxu0 0.0
  %2261 = vmatpush1.msra.mxu0 0.0
  %2262 = vmatprep.subr.mxu0 0.0
  %2263 = vmatpush1.msra.mxu0 0.0
  %2264 = vmatprep.subr.mxu0 0.0
  %2265 = vmatpush1.msra.mxu0 0.0
  %2266 = vmatprep.subr.mxu0 0.0
  %2267 = vmatpush1.msra.mxu0 0.0
  %2268 = vmatprep.subr.mxu0 0.0
  %2269 = vmatpush1.msra.mxu0 0.0
  %2270 = vmatprep.subr.mxu0 0.0
  %2271 = vmatpush1.msra.mxu0 0.0
  %2272 = vmatprep.subr.mxu0 0.0
  %2273 = vmatpush1.msra.mxu0 0.0
  %2274 = vmatprep.subr.mxu0 0.0
  %2275 = vmatpush1.msra.mxu0 0.0
  %2276 = vmatprep.subr.mxu0 0.0
  %2277 = vmatpush1.msra.mxu0 0.0
  %2278 = vmatprep.subr.mxu0 0.0
  %2279 = vmatpush1.msra.mxu0 0.0
  %2280 = vmatprep.subr.mxu0 0.0
  %2281 = vmatpush1.msra.mxu0 0.0
  %2282 = vmatprep.subr.mxu0 0.0
  %2283 = vmatpush1.msra.mxu0 0.0
  %2284 = vmatprep.subr.mxu0 0.0
  %2285 = vmatpush1.msra.mxu0 0.0
  %2286 = vmatprep.subr.mxu0 0.0
  %2287 = vmatpush1.msra.mxu0 0.0
  %2288 = vmatprep.subr.mxu0 0.0
  %2289 = vmatpush1.msra.mxu0 0.0
  %2290 = vmatprep.subr.mxu0 0.0
  %2291 = vmatpush1.msra.mxu0 0.0
  %2292 = vmatprep.subr.mxu0 0.0
  %2293 = vmatpush1.msra.mxu0 0.0
  %2294 = vmatprep.subr.mxu0 0.0
  %2295 = vmatpush1.msra.mxu0 0.0
  %2296 = vmatprep.subr.mxu0 0.0
  %2297 = vmatpush1.msra.mxu0 0.0
  %2298 = vmatprep.subr.mxu0 0.0
  %2299 = vmatpush1.msra.mxu0 0.0
  %2300 = vmatprep.subr.mxu0 0.0
  %2301 = vmatpush1.msra.mxu0 0.0
  %2302 = vmatprep.subr.mxu0 0.0
  %2303 = vmatpush1.msra.mxu0 0.0
  %2304 = vmatprep.subr.mxu0 0.0
  %2305 = vmatpush1.msra.mxu0 0.0
  %2306 = vmatprep.subr.mxu0 0.0
  %2307 = vmatpush1.msra.mxu0 0.0
  %2308 = vmatprep.mubr.f32.mxu0 0.0
  %2309 = vmatmul.mubr.f32.gmra.mrb[0].mxu0 %v2239
  %v2310 = vpop.f32.mrb[0].mxu0
  %v2311 = vadd.f32 0.0, %v2310
  %v2312 = vpop.f32.mrb[0].mxu0
  %2313 = vmatprep.mubr.f32.mxu0 0.0
  %2314 = vmatmul.mubr.f32.gmra.mrb[0].mxu0 %v2242
  %v2315 = vpop.f32.mrb[0].mxu0
  %v2316 = vadd.f32 0.0, %v2315
  %v2317 = vpop.f32.mrb[0].mxu0
  %2318 = vdwg.mxu0
  %v2319 = vld [vmem:[%s2 + $0x2b8] sm:$0xff]
  %v2320 = vld [vmem:[%s2 + $0x2c0] sm:$0xff]
  %v2322 = vsel %vm318, %v2311, 0
  %v2325 = vsel %vm318, %v2316, 0
  %2327 = vmatprep.subr.mxu0 0.0
  %2328 = vmatpush1.msra.mxu0 %v2319
  %2329 = vmatprep.subr.mxu0 0.0
  %2330 = vmatpush1.msra.mxu0 %v2320
  %2331 = vmatprep.subr.mxu0 0.0
  %2332 = vmatpush1.msra.mxu0 0.0
  %2333 = vmatprep.subr.mxu0 0.0
  %2334 = vmatpush1.msra.mxu0 0.0
  %2335 = vmatprep.subr.mxu0 0.0
  %2336 = vmatpush1.msra.mxu0 0.0
  %2337 = vmatprep.subr.mxu0 0.0
  %2338 = vmatpush1.msra.mxu0 0.0
  %2339 = vmatprep.subr.mxu0 0.0
  %2340 = vmatpush1.msra.mxu0 0.0
  %2341 = vmatprep.subr.mxu0 0.0
  %2342 = vmatpush1.msra.mxu0 0.0
  %2343 = vmatprep.subr.mxu0 0.0
  %2344 = vmatpush1.msra.mxu0 0.0
  %2345 = vmatprep.subr.mxu0 0.0
  %2346 = vmatpush1.msra.mxu0 0.0
  %2347 = vmatprep.subr.mxu0 0.0
  %2348 = vmatpush1.msra.mxu0 0.0
  %2349 = vmatprep.subr.mxu0 0.0
  %2350 = vmatpush1.msra.mxu0 0.0
  %2351 = vmatprep.subr.mxu0 0.0
  %2352 = vmatpush1.msra.mxu0 0.0
  %2353 = vmatprep.subr.mxu0 0.0
  %2354 = vmatpush1.msra.mxu0 0.0
  %2355 = vmatprep.subr.mxu0 0.0
  %2356 = vmatpush1.msra.mxu0 0.0
  %2357 = vmatprep.subr.mxu0 0.0
  %2358 = vmatpush1.msra.mxu0 0.0
  %2359 = vmatprep.subr.mxu0 0.0
  %2360 = vmatpush1.msra.mxu0 0.0
  %2361 = vmatprep.subr.mxu0 0.0
  %2362 = vmatpush1.msra.mxu0 0.0
  %2363 = vmatprep.subr.mxu0 0.0
  %2364 = vmatpush1.msra.mxu0 0.0
  %2365 = vmatprep.subr.mxu0 0.0
  %2366 = vmatpush1.msra.mxu0 0.0
  %2367 = vmatprep.subr.mxu0 0.0
  %2368 = vmatpush1.msra.mxu0 0.0
  %2369 = vmatprep.subr.mxu0 0.0
  %2370 = vmatpush1.msra.mxu0 0.0
  %2371 = vmatprep.subr.mxu0 0.0
  %2372 = vmatpush1.msra.mxu0 0.0
  %2373 = vmatprep.subr.mxu0 0.0
  %2374 = vmatpush1.msra.mxu0 0.0
  %2375 = vmatprep.subr.mxu0 0.0
  %2376 = vmatpush1.msra.mxu0 0.0
  %2377 = vmatprep.subr.mxu0 0.0
  %2378 = vmatpush1.msra.mxu0 0.0
  %2379 = vmatprep.subr.mxu0 0.0
  %2380 = vmatpush1.msra.mxu0 0.0
  %2381 = vmatprep.subr.mxu0 0.0
  %2382 = vmatpush1.msra.mxu0 0.0
  %2383 = vmatprep.subr.mxu0 0.0
  %2384 = vmatpush1.msra.mxu0 0.0
  %2385 = vmatprep.subr.mxu0 0.0
  %2386 = vmatpush1.msra.mxu0 0.0
  %2387 = vmatprep.subr.mxu0 0.0
  %2388 = vmatpush1.msra.mxu0 0.0
  %2389 = vmatprep.subr.mxu0 0.0
  %2390 = vmatpush1.msra.mxu0 0.0
  %2391 = vmatprep.mubr.f32.mxu0 0.0
  %2392 = vmatmul.mubr.f32.gmra.mrb[0].mxu0 %v2322
  %v2393 = vpop.f32.mrb[0].mxu0
  %v2394 = vadd.f32 0.0, %v2393
  %v2395 = vpop.f32.mrb[0].mxu0
  %2396 = vmatprep.mubr.f32.mxu0 0.0
  %2397 = vmatmul.mubr.f32.gmra.mrb[0].mxu0 %v2325
  %v2398 = vpop.f32.mrb[0].mxu0
  %v2399 = vadd.f32 0.0, %v2398
  %v2400 = vpop.f32.mrb[0].mxu0
  %2401 = vdwg.mxu0
  %v2403 = vsel %vm318, %v1863, 0
  %v2406 = vsel %vm318, %v1868, 0
  %2408 = vmatprep.subr.mxu0 0.0
  %2409 = vmatpush1.msra.mxu0 %v1871
  %2410 = vmatprep.subr.mxu0 0.0
  %2411 = vmatpush1.msra.mxu0 %v1872
  %2412 = vmatprep.subr.mxu0 0.0
  %2413 = vmatpush1.msra.mxu0 0.0
  %2414 = vmatprep.subr.mxu0 0.0
  %2415 = vmatpush1.msra.mxu0 0.0
  %2416 = vmatprep.subr.mxu0 0.0
  %2417 = vmatpush1.msra.mxu0 0.0
  %2418 = vmatprep.subr.mxu0 0.0
  %2419 = vmatpush1.msra.mxu0 0.0
  %2420 = vmatprep.subr.mxu0 0.0
  %2421 = vmatpush1.msra.mxu0 0.0
  %2422 = vmatprep.subr.mxu0 0.0
  %2423 = vmatpush1.msra.mxu0 0.0
  %2424 = vmatprep.subr.mxu0 0.0
  %2425 = vmatpush1.msra.mxu0 0.0
  %2426 = vmatprep.subr.mxu0 0.0
  %2427 = vmatpush1.msra.mxu0 0.0
  %2428 = vmatprep.subr.mxu0 0.0
  %2429 = vmatpush1.msra.mxu0 0.0
  %2430 = vmatprep.subr.mxu0 0.0
  %2431 = vmatpush1.msra.mxu0 0.0
  %2432 = vmatprep.subr.mxu0 0.0
  %2433 = vmatpush1.msra.mxu0 0.0
  %2434 = vmatprep.subr.mxu0 0.0
  %2435 = vmatpush1.msra.mxu0 0.0
  %2436 = vmatprep.subr.mxu0 0.0
  %2437 = vmatpush1.msra.mxu0 0.0
  %2438 = vmatprep.subr.mxu0 0.0
  %2439 = vmatpush1.msra.mxu0 0.0
  %2440 = vmatprep.subr.mxu0 0.0
  %2441 = vmatpush1.msra.mxu0 0.0
  %2442 = vmatprep.subr.mxu0 0.0
  %2443 = vmatpush1.msra.mxu0 0.0
  %2444 = vmatprep.subr.mxu0 0.0
  %2445 = vmatpush1.msra.mxu0 0.0
  %2446 = vmatprep.subr.mxu0 0.0
  %2447 = vmatpush1.msra.mxu0 0.0
  %2448 = vmatprep.subr.mxu0 0.0
  %2449 = vmatpush1.msra.mxu0 0.0
  %2450 = vmatprep.subr.mxu0 0.0
  %2451 = vmatpush1.msra.mxu0 0.0
  %2452 = vmatprep.subr.mxu0 0.0
  %2453 = vmatpush1.msra.mxu0 0.0
  %2454 = vmatprep.subr.mxu0 0.0
  %2455 = vmatpush1.msra.mxu0 0.0
  %2456 = vmatprep.subr.mxu0 0.0
  %2457 = vmatpush1.msra.mxu0 0.0
  %2458 = vmatprep.subr.mxu0 0.0
  %2459 = vmatpush1.msra.mxu0 0.0
  %2460 = vmatprep.subr.mxu0 0.0
  %2461 = vmatpush1.msra.mxu0 0.0
  %2462 = vmatprep.subr.mxu0 0.0
  %2463 = vmatpush1.msra.mxu0 0.0
  %2464 = vmatprep.subr.mxu0 0.0
  %2465 = vmatpush1.msra.mxu0 0.0
  %2466 = vmatprep.subr.mxu0 0.0
  %2467 = vmatpush1.msra.mxu0 0.0
  %2468 = vmatprep.subr.mxu0 0.0
  %2469 = vmatpush1.msra.mxu0 0.0
  %2470 = vmatprep.subr.mxu0 0.0
  %2471 = vmatpush1.msra.mxu0 0.0
  %2472 = vmatprep.mubr.f32.mxu0 0.0
  %2473 = vmatmul.mubr.f32.gmra.mrb[0].mxu0 %v2403
  %v2474 = vpop.f32.mrb[0].mxu0
  %v2475 = vadd.f32 %v2394, %v2474
  %v2476 = vpop.f32.mrb[0].mxu0
  %2477 = vmatprep.mubr.f32.mxu0 0.0
  %2478 = vmatmul.mubr.f32.gmra.mrb[0].mxu0 %v2406
  %v2479 = vpop.f32.mrb[0].mxu0
  %v2480 = vadd.f32 %v2399, %v2479
  %v2481 = vpop.f32.mrb[0].mxu0
  %2482 = vdwg.mxu0
  %v2483 = vld [vmem:[%s2 + $0x2c8] sm:$0x1]
  %v2484 = vlaneseq
  %v2485 = vshrl.u32 %v2484, 7
  %v2486 = vsub.s32 0, %v2485
  %v2487 = vrot.slane %v2483, %v2486
  %v2488 = vadd.f32 %v2475, %v2487
  %v2489 = vadd.f32 %v2480, %v2487
  %v2490 = vadd.f32 %v2488, %v1417
  %v2491 = vadd.f32 %v2489, %v1418
  %v2492 = vld [vmem:[%s2 + $0x2d0] sm:$0x1]
  %v2493 = vld [vmem:[%s2 + $0x2d8] sm:$0x1]
  %v2494 = vsel %vm20, %v2490, 0.0
  %2495 = vadd.xlane.f32.xlu0 %v2494
  %v2496 = vpop.xlane.xlu0 %2495
  %v2497 = vsel %vm20, %v2491, 0.0
  %2498 = vadd.xlane.f32.xlu0 %v2497
  %v2499 = vpop.xlane.xlu0 %2498
  %v2500 = vmul.f32 %v2496, %v27
  %v2501 = vmul.f32 %v2499, %v27
  %v2502 = vsub.f32 %v2490, %v2500
  %v2503 = vsub.f32 %v2491, %v2501
  %v2504 = vmul.f32 %v2502, %v2502
  %v2505 = vmul.f32 %v2503, %v2503
  %v2506 = vsel %vm20, %v2504, 0.0
  %2507 = vadd.xlane.f32.xlu0 %v2506
  %v2508 = vpop.xlane.xlu0 %2507
  %v2509 = vsel %vm20, %v2505, 0.0
  %2510 = vadd.xlane.f32.xlu0 %v2509
  %v2511 = vpop.xlane.xlu0 %2510
  %v2512 = vmul.f32 %v2508, %v27
  %v2513 = vmul.f32 %v2511, %v27
  %v2514 = vadd.f32 %v2512, 1e-05
  %v2515 = vadd.f32 %v2513, 1e-05
  %v2516 = vrsqrt.pop %v2514
  %v2517 = vrsqrt.pop %v2515
  %v2518 = vmul.f32 %v2502, %v2516
  %v2519 = vmul.f32 %v2503, %v2517
  %v2520 = vlaneseq
  %v2521 = vshrl.u32 %v2520, 7
  %v2522 = vsub.s32 0, %v2521
  %v2523 = vrot.slane %v2492, %v2522
  %v2524 = vmul.f32 %v2518, %v2523
  %v2525 = vmul.f32 %v2519, %v2523
  %v2526 = vlaneseq
  %v2527 = vshrl.u32 %v2526, 7
  %v2528 = vsub.s32 0, %v2527
  %v2529 = vrot.slane %v2493, %v2528
  %v2530 = vadd.f32 %v2524, %v2529
  %v2531 = vadd.f32 %v2525, %v2529
  %v2532 = vld [vmem:[%s2 + $0x2e0] sm:$0xff]
  %v2533 = vld [vmem:[%s2 + $0x2e8] sm:$0xff]
  %v2534 = vld [vmem:[%s2 + $0x2f0] sm:$0xff]
  %v2535 = vld [vmem:[%s2 + $0x2f8] sm:$0xff]
  %v2536 = vld [vmem:[%s2 + $0x300] sm:$0x1]
  %v2537 = vlaneseq
  %v2538 = vshrl.u32 %v2537, 7
  %v2539 = vsub.s32 0, %v2538
  %v2540 = vrot.slane %v2536, %v2539
  %v2542 = vsel %vm20, %v2530, 0
  %v2545 = vsel %vm20, %v2531, 0
  %2547 = vmatprep.subr.mxu0 0.0
  %2548 = vmatpush1.msra.mxu0 %v2532
  %2549 = vmatprep.subr.mxu0 0.0
  %2550 = vmatpush1.msra.mxu0 %v2533
  %2551 = vmatprep.subr.mxu0 0.0
  %2552 = vmatpush1.msra.mxu0 %v2534
  %2553 = vmatprep.subr.mxu0 0.0
  %2554 = vmatpush1.msra.mxu0 %v2535
  %2555 = vmatprep.subr.mxu0 0.0
  %2556 = vmatpush1.msra.mxu0 0.0
  %2557 = vmatprep.subr.mxu0 0.0
  %2558 = vmatpush1.msra.mxu0 0.0
  %2559 = vmatprep.subr.mxu0 0.0
  %2560 = vmatpush1.msra.mxu0 0.0
  %2561 = vmatprep.subr.mxu0 0.0
  %2562 = vmatpush1.msra.mxu0 0.0
  %2563 = vmatprep.subr.mxu0 0.0
  %2564 = vmatpush1.msra.mxu0 0.0
  %2565 = vmatprep.subr.mxu0 0.0
  %2566 = vmatpush1.msra.mxu0 0.0
  %2567 = vmatprep.subr.mxu0 0.0
  %2568 = vmatpush1.msra.mxu0 0.0
  %2569 = vmatprep.subr.mxu0 0.0
  %2570 = vmatpush1.msra.mxu0 0.0
  %2571 = vmatprep.subr.mxu0 0.0
  %2572 = vmatpush1.msra.mxu0 0.0
  %2573 = vmatprep.subr.mxu0 0.0
  %2574 = vmatpush1.msra.mxu0 0.0
  %2575 = vmatprep.subr.mxu0 0.0
  %2576 = vmatpush1.msra.mxu0 0.0
  %2577 = vmatprep.subr.mxu0 0.0
  %2578 = vmatpush1.msra.mxu0 0.0
  %2579 = vmatprep.subr.mxu0 0.0
  %2580 = vmatpush1.msra.mxu0 0.0
  %2581 = vmatprep.subr.mxu0 0.0
  %2582 = vmatpush1.msra.mxu0 0.0
  %2583 = vmatprep.subr.mxu0 0.0
  %2584 = vmatpush1.msra.mxu0 0.0
  %2585 = vmatprep.subr.mxu0 0.0
  %2586 = vmatpush1.msra.mxu0 0.0
  %2587 = vmatprep.subr.mxu0 0.0
  %2588 = vmatpush1.msra.mxu0 0.0
  %2589 = vmatprep.subr.mxu0 0.0
  %2590 = vmatpush1.msra.mxu0 0.0
  %2591 = vmatprep.subr.mxu0 0.0
  %2592 = vmatpush1.msra.mxu0 0.0
  %2593 = vmatprep.subr.mxu0 0.0
  %2594 = vmatpush1.msra.mxu0 0.0
  %2595 = vmatprep.subr.mxu0 0.0
  %2596 = vmatpush1.msra.mxu0 0.0
  %2597 = vmatprep.subr.mxu0 0.0
  %2598 = vmatpush1.msra.mxu0 0.0
  %2599 = vmatprep.subr.mxu0 0.0
  %2600 = vmatpush1.msra.mxu0 0.0
  %2601 = vmatprep.subr.mxu0 0.0
  %2602 = vmatpush1.msra.mxu0 0.0
  %2603 = vmatprep.subr.mxu0 0.0
  %2604 = vmatpush1.msra.mxu0 0.0
  %2605 = vmatprep.subr.mxu0 0.0
  %2606 = vmatpush1.msra.mxu0 0.0
  %2607 = vmatprep.subr.mxu0 0.0
  %2608 = vmatpush1.msra.mxu0 0.0
  %2609 = vmatprep.subr.mxu0 0.0
  %2610 = vmatpush1.msra.mxu0 0.0
  %2611 = vmatprep.mubr.f32.mxu0 0.0
  %2612 = vmatmul.mubr.f32.gmra.mrb[0].mxu0 %v2542
  %v2613 = vpop.f32.mrb[0].mxu0
  %v2614 = vadd.f32 %v2540, %v2613
  %v2615 = vpop.f32.mrb[0].mxu0
  %2616 = vmatprep.mubr.f32.mxu0 0.0
  %2617 = vmatmul.mubr.f32.gmra.mrb[0].mxu0 %v2545
  %v2618 = vpop.f32.mrb[0].mxu0
  %v2619 = vadd.f32 %v2540, %v2618
  %v2620 = vpop.f32.mrb[0].mxu0
  %2621 = vdwg.mxu0
  %v2622 = vmul.f32 %v2614, 0.5
  %v2623 = vmul.f32 %v2619, 0.5
  %v2624 = vmul.f32 %v2614, 0.044715
  %v2625 = vmul.f32 %v2619, 0.044715
  %v2626 = vmul.f32 %v2624, %v2614
  %v2627 = vmul.f32 %v2625, %v2619
  %v2628 = vmul.f32 %v2626, %v2614
  %v2629 = vmul.f32 %v2627, %v2619
  %v2630 = vadd.f32 %v2614, %v2628
  %v2631 = vadd.f32 %v2619, %v2629
  %v2632 = vmul.f32 %v2630, 0.7978846
  %v2633 = vmul.f32 %v2631, 0.7978846
  %v2634 = vtanh.pop %v2632
  %v2635 = vtanh.pop %v2633
  %v2636 = vadd.f32 %v2634, 1.0
  %v2637 = vadd.f32 %v2635, 1.0
  %v2638 = vmul.f32 %v2622, %v2636
  %v2639 = vmul.f32 %v2623, %v2637
  %v2640 = vld [vmem:[%s2 + $0x308] sm:$0xff]
  %v2641 = vld [vmem:[%s2 + $0x310] sm:$0xff]
  %v2642 = vld [vmem:[%s2 + $0x318] sm:$0xff]
  %v2643 = vld [vmem:[%s2 + $0x320] sm:$0xff]
  %v2644 = vld [vmem:[%s2 + $0x328] sm:$0xff]
  %v2645 = vld [vmem:[%s2 + $0x330] sm:$0xff]
  %v2646 = vld [vmem:[%s2 + $0x338] sm:$0xff]
  %v2647 = vld [vmem:[%s2 + $0x340] sm:$0xff]
  %v2648 = vld [vmem:[%s2 + $0x348] sm:$0x1]
  %v2649 = vlaneseq
  %v2650 = vshrl.u32 %v2649, 7
  %v2651 = vsub.s32 0, %v2650
  %v2652 = vrot.slane %v2648, %v2651
  %v2654 = vsel %vm1295, %v2638, 0
  %v2657 = vsel %vm1295, %v2639, 0
  %2659 = vmatprep.subr.mxu0 0.0
  %2660 = vmatpush1.msra.mxu0 %v2640
  %2661 = vmatprep.subr.mxu0 0.0
  %2662 = vmatpush1.msra.mxu0 %v2641
  %2663 = vmatprep.subr.mxu0 0.0
  %2664 = vmatpush1.msra.mxu0 %v2642
  %2665 = vmatprep.subr.mxu0 0.0
  %2666 = vmatpush1.msra.mxu0 %v2643
  %2667 = vmatprep.subr.mxu0 0.0
  %2668 = vmatpush1.msra.mxu0 %v2644
  %2669 = vmatprep.subr.mxu0 0.0
  %2670 = vmatpush1.msra.mxu0 %v2645
  %2671 = vmatprep.subr.mxu0 0.0
  %2672 = vmatpush1.msra.mxu0 %v2646
  %2673 = vmatprep.subr.mxu0 0.0
  %2674 = vmatpush1.msra.mxu0 %v2647
  %2675 = vmatprep.subr.mxu0 0.0
  %2676 = vmatpush1.msra.mxu0 0.0
  %2677 = vmatprep.subr.mxu0 0.0
  %2678 = vmatpush1.msra.mxu0 0.0
  %2679 = vmatprep.subr.mxu0 0.0
  %2680 = vmatpush1.msra.mxu0 0.0
  %2681 = vmatprep.subr.mxu0 0.0
  %2682 = vmatpush1.msra.mxu0 0.0
  %2683 = vmatprep.subr.mxu0 0.0
  %2684 = vmatpush1.msra.mxu0 0.0
  %2685 = vmatprep.subr.mxu0 0.0
  %2686 = vmatpush1.msra.mxu0 0.0
  %2687 = vmatprep.subr.mxu0 0.0
  %2688 = vmatpush1.msra.mxu0 0.0
  %2689 = vmatprep.subr.mxu0 0.0
  %2690 = vmatpush1.msra.mxu0 0.0
  %2691 = vmatprep.subr.mxu0 0.0
  %2692 = vmatpush1.msra.mxu0 0.0
  %2693 = vmatprep.subr.mxu0 0.0
  %2694 = vmatpush1.msra.mxu0 0.0
  %2695 = vmatprep.subr.mxu0 0.0
  %2696 = vmatpush1.msra.mxu0 0.0
  %2697 = vmatprep.subr.mxu0 0.0
  %2698 = vmatpush1.msra.mxu0 0.0
  %2699 = vmatprep.subr.mxu0 0.0
  %2700 = vmatpush1.msra.mxu0 0.0
  %2701 = vmatprep.subr.mxu0 0.0
  %2702 = vmatpush1.msra.mxu0 0.0
  %2703 = vmatprep.subr.mxu0 0.0
  %2704 = vmatpush1.msra.mxu0 0.0
  %2705 = vmatprep.subr.mxu0 0.0
  %2706 = vmatpush1.msra.mxu0 0.0
  %2707 = vmatprep.subr.mxu0 0.0
  %2708 = vmatpush1.msra.mxu0 0.0
  %2709 = vmatprep.subr.mxu0 0.0
  %2710 = vmatpush1.msra.mxu0 0.0
  %2711 = vmatprep.subr.mxu0 0.0
  %2712 = vmatpush1.msra.mxu0 0.0
  %2713 = vmatprep.subr.mxu0 0.0
  %2714 = vmatpush1.msra.mxu0 0.0
  %2715 = vmatprep.subr.mxu0 0.0
  %2716 = vmatpush1.msra.mxu0 0.0
  %2717 = vmatprep.subr.mxu0 0.0
  %2718 = vmatpush1.msra.mxu0 0.0
  %2719 = vmatprep.subr.mxu0 0.0
  %2720 = vmatpush1.msra.mxu0 0.0
  %2721 = vmatprep.subr.mxu0 0.0
  %2722 = vmatpush1.msra.mxu0 0.0
  %2723 = vmatprep.mubr.f32.mxu0 0.0
  %2724 = vmatmul.mubr.f32.gmra.mrb[0].mxu0 %v2654
  %v2725 = vpop.f32.mrb[0].mxu0
  %v2726 = vadd.f32 %v2652, %v2725
  %v2727 = vpop.f32.mrb[0].mxu0
  %2728 = vmatprep.mubr.f32.mxu0 0.0
  %2729 = vmatmul.mubr.f32.gmra.mrb[0].mxu0 %v2657
  %v2730 = vpop.f32.mrb[0].mxu0
  %v2731 = vadd.f32 %v2652, %v2730
  %v2732 = vpop.f32.mrb[0].mxu0
  %2733 = vdwg.mxu0
  %v2734 = vadd.f32 %v2726, %v2530
  %v2735 = vadd.f32 %v2731, %v2531
  %v2736 = vld [vmem:[%s2 + $0x350] sm:$0x1]
  %v2737 = vld [vmem:[%s2 + $0x358] sm:$0x1]
  %v2738 = vsel %vm20, %v2734, 0.0
  %2739 = vadd.xlane.f32.xlu0 %v2738
  %v2740 = vpop.xlane.xlu0 %2739
  %v2741 = vsel %vm20, %v2735, 0.0
  %2742 = vadd.xlane.f32.xlu0 %v2741
  %v2743 = vpop.xlane.xlu0 %2742
  %v2744 = vmul.f32 %v2740, %v27
  %v2745 = vmul.f32 %v2743, %v27
  %v2746 = vsub.f32 %v2734, %v2744
  %v2747 = vsub.f32 %v2735, %v2745
  %v2748 = vmul.f32 %v2746, %v2746
  %v2749 = vmul.f32 %v2747, %v2747
  %v2750 = vsel %vm20, %v2748, 0.0
  %2751 = vadd.xlane.f32.xlu0 %v2750
  %v2752 = vpop.xlane.xlu0 %2751
  %v2753 = vsel %vm20, %v2749, 0.0
  %2754 = vadd.xlane.f32.xlu0 %v2753
  %v2755 = vpop.xlane.xlu0 %2754
  %v2756 = vmul.f32 %v2752, %v27
  %v2757 = vmul.f32 %v2755, %v27
  %v2758 = vadd.f32 %v2756, 1e-05
  %v2759 = vadd.f32 %v2757, 1e-05
  %v2760 = vrsqrt.pop %v2758
  %v2761 = vrsqrt.pop %v2759
  %v2762 = vmul.f32 %v2746, %v2760
  %v2763 = vmul.f32 %v2747, %v2761
  %v2764 = vlaneseq
  %v2765 = vshrl.u32 %v2764, 7
  %v2766 = vsub.s32 0, %v2765
  %v2767 = vrot.slane %v2736, %v2766
  %v2768 = vmul.f32 %v2762, %v2767
  %v2769 = vmul.f32 %v2763, %v2767
  %v2770 = vlaneseq
  %v2771 = vshrl.u32 %v2770, 7
  %v2772 = vsub.s32 0, %v2771
  %v2773 = vrot.slane %v2737, %v2772
  %v2774 = vadd.f32 %v2768, %v2773
  %v2775 = vadd.f32 %v2769, %v2773
  %v2776 = vld [vmem:[%s2 + $0x360] sm:$0xff]
  %v2777 = vld [vmem:[%s2 + $0x368] sm:$0xff]
  %v2778 = vld [vmem:[%s2 + $0x370] sm:$0xff]
  %v2779 = vld [vmem:[%s2 + $0x378] sm:$0xff]
  %v2780 = vld [vmem:[%s2 + $0x380] sm:$0x1]
  %v2781 = vlaneseq
  %v2782 = vshrl.u32 %v2781, 7
  %v2783 = vsub.s32 0, %v2782
  %v2784 = vrot.slane %v2780, %v2783
  %v2786 = vsel %vm20, %v2774, 0
  %v2789 = vsel %vm20, %v2775, 0
  %2791 = vmatprep.subr.mxu0 0.0
  %2792 = vmatpush1.msra.mxu0 %v2776
  %2793 = vmatprep.subr.mxu0 0.0
  %2794 = vmatpush1.msra.mxu0 %v2777
  %2795 = vmatprep.subr.mxu0 0.0
  %2796 = vmatpush1.msra.mxu0 %v2778
  %2797 = vmatprep.subr.mxu0 0.0
  %2798 = vmatpush1.msra.mxu0 %v2779
  %2799 = vmatprep.subr.mxu0 0.0
  %2800 = vmatpush1.msra.mxu0 0.0
  %2801 = vmatprep.subr.mxu0 0.0
  %2802 = vmatpush1.msra.mxu0 0.0
  %2803 = vmatprep.subr.mxu0 0.0
  %2804 = vmatpush1.msra.mxu0 0.0
  %2805 = vmatprep.subr.mxu0 0.0
  %2806 = vmatpush1.msra.mxu0 0.0
  %2807 = vmatprep.subr.mxu0 0.0
  %2808 = vmatpush1.msra.mxu0 0.0
  %2809 = vmatprep.subr.mxu0 0.0
  %2810 = vmatpush1.msra.mxu0 0.0
  %2811 = vmatprep.subr.mxu0 0.0
  %2812 = vmatpush1.msra.mxu0 0.0
  %2813 = vmatprep.subr.mxu0 0.0
  %2814 = vmatpush1.msra.mxu0 0.0
  %2815 = vmatprep.subr.mxu0 0.0
  %2816 = vmatpush1.msra.mxu0 0.0
  %2817 = vmatprep.subr.mxu0 0.0
  %2818 = vmatpush1.msra.mxu0 0.0
  %2819 = vmatprep.subr.mxu0 0.0
  %2820 = vmatpush1.msra.mxu0 0.0
  %2821 = vmatprep.subr.mxu0 0.0
  %2822 = vmatpush1.msra.mxu0 0.0
  %2823 = vmatprep.subr.mxu0 0.0
  %2824 = vmatpush1.msra.mxu0 0.0
  %2825 = vmatprep.subr.mxu0 0.0
  %2826 = vmatpush1.msra.mxu0 0.0
  %2827 = vmatprep.subr.mxu0 0.0
  %2828 = vmatpush1.msra.mxu0 0.0
  %2829 = vmatprep.subr.mxu0 0.0
  %2830 = vmatpush1.msra.mxu0 0.0
  %2831 = vmatprep.subr.mxu0 0.0
  %2832 = vmatpush1.msra.mxu0 0.0
  %2833 = vmatprep.subr.mxu0 0.0
  %2834 = vmatpush1.msra.mxu0 0.0
  %2835 = vmatprep.subr.mxu0 0.0
  %2836 = vmatpush1.msra.mxu0 0.0
  %2837 = vmatprep.subr.mxu0 0.0
  %2838 = vmatpush1.msra.mxu0 0.0
  %2839 = vmatprep.subr.mxu0 0.0
  %2840 = vmatpush1.msra.mxu0 0.0
  %2841 = vmatprep.subr.mxu0 0.0
  %2842 = vmatpush1.msra.mxu0 0.0
  %2843 = vmatprep.subr.mxu0 0.0
  %2844 = vmatpush1.msra.mxu0 0.0
  %2845 = vmatprep.subr.mxu0 0.0
  %2846 = vmatpush1.msra.mxu0 0.0
  %2847 = vmatprep.subr.mxu0 0.0
  %2848 = vmatpush1.msra.mxu0 0.0
  %2849 = vmatprep.subr.mxu0 0.0
  %2850 = vmatpush1.msra.mxu0 0.0
  %2851 = vmatprep.subr.mxu0 0.0
  %2852 = vmatpush1.msra.mxu0 0.0
  %2853 = vmatprep.subr.mxu0 0.0
  %2854 = vmatpush1.msra.mxu0 0.0
  %2855 = vmatprep.mubr.f32.mxu0 0.0
  %2856 = vmatmul.mubr.f32.gmra.mrb[0].mxu0 %v2786
  %v2857 = vpop.f32.mrb[0].mxu0
  %v2858 = vadd.f32 %v2784, %v2857
  %v2859 = vpop.f32.mrb[0].mxu0
  %2860 = vmatprep.mubr.f32.mxu0 0.0
  %2861 = vmatmul.mubr.f32.gmra.mrb[0].mxu0 %v2789
  %v2862 = vpop.f32.mrb[0].mxu0
  %v2863 = vadd.f32 %v2784, %v2862
  %v2864 = vpop.f32.mrb[0].mxu0
  %2865 = vdwg.mxu0
  %v2866 = vtanh.pop %v2858
  %v2867 = vtanh.pop %v2863
  %v2868 = vld [vmem:[%s2 + $0x388] sm:$0xff]
  %v2869 = vld [vmem:[%s2 + $0x390] sm:$0xff]
  %v2870 = vld [vmem:[%s2 + $0x398] sm:$0xff]
  %v2871 = vld [vmem:[%s2 + $0x3a0] sm:$0xff]
  %v2872 = vld [vmem:[%s2 + $0x3a8] sm:$0x1]
  %v2873 = vlaneseq
  %v2874 = vshrl.u32 %v2873, 7
  %v2875 = vsub.s32 0, %v2874
  %v2876 = vrot.slane %v2872, %v2875
  %v2878 = vsel %vm20, %v2866, 0
  %v2881 = vsel %vm20, %v2867, 0
  %2883 = vmatprep.subr.mxu0 0.0
  %2884 = vmatpush1.msra.mxu0 %v2868
  %2885 = vmatprep.subr.mxu0 0.0
  %2886 = vmatpush1.msra.mxu0 %v2869
  %2887 = vmatprep.subr.mxu0 0.0
  %2888 = vmatpush1.msra.mxu0 %v2870
  %2889 = vmatprep.subr.mxu0 0.0
  %2890 = vmatpush1.msra.mxu0 %v2871
  %2891 = vmatprep.subr.mxu0 0.0
  %2892 = vmatpush1.msra.mxu0 0.0
  %2893 = vmatprep.subr.mxu0 0.0
  %2894 = vmatpush1.msra.mxu0 0.0
  %2895 = vmatprep.subr.mxu0 0.0
  %2896 = vmatpush1.msra.mxu0 0.0
  %2897 = vmatprep.subr.mxu0 0.0
  %2898 = vmatpush1.msra.mxu0 0.0
  %2899 = vmatprep.subr.mxu0 0.0
  %2900 = vmatpush1.msra.mxu0 0.0
  %2901 = vmatprep.subr.mxu0 0.0
  %2902 = vmatpush1.msra.mxu0 0.0
  %2903 = vmatprep.subr.mxu0 0.0
  %2904 = vmatpush1.msra.mxu0 0.0
  %2905 = vmatprep.subr.mxu0 0.0
  %2906 = vmatpush1.msra.mxu0 0.0
  %2907 = vmatprep.subr.mxu0 0.0
  %2908 = vmatpush1.msra.mxu0 0.0
  %2909 = vmatprep.subr.mxu0 0.0
  %2910 = vmatpush1.msra.mxu0 0.0
  %2911 = vmatprep.subr.mxu0 0.0
  %2912 = vmatpush1.msra.mxu0 0.0
  %2913 = vmatprep.subr.mxu0 0.0
  %2914 = vmatpush1.msra.mxu0 0.0
  %2915 = vmatprep.subr.mxu0 0.0
  %2916 = vmatpush1.msra.mxu0 0.0
  %2917 = vmatprep.subr.mxu0 0.0
  %2918 = vmatpush1.msra.mxu0 0.0
  %2919 = vmatprep.subr.mxu0 0.0
  %2920 = vmatpush1.msra.mxu0 0.0
  %2921 = vmatprep.subr.mxu0 0.0
  %2922 = vmatpush1.msra.mxu0 0.0
  %2923 = vmatprep.subr.mxu0 0.0
  %2924 = vmatpush1.msra.mxu0 0.0
  %2925 = vmatprep.subr.mxu0 0.0
  %2926 = vmatpush1.msra.mxu0 0.0
  %2927 = vmatprep.subr.mxu0 0.0
  %2928 = vmatpush1.msra.mxu0 0.0
  %2929 = vmatprep.subr.mxu0 0.0
  %2930 = vmatpush1.msra.mxu0 0.0
  %2931 = vmatprep.subr.mxu0 0.0
  %2932 = vmatpush1.msra.mxu0 0.0
  %2933 = vmatprep.subr.mxu0 0.0
  %2934 = vmatpush1.msra.mxu0 0.0
  %2935 = vmatprep.subr.mxu0 0.0
  %2936 = vmatpush1.msra.mxu0 0.0
  %2937 = vmatprep.subr.mxu0 0.0
  %2938 = vmatpush1.msra.mxu0 0.0
  %2939 = vmatprep.subr.mxu0 0.0
  %2940 = vmatpush1.msra.mxu0 0.0
  %2941 = vmatprep.subr.mxu0 0.0
  %2942 = vmatpush1.msra.mxu0 0.0
  %2943 = vmatprep.subr.mxu0 0.0
  %2944 = vmatpush1.msra.mxu0 0.0
  %2945 = vmatprep.subr.mxu0 0.0
  %2946 = vmatpush1.msra.mxu0 0.0
  %2947 = vmatprep.mubr.f32.mxu0 0.0
  %2948 = vmatmul.mubr.f32.gmra.mrb[0].mxu0 %v2878
  %v2949 = vpop.f32.mrb[0].mxu0
  %v2950 = vadd.f32 %v2876, %v2949
  %v2951 = vpop.f32.mrb[0].mxu0
  %2952 = vmatprep.mubr.f32.mxu0 0.0
  %2953 = vmatmul.mubr.f32.gmra.mrb[0].mxu0 %v2881
  %v2954 = vpop.f32.mrb[0].mxu0
  %v2955 = vadd.f32 %v2876, %v2954
  %v2956 = vpop.f32.mrb[0].mxu0
  %2957 = vdwg.mxu0
  %vm2958 = vcmask 15360
  %2959 = vst.msk [vmem:[%s3] sm:$0xff] %vm2958, %v2950
  %2960 = vst.msk [vmem:[%s3 + $0x8] sm:$0xff] %vm2958, %v2955
  // Predicated region
  $region14: #{ascc_forward.2} parent=0 // pred_check
    _
  $region15: #{ascc_forward.2} parent=0 // pred_check_branch
    %2962 = sbr.rel (0) target = $region17
  $region16: #{ascc_forward.2} parent=0 // pred_region
    _
  $region17: #{ascc_forward.2} parent=0 // pred_fallthru
    _
  // Predicated region
  $region18: #{ascc_forward.2} parent=0 // pred_check
    _
  $region19: #{ascc_forward.2} parent=0 // pred_check_branch
    %2964 = sbr.rel (0) target = $region21
  $region20: #{ascc_forward.2} parent=0 // pred_region
    _
  $region21: #{ascc_forward.2} parent=0 // pred_fallthru
    _

// kernel: ascc_forward.3
$region0: #{ascc_forward.3}
  #allocation0 [shape = 'u32[]', space=smem, size = 0x4, offset = 0x4, fixed_abs, tag = 'smem constant byte address 0x4 - core index']
  #allocation1 [shape = 'u32[144,128]{1,0:T(1,128)}', space=vmem, size = 0x12000, scoped, tag = 'internal scratch']
  %s0 = inlined_call_operand.vmem [shape: f32[4,16,32], index: 0, kind: input, shape index: {}]
  %s1 = inlined_call_operand.vmem [shape: f32[16,4], index: 1, kind: input, shape index: {}]
  %s2 = inlined_call_operand.vmem [shape: f32[16,4], index: 2, kind: input, shape index: {}]
  %s3 = inlined_call_operand.vmem [shape: f32[16,32], index: 3, kind: input, shape index: {}]
  %s4 = inlined_call_operand.vmem [shape: f32[16,16], index: 4, kind: input, shape index: {}]
  %s5 = inlined_call_operand.vmem [shape: f32[944,128], index: 5, kind: input, shape index: {}]
  %s6 = inlined_call_operand.vmem [shape: f32[16,2], index: 6, kind: output, shape index: {}]
  %s7 = sld [smem:[#allocation0]]
  $region34: #{ascc_forward.3} parent=0
    _
  %s9 = ssub.s32 1, %s7
  %s10 = scalar_select 0, %s9, %s7
  // Predicated region
  $region2: #{ascc_forward.3} parent=0 // pred_check
    _
  $region3: #{ascc_forward.3} parent=0 // pred_check_branch
    %12 = sbr.rel (0) target = $region5
  $region4: #{ascc_forward.3} parent=0 // pred_region
    _
  $region5: #{ascc_forward.3} parent=0 // pred_fallthru
    _
  // Predicated region
  $region6: #{ascc_forward.3} parent=0 // pred_check
    _
  $region7: #{ascc_forward.3} parent=0 // pred_check_branch
    %14 = sbr.rel (0) target = $region9
  $region8: #{ascc_forward.3} parent=0 // pred_region
    _
  $region9: #{ascc_forward.3} parent=0 // pred_fallthru
    _
  // Predicated region
  $region10: #{ascc_forward.3} parent=0 // pred_check
    _
  $region11: #{ascc_forward.3} parent=0 // pred_check_branch
    %16 = sbr.rel (0) target = $region13
  $region12: #{ascc_forward.3} parent=0 // pred_region
    _
  $region13: #{ascc_forward.3} parent=0 // pred_fallthru
    _
  // Predicated region
  $region14: #{ascc_forward.3} parent=0 // pred_check
    _
  $region15: #{ascc_forward.3} parent=0 // pred_check_branch
    %18 = sbr.rel (0) target = $region17
  $region16: #{ascc_forward.3} parent=0 // pred_region
    _
  $region17: #{ascc_forward.3} parent=0 // pred_fallthru
    _
  // Predicated region
  $region18: #{ascc_forward.3} parent=0 // pred_check
    _
  $region19: #{ascc_forward.3} parent=0 // pred_check_branch
    %20 = sbr.rel (0) target = $region21
  $region20: #{ascc_forward.3} parent=0 // pred_region
    _
  $region21: #{ascc_forward.3} parent=0 // pred_fallthru
    _
  // Predicated region
  $region22: #{ascc_forward.3} parent=0 // pred_check
    _
  $region23: #{ascc_forward.3} parent=0 // pred_check_branch
    %22 = sbr.rel (0) target = $region25
  $region24: #{ascc_forward.3} parent=0 // pred_region
    _
  $region25: #{ascc_forward.3} parent=0 // pred_fallthru
    _
  %v23 = vld [vmem:[%s1] sm:$0xff]
  %v24 = vld [vmem:[%s1 + $0x8] sm:$0xff]
  %v25 = vld [vmem:[%s2] sm:$0xff]
  %v26 = vld [vmem:[%s2 + $0x8] sm:$0xff]
  %v27 = vmul.f32 %v25, %v23
  %v28 = vmul.f32 %v26, %v24
  %v29 = vsub.f32 1.0, %v25
  %v30 = vsub.f32 1.0, %v26
  %v31 = vmul.f32 %v29, -999.0
  %v32 = vmul.f32 %v30, -999.0
  %v33 = vadd.f32 %v27, %v31
  %v34 = vadd.f32 %v28, %v32
  %vm35 = vcmask 31744
  %v36 = vsel %vm35, %v33, -inf
  %37 = vmax.xlane.f32.xlu0 %v36
  %v38 = vpop.xlane.xlu0 %37
  %v39 = vsel %vm35, %v34, -inf
  %40 = vmax.xlane.f32.xlu0 %v39
  %v41 = vpop.xlane.xlu0 %40
  %v42 = vsub.f32 %v33, %v38
  %v43 = vsub.f32 %v34, %v41
  %v44 = vmul.f32 %v42, 1.442695
  %v45 = vpow.pop %v44
  %v46 = vmul.f32 %v43, 1.442695
  %v47 = vpow.pop %v46
  %v48 = vsel %vm35, %v45, 0.0
  %49 = vadd.xlane.f32.xlu0 %v48
  %v50 = vpop.xlane.xlu0 %49
  %v51 = vsel %vm35, %v47, 0.0
  %52 = vadd.xlane.f32.xlu0 %v51
  %v53 = vpop.xlane.xlu0 %52
  %v54 = vrcp.pop %v50
  %v55 = vrcp.pop %v53
  %v56 = vmul.f32 %v45, %v54
  %v57 = vmul.f32 %v47, %v55
  %v58 = vmul.f32 %v56, %v25
  %v59 = vmul.f32 %v57, %v26
  %v60 = vld [vmem:[%s3] sm:$0xff]
  %v61 = vld [vmem:[%s3 + $0x8] sm:$0xff]
  %v62 = vld [vmem:[%s0] sm:$0xff]
  %v63 = vld [vmem:[%s0 + $0x8] sm:$0xff]
  %65 = vset.pattern.permute.xlu0 0
  %66 = vperm.xlu0 %65, %v58
  %v67 = vpop.permute.xlu0 %66
  %70 = vset.pattern.permute.xlu0 0
  %71 = vperm.xlu0 %70, %v59
  %v72 = vpop.permute.xlu0 %71
  %v74 = vmul.f32 %v67, %v62
  %v75 = vmul.f32 %v72, %v63
  %v76 = vadd.f32 %v60, %v74
  %v77 = vadd.f32 %v61, %v75
  %s78 = scalar_lea.vmem %s0, 16
  %v79 = vld [vmem:[%s78] sm:$0xff]
  %v80 = vld [vmem:[%s78 + $0x8] sm:$0xff]
  %81 = vset.pattern.permute.xlu0 1
  %82 = vperm.xlu0 %81, %v58
  %v83 = vpop.permute.xlu0 %82
  %85 = vset.pattern.permute.xlu0 1
  %86 = vperm.xlu0 %85, %v59
  %v87 = vpop.permute.xlu0 %86
  %v89 = vmul.f32 %v83, %v79
  %v90 = vmul.f32 %v87, %v80
  %v91 = vadd.f32 %v76, %v89
  %v92 = vadd.f32 %v77, %v90
  %s93 = scalar_lea.vmem %s0, 32
  %v94 = vld [vmem:[%s93] sm:$0xff]
  %v95 = vld [vmem:[%s93 + $0x8] sm:$0xff]
  %96 = vset.pattern.permute.xlu0 2
  %97 = vperm.xlu0 %96, %v58
  %v98 = vpop.permute.xlu0 %97
  %100 = vset.pattern.permute.xlu0 2
  %101 = vperm.xlu0 %100, %v59
  %v102 = vpop.permute.xlu0 %101
  %v104 = vmul.f32 %v98, %v94
  %v105 = vmul.f32 %v102, %v95
  %v106 = vadd.f32 %v91, %v104
  %v107 = vadd.f32 %v92, %v105
  %s108 = scalar_lea.vmem %s0, 48
  %v109 = vld [vmem:[%s108] sm:$0xff]
  %v110 = vld [vmem:[%s108 + $0x8] sm:$0xff]
  %111 = vset.pattern.permute.xlu0 3
  %112 = vperm.xlu0 %111, %v58
  %v113 = vpop.permute.xlu0 %112
  %115 = vset.pattern.permute.xlu0 3
  %116 = vperm.xlu0 %115, %v59
  %v117 = vpop.permute.xlu0 %116
  %v119 = vmul.f32 %v113, %v109
  %v120 = vmul.f32 %v117, %v110
  %v121 = vadd.f32 %v106, %v119
  %v122 = vadd.f32 %v107, %v120
  %v123 = vld [vmem:[%s4] sm:$0xff]
  %v124 = vld [vmem:[%s4 + $0x8] sm:$0xff]
  %v125 = vld [vmem:[%s5] sm:$0x1]
  %v126 = vld [vmem:[%s5 + $0x8] sm:$0x1]
  %vm127 = vcmask 261120
  %v128 = vsel %vm127, %v121, 0.0
  %129 = vadd.xlane.f32.xlu0 %v128
  %v130 = vpop.xlane.xlu0 %129
  %v131 = vsel %vm127, %v122, 0.0
  %132 = vadd.xlane.f32.xlu0 %v131
  %v133 = vpop.xlane.xlu0 %132
  %v134 = vrcp.pop 32.0
  %v135 = vmul.f32 %v130, %v134
  %v136 = vmul.f32 %v133, %v134
  %v137 = vsub.f32 %v121, %v135
  %v138 = vsub.f32 %v122, %v136
  %v139 = vmul.f32 %v137, %v137
  %v140 = vmul.f32 %v138, %v138
  %v141 = vsel %vm127, %v139, 0.0
  %142 = vadd.xlane.f32.xlu0 %v141
  %v143 = vpop.xlane.xlu0 %142
  %v144 = vsel %vm127, %v140, 0.0
  %145 = vadd.xlane.f32.xlu0 %v144
  %v146 = vpop.xlane.xlu0 %145
  %v147 = vmul.f32 %v143, %v134
  %v148 = vmul.f32 %v146, %v134
  %v149 = vadd.f32 %v147, 1e-05
  %v150 = vadd.f32 %v148, 1e-05
  %v151 = vrsqrt.pop %v149
  %v152 = vrsqrt.pop %v150
  %v153 = vmul.f32 %v137, %v151
  %v154 = vmul.f32 %v138, %v152
  %v155 = vlaneseq
  %v156 = vshrl.u32 %v155, 7
  %v157 = vsub.s32 0, %v156
  %v158 = vrot.slane %v125, %v157
  %v159 = vmul.f32 %v153, %v158
  %v160 = vmul.f32 %v154, %v158
  %v161 = vlaneseq
  %v162 = vshrl.u32 %v161, 7
  %v163 = vsub.s32 0, %v162
  %v164 = vrot.slane %v126, %v163
  %v165 = vadd.f32 %v159, %v164
  %v166 = vadd.f32 %v160, %v164
  %v167 = vld [vmem:[%s5 + $0x10] sm:$0xff]
  %v168 = vld [vmem:[%s5 + $0x18] sm:$0xff]
  %v169 = vld [vmem:[%s5 + $0x20] sm:$0xff]
  %v170 = vld [vmem:[%s5 + $0x28] sm:$0xff]
  %v171 = vld [vmem:[%s5 + $0x30] sm:$0x1]
  %v172 = vlaneseq
  %v173 = vshrl.u32 %v172, 7
  %v174 = vsub.s32 0, %v173
  %v175 = vrot.slane %v171, %v174
  %v177 = vsel %vm127, %v165, 0
  %v180 = vsel %vm127, %v166, 0
  %182 = vmatprep.subr.mxu0 0.0
  %183 = vmatpush1.msra.mxu0 %v167
  %184 = vmatprep.subr.mxu0 0.0
  %185 = vmatpush1.msra.mxu0 %v168
  %186 = vmatprep.subr.mxu0 0.0
  %187 = vmatpush1.msra.mxu0 %v169
  %188 = vmatprep.subr.mxu0 0.0
  %189 = vmatpush1.msra.mxu0 %v170
  %190 = vmatprep.subr.mxu0 0.0
  %191 = vmatpush1.msra.mxu0 0.0
  %192 = vmatprep.subr.mxu0 0.0
  %193 = vmatpush1.msra.mxu0 0.0
  %194 = vmatprep.subr.mxu0 0.0
  %195 = vmatpush1.msra.mxu0 0.0
  %196 = vmatprep.subr.mxu0 0.0
  %197 = vmatpush1.msra.mxu0 0.0
  %198 = vmatprep.subr.mxu0 0.0
  %199 = vmatpush1.msra.mxu0 0.0
  %200 = vmatprep.subr.mxu0 0.0
  %201 = vmatpush1.msra.mxu0 0.0
  %202 = vmatprep.subr.mxu0 0.0
  %203 = vmatpush1.msra.mxu0 0.0
  %204 = vmatprep.subr.mxu0 0.0
  %205 = vmatpush1.msra.mxu0 0.0
  %206 = vmatprep.subr.mxu0 0.0
  %207 = vmatpush1.msra.mxu0 0.0
  %208 = vmatprep.subr.mxu0 0.0
  %209 = vmatpush1.msra.mxu0 0.0
  %210 = vmatprep.subr.mxu0 0.0
  %211 = vmatpush1.msra.mxu0 0.0
  %212 = vmatprep.subr.mxu0 0.0
  %213 = vmatpush1.msra.mxu0 0.0
  %214 = vmatprep.subr.mxu0 0.0
  %215 = vmatpush1.msra.mxu0 0.0
  %216 = vmatprep.subr.mxu0 0.0
  %217 = vmatpush1.msra.mxu0 0.0
  %218 = vmatprep.subr.mxu0 0.0
  %219 = vmatpush1.msra.mxu0 0.0
  %220 = vmatprep.subr.mxu0 0.0
  %221 = vmatpush1.msra.mxu0 0.0
  %222 = vmatprep.subr.mxu0 0.0
  %223 = vmatpush1.msra.mxu0 0.0
  %224 = vmatprep.subr.mxu0 0.0
  %225 = vmatpush1.msra.mxu0 0.0
  %226 = vmatprep.subr.mxu0 0.0
  %227 = vmatpush1.msra.mxu0 0.0
  %228 = vmatprep.subr.mxu0 0.0
  %229 = vmatpush1.msra.mxu0 0.0
  %230 = vmatprep.subr.mxu0 0.0
  %231 = vmatpush1.msra.mxu0 0.0
  %232 = vmatprep.subr.mxu0 0.0
  %233 = vmatpush1.msra.mxu0 0.0
  %234 = vmatprep.subr.mxu0 0.0
  %235 = vmatpush1.msra.mxu0 0.0
  %236 = vmatprep.subr.mxu0 0.0
  %237 = vmatpush1.msra.mxu0 0.0
  %238 = vmatprep.subr.mxu0 0.0
  %239 = vmatpush1.msra.mxu0 0.0
  %240 = vmatprep.subr.mxu0 0.0
  %241 = vmatpush1.msra.mxu0 0.0
  %242 = vmatprep.subr.mxu0 0.0
  %243 = vmatpush1.msra.mxu0 0.0
  %244 = vmatprep.subr.mxu0 0.0
  %245 = vmatpush1.msra.mxu0 0.0
  %246 = vmatprep.mubr.f32.mxu0 0.0
  %247 = vmatmul.mubr.f32.gmra.mrb[0].mxu0 %v177
  %v248 = vpop.f32.mrb[0].mxu0
  %v249 = vadd.f32 %v175, %v248
  %v250 = vpop.f32.mrb[0].mxu0
  %251 = vmatprep.mubr.f32.mxu0 0.0
  %252 = vmatmul.mubr.f32.gmra.mrb[0].mxu0 %v180
  %v253 = vpop.f32.mrb[0].mxu0
  %v254 = vadd.f32 %v175, %v253
  %v255 = vpop.f32.mrb[0].mxu0
  %256 = vdwg.mxu0
  %v257 = vld [vmem:[%s5 + $0x60] sm:$0xff]
  %v258 = vld [vmem:[%s5 + $0x68] sm:$0xff]
  %v259 = vld [vmem:[%s5 + $0x70] sm:$0xff]
  %v260 = vld [vmem:[%s5 + $0x78] sm:$0xff]
  %v261 = vld [vmem:[%s5 + $0x80] sm:$0x1]
  %v262 = vlaneseq
  %v263 = vshrl.u32 %v262, 7
  %v264 = vsub.s32 0, %v263
  %v265 = vrot.slane %v261, %v264
  %266 = vmatprep.subr.mxu0 0.0
  %267 = vmatpush1.msra.mxu0 %v257
  %268 = vmatprep.subr.mxu0 0.0
  %269 = vmatpush1.msra.mxu0 %v258
  %270 = vmatprep.subr.mxu0 0.0
  %271 = vmatpush1.msra.mxu0 %v259
  %272 = vmatprep.subr.mxu0 0.0
  %273 = vmatpush1.msra.mxu0 %v260
  %274 = vmatprep.subr.mxu0 0.0
  %275 = vmatpush1.msra.mxu0 0.0
  %276 = vmatprep.subr.mxu0 0.0
  %277 = vmatpush1.msra.mxu0 0.0
  %278 = vmatprep.subr.mxu0 0.0
  %279 = vmatpush1.msra.mxu0 0.0
  %280 = vmatprep.subr.mxu0 0.0
  %281 = vmatpush1.msra.mxu0 0.0
  %282 = vmatprep.subr.mxu0 0.0
  %283 = vmatpush1.msra.mxu0 0.0
  %284 = vmatprep.subr.mxu0 0.0
  %285 = vmatpush1.msra.mxu0 0.0
  %286 = vmatprep.subr.mxu0 0.0
  %287 = vmatpush1.msra.mxu0 0.0
  %288 = vmatprep.subr.mxu0 0.0
  %289 = vmatpush1.msra.mxu0 0.0
  %290 = vmatprep.subr.mxu0 0.0
  %291 = vmatpush1.msra.mxu0 0.0
  %292 = vmatprep.subr.mxu0 0.0
  %293 = vmatpush1.msra.mxu0 0.0
  %294 = vmatprep.subr.mxu0 0.0
  %295 = vmatpush1.msra.mxu0 0.0
  %296 = vmatprep.subr.mxu0 0.0
  %297 = vmatpush1.msra.mxu0 0.0
  %298 = vmatprep.subr.mxu0 0.0
  %299 = vmatpush1.msra.mxu0 0.0
  %300 = vmatprep.subr.mxu0 0.0
  %301 = vmatpush1.msra.mxu0 0.0
  %302 = vmatprep.subr.mxu0 0.0
  %303 = vmatpush1.msra.mxu0 0.0
  %304 = vmatprep.subr.mxu0 0.0
  %305 = vmatpush1.msra.mxu0 0.0
  %306 = vmatprep.subr.mxu0 0.0
  %307 = vmatpush1.msra.mxu0 0.0
  %308 = vmatprep.subr.mxu0 0.0
  %309 = vmatpush1.msra.mxu0 0.0
  %310 = vmatprep.subr.mxu0 0.0
  %311 = vmatpush1.msra.mxu0 0.0
  %312 = vmatprep.subr.mxu0 0.0
  %313 = vmatpush1.msra.mxu0 0.0
  %314 = vmatprep.subr.mxu0 0.0
  %315 = vmatpush1.msra.mxu0 0.0
  %316 = vmatprep.subr.mxu0 0.0
  %317 = vmatpush1.msra.mxu0 0.0
  %318 = vmatprep.subr.mxu0 0.0
  %319 = vmatpush1.msra.mxu0 0.0
  %320 = vmatprep.subr.mxu0 0.0
  %321 = vmatpush1.msra.mxu0 0.0
  %322 = vmatprep.subr.mxu0 0.0
  %323 = vmatpush1.msra.mxu0 0.0
  %324 = vmatprep.subr.mxu0 0.0
  %325 = vmatpush1.msra.mxu0 0.0
  %326 = vmatprep.subr.mxu0 0.0
  %327 = vmatpush1.msra.mxu0 0.0
  %328 = vmatprep.subr.mxu0 0.0
  %329 = vmatpush1.msra.mxu0 0.0
  %330 = vmatprep.mubr.f32.mxu0 0.0
  %331 = vmatmul.mubr.f32.gmra.mrb[0].mxu0 %v177
  %v332 = vpop.f32.mrb[0].mxu0
  %v333 = vadd.f32 %v265, %v332
  %v334 = vpop.f32.mrb[0].mxu0
  %335 = vmatprep.mubr.f32.mxu0 0.0
  %336 = vmatmul.mubr.f32.gmra.mrb[0].mxu0 %v180
  %v337 = vpop.f32.mrb[0].mxu0
  %v338 = vadd.f32 %v265, %v337
  %v339 = vpop.f32.mrb[0].mxu0
  %340 = vdwg.mxu0
  %v341 = vld [vmem:[%s5 + $0xb0] sm:$0xff]
  %v342 = vld [vmem:[%s5 + $0xb8] sm:$0xff]
  %v343 = vld [vmem:[%s5 + $0xc0] sm:$0xff]
  %v344 = vld [vmem:[%s5 + $0xc8] sm:$0xff]
  %v345 = vld [vmem:[%s5 + $0xd0] sm:$0x1]
  %v346 = vlaneseq
  %v347 = vshrl.u32 %v346, 7
  %v348 = vsub.s32 0, %v347
  %v349 = vrot.slane %v345, %v348
  %350 = vmatprep.subr.mxu0 0.0
  %351 = vmatpush1.msra.mxu0 %v341
  %352 = vmatprep.subr.mxu0 0.0
  %353 = vmatpush1.msra.mxu0 %v342
  %354 = vmatprep.subr.mxu0 0.0
  %355 = vmatpush1.msra.mxu0 %v343
  %356 = vmatprep.subr.mxu0 0.0
  %357 = vmatpush1.msra.mxu0 %v344
  %358 = vmatprep.subr.mxu0 0.0
  %359 = vmatpush1.msra.mxu0 0.0
  %360 = vmatprep.subr.mxu0 0.0
  %361 = vmatpush1.msra.mxu0 0.0
  %362 = vmatprep.subr.mxu0 0.0
  %363 = vmatpush1.msra.mxu0 0.0
  %364 = vmatprep.subr.mxu0 0.0
  %365 = vmatpush1.msra.mxu0 0.0
  %366 = vmatprep.subr.mxu0 0.0
  %367 = vmatpush1.msra.mxu0 0.0
  %368 = vmatprep.subr.mxu0 0.0
  %369 = vmatpush1.msra.mxu0 0.0
  %370 = vmatprep.subr.mxu0 0.0
  %371 = vmatpush1.msra.mxu0 0.0
  %372 = vmatprep.subr.mxu0 0.0
  %373 = vmatpush1.msra.mxu0 0.0
  %374 = vmatprep.subr.mxu0 0.0
  %375 = vmatpush1.msra.mxu0 0.0
  %376 = vmatprep.subr.mxu0 0.0
  %377 = vmatpush1.msra.mxu0 0.0
  %378 = vmatprep.subr.mxu0 0.0
  %379 = vmatpush1.msra.mxu0 0.0
  %380 = vmatprep.subr.mxu0 0.0
  %381 = vmatpush1.msra.mxu0 0.0
  %382 = vmatprep.subr.mxu0 0.0
  %383 = vmatpush1.msra.mxu0 0.0
  %384 = vmatprep.subr.mxu0 0.0
  %385 = vmatpush1.msra.mxu0 0.0
  %386 = vmatprep.subr.mxu0 0.0
  %387 = vmatpush1.msra.mxu0 0.0
  %388 = vmatprep.subr.mxu0 0.0
  %389 = vmatpush1.msra.mxu0 0.0
  %390 = vmatprep.subr.mxu0 0.0
  %391 = vmatpush1.msra.mxu0 0.0
  %392 = vmatprep.subr.mxu0 0.0
  %393 = vmatpush1.msra.mxu0 0.0
  %394 = vmatprep.subr.mxu0 0.0
  %395 = vmatpush1.msra.mxu0 0.0
  %396 = vmatprep.subr.mxu0 0.0
  %397 = vmatpush1.msra.mxu0 0.0
  %398 = vmatprep.subr.mxu0 0.0
  %399 = vmatpush1.msra.mxu0 0.0
  %400 = vmatprep.subr.mxu0 0.0
  %401 = vmatpush1.msra.mxu0 0.0
  %402 = vmatprep.subr.mxu0 0.0
  %403 = vmatpush1.msra.mxu0 0.0
  %404 = vmatprep.subr.mxu0 0.0
  %405 = vmatpush1.msra.mxu0 0.0
  %406 = vmatprep.subr.mxu0 0.0
  %407 = vmatpush1.msra.mxu0 0.0
  %408 = vmatprep.subr.mxu0 0.0
  %409 = vmatpush1.msra.mxu0 0.0
  %410 = vmatprep.subr.mxu0 0.0
  %411 = vmatpush1.msra.mxu0 0.0
  %412 = vmatprep.subr.mxu0 0.0
  %413 = vmatpush1.msra.mxu0 0.0
  %414 = vmatprep.mubr.f32.mxu0 0.0
  %415 = vmatmul.mubr.f32.gmra.mrb[0].mxu0 %v177
  %v416 = vpop.f32.mrb[0].mxu0
  %v417 = vadd.f32 %v349, %v416
  %v418 = vpop.f32.mrb[0].mxu0
  %419 = vmatprep.mubr.f32.mxu0 0.0
  %420 = vmatmul.mubr.f32.gmra.mrb[0].mxu0 %v180
  %v421 = vpop.f32.mrb[0].mxu0
  %v422 = vadd.f32 %v349, %v421
  %v423 = vpop.f32.mrb[0].mxu0
  %424 = vdwg.mxu0
  %vm425 = vcmask 130048
  %v427 = vsel %vm425, %v249, 0
  %v430 = vsel %vm425, %v254, 0
  %v433 = vsel %vm425, %v333, 0
  %v436 = vsel %vm425, %v338, 0
  %438 = vmatprep.subr.mxu0 0.0
  %439 = vmatpush1.xpose.msra.mxu0 %v433
  %440 = vmatprep.subr.mxu0 0.0
  %441 = vmatpush1.xpose.msra.mxu0 %v436
  %442 = vmatprep.subr.mxu0 0.0
  %443 = vmatpush1.xpose.msra.mxu0 0.0
  %444 = vmatprep.subr.mxu0 0.0
  %445 = vmatpush1.xpose.msra.mxu0 0.0
  %446 = vmatprep.subr.mxu0 0.0
  %447 = vmatpush1.xpose.msra.mxu0 0.0
  %448 = vmatprep.subr.mxu0 0.0
  %449 = vmatpush1.xpose.msra.mxu0 0.0
  %450 = vmatprep.subr.mxu0 0.0
  %451 = vmatpush1.xpose.msra.mxu0 0.0
  %452 = vmatprep.subr.mxu0 0.0
  %453 = vmatpush1.xpose.msra.mxu0 0.0
  %454 = vmatprep.subr.mxu0 0.0
  %455 = vmatpush1.xpose.msra.mxu0 0.0
  %456 = vmatprep.subr.mxu0 0.0
  %457 = vmatpush1.xpose.msra.mxu0 0.0
  %458 = vmatprep.subr.mxu0 0.0
  %459 = vmatpush1.xpose.msra.mxu0 0.0
  %460 = vmatprep.subr.mxu0 0.0
  %461 = vmatpush1.xpose.msra.mxu0 0.0
  %462 = vmatprep.subr.mxu0 0.0
  %463 = vmatpush1.xpose.msra.mxu0 0.0
  %464 = vmatprep.subr.mxu0 0.0
  %465 = vmatpush1.xpose.msra.mxu0 0.0
  %466 = vmatprep.subr.mxu0 0.0
  %467 = vmatpush1.xpose.msra.mxu0 0.0
  %468 = vmatprep.subr.mxu0 0.0
  %469 = vmatpush1.xpose.msra.mxu0 0.0
  %470 = vmatprep.subr.mxu0 0.0
  %471 = vmatpush1.xpose.msra.mxu0 0.0
  %472 = vmatprep.subr.mxu0 0.0
  %473 = vmatpush1.xpose.msra.mxu0 0.0
  %474 = vmatprep.subr.mxu0 0.0
  %475 = vmatpush1.xpose.msra.mxu0 0.0
  %476 = vmatprep.subr.mxu0 0.0
  %477 = vmatpush1.xpose.msra.mxu0 0.0
  %478 = vmatprep.subr.mxu0 0.0
  %479 = vmatpush1.xpose.msra.mxu0 0.0
  %480 = vmatprep.subr.mxu0 0.0
  %481 = vmatpush1.xpose.msra.mxu0 0.0
  %482 = vmatprep.subr.mxu0 0.0
  %483 = vmatpush1.xpose.msra.mxu0 0.0
  %484 = vmatprep.subr.mxu0 0.0
  %485 = vmatpush1.xpose.msra.mxu0 0.0
  %486 = vmatprep.subr.mxu0 0.0
  %487 = vmatpush1.xpose.msra.mxu0 0.0
  %488 = vmatprep.subr.mxu0 0.0
  %489 = vmatpush1.xpose.msra.mxu0 0.0
  %490 = vmatprep.subr.mxu0 0.0
  %491 = vmatpush1.xpose.msra.mxu0 0.0
  %492 = vmatprep.subr.mxu0 0.0
  %493 = vmatpush1.xpose.msra.mxu0 0.0
  %494 = vmatprep.subr.mxu0 0.0
  %495 = vmatpush1.xpose.msra.mxu0 0.0
  %496 = vmatprep.subr.mxu0 0.0
  %497 = vmatpush1.xpose.msra.mxu0 0.0
  %498 = vmatprep.subr.mxu0 0.0
  %499 = vmatpush1.xpose.msra.mxu0 0.0
  %500 = vmatprep.subr.mxu0 0.0
  %501 = vmatpush1.xpose.msra.mxu0 0.0
  %502 = vmatprep.mubr.f32.mxu0 0.0
  %503 = vmatmul.mubr.f32.gmra.mrb[0].mxu0 %v427
  %v504 = vpop.f32.mrb[0].mxu0
  %v505 = vadd.f32 0.0, %v504
  %v506 = vpop.f32.mrb[0].mxu0
  %507 = vmatprep.mubr.f32.mxu0 0.0
  %508 = vmatmul.mubr.f32.gmra.mrb[0].mxu0 %v430
  %v509 = vpop.f32.mrb[0].mxu0
  %v510 = vadd.f32 0.0, %v509
  %v511 = vpop.f32.mrb[0].mxu0
  %512 = vdwg.mxu0
  %v513 = vmul.f32 %v505, 0.25
  %v514 = vmul.f32 %v510, 0.25
  %v515 = vadd.f32 %v513, %v123
  %v516 = vadd.f32 %v514, %v124
  %v517 = vsel %vm425, %v515, -inf
  %518 = vmax.xlane.f32.xlu0 %v517
  %v519 = vpop.xlane.xlu0 %518
  %v520 = vsel %vm425, %v516, -inf
  %521 = vmax.xlane.f32.xlu0 %v520
  %v522 = vpop.xlane.xlu0 %521
  %v523 = vsub.f32 %v515, %v519
  %v524 = vsub.f32 %v516, %v522
  %v525 = vmul.f32 %v523, 1.442695
  %v526 = vpow.pop %v525
  %v527 = vmul.f32 %v524, 1.442695
  %v528 = vpow.pop %v527
  %v529 = vsel %vm425, %v526, 0.0
  %530 = vadd.xlane.f32.xlu0 %v529
  %v531 = vpop.xlane.xlu0 %530
  %v532 = vsel %vm425, %v528, 0.0
  %533 = vadd.xlane.f32.xlu0 %v532
  %v534 = vpop.xlane.xlu0 %533
  %v535 = vrcp.pop %v531
  %v536 = vrcp.pop %v534
  %v537 = vmul.f32 %v526, %v535
  %v538 = vmul.f32 %v528, %v536
  %v540 = vsel %vm425, %v537, 0
  %v543 = vsel %vm425, %v538, 0
  %545 = vmatprep.subr.mxu0 0.0
  %546 = vmatpush1.msra.mxu0 %v417
  %547 = vmatprep.subr.mxu0 0.0
  %548 = vmatpush1.msra.mxu0 %v422
  %549 = vmatprep.subr.mxu0 0.0
  %550 = vmatpush1.msra.mxu0 0.0
  %551 = vmatprep.subr.mxu0 0.0
  %552 = vmatpush1.msra.mxu0 0.0
  %553 = vmatprep.subr.mxu0 0.0
  %554 = vmatpush1.msra.mxu0 0.0
  %555 = vmatprep.subr.mxu0 0.0
  %556 = vmatpush1.msra.mxu0 0.0
  %557 = vmatprep.subr.mxu0 0.0
  %558 = vmatpush1.msra.mxu0 0.0
  %559 = vmatprep.subr.mxu0 0.0
  %560 = vmatpush1.msra.mxu0 0.0
  %561 = vmatprep.subr.mxu0 0.0
  %562 = vmatpush1.msra.mxu0 0.0
  %563 = vmatprep.subr.mxu0 0.0
  %564 = vmatpush1.msra.mxu0 0.0
  %565 = vmatprep.subr.mxu0 0.0
  %566 = vmatpush1.msra.mxu0 0.0
  %567 = vmatprep.subr.mxu0 0.0
  %568 = vmatpush1.msra.mxu0 0.0
  %569 = vmatprep.subr.mxu0 0.0
  %570 = vmatpush1.msra.mxu0 0.0
  %571 = vmatprep.subr.mxu0 0.0
  %572 = vmatpush1.msra.mxu0 0.0
  %573 = vmatprep.subr.mxu0 0.0
  %574 = vmatpush1.msra.mxu0 0.0
  %575 = vmatprep.subr.mxu0 0.0
  %576 = vmatpush1.msra.mxu0 0.0
  %577 = vmatprep.subr.mxu0 0.0
  %578 = vmatpush1.msra.mxu0 0.0
  %579 = vmatprep.subr.mxu0 0.0
  %580 = vmatpush1.msra.mxu0 0.0
  %581 = vmatprep.subr.mxu0 0.0
  %582 = vmatpush1.msra.mxu0 0.0
  %583 = vmatprep.subr.mxu0 0.0
  %584 = vmatpush1.msra.mxu0 0.0
  %585 = vmatprep.subr.mxu0 0.0
  %586 = vmatpush1.msra.mxu0 0.0
  %587 = vmatprep.subr.mxu0 0.0
  %588 = vmatpush1.msra.mxu0 0.0
  %589 = vmatprep.subr.mxu0 0.0
  %590 = vmatpush1.msra.mxu0 0.0
  %591 = vmatprep.subr.mxu0 0.0
  %592 = vmatpush1.msra.mxu0 0.0
  %593 = vmatprep.subr.mxu0 0.0
  %594 = vmatpush1.msra.mxu0 0.0
  %595 = vmatprep.subr.mxu0 0.0
  %596 = vmatpush1.msra.mxu0 0.0
  %597 = vmatprep.subr.mxu0 0.0
  %598 = vmatpush1.msra.mxu0 0.0
  %599 = vmatprep.subr.mxu0 0.0
  %600 = vmatpush1.msra.mxu0 0.0
  %601 = vmatprep.subr.mxu0 0.0
  %602 = vmatpush1.msra.mxu0 0.0
  %603 = vmatprep.subr.mxu0 0.0
  %604 = vmatpush1.msra.mxu0 0.0
  %605 = vmatprep.subr.mxu0 0.0
  %606 = vmatpush1.msra.mxu0 0.0
  %607 = vmatprep.subr.mxu0 0.0
  %608 = vmatpush1.msra.mxu0 0.0
  %609 = vmatprep.mubr.f32.mxu0 0.0
  %610 = vmatmul.mubr.f32.gmra.mrb[0].mxu0 %v540
  %v611 = vpop.f32.mrb[0].mxu0
  %v612 = vadd.f32 0.0, %v611
  %v613 = vpop.f32.mrb[0].mxu0
  %614 = vmatprep.mubr.f32.mxu0 0.0
  %615 = vmatmul.mubr.f32.gmra.mrb[0].mxu0 %v543
  %v616 = vpop.f32.mrb[0].mxu0
  %v617 = vadd.f32 0.0, %v616
  %v618 = vpop.f32.mrb[0].mxu0
  %619 = vdwg.mxu0
  %v620 = vld [vmem:[%s5 + $0x100] sm:$0xff]
  %v621 = vld [vmem:[%s5 + $0x108] sm:$0xff]
  %v622 = vld [vmem:[%s5 + $0x38] sm:$0xff]
  %v623 = vld [vmem:[%s5 + $0x40] sm:$0xff]
  %v624 = vld [vmem:[%s5 + $0x48] sm:$0xff]
  %v625 = vld [vmem:[%s5 + $0x50] sm:$0xff]
  %v626 = vld [vmem:[%s5 + $0x58] sm:$0x1]
  %v627 = vlaneseq
  %v628 = vshrl.u32 %v627, 7
  %v629 = vsub.s32 0, %v628
  %v630 = vrot.slane %v626, %v629
  %631 = vmatprep.subr.mxu0 0.0
  %632 = vmatpush1.msra.mxu0 %v622
  %633 = vmatprep.subr.mxu0 0.0
  %634 = vmatpush1.msra.mxu0 %v623
  %635 = vmatprep.subr.mxu0 0.0
  %636 = vmatpush1.msra.mxu0 %v624
  %637 = vmatprep.subr.mxu0 0.0
  %638 = vmatpush1.msra.mxu0 %v625
  %639 = vmatprep.subr.mxu0 0.0
  %640 = vmatpush1.msra.mxu0 0.0
  %641 = vmatprep.subr.mxu0 0.0
  %642 = vmatpush1.msra.mxu0 0.0
  %643 = vmatprep.subr.mxu0 0.0
  %644 = vmatpush1.msra.mxu0 0.0
  %645 = vmatprep.subr.mxu0 0.0
  %646 = vmatpush1.msra.mxu0 0.0
  %647 = vmatprep.subr.mxu0 0.0
  %648 = vmatpush1.msra.mxu0 0.0
  %649 = vmatprep.subr.mxu0 0.0
  %650 = vmatpush1.msra.mxu0 0.0
  %651 = vmatprep.subr.mxu0 0.0
  %652 = vmatpush1.msra.mxu0 0.0
  %653 = vmatprep.subr.mxu0 0.0
  %654 = vmatpush1.msra.mxu0 0.0
  %655 = vmatprep.subr.mxu0 0.0
  %656 = vmatpush1.msra.mxu0 0.0
  %657 = vmatprep.subr.mxu0 0.0
  %658 = vmatpush1.msra.mxu0 0.0
  %659 = vmatprep.subr.mxu0 0.0
  %660 = vmatpush1.msra.mxu0 0.0
  %661 = vmatprep.subr.mxu0 0.0
  %662 = vmatpush1.msra.mxu0 0.0
  %663 = vmatprep.subr.mxu0 0.0
  %664 = vmatpush1.msra.mxu0 0.0
  %665 = vmatprep.subr.mxu0 0.0
  %666 = vmatpush1.msra.mxu0 0.0
  %667 = vmatprep.subr.mxu0 0.0
  %668 = vmatpush1.msra.mxu0 0.0
  %669 = vmatprep.subr.mxu0 0.0
  %670 = vmatpush1.msra.mxu0 0.0
  %671 = vmatprep.subr.mxu0 0.0
  %672 = vmatpush1.msra.mxu0 0.0
  %673 = vmatprep.subr.mxu0 0.0
  %674 = vmatpush1.msra.mxu0 0.0
  %675 = vmatprep.subr.mxu0 0.0
  %676 = vmatpush1.msra.mxu0 0.0
  %677 = vmatprep.subr.mxu0 0.0
  %678 = vmatpush1.msra.mxu0 0.0
  %679 = vmatprep.subr.mxu0 0.0
  %680 = vmatpush1.msra.mxu0 0.0
  %681 = vmatprep.subr.mxu0 0.0
  %682 = vmatpush1.msra.mxu0 0.0
  %683 = vmatprep.subr.mxu0 0.0
  %684 = vmatpush1.msra.mxu0 0.0
  %685 = vmatprep.subr.mxu0 0.0
  %686 = vmatpush1.msra.mxu0 0.0
  %687 = vmatprep.subr.mxu0 0.0
  %688 = vmatpush1.msra.mxu0 0.0
  %689 = vmatprep.subr.mxu0 0.0
  %690 = vmatpush1.msra.mxu0 0.0
  %691 = vmatprep.subr.mxu0 0.0
  %692 = vmatpush1.msra.mxu0 0.0
  %693 = vmatprep.subr.mxu0 0.0
  %694 = vmatpush1.msra.mxu0 0.0
  %695 = vmatprep.mubr.f32.mxu0 0.0
  %696 = vmatmul.mubr.f32.gmra.mrb[0].mxu0 %v177
  %v697 = vpop.f32.mrb[0].mxu0
  %v698 = vadd.f32 %v630, %v697
  %v699 = vpop.f32.mrb[0].mxu0
  %700 = vmatprep.mubr.f32.mxu0 0.0
  %701 = vmatmul.mubr.f32.gmra.mrb[0].mxu0 %v180
  %v702 = vpop.f32.mrb[0].mxu0
  %v703 = vadd.f32 %v630, %v702
  %v704 = vpop.f32.mrb[0].mxu0
  %705 = vdwg.mxu0
  %v706 = vld [vmem:[%s5 + $0x88] sm:$0xff]
  %v707 = vld [vmem:[%s5 + $0x90] sm:$0xff]
  %v708 = vld [vmem:[%s5 + $0x98] sm:$0xff]
  %v709 = vld [vmem:[%s5 + $0xa0] sm:$0xff]
  %v710 = vld [vmem:[%s5 + $0xa8] sm:$0x1]
  %v711 = vlaneseq
  %v712 = vshrl.u32 %v711, 7
  %v713 = vsub.s32 0, %v712
  %v714 = vrot.slane %v710, %v713
  %715 = vmatprep.subr.mxu0 0.0
  %716 = vmatpush1.msra.mxu0 %v706
  %717 = vmatprep.subr.mxu0 0.0
  %718 = vmatpush1.msra.mxu0 %v707
  %719 = vmatprep.subr.mxu0 0.0
  %720 = vmatpush1.msra.mxu0 %v708
  %721 = vmatprep.subr.mxu0 0.0
  %722 = vmatpush1.msra.mxu0 %v709
  %723 = vmatprep.subr.mxu0 0.0
  %724 = vmatpush1.msra.mxu0 0.0
  %725 = vmatprep.subr.mxu0 0.0
  %726 = vmatpush1.msra.mxu0 0.0
  %727 = vmatprep.subr.mxu0 0.0
  %728 = vmatpush1.msra.mxu0 0.0
  %729 = vmatprep.subr.mxu0 0.0
  %730 = vmatpush1.msra.mxu0 0.0
  %731 = vmatprep.subr.mxu0 0.0
  %732 = vmatpush1.msra.mxu0 0.0
  %733 = vmatprep.subr.mxu0 0.0
  %734 = vmatpush1.msra.mxu0 0.0
  %735 = vmatprep.subr.mxu0 0.0
  %736 = vmatpush1.msra.mxu0 0.0
  %737 = vmatprep.subr.mxu0 0.0
  %738 = vmatpush1.msra.mxu0 0.0
  %739 = vmatprep.subr.mxu0 0.0
  %740 = vmatpush1.msra.mxu0 0.0
  %741 = vmatprep.subr.mxu0 0.0
  %742 = vmatpush1.msra.mxu0 0.0
  %743 = vmatprep.subr.mxu0 0.0
  %744 = vmatpush1.msra.mxu0 0.0
  %745 = vmatprep.subr.mxu0 0.0
  %746 = vmatpush1.msra.mxu0 0.0
  %747 = vmatprep.subr.mxu0 0.0
  %748 = vmatpush1.msra.mxu0 0.0
  %749 = vmatprep.subr.mxu0 0.0
  %750 = vmatpush1.msra.mxu0 0.0
  %751 = vmatprep.subr.mxu0 0.0
  %752 = vmatpush1.msra.mxu0 0.0
  %753 = vmatprep.subr.mxu0 0.0
  %754 = vmatpush1.msra.mxu0 0.0
  %755 = vmatprep.subr.mxu0 0.0
  %756 = vmatpush1.msra.mxu0 0.0
  %757 = vmatprep.subr.mxu0 0.0
  %758 = vmatpush1.msra.mxu0 0.0
  %759 = vmatprep.subr.mxu0 0.0
  %760 = vmatpush1.msra.mxu0 0.0
  %761 = vmatprep.subr.mxu0 0.0
  %762 = vmatpush1.msra.mxu0 0.0
  %763 = vmatprep.subr.mxu0 0.0
  %764 = vmatpush1.msra.mxu0 0.0
  %765 = vmatprep.subr.mxu0 0.0
  %766 = vmatpush1.msra.mxu0 0.0
  %767 = vmatprep.subr.mxu0 0.0
  %768 = vmatpush1.msra.mxu0 0.0
  %769 = vmatprep.subr.mxu0 0.0
  %770 = vmatpush1.msra.mxu0 0.0
  %771 = vmatprep.subr.mxu0 0.0
  %772 = vmatpush1.msra.mxu0 0.0
  %773 = vmatprep.subr.mxu0 0.0
  %774 = vmatpush1.msra.mxu0 0.0
  %775 = vmatprep.subr.mxu0 0.0
  %776 = vmatpush1.msra.mxu0 0.0
  %777 = vmatprep.subr.mxu0 0.0
  %778 = vmatpush1.msra.mxu0 0.0
  %779 = vmatprep.mubr.f32.mxu0 0.0
  %780 = vmatmul.mubr.f32.gmra.mrb[0].mxu0 %v177
  %v781 = vpop.f32.mrb[0].mxu0
  %v782 = vadd.f32 %v714, %v781
  %v783 = vpop.f32.mrb[0].mxu0
  %784 = vmatprep.mubr.f32.mxu0 0.0
  %785 = vmatmul.mubr.f32.gmra.mrb[0].mxu0 %v180
  %v786 = vpop.f32.mrb[0].mxu0
  %v787 = vadd.f32 %v714, %v786
  %v788 = vpop.f32.mrb[0].mxu0
  %789 = vdwg.mxu0
  %v790 = vld [vmem:[%s5 + $0xd8] sm:$0xff]
  %v791 = vld [vmem:[%s5 + $0xe0] sm:$0xff]
  %v792 = vld [vmem:[%s5 + $0xe8] sm:$0xff]
  %v793 = vld [vmem:[%s5 + $0xf0] sm:$0xff]
  %v794 = vld [vmem:[%s5 + $0xf8] sm:$0x1]
  %v795 = vlaneseq
  %v796 = vshrl.u32 %v795, 7
  %v797 = vsub.s32 0, %v796
  %v798 = vrot.slane %v794, %v797
  %799 = vmatprep.subr.mxu0 0.0
  %800 = vmatpush1.msra.mxu0 %v790
  %801 = vmatprep.subr.mxu0 0.0
  %802 = vmatpush1.msra.mxu0 %v791
  %803 = vmatprep.subr.mxu0 0.0
  %804 = vmatpush1.msra.mxu0 %v792
  %805 = vmatprep.subr.mxu0 0.0
  %806 = vmatpush1.msra.mxu0 %v793
  %807 = vmatprep.subr.mxu0 0.0
  %808 = vmatpush1.msra.mxu0 0.0
  %809 = vmatprep.subr.mxu0 0.0
  %810 = vmatpush1.msra.mxu0 0.0
  %811 = vmatprep.subr.mxu0 0.0
  %812 = vmatpush1.msra.mxu0 0.0
  %813 = vmatprep.subr.mxu0 0.0
  %814 = vmatpush1.msra.mxu0 0.0
  %815 = vmatprep.subr.mxu0 0.0
  %816 = vmatpush1.msra.mxu0 0.0
  %817 = vmatprep.subr.mxu0 0.0
  %818 = vmatpush1.msra.mxu0 0.0
  %819 = vmatprep.subr.mxu0 0.0
  %820 = vmatpush1.msra.mxu0 0.0
  %821 = vmatprep.subr.mxu0 0.0
  %822 = vmatpush1.msra.mxu0 0.0
  %823 = vmatprep.subr.mxu0 0.0
  %824 = vmatpush1.msra.mxu0 0.0
  %825 = vmatprep.subr.mxu0 0.0
  %826 = vmatpush1.msra.mxu0 0.0
  %827 = vmatprep.subr.mxu0 0.0
  %828 = vmatpush1.msra.mxu0 0.0
  %829 = vmatprep.subr.mxu0 0.0
  %830 = vmatpush1.msra.mxu0 0.0
  %831 = vmatprep.subr.mxu0 0.0
  %832 = vmatpush1.msra.mxu0 0.0
  %833 = vmatprep.subr.mxu0 0.0
  %834 = vmatpush1.msra.mxu0 0.0
  %835 = vmatprep.subr.mxu0 0.0
  %836 = vmatpush1.msra.mxu0 0.0
  %837 = vmatprep.subr.mxu0 0.0
  %838 = vmatpush1.msra.mxu0 0.0
  %839 = vmatprep.subr.mxu0 0.0
  %840 = vmatpush1.msra.mxu0 0.0
  %841 = vmatprep.subr.mxu0 0.0
  %842 = vmatpush1.msra.mxu0 0.0
  %843 = vmatprep.subr.mxu0 0.0
  %844 = vmatpush1.msra.mxu0 0.0
  %845 = vmatprep.subr.mxu0 0.0
  %846 = vmatpush1.msra.mxu0 0.0
  %847 = vmatprep.subr.mxu0 0.0
  %848 = vmatpush1.msra.mxu0 0.0
  %849 = vmatprep.subr.mxu0 0.0
  %850 = vmatpush1.msra.mxu0 0.0
  %851 = vmatprep.subr.mxu0 0.0
  %852 = vmatpush1.msra.mxu0 0.0
  %853 = vmatprep.subr.mxu0 0.0
  %854 = vmatpush1.msra.mxu0 0.0
  %855 = vmatprep.subr.mxu0 0.0
  %856 = vmatpush1.msra.mxu0 0.0
  %857 = vmatprep.subr.mxu0 0.0
  %858 = vmatpush1.msra.mxu0 0.0
  %859 = vmatprep.subr.mxu0 0.0
  %860 = vmatpush1.msra.mxu0 0.0
  %861 = vmatprep.subr.mxu0 0.0
  %862 = vmatpush1.msra.mxu0 0.0
  %863 = vmatprep.mubr.f32.mxu0 0.0
  %864 = vmatmul.mubr.f32.gmra.mrb[0].mxu0 %v177
  %v865 = vpop.f32.mrb[0].mxu0
  %v866 = vadd.f32 %v798, %v865
  %v867 = vpop.f32.mrb[0].mxu0
  %868 = vmatprep.mubr.f32.mxu0 0.0
  %869 = vmatmul.mubr.f32.gmra.mrb[0].mxu0 %v180
  %v870 = vpop.f32.mrb[0].mxu0
  %v871 = vadd.f32 %v798, %v870
  %v872 = vpop.f32.mrb[0].mxu0
  %873 = vdwg.mxu0
  %v875 = vsel %vm425, %v698, 0
  %v878 = vsel %vm425, %v703, 0
  %v881 = vsel %vm425, %v782, 0
  %v884 = vsel %vm425, %v787, 0
  %886 = vmatprep.subr.mxu0 0.0
  %887 = vmatpush1.xpose.msra.mxu0 %v881
  %888 = vmatprep.subr.mxu0 0.0
  %889 = vmatpush1.xpose.msra.mxu0 %v884
  %890 = vmatprep.subr.mxu0 0.0
  %891 = vmatpush1.xpose.msra.mxu0 0.0
  %892 = vmatprep.subr.mxu0 0.0
  %893 = vmatpush1.xpose.msra.mxu0 0.0
  %894 = vmatprep.subr.mxu0 0.0
  %895 = vmatpush1.xpose.msra.mxu0 0.0
  %896 = vmatprep.subr.mxu0 0.0
  %897 = vmatpush1.xpose.msra.mxu0 0.0
  %898 = vmatprep.subr.mxu0 0.0
  %899 = vmatpush1.xpose.msra.mxu0 0.0
  %900 = vmatprep.subr.mxu0 0.0
  %901 = vmatpush1.xpose.msra.mxu0 0.0
  %902 = vmatprep.subr.mxu0 0.0
  %903 = vmatpush1.xpose.msra.mxu0 0.0
  %904 = vmatprep.subr.mxu0 0.0
  %905 = vmatpush1.xpose.msra.mxu0 0.0
  %906 = vmatprep.subr.mxu0 0.0
  %907 = vmatpush1.xpose.msra.mxu0 0.0
  %908 = vmatprep.subr.mxu0 0.0
  %909 = vmatpush1.xpose.msra.mxu0 0.0
  %910 = vmatprep.subr.mxu0 0.0
  %911 = vmatpush1.xpose.msra.mxu0 0.0
  %912 = vmatprep.subr.mxu0 0.0
  %913 = vmatpush1.xpose.msra.mxu0 0.0
  %914 = vmatprep.subr.mxu0 0.0
  %915 = vmatpush1.xpose.msra.mxu0 0.0
  %916 = vmatprep.subr.mxu0 0.0
  %917 = vmatpush1.xpose.msra.mxu0 0.0
  %918 = vmatprep.subr.mxu0 0.0
  %919 = vmatpush1.xpose.msra.mxu0 0.0
  %920 = vmatprep.subr.mxu0 0.0
  %921 = vmatpush1.xpose.msra.mxu0 0.0
  %922 = vmatprep.subr.mxu0 0.0
  %923 = vmatpush1.xpose.msra.mxu0 0.0
  %924 = vmatprep.subr.mxu0 0.0
  %925 = vmatpush1.xpose.msra.mxu0 0.0
  %926 = vmatprep.subr.mxu0 0.0
  %927 = vmatpush1.xpose.msra.mxu0 0.0
  %928 = vmatprep.subr.mxu0 0.0
  %929 = vmatpush1.xpose.msra.mxu0 0.0
  %930 = vmatprep.subr.mxu0 0.0
  %931 = vmatpush1.xpose.msra.mxu0 0.0
  %932 = vmatprep.subr.mxu0 0.0
  %933 = vmatpush1.xpose.msra.mxu0 0.0
  %934 = vmatprep.subr.mxu0 0.0
  %935 = vmatpush1.xpose.msra.mxu0 0.0
  %936 = vmatprep.subr.mxu0 0.0
  %937 = vmatpush1.xpose.msra.mxu0 0.0
  %938 = vmatprep.subr.mxu0 0.0
  %939 = vmatpush1.xpose.msra.mxu0 0.0
  %940 = vmatprep.subr.mxu0 0.0
  %941 = vmatpush1.xpose.msra.mxu0 0.0
  %942 = vmatprep.subr.mxu0 0.0
  %943 = vmatpush1.xpose.msra.mxu0 0.0
  %944 = vmatprep.subr.mxu0 0.0
  %945 = vmatpush1.xpose.msra.mxu0 0.0
  %946 = vmatprep.subr.mxu0 0.0
  %947 = vmatpush1.xpose.msra.mxu0 0.0
  %948 = vmatprep.subr.mxu0 0.0
  %949 = vmatpush1.xpose.msra.mxu0 0.0
  %950 = vmatprep.mubr.f32.mxu0 0.0
  %951 = vmatmul.mubr.f32.gmra.mrb[0].mxu0 %v875
  %v952 = vpop.f32.mrb[0].mxu0
  %v953 = vadd.f32 0.0, %v952
  %v954 = vpop.f32.mrb[0].mxu0
  %955 = vmatprep.mubr.f32.mxu0 0.0
  %956 = vmatmul.mubr.f32.gmra.mrb[0].mxu0 %v878
  %v957 = vpop.f32.mrb[0].mxu0
  %v958 = vadd.f32 0.0, %v957
  %v959 = vpop.f32.mrb[0].mxu0
  %960 = vdwg.mxu0
  %v961 = vmul.f32 %v953, 0.25
  %v962 = vmul.f32 %v958, 0.25
  %v963 = vadd.f32 %v961, %v123
  %v964 = vadd.f32 %v962, %v124
  %v965 = vsel %vm425, %v963, -inf
  %966 = vmax.xlane.f32.xlu0 %v965
  %v967 = vpop.xlane.xlu0 %966
  %v968 = vsel %vm425, %v964, -inf
  %969 = vmax.xlane.f32.xlu0 %v968
  %v970 = vpop.xlane.xlu0 %969
  %v971 = vsub.f32 %v963, %v967
  %v972 = vsub.f32 %v964, %v970
  %v973 = vmul.f32 %v971, 1.442695
  %v974 = vpow.pop %v973
  %v975 = vmul.f32 %v972, 1.442695
  %v976 = vpow.pop %v975
  %v977 = vsel %vm425, %v974, 0.0
  %978 = vadd.xlane.f32.xlu0 %v977
  %v979 = vpop.xlane.xlu0 %978
  %v980 = vsel %vm425, %v976, 0.0
  %981 = vadd.xlane.f32.xlu0 %v980
  %v982 = vpop.xlane.xlu0 %981
  %v983 = vrcp.pop %v979
  %v984 = vrcp.pop %v982
  %v985 = vmul.f32 %v974, %v983
  %v986 = vmul.f32 %v976, %v984
  %v988 = vsel %vm425, %v985, 0
  %v991 = vsel %vm425, %v986, 0
  %993 = vmatprep.subr.mxu0 0.0
  %994 = vmatpush1.msra.mxu0 %v866
  %995 = vmatprep.subr.mxu0 0.0
  %996 = vmatpush1.msra.mxu0 %v871
  %997 = vmatprep.subr.mxu0 0.0
  %998 = vmatpush1.msra.mxu0 0.0
  %999 = vmatprep.subr.mxu0 0.0
  %1000 = vmatpush1.msra.mxu0 0.0
  %1001 = vmatprep.subr.mxu0 0.0
  %1002 = vmatpush1.msra.mxu0 0.0
  %1003 = vmatprep.subr.mxu0 0.0
  %1004 = vmatpush1.msra.mxu0 0.0
  %1005 = vmatprep.subr.mxu0 0.0
  %1006 = vmatpush1.msra.mxu0 0.0
  %1007 = vmatprep.subr.mxu0 0.0
  %1008 = vmatpush1.msra.mxu0 0.0
  %1009 = vmatprep.subr.mxu0 0.0
  %1010 = vmatpush1.msra.mxu0 0.0
  %1011 = vmatprep.subr.mxu0 0.0
  %1012 = vmatpush1.msra.mxu0 0.0
  %1013 = vmatprep.subr.mxu0 0.0
  %1014 = vmatpush1.msra.mxu0 0.0
  %1015 = vmatprep.subr.mxu0 0.0
  %1016 = vmatpush1.msra.mxu0 0.0
  %1017 = vmatprep.subr.mxu0 0.0
  %1018 = vmatpush1.msra.mxu0 0.0
  %1019 = vmatprep.subr.mxu0 0.0
  %1020 = vmatpush1.msra.mxu0 0.0
  %1021 = vmatprep.subr.mxu0 0.0
  %1022 = vmatpush1.msra.mxu0 0.0
  %1023 = vmatprep.subr.mxu0 0.0
  %1024 = vmatpush1.msra.mxu0 0.0
  %1025 = vmatprep.subr.mxu0 0.0
  %1026 = vmatpush1.msra.mxu0 0.0
  %1027 = vmatprep.subr.mxu0 0.0
  %1028 = vmatpush1.msra.mxu0 0.0
  %1029 = vmatprep.subr.mxu0 0.0
  %1030 = vmatpush1.msra.mxu0 0.0
  %1031 = vmatprep.subr.mxu0 0.0
  %1032 = vmatpush1.msra.mxu0 0.0
  %1033 = vmatprep.subr.mxu0 0.0
  %1034 = vmatpush1.msra.mxu0 0.0
  %1035 = vmatprep.subr.mxu0 0.0
  %1036 = vmatpush1.msra.mxu0 0.0
  %1037 = vmatprep.subr.mxu0 0.0
  %1038 = vmatpush1.msra.mxu0 0.0
  %1039 = vmatprep.subr.mxu0 0.0
  %1040 = vmatpush1.msra.mxu0 0.0
  %1041 = vmatprep.subr.mxu0 0.0
  %1042 = vmatpush1.msra.mxu0 0.0
  %1043 = vmatprep.subr.mxu0 0.0
  %1044 = vmatpush1.msra.mxu0 0.0
  %1045 = vmatprep.subr.mxu0 0.0
  %1046 = vmatpush1.msra.mxu0 0.0
  %1047 = vmatprep.subr.mxu0 0.0
  %1048 = vmatpush1.msra.mxu0 0.0
  %1049 = vmatprep.subr.mxu0 0.0
  %1050 = vmatpush1.msra.mxu0 0.0
  %1051 = vmatprep.subr.mxu0 0.0
  %1052 = vmatpush1.msra.mxu0 0.0
  %1053 = vmatprep.subr.mxu0 0.0
  %1054 = vmatpush1.msra.mxu0 0.0
  %1055 = vmatprep.subr.mxu0 0.0
  %1056 = vmatpush1.msra.mxu0 0.0
  %1057 = vmatprep.mubr.f32.mxu0 0.0
  %1058 = vmatmul.mubr.f32.gmra.mrb[0].mxu0 %v988
  %v1059 = vpop.f32.mrb[0].mxu0
  %v1060 = vadd.f32 0.0, %v1059
  %v1061 = vpop.f32.mrb[0].mxu0
  %1062 = vmatprep.mubr.f32.mxu0 0.0
  %1063 = vmatmul.mubr.f32.gmra.mrb[0].mxu0 %v991
  %v1064 = vpop.f32.mrb[0].mxu0
  %v1065 = vadd.f32 0.0, %v1064
  %v1066 = vpop.f32.mrb[0].mxu0
  %1067 = vdwg.mxu0
  %v1068 = vld [vmem:[%s5 + $0x110] sm:$0xff]
  %v1069 = vld [vmem:[%s5 + $0x118] sm:$0xff]
  %v1071 = vsel %vm425, %v1060, 0
  %v1074 = vsel %vm425, %v1065, 0
  %1076 = vmatprep.subr.mxu0 0.0
  %1077 = vmatpush1.msra.mxu0 %v1068
  %1078 = vmatprep.subr.mxu0 0.0
  %1079 = vmatpush1.msra.mxu0 %v1069
  %1080 = vmatprep.subr.mxu0 0.0
  %1081 = vmatpush1.msra.mxu0 0.0
  %1082 = vmatprep.subr.mxu0 0.0
  %1083 = vmatpush1.msra.mxu0 0.0
  %1084 = vmatprep.subr.mxu0 0.0
  %1085 = vmatpush1.msra.mxu0 0.0
  %1086 = vmatprep.subr.mxu0 0.0
  %1087 = vmatpush1.msra.mxu0 0.0
  %1088 = vmatprep.subr.mxu0 0.0
  %1089 = vmatpush1.msra.mxu0 0.0
  %1090 = vmatprep.subr.mxu0 0.0
  %1091 = vmatpush1.msra.mxu0 0.0
  %1092 = vmatprep.subr.mxu0 0.0
  %1093 = vmatpush1.msra.mxu0 0.0
  %1094 = vmatprep.subr.mxu0 0.0
  %1095 = vmatpush1.msra.mxu0 0.0
  %1096 = vmatprep.subr.mxu0 0.0
  %1097 = vmatpush1.msra.mxu0 0.0
  %1098 = vmatprep.subr.mxu0 0.0
  %1099 = vmatpush1.msra.mxu0 0.0
  %1100 = vmatprep.subr.mxu0 0.0
  %1101 = vmatpush1.msra.mxu0 0.0
  %1102 = vmatprep.subr.mxu0 0.0
  %1103 = vmatpush1.msra.mxu0 0.0
  %1104 = vmatprep.subr.mxu0 0.0
  %1105 = vmatpush1.msra.mxu0 0.0
  %1106 = vmatprep.subr.mxu0 0.0
  %1107 = vmatpush1.msra.mxu0 0.0
  %1108 = vmatprep.subr.mxu0 0.0
  %1109 = vmatpush1.msra.mxu0 0.0
  %1110 = vmatprep.subr.mxu0 0.0
  %1111 = vmatpush1.msra.mxu0 0.0
  %1112 = vmatprep.subr.mxu0 0.0
  %1113 = vmatpush1.msra.mxu0 0.0
  %1114 = vmatprep.subr.mxu0 0.0
  %1115 = vmatpush1.msra.mxu0 0.0
  %1116 = vmatprep.subr.mxu0 0.0
  %1117 = vmatpush1.msra.mxu0 0.0
  %1118 = vmatprep.subr.mxu0 0.0
  %1119 = vmatpush1.msra.mxu0 0.0
  %1120 = vmatprep.subr.mxu0 0.0
  %1121 = vmatpush1.msra.mxu0 0.0
  %1122 = vmatprep.subr.mxu0 0.0
  %1123 = vmatpush1.msra.mxu0 0.0
  %1124 = vmatprep.subr.mxu0 0.0
  %1125 = vmatpush1.msra.mxu0 0.0
  %1126 = vmatprep.subr.mxu0 0.0
  %1127 = vmatpush1.msra.mxu0 0.0
  %1128 = vmatprep.subr.mxu0 0.0
  %1129 = vmatpush1.msra.mxu0 0.0
  %1130 = vmatprep.subr.mxu0 0.0
  %1131 = vmatpush1.msra.mxu0 0.0
  %1132 = vmatprep.subr.mxu0 0.0
  %1133 = vmatpush1.msra.mxu0 0.0
  %1134 = vmatprep.subr.mxu0 0.0
  %1135 = vmatpush1.msra.mxu0 0.0
  %1136 = vmatprep.subr.mxu0 0.0
  %1137 = vmatpush1.msra.mxu0 0.0
  %1138 = vmatprep.subr.mxu0 0.0
  %1139 = vmatpush1.msra.mxu0 0.0
  %1140 = vmatprep.mubr.f32.mxu0 0.0
  %1141 = vmatmul.mubr.f32.gmra.mrb[0].mxu0 %v1071
  %v1142 = vpop.f32.mrb[0].mxu0
  %v1143 = vadd.f32 0.0, %v1142
  %v1144 = vpop.f32.mrb[0].mxu0
  %1145 = vmatprep.mubr.f32.mxu0 0.0
  %1146 = vmatmul.mubr.f32.gmra.mrb[0].mxu0 %v1074
  %v1147 = vpop.f32.mrb[0].mxu0
  %v1148 = vadd.f32 0.0, %v1147
  %v1149 = vpop.f32.mrb[0].mxu0
  %1150 = vdwg.mxu0
  %v1152 = vsel %vm425, %v612, 0
  %v1155 = vsel %vm425, %v617, 0
  %1157 = vmatprep.subr.mxu0 0.0
  %1158 = vmatpush1.msra.mxu0 %v620
  %1159 = vmatprep.subr.mxu0 0.0
  %1160 = vmatpush1.msra.mxu0 %v621
  %1161 = vmatprep.subr.mxu0 0.0
  %1162 = vmatpush1.msra.mxu0 0.0
  %1163 = vmatprep.subr.mxu0 0.0
  %1164 = vmatpush1.msra.mxu0 0.0
  %1165 = vmatprep.subr.mxu0 0.0
  %1166 = vmatpush1.msra.mxu0 0.0
  %1167 = vmatprep.subr.mxu0 0.0
  %1168 = vmatpush1.msra.mxu0 0.0
  %1169 = vmatprep.subr.mxu0 0.0
  %1170 = vmatpush1.msra.mxu0 0.0
  %1171 = vmatprep.subr.mxu0 0.0
  %1172 = vmatpush1.msra.mxu0 0.0
  %1173 = vmatprep.subr.mxu0 0.0
  %1174 = vmatpush1.msra.mxu0 0.0
  %1175 = vmatprep.subr.mxu0 0.0
  %1176 = vmatpush1.msra.mxu0 0.0
  %1177 = vmatprep.subr.mxu0 0.0
  %1178 = vmatpush1.msra.mxu0 0.0
  %1179 = vmatprep.subr.mxu0 0.0
  %1180 = vmatpush1.msra.mxu0 0.0
  %1181 = vmatprep.subr.mxu0 0.0
  %1182 = vmatpush1.msra.mxu0 0.0
  %1183 = vmatprep.subr.mxu0 0.0
  %1184 = vmatpush1.msra.mxu0 0.0
  %1185 = vmatprep.subr.mxu0 0.0
  %1186 = vmatpush1.msra.mxu0 0.0
  %1187 = vmatprep.subr.mxu0 0.0
  %1188 = vmatpush1.msra.mxu0 0.0
  %1189 = vmatprep.subr.mxu0 0.0
  %1190 = vmatpush1.msra.mxu0 0.0
  %1191 = vmatprep.subr.mxu0 0.0
  %1192 = vmatpush1.msra.mxu0 0.0
  %1193 = vmatprep.subr.mxu0 0.0
  %1194 = vmatpush1.msra.mxu0 0.0
  %1195 = vmatprep.subr.mxu0 0.0
  %1196 = vmatpush1.msra.mxu0 0.0
  %1197 = vmatprep.subr.mxu0 0.0
  %1198 = vmatpush1.msra.mxu0 0.0
  %1199 = vmatprep.subr.mxu0 0.0
  %1200 = vmatpush1.msra.mxu0 0.0
  %1201 = vmatprep.subr.mxu0 0.0
  %1202 = vmatpush1.msra.mxu0 0.0
  %1203 = vmatprep.subr.mxu0 0.0
  %1204 = vmatpush1.msra.mxu0 0.0
  %1205 = vmatprep.subr.mxu0 0.0
  %1206 = vmatpush1.msra.mxu0 0.0
  %1207 = vmatprep.subr.mxu0 0.0
  %1208 = vmatpush1.msra.mxu0 0.0
  %1209 = vmatprep.subr.mxu0 0.0
  %1210 = vmatpush1.msra.mxu0 0.0
  %1211 = vmatprep.subr.mxu0 0.0
  %1212 = vmatpush1.msra.mxu0 0.0
  %1213 = vmatprep.subr.mxu0 0.0
  %1214 = vmatpush1.msra.mxu0 0.0
  %1215 = vmatprep.subr.mxu0 0.0
  %1216 = vmatpush1.msra.mxu0 0.0
  %1217 = vmatprep.subr.mxu0 0.0
  %1218 = vmatpush1.msra.mxu0 0.0
  %1219 = vmatprep.subr.mxu0 0.0
  %1220 = vmatpush1.msra.mxu0 0.0
  %1221 = vmatprep.mubr.f32.mxu0 0.0
  %1222 = vmatmul.mubr.f32.gmra.mrb[0].mxu0 %v1152
  %v1223 = vpop.f32.mrb[0].mxu0
  %v1224 = vadd.f32 %v1143, %v1223
  %v1225 = vpop.f32.mrb[0].mxu0
  %1226 = vmatprep.mubr.f32.mxu0 0.0
  %1227 = vmatmul.mubr.f32.gmra.mrb[0].mxu0 %v1155
  %v1228 = vpop.f32.mrb[0].mxu0
  %v1229 = vadd.f32 %v1148, %v1228
  %v1230 = vpop.f32.mrb[0].mxu0
  %1231 = vdwg.mxu0
  %v1232 = vld [vmem:[%s5 + $0x120] sm:$0x1]
  %v1233 = vlaneseq
  %v1234 = vshrl.u32 %v1233, 7
  %v1235 = vsub.s32 0, %v1234
  %v1236 = vrot.slane %v1232, %v1235
  %v1237 = vadd.f32 %v1224, %v1236
  %v1238 = vadd.f32 %v1229, %v1236
  %v1239 = vadd.f32 %v1237, %v165
  %v1240 = vadd.f32 %v1238, %v166
  %v1241 = vld [vmem:[%s5 + $0x128] sm:$0x1]
  %v1242 = vld [vmem:[%s5 + $0x130] sm:$0x1]
  %v1243 = vsel %vm127, %v1239, 0.0
  %1244 = vadd.xlane.f32.xlu0 %v1243
  %v1245 = vpop.xlane.xlu0 %1244
  %v1246 = vsel %vm127, %v1240, 0.0
  %1247 = vadd.xlane.f32.xlu0 %v1246
  %v1248 = vpop.xlane.xlu0 %1247
  %v1249 = vmul.f32 %v1245, %v134
  %v1250 = vmul.f32 %v1248, %v134
  %v1251 = vsub.f32 %v1239, %v1249
  %v1252 = vsub.f32 %v1240, %v1250
  %v1253 = vmul.f32 %v1251, %v1251
  %v1254 = vmul.f32 %v1252, %v1252
  %v1255 = vsel %vm127, %v1253, 0.0
  %1256 = vadd.xlane.f32.xlu0 %v1255
  %v1257 = vpop.xlane.xlu0 %1256
  %v1258 = vsel %vm127, %v1254, 0.0
  %1259 = vadd.xlane.f32.xlu0 %v1258
  %v1260 = vpop.xlane.xlu0 %1259
  %v1261 = vmul.f32 %v1257, %v134
  %v1262 = vmul.f32 %v1260, %v134
  %v1263 = vadd.f32 %v1261, 1e-05
  %v1264 = vadd.f32 %v1262, 1e-05
  %v1265 = vrsqrt.pop %v1263
  %v1266 = vrsqrt.pop %v1264
  %v1267 = vmul.f32 %v1251, %v1265
  %v1268 = vmul.f32 %v1252, %v1266
  %v1269 = vlaneseq
  %v1270 = vshrl.u32 %v1269, 7
  %v1271 = vsub.s32 0, %v1270
  %v1272 = vrot.slane %v1241, %v1271
  %v1273 = vmul.f32 %v1267, %v1272
  %v1274 = vmul.f32 %v1268, %v1272
  %v1275 = vlaneseq
  %v1276 = vshrl.u32 %v1275, 7
  %v1277 = vsub.s32 0, %v1276
  %v1278 = vrot.slane %v1242, %v1277
  %v1279 = vadd.f32 %v1273, %v1278
  %v1280 = vadd.f32 %v1274, %v1278
  %v1281 = vld [vmem:[%s5 + $0x138] sm:$0xff]
  %v1282 = vld [vmem:[%s5 + $0x140] sm:$0xff]
  %v1283 = vld [vmem:[%s5 + $0x148] sm:$0xff]
  %v1284 = vld [vmem:[%s5 + $0x150] sm:$0xff]
  %v1285 = vld [vmem:[%s5 + $0x158] sm:$0x1]
  %v1286 = vlaneseq
  %v1287 = vshrl.u32 %v1286, 7
  %v1288 = vsub.s32 0, %v1287
  %v1289 = vrot.slane %v1285, %v1288
  %v1291 = vsel %vm127, %v1279, 0
  %v1294 = vsel %vm127, %v1280, 0
  %1296 = vmatprep.subr.mxu0 0.0
  %1297 = vmatpush1.msra.mxu0 %v1281
  %1298 = vmatprep.subr.mxu0 0.0
  %1299 = vmatpush1.msra.mxu0 %v1282
  %1300 = vmatprep.subr.mxu0 0.0
  %1301 = vmatpush1.msra.mxu0 %v1283
  %1302 = vmatprep.subr.mxu0 0.0
  %1303 = vmatpush1.msra.mxu0 %v1284
  %1304 = vmatprep.subr.mxu0 0.0
  %1305 = vmatpush1.msra.mxu0 0.0
  %1306 = vmatprep.subr.mxu0 0.0
  %1307 = vmatpush1.msra.mxu0 0.0
  %1308 = vmatprep.subr.mxu0 0.0
  %1309 = vmatpush1.msra.mxu0 0.0
  %1310 = vmatprep.subr.mxu0 0.0
  %1311 = vmatpush1.msra.mxu0 0.0
  %1312 = vmatprep.subr.mxu0 0.0
  %1313 = vmatpush1.msra.mxu0 0.0
  %1314 = vmatprep.subr.mxu0 0.0
  %1315 = vmatpush1.msra.mxu0 0.0
  %1316 = vmatprep.subr.mxu0 0.0
  %1317 = vmatpush1.msra.mxu0 0.0
  %1318 = vmatprep.subr.mxu0 0.0
  %1319 = vmatpush1.msra.mxu0 0.0
  %1320 = vmatprep.subr.mxu0 0.0
  %1321 = vmatpush1.msra.mxu0 0.0
  %1322 = vmatprep.subr.mxu0 0.0
  %1323 = vmatpush1.msra.mxu0 0.0
  %1324 = vmatprep.subr.mxu0 0.0
  %1325 = vmatpush1.msra.mxu0 0.0
  %1326 = vmatprep.subr.mxu0 0.0
  %1327 = vmatpush1.msra.mxu0 0.0
  %1328 = vmatprep.subr.mxu0 0.0
  %1329 = vmatpush1.msra.mxu0 0.0
  %1330 = vmatprep.subr.mxu0 0.0
  %1331 = vmatpush1.msra.mxu0 0.0
  %1332 = vmatprep.subr.mxu0 0.0
  %1333 = vmatpush1.msra.mxu0 0.0
  %1334 = vmatprep.subr.mxu0 0.0
  %1335 = vmatpush1.msra.mxu0 0.0
  %1336 = vmatprep.subr.mxu0 0.0
  %1337 = vmatpush1.msra.mxu0 0.0
  %1338 = vmatprep.subr.mxu0 0.0
  %1339 = vmatpush1.msra.mxu0 0.0
  %1340 = vmatprep.subr.mxu0 0.0
  %1341 = vmatpush1.msra.mxu0 0.0
  %1342 = vmatprep.subr.mxu0 0.0
  %1343 = vmatpush1.msra.mxu0 0.0
  %1344 = vmatprep.subr.mxu0 0.0
  %1345 = vmatpush1.msra.mxu0 0.0
  %1346 = vmatprep.subr.mxu0 0.0
  %1347 = vmatpush1.msra.mxu0 0.0
  %1348 = vmatprep.subr.mxu0 0.0
  %1349 = vmatpush1.msra.mxu0 0.0
  %1350 = vmatprep.subr.mxu0 0.0
  %1351 = vmatpush1.msra.mxu0 0.0
  %1352 = vmatprep.subr.mxu0 0.0
  %1353 = vmatpush1.msra.mxu0 0.0
  %1354 = vmatprep.subr.mxu0 0.0
  %1355 = vmatpush1.msra.mxu0 0.0
  %1356 = vmatprep.subr.mxu0 0.0
  %1357 = vmatpush1.msra.mxu0 0.0
  %1358 = vmatprep.subr.mxu0 0.0
  %1359 = vmatpush1.msra.mxu0 0.0
  %1360 = vmatprep.mubr.f32.mxu0 0.0
  %1361 = vmatmul.mubr.f32.gmra.mrb[0].mxu0 %v1291
  %v1362 = vpop.f32.mrb[0].mxu0
  %v1363 = vadd.f32 %v1289, %v1362
  %v1364 = vpop.f32.mrb[0].mxu0
  %1365 = vmatprep.mubr.f32.mxu0 0.0
  %1366 = vmatmul.mubr.f32.gmra.mrb[0].mxu0 %v1294
  %v1367 = vpop.f32.mrb[0].mxu0
  %v1368 = vadd.f32 %v1289, %v1367
  %v1369 = vpop.f32.mrb[0].mxu0
  %1370 = vdwg.mxu0
  %v1371 = vmul.f32 %v1363, 0.5
  %v1372 = vmul.f32 %v1368, 0.5
  %v1373 = vmul.f32 %v1363, 0.044715
  %v1374 = vmul.f32 %v1368, 0.044715
  %v1375 = vmul.f32 %v1373, %v1363
  %v1376 = vmul.f32 %v1374, %v1368
  %v1377 = vmul.f32 %v1375, %v1363
  %v1378 = vmul.f32 %v1376, %v1368
  %v1379 = vadd.f32 %v1363, %v1377
  %v1380 = vadd.f32 %v1368, %v1378
  %v1381 = vmul.f32 %v1379, 0.7978846
  %v1382 = vmul.f32 %v1380, 0.7978846
  %v1383 = vtanh.pop %v1381
  %v1384 = vtanh.pop %v1382
  %v1385 = vadd.f32 %v1383, 1.0
  %v1386 = vadd.f32 %v1384, 1.0
  %v1387 = vmul.f32 %v1371, %v1385
  %v1388 = vmul.f32 %v1372, %v1386
  %v1389 = vld [vmem:[%s5 + $0x160] sm:$0xff]
  %v1390 = vld [vmem:[%s5 + $0x168] sm:$0xff]
  %v1391 = vld [vmem:[%s5 + $0x170] sm:$0xff]
  %v1392 = vld [vmem:[%s5 + $0x178] sm:$0xff]
  %v1393 = vld [vmem:[%s5 + $0x180] sm:$0xff]
  %v1394 = vld [vmem:[%s5 + $0x188] sm:$0xff]
  %v1395 = vld [vmem:[%s5 + $0x190] sm:$0xff]
  %v1396 = vld [vmem:[%s5 + $0x198] sm:$0xff]
  %v1397 = vld [vmem:[%s5 + $0x1a0] sm:$0x1]
  %v1398 = vlaneseq
  %v1399 = vshrl.u32 %v1398, 7
  %v1400 = vsub.s32 0, %v1399
  %v1401 = vrot.slane %v1397, %v1400
  %vm1402 = vcmask 523264
  %v1404 = vsel %vm1402, %v1387, 0
  %v1407 = vsel %vm1402, %v1388, 0
  %1409 = vmatprep.subr.mxu0 0.0
  %1410 = vmatpush1.msra.mxu0 %v1389
  %1411 = vmatprep.subr.mxu0 0.0
  %1412 = vmatpush1.msra.mxu0 %v1390
  %1413 = vmatprep.subr.mxu0 0.0
  %1414 = vmatpush1.msra.mxu0 %v1391
  %1415 = vmatprep.subr.mxu0 0.0
  %1416 = vmatpush1.msra.mxu0 %v1392
  %1417 = vmatprep.subr.mxu0 0.0
  %1418 = vmatpush1.msra.mxu0 %v1393
  %1419 = vmatprep.subr.mxu0 0.0
  %1420 = vmatpush1.msra.mxu0 %v1394
  %1421 = vmatprep.subr.mxu0 0.0
  %1422 = vmatpush1.msra.mxu0 %v1395
  %1423 = vmatprep.subr.mxu0 0.0
  %1424 = vmatpush1.msra.mxu0 %v1396
  %1425 = vmatprep.subr.mxu0 0.0
  %1426 = vmatpush1.msra.mxu0 0.0
  %1427 = vmatprep.subr.mxu0 0.0
  %1428 = vmatpush1.msra.mxu0 0.0
  %1429 = vmatprep.subr.mxu0 0.0
  %1430 = vmatpush1.msra.mxu0 0.0
  %1431 = vmatprep.subr.mxu0 0.0
  %1432 = vmatpush1.msra.mxu0 0.0
  %1433 = vmatprep.subr.mxu0 0.0
  %1434 = vmatpush1.msra.mxu0 0.0
  %1435 = vmatprep.subr.mxu0 0.0
  %1436 = vmatpush1.msra.mxu0 0.0
  %1437 = vmatprep.subr.mxu0 0.0
  %1438 = vmatpush1.msra.mxu0 0.0
  %1439 = vmatprep.subr.mxu0 0.0
  %1440 = vmatpush1.msra.mxu0 0.0
  %1441 = vmatprep.subr.mxu0 0.0
  %1442 = vmatpush1.msra.mxu0 0.0
  %1443 = vmatprep.subr.mxu0 0.0
  %1444 = vmatpush1.msra.mxu0 0.0
  %1445 = vmatprep.subr.mxu0 0.0
  %1446 = vmatpush1.msra.mxu0 0.0
  %1447 = vmatprep.subr.mxu0 0.0
  %1448 = vmatpush1.msra.mxu0 0.0
  %1449 = vmatprep.subr.mxu0 0.0
  %1450 = vmatpush1.msra.mxu0 0.0
  %1451 = vmatprep.subr.mxu0 0.0
  %1452 = vmatpush1.msra.mxu0 0.0
  %1453 = vmatprep.subr.mxu0 0.0
  %1454 = vmatpush1.msra.mxu0 0.0
  %1455 = vmatprep.subr.mxu0 0.0
  %1456 = vmatpush1.msra.mxu0 0.0
  %1457 = vmatprep.subr.mxu0 0.0
  %1458 = vmatpush1.msra.mxu0 0.0
  %1459 = vmatprep.subr.mxu0 0.0
  %1460 = vmatpush1.msra.mxu0 0.0
  %1461 = vmatprep.subr.mxu0 0.0
  %1462 = vmatpush1.msra.mxu0 0.0
  %1463 = vmatprep.subr.mxu0 0.0
  %1464 = vmatpush1.msra.mxu0 0.0
  %1465 = vmatprep.subr.mxu0 0.0
  %1466 = vmatpush1.msra.mxu0 0.0
  %1467 = vmatprep.subr.mxu0 0.0
  %1468 = vmatpush1.msra.mxu0 0.0
  %1469 = vmatprep.subr.mxu0 0.0
  %1470 = vmatpush1.msra.mxu0 0.0
  %1471 = vmatprep.subr.mxu0 0.0
  %1472 = vmatpush1.msra.mxu0 0.0
  %1473 = vmatprep.mubr.f32.mxu0 0.0
  %1474 = vmatmul.mubr.f32.gmra.mrb[0].mxu0 %v1404
  %v1475 = vpop.f32.mrb[0].mxu0
  %v1476 = vadd.f32 %v1401, %v1475
  %v1477 = vpop.f32.mrb[0].mxu0
  %1478 = vmatprep.mubr.f32.mxu0 0.0
  %1479 = vmatmul.mubr.f32.gmra.mrb[0].mxu0 %v1407
  %v1480 = vpop.f32.mrb[0].mxu0
  %v1481 = vadd.f32 %v1401, %v1480
  %v1482 = vpop.f32.mrb[0].mxu0
  %1483 = vdwg.mxu0
  %v1484 = vadd.f32 %v1476, %v1279
  %v1485 = vadd.f32 %v1481, %v1280
  %v1486 = vld [vmem:[%s5 + $0x1a8] sm:$0x1]
  %v1487 = vld [vmem:[%s5 + $0x1b0] sm:$0x1]
  %v1488 = vsel %vm127, %v1484, 0.0
  %1489 = vadd.xlane.f32.xlu0 %v1488
  %v1490 = vpop.xlane.xlu0 %1489
  %v1491 = vsel %vm127, %v1485, 0.0
  %1492 = vadd.xlane.f32.xlu0 %v1491
  %v1493 = vpop.xlane.xlu0 %1492
  %v1494 = vmul.f32 %v1490, %v134
  %v1495 = vmul.f32 %v1493, %v134
  %v1496 = vsub.f32 %v1484, %v1494
  %v1497 = vsub.f32 %v1485, %v1495
  %v1498 = vmul.f32 %v1496, %v1496
  %v1499 = vmul.f32 %v1497, %v1497
  %v1500 = vsel %vm127, %v1498, 0.0
  %1501 = vadd.xlane.f32.xlu0 %v1500
  %v1502 = vpop.xlane.xlu0 %1501
  %v1503 = vsel %vm127, %v1499, 0.0
  %1504 = vadd.xlane.f32.xlu0 %v1503
  %v1505 = vpop.xlane.xlu0 %1504
  %v1506 = vmul.f32 %v1502, %v134
  %v1507 = vmul.f32 %v1505, %v134
  %v1508 = vadd.f32 %v1506, 1e-05
  %v1509 = vadd.f32 %v1507, 1e-05
  %v1510 = vrsqrt.pop %v1508
  %v1511 = vrsqrt.pop %v1509
  %v1512 = vmul.f32 %v1496, %v1510
  %v1513 = vmul.f32 %v1497, %v1511
  %v1514 = vlaneseq
  %v1515 = vshrl.u32 %v1514, 7
  %v1516 = vsub.s32 0, %v1515
  %v1517 = vrot.slane %v1486, %v1516
  %v1518 = vmul.f32 %v1512, %v1517
  %v1519 = vmul.f32 %v1513, %v1517
  %v1520 = vlaneseq
  %v1521 = vshrl.u32 %v1520, 7
  %v1522 = vsub.s32 0, %v1521
  %v1523 = vrot.slane %v1487, %v1522
  %v1524 = vadd.f32 %v1518, %v1523
  %v1525 = vadd.f32 %v1519, %v1523
  %v1526 = vld [vmem:[%s5 + $0x1b8] sm:$0xff]
  %v1527 = vld [vmem:[%s5 + $0x1c0] sm:$0xff]
  %v1528 = vld [vmem:[%s5 + $0x1c8] sm:$0xff]
  %v1529 = vld [vmem:[%s5 + $0x1d0] sm:$0xff]
  %v1530 = vld [vmem:[%s5 + $0x1d8] sm:$0x1]
  %v1531 = vlaneseq
  %v1532 = vshrl.u32 %v1531, 7
  %v1533 = vsub.s32 0, %v1532
  %v1534 = vrot.slane %v1530, %v1533
  %v1536 = vsel %vm127, %v1524, 0
  %v1539 = vsel %vm127, %v1525, 0
  %1541 = vmatprep.subr.mxu0 0.0
  %1542 = vmatpush1.msra.mxu0 %v1526
  %1543 = vmatprep.subr.mxu0 0.0
  %1544 = vmatpush1.msra.mxu0 %v1527
  %1545 = vmatprep.subr.mxu0 0.0
  %1546 = vmatpush1.msra.mxu0 %v1528
  %1547 = vmatprep.subr.mxu0 0.0
  %1548 = vmatpush1.msra.mxu0 %v1529
  %1549 = vmatprep.subr.mxu0 0.0
  %1550 = vmatpush1.msra.mxu0 0.0
  %1551 = vmatprep.subr.mxu0 0.0
  %1552 = vmatpush1.msra.mxu0 0.0
  %1553 = vmatprep.subr.mxu0 0.0
  %1554 = vmatpush1.msra.mxu0 0.0
  %1555 = vmatprep.subr.mxu0 0.0
  %1556 = vmatpush1.msra.mxu0 0.0
  %1557 = vmatprep.subr.mxu0 0.0
  %1558 = vmatpush1.msra.mxu0 0.0
  %1559 = vmatprep.subr.mxu0 0.0
  %1560 = vmatpush1.msra.mxu0 0.0
  %1561 = vmatprep.subr.mxu0 0.0
  %1562 = vmatpush1.msra.mxu0 0.0
  %1563 = vmatprep.subr.mxu0 0.0
  %1564 = vmatpush1.msra.mxu0 0.0
  %1565 = vmatprep.subr.mxu0 0.0
  %1566 = vmatpush1.msra.mxu0 0.0
  %1567 = vmatprep.subr.mxu0 0.0
  %1568 = vmatpush1.msra.mxu0 0.0
  %1569 = vmatprep.subr.mxu0 0.0
  %1570 = vmatpush1.msra.mxu0 0.0
  %1571 = vmatprep.subr.mxu0 0.0
  %1572 = vmatpush1.msra.mxu0 0.0
  %1573 = vmatprep.subr.mxu0 0.0
  %1574 = vmatpush1.msra.mxu0 0.0
  %1575 = vmatprep.subr.mxu0 0.0
  %1576 = vmatpush1.msra.mxu0 0.0
  %1577 = vmatprep.subr.mxu0 0.0
  %1578 = vmatpush1.msra.mxu0 0.0
  %1579 = vmatprep.subr.mxu0 0.0
  %1580 = vmatpush1.msra.mxu0 0.0
  %1581 = vmatprep.subr.mxu0 0.0
  %1582 = vmatpush1.msra.mxu0 0.0
  %1583 = vmatprep.subr.mxu0 0.0
  %1584 = vmatpush1.msra.mxu0 0.0
  %1585 = vmatprep.subr.mxu0 0.0
  %1586 = vmatpush1.msra.mxu0 0.0
  %1587 = vmatprep.subr.mxu0 0.0
  %1588 = vmatpush1.msra.mxu0 0.0
  %1589 = vmatprep.subr.mxu0 0.0
  %1590 = vmatpush1.msra.mxu0 0.0
  %1591 = vmatprep.subr.mxu0 0.0
  %1592 = vmatpush1.msra.mxu0 0.0
  %1593 = vmatprep.subr.mxu0 0.0
  %1594 = vmatpush1.msra.mxu0 0.0
  %1595 = vmatprep.subr.mxu0 0.0
  %1596 = vmatpush1.msra.mxu0 0.0
  %1597 = vmatprep.subr.mxu0 0.0
  %1598 = vmatpush1.msra.mxu0 0.0
  %1599 = vmatprep.subr.mxu0 0.0
  %1600 = vmatpush1.msra.mxu0 0.0
  %1601 = vmatprep.subr.mxu0 0.0
  %1602 = vmatpush1.msra.mxu0 0.0
  %1603 = vmatprep.subr.mxu0 0.0
  %1604 = vmatpush1.msra.mxu0 0.0
  %1605 = vmatprep.mubr.f32.mxu0 0.0
  %1606 = vmatmul.mubr.f32.gmra.mrb[0].mxu0 %v1536
  %v1607 = vpop.f32.mrb[0].mxu0
  %v1608 = vadd.f32 %v1534, %v1607
  %v1609 = vpop.f32.mrb[0].mxu0
  %1610 = vmatprep.mubr.f32.mxu0 0.0
  %1611 = vmatmul.mubr.f32.gmra.mrb[0].mxu0 %v1539
  %v1612 = vpop.f32.mrb[0].mxu0
  %v1613 = vadd.f32 %v1534, %v1612
  %v1614 = vpop.f32.mrb[0].mxu0
  %1615 = vdwg.mxu0
  %v1616 = vld [vmem:[%s5 + $0x208] sm:$0xff]
  %v1617 = vld [vmem:[%s5 + $0x210] sm:$0xff]
  %v1618 = vld [vmem:[%s5 + $0x218] sm:$0xff]
  %v1619 = vld [vmem:[%s5 + $0x220] sm:$0xff]
  %v1620 = vld [vmem:[%s5 + $0x228] sm:$0x1]
  %v1621 = vlaneseq
  %v1622 = vshrl.u32 %v1621, 7
  %v1623 = vsub.s32 0, %v1622
  %v1624 = vrot.slane %v1620, %v1623
  %1625 = vmatprep.subr.mxu0 0.0
  %1626 = vmatpush1.msra.mxu0 %v1616
  %1627 = vmatprep.subr.mxu0 0.0
  %1628 = vmatpush1.msra.mxu0 %v1617
  %1629 = vmatprep.subr.mxu0 0.0
  %1630 = vmatpush1.msra.mxu0 %v1618
  %1631 = vmatprep.subr.mxu0 0.0
  %1632 = vmatpush1.msra.mxu0 %v1619
  %1633 = vmatprep.subr.mxu0 0.0
  %1634 = vmatpush1.msra.mxu0 0.0
  %1635 = vmatprep.subr.mxu0 0.0
  %1636 = vmatpush1.msra.mxu0 0.0
  %1637 = vmatprep.subr.mxu0 0.0
  %1638 = vmatpush1.msra.mxu0 0.0
  %1639 = vmatprep.subr.mxu0 0.0
  %1640 = vmatpush1.msra.mxu0 0.0
  %1641 = vmatprep.subr.mxu0 0.0
  %1642 = vmatpush1.msra.mxu0 0.0
  %1643 = vmatprep.subr.mxu0 0.0
  %1644 = vmatpush1.msra.mxu0 0.0
  %1645 = vmatprep.subr.mxu0 0.0
  %1646 = vmatpush1.msra.mxu0 0.0
  %1647 = vmatprep.subr.mxu0 0.0
  %1648 = vmatpush1.msra.mxu0 0.0
  %1649 = vmatprep.subr.mxu0 0.0
  %1650 = vmatpush1.msra.mxu0 0.0
  %1651 = vmatprep.subr.mxu0 0.0
  %1652 = vmatpush1.msra.mxu0 0.0
  %1653 = vmatprep.subr.mxu0 0.0
  %1654 = vmatpush1.msra.mxu0 0.0
  %1655 = vmatprep.subr.mxu0 0.0
  %1656 = vmatpush1.msra.mxu0 0.0
  %1657 = vmatprep.subr.mxu0 0.0
  %1658 = vmatpush1.msra.mxu0 0.0
  %1659 = vmatprep.subr.mxu0 0.0
  %1660 = vmatpush1.msra.mxu0 0.0
  %1661 = vmatprep.subr.mxu0 0.0
  %1662 = vmatpush1.msra.mxu0 0.0
  %1663 = vmatprep.subr.mxu0 0.0
  %1664 = vmatpush1.msra.mxu0 0.0
  %1665 = vmatprep.subr.mxu0 0.0
  %1666 = vmatpush1.msra.mxu0 0.0
  %1667 = vmatprep.subr.mxu0 0.0
  %1668 = vmatpush1.msra.mxu0 0.0
  %1669 = vmatprep.subr.mxu0 0.0
  %1670 = vmatpush1.msra.mxu0 0.0
  %1671 = vmatprep.subr.mxu0 0.0
  %1672 = vmatpush1.msra.mxu0 0.0
  %1673 = vmatprep.subr.mxu0 0.0
  %1674 = vmatpush1.msra.mxu0 0.0
  %1675 = vmatprep.subr.mxu0 0.0
  %1676 = vmatpush1.msra.mxu0 0.0
  %1677 = vmatprep.subr.mxu0 0.0
  %1678 = vmatpush1.msra.mxu0 0.0
  %1679 = vmatprep.subr.mxu0 0.0
  %1680 = vmatpush1.msra.mxu0 0.0
  %1681 = vmatprep.subr.mxu0 0.0
  %1682 = vmatpush1.msra.mxu0 0.0
  %1683 = vmatprep.subr.mxu0 0.0
  %1684 = vmatpush1.msra.mxu0 0.0
  %1685 = vmatprep.subr.mxu0 0.0
  %1686 = vmatpush1.msra.mxu0 0.0
  %1687 = vmatprep.subr.mxu0 0.0
  %1688 = vmatpush1.msra.mxu0 0.0
  %1689 = vmatprep.mubr.f32.mxu0 0.0
  %1690 = vmatmul.mubr.f32.gmra.mrb[0].mxu0 %v1536
  %v1691 = vpop.f32.mrb[0].mxu0
  %v1692 = vadd.f32 %v1624, %v1691
  %v1693 = vpop.f32.mrb[0].mxu0
  %1694 = vmatprep.mubr.f32.mxu0 0.0
  %1695 = vmatmul.mubr.f32.gmra.mrb[0].mxu0 %v1539
  %v1696 = vpop.f32.mrb[0].mxu0
  %v1697 = vadd.f32 %v1624, %v1696
  %v1698 = vpop.f32.mrb[0].mxu0
  %1699 = vdwg.mxu0
  %v1700 = vld [vmem:[%s5 + $0x258] sm:$0xff]
  %v1701 = vld [vmem:[%s5 + $0x260] sm:$0xff]
  %v1702 = vld [vmem:[%s5 + $0x268] sm:$0xff]
  %v1703 = vld [vmem:[%s5 + $0x270] sm:$0xff]
  %v1704 = vld [vmem:[%s5 + $0x278] sm:$0x1]
  %v1705 = vlaneseq
  %v1706 = vshrl.u32 %v1705, 7
  %v1707 = vsub.s32 0, %v1706
  %v1708 = vrot.slane %v1704, %v1707
  %1709 = vmatprep.subr.mxu0 0.0
  %1710 = vmatpush1.msra.mxu0 %v1700
  %1711 = vmatprep.subr.mxu0 0.0
  %1712 = vmatpush1.msra.mxu0 %v1701
  %1713 = vmatprep.subr.mxu0 0.0
  %1714 = vmatpush1.msra.mxu0 %v1702
  %1715 = vmatprep.subr.mxu0 0.0
  %1716 = vmatpush1.msra.mxu0 %v1703
  %1717 = vmatprep.subr.mxu0 0.0
  %1718 = vmatpush1.msra.mxu0 0.0
  %1719 = vmatprep.subr.mxu0 0.0
  %1720 = vmatpush1.msra.mxu0 0.0
  %1721 = vmatprep.subr.mxu0 0.0
  %1722 = vmatpush1.msra.mxu0 0.0
  %1723 = vmatprep.subr.mxu0 0.0
  %1724 = vmatpush1.msra.mxu0 0.0
  %1725 = vmatprep.subr.mxu0 0.0
  %1726 = vmatpush1.msra.mxu0 0.0
  %1727 = vmatprep.subr.mxu0 0.0
  %1728 = vmatpush1.msra.mxu0 0.0
  %1729 = vmatprep.subr.mxu0 0.0
  %1730 = vmatpush1.msra.mxu0 0.0
  %1731 = vmatprep.subr.mxu0 0.0
  %1732 = vmatpush1.msra.mxu0 0.0
  %1733 = vmatprep.subr.mxu0 0.0
  %1734 = vmatpush1.msra.mxu0 0.0
  %1735 = vmatprep.subr.mxu0 0.0
  %1736 = vmatpush1.msra.mxu0 0.0
  %1737 = vmatprep.subr.mxu0 0.0
  %1738 = vmatpush1.msra.mxu0 0.0
  %1739 = vmatprep.subr.mxu0 0.0
  %1740 = vmatpush1.msra.mxu0 0.0
  %1741 = vmatprep.subr.mxu0 0.0
  %1742 = vmatpush1.msra.mxu0 0.0
  %1743 = vmatprep.subr.mxu0 0.0
  %1744 = vmatpush1.msra.mxu0 0.0
  %1745 = vmatprep.subr.mxu0 0.0
  %1746 = vmatpush1.msra.mxu0 0.0
  %1747 = vmatprep.subr.mxu0 0.0
  %1748 = vmatpush1.msra.mxu0 0.0
  %1749 = vmatprep.subr.mxu0 0.0
  %1750 = vmatpush1.msra.mxu0 0.0
  %1751 = vmatprep.subr.mxu0 0.0
  %1752 = vmatpush1.msra.mxu0 0.0
  %1753 = vmatprep.subr.mxu0 0.0
  %1754 = vmatpush1.msra.mxu0 0.0
  %1755 = vmatprep.subr.mxu0 0.0
  %1756 = vmatpush1.msra.mxu0 0.0
  %1757 = vmatprep.subr.mxu0 0.0
  %1758 = vmatpush1.msra.mxu0 0.0
  %1759 = vmatprep.subr.mxu0 0.0
  %1760 = vmatpush1.msra.mxu0 0.0
  %1761 = vmatprep.subr.mxu0 0.0
  %1762 = vmatpush1.msra.mxu0 0.0
  %1763 = vmatprep.subr.mxu0 0.0
  %1764 = vmatpush1.msra.mxu0 0.0
  %1765 = vmatprep.subr.mxu0 0.0
  %1766 = vmatpush1.msra.mxu0 0.0
  %1767 = vmatprep.subr.mxu0 0.0
  %1768 = vmatpush1.msra.mxu0 0.0
  %1769 = vmatprep.subr.mxu0 0.0
  %1770 = vmatpush1.msra.mxu0 0.0
  %1771 = vmatprep.subr.mxu0 0.0
  %1772 = vmatpush1.msra.mxu0 0.0
  %1773 = vmatprep.mubr.f32.mxu0 0.0
  %1774 = vmatmul.mubr.f32.gmra.mrb[0].mxu0 %v1536
  %v1775 = vpop.f32.mrb[0].mxu0
  %v1776 = vadd.f32 %v1708, %v1775
  %v1777 = vpop.f32.mrb[0].mxu0
  %1778 = vmatprep.mubr.f32.mxu0 0.0
  %1779 = vmatmul.mubr.f32.gmra.mrb[0].mxu0 %v1539
  %v1780 = vpop.f32.mrb[0].mxu0
  %v1781 = vadd.f32 %v1708, %v1780
  %v1782 = vpop.f32.mrb[0].mxu0
  %1783 = vdwg.mxu0
  %v1785 = vsel %vm425, %v1608, 0
  %v1788 = vsel %vm425, %v1613, 0
  %v1791 = vsel %vm425, %v1692, 0
  %v1794 = vsel %vm425, %v1697, 0
  %1796 = vmatprep.subr.mxu0 0.0
  %1797 = vmatpush1.xpose.msra.mxu0 %v1791
  %1798 = vmatprep.subr.mxu0 0.0
  %1799 = vmatpush1.xpose.msra.mxu0 %v1794
  %1800 = vmatprep.subr.mxu0 0.0
  %1801 = vmatpush1.xpose.msra.mxu0 0.0
  %1802 = vmatprep.subr.mxu0 0.0
  %1803 = vmatpush1.xpose.msra.mxu0 0.0
  %1804 = vmatprep.subr.mxu0 0.0
  %1805 = vmatpush1.xpose.msra.mxu0 0.0
  %1806 = vmatprep.subr.mxu0 0.0
  %1807 = vmatpush1.xpose.msra.mxu0 0.0
  %1808 = vmatprep.subr.mxu0 0.0
  %1809 = vmatpush1.xpose.msra.mxu0 0.0
  %1810 = vmatprep.subr.mxu0 0.0
  %1811 = vmatpush1.xpose.msra.mxu0 0.0
  %1812 = vmatprep.subr.mxu0 0.0
  %1813 = vmatpush1.xpose.msra.mxu0 0.0
  %1814 = vmatprep.subr.mxu0 0.0
  %1815 = vmatpush1.xpose.msra.mxu0 0.0
  %1816 = vmatprep.subr.mxu0 0.0
  %1817 = vmatpush1.xpose.msra.mxu0 0.0
  %1818 = vmatprep.subr.mxu0 0.0
  %1819 = vmatpush1.xpose.msra.mxu0 0.0
  %1820 = vmatprep.subr.mxu0 0.0
  %1821 = vmatpush1.xpose.msra.mxu0 0.0
  %1822 = vmatprep.subr.mxu0 0.0
  %1823 = vmatpush1.xpose.msra.mxu0 0.0
  %1824 = vmatprep.subr.mxu0 0.0
  %1825 = vmatpush1.xpose.msra.mxu0 0.0
  %1826 = vmatprep.subr.mxu0 0.0
  %1827 = vmatpush1.xpose.msra.mxu0 0.0
  %1828 = vmatprep.subr.mxu0 0.0
  %1829 = vmatpush1.xpose.msra.mxu0 0.0
  %1830 = vmatprep.subr.mxu0 0.0
  %1831 = vmatpush1.xpose.msra.mxu0 0.0
  %1832 = vmatprep.subr.mxu0 0.0
  %1833 = vmatpush1.xpose.msra.mxu0 0.0
  %1834 = vmatprep.subr.mxu0 0.0
  %1835 = vmatpush1.xpose.msra.mxu0 0.0
  %1836 = vmatprep.subr.mxu0 0.0
  %1837 = vmatpush1.xpose.msra.mxu0 0.0
  %1838 = vmatprep.subr.mxu0 0.0
  %1839 = vmatpush1.xpose.msra.mxu0 0.0
  %1840 = vmatprep.subr.mxu0 0.0
  %1841 = vmatpush1.xpose.msra.mxu0 0.0
  %1842 = vmatprep.subr.mxu0 0.0
  %1843 = vmatpush1.xpose.msra.mxu0 0.0
  %1844 = vmatprep.subr.mxu0 0.0
  %1845 = vmatpush1.xpose.msra.mxu0 0.0
  %1846 = vmatprep.subr.mxu0 0.0
  %1847 = vmatpush1.xpose.msra.mxu0 0.0
  %1848 = vmatprep.subr.mxu0 0.0
  %1849 = vmatpush1.xpose.msra.mxu0 0.0
  %1850 = vmatprep.subr.mxu0 0.0
  %1851 = vmatpush1.xpose.msra.mxu0 0.0
  %1852 = vmatprep.subr.mxu0 0.0
  %1853 = vmatpush1.xpose.msra.mxu0 0.0
  %1854 = vmatprep.subr.mxu0 0.0
  %1855 = vmatpush1.xpose.msra.mxu0 0.0
  %1856 = vmatprep.subr.mxu0 0.0
  %1857 = vmatpush1.xpose.msra.mxu0 0.0
  %1858 = vmatprep.subr.mxu0 0.0
  %1859 = vmatpush1.xpose.msra.mxu0 0.0
  %1860 = vmatprep.mubr.f32.mxu0 0.0
  %1861 = vmatmul.mubr.f32.gmra.mrb[0].mxu0 %v1785
  %v1862 = vpop.f32.mrb[0].mxu0
  %v1863 = vadd.f32 0.0, %v1862
  %v1864 = vpop.f32.mrb[0].mxu0
  %1865 = vmatprep.mubr.f32.mxu0 0.0
  %1866 = vmatmul.mubr.f32.gmra.mrb[0].mxu0 %v1788
  %v1867 = vpop.f32.mrb[0].mxu0
  %v1868 = vadd.f32 0.0, %v1867
  %v1869 = vpop.f32.mrb[0].mxu0
  %1870 = vdwg.mxu0
  %v1871 = vmul.f32 %v1863, 0.25
  %v1872 = vmul.f32 %v1868, 0.25
  %v1873 = vadd.f32 %v1871, %v123
  %v1874 = vadd.f32 %v1872, %v124
  %v1875 = vsel %vm425, %v1873, -inf
  %1876 = vmax.xlane.f32.xlu0 %v1875
  %v1877 = vpop.xlane.xlu0 %1876
  %v1878 = vsel %vm425, %v1874, -inf
  %1879 = vmax.xlane.f32.xlu0 %v1878
  %v1880 = vpop.xlane.xlu0 %1879
  %v1881 = vsub.f32 %v1873, %v1877
  %v1882 = vsub.f32 %v1874, %v1880
  %v1883 = vmul.f32 %v1881, 1.442695
  %v1884 = vpow.pop %v1883
  %v1885 = vmul.f32 %v1882, 1.442695
  %v1886 = vpow.pop %v1885
  %v1887 = vsel %vm425, %v1884, 0.0
  %1888 = vadd.xlane.f32.xlu0 %v1887
  %v1889 = vpop.xlane.xlu0 %1888
  %v1890 = vsel %vm425, %v1886, 0.0
  %1891 = vadd.xlane.f32.xlu0 %v1890
  %v1892 = vpop.xlane.xlu0 %1891
  %v1893 = vrcp.pop %v1889
  %v1894 = vrcp.pop %v1892
  %v1895 = vmul.f32 %v1884, %v1893
  %v1896 = vmul.f32 %v1886, %v1894
  %v1898 = vsel %vm425, %v1895, 0
  %v1901 = vsel %vm425, %v1896, 0
  %1903 = vmatprep.subr.mxu0 0.0
  %1904 = vmatpush1.msra.mxu0 %v1776
  %1905 = vmatprep.subr.mxu0 0.0
  %1906 = vmatpush1.msra.mxu0 %v1781
  %1907 = vmatprep.subr.mxu0 0.0
  %1908 = vmatpush1.msra.mxu0 0.0
  %1909 = vmatprep.subr.mxu0 0.0
  %1910 = vmatpush1.msra.mxu0 0.0
  %1911 = vmatprep.subr.mxu0 0.0
  %1912 = vmatpush1.msra.mxu0 0.0
  %1913 = vmatprep.subr.mxu0 0.0
  %1914 = vmatpush1.msra.mxu0 0.0
  %1915 = vmatprep.subr.mxu0 0.0
  %1916 = vmatpush1.msra.mxu0 0.0
  %1917 = vmatprep.subr.mxu0 0.0
  %1918 = vmatpush1.msra.mxu0 0.0
  %1919 = vmatprep.subr.mxu0 0.0
  %1920 = vmatpush1.msra.mxu0 0.0
  %1921 = vmatprep.subr.mxu0 0.0
  %1922 = vmatpush1.msra.mxu0 0.0
  %1923 = vmatprep.subr.mxu0 0.0
  %1924 = vmatpush1.msra.mxu0 0.0
  %1925 = vmatprep.subr.mxu0 0.0
  %1926 = vmatpush1.msra.mxu0 0.0
  %1927 = vmatprep.subr.mxu0 0.0
  %1928 = vmatpush1.msra.mxu0 0.0
  %1929 = vmatprep.subr.mxu0 0.0
  %1930 = vmatpush1.msra.mxu0 0.0
  %1931 = vmatprep.subr.mxu0 0.0
  %1932 = vmatpush1.msra.mxu0 0.0
  %1933 = vmatprep.subr.mxu0 0.0
  %1934 = vmatpush1.msra.mxu0 0.0
  %1935 = vmatprep.subr.mxu0 0.0
  %1936 = vmatpush1.msra.mxu0 0.0
  %1937 = vmatprep.subr.mxu0 0.0
  %1938 = vmatpush1.msra.mxu0 0.0
  %1939 = vmatprep.subr.mxu0 0.0
  %1940 = vmatpush1.msra.mxu0 0.0
  %1941 = vmatprep.subr.mxu0 0.0
  %1942 = vmatpush1.msra.mxu0 0.0
  %1943 = vmatprep.subr.mxu0 0.0
  %1944 = vmatpush1.msra.mxu0 0.0
  %1945 = vmatprep.subr.mxu0 0.0
  %1946 = vmatpush1.msra.mxu0 0.0
  %1947 = vmatprep.subr.mxu0 0.0
  %1948 = vmatpush1.msra.mxu0 0.0
  %1949 = vmatprep.subr.mxu0 0.0
  %1950 = vmatpush1.msra.mxu0 0.0
  %1951 = vmatprep.subr.mxu0 0.0
  %1952 = vmatpush1.msra.mxu0 0.0
  %1953 = vmatprep.subr.mxu0 0.0
  %1954 = vmatpush1.msra.mxu0 0.0
  %1955 = vmatprep.subr.mxu0 0.0
  %1956 = vmatpush1.msra.mxu0 0.0
  %1957 = vmatprep.subr.mxu0 0.0
  %1958 = vmatpush1.msra.mxu0 0.0
  %1959 = vmatprep.subr.mxu0 0.0
  %1960 = vmatpush1.msra.mxu0 0.0
  %1961 = vmatprep.subr.mxu0 0.0
  %1962 = vmatpush1.msra.mxu0 0.0
  %1963 = vmatprep.subr.mxu0 0.0
  %1964 = vmatpush1.msra.mxu0 0.0
  %1965 = vmatprep.subr.mxu0 0.0
  %1966 = vmatpush1.msra.mxu0 0.0
  %1967 = vmatprep.mubr.f32.mxu0 0.0
  %1968 = vmatmul.mubr.f32.gmra.mrb[0].mxu0 %v1898
  %v1969 = vpop.f32.mrb[0].mxu0
  %v1970 = vadd.f32 0.0, %v1969
  %v1971 = vpop.f32.mrb[0].mxu0
  %1972 = vmatprep.mubr.f32.mxu0 0.0
  %1973 = vmatmul.mubr.f32.gmra.mrb[0].mxu0 %v1901
  %v1974 = vpop.f32.mrb[0].mxu0
  %v1975 = vadd.f32 0.0, %v1974
  %v1976 = vpop.f32.mrb[0].mxu0
  %1977 = vdwg.mxu0
  %v1978 = vld [vmem:[%s5 + $0x2a8] sm:$0xff]
  %v1979 = vld [vmem:[%s5 + $0x2b0] sm:$0xff]
  %v1980 = vld [vmem:[%s5 + $0x1e0] sm:$0xff]
  %v1981 = vld [vmem:[%s5 + $0x1e8] sm:$0xff]
  %v1982 = vld [vmem:[%s5 + $0x1f0] sm:$0xff]
  %v1983 = vld [vmem:[%s5 + $0x1f8] sm:$0xff]
  %v1984 = vld [vmem:[%s5 + $0x200] sm:$0x1]
  %v1985 = vlaneseq
  %v1986 = vshrl.u32 %v1985, 7
  %v1987 = vsub.s32 0, %v1986
  %v1988 = vrot.slane %v1984, %v1987
  %1989 = vmatprep.subr.mxu0 0.0
  %1990 = vmatpush1.msra.mxu0 %v1980
  %1991 = vmatprep.subr.mxu0 0.0
  %1992 = vmatpush1.msra.mxu0 %v1981
  %1993 = vmatprep.subr.mxu0 0.0
  %1994 = vmatpush1.msra.mxu0 %v1982
  %1995 = vmatprep.subr.mxu0 0.0
  %1996 = vmatpush1.msra.mxu0 %v1983
  %1997 = vmatprep.subr.mxu0 0.0
  %1998 = vmatpush1.msra.mxu0 0.0
  %1999 = vmatprep.subr.mxu0 0.0
  %2000 = vmatpush1.msra.mxu0 0.0
  %2001 = vmatprep.subr.mxu0 0.0
  %2002 = vmatpush1.msra.mxu0 0.0
  %2003 = vmatprep.subr.mxu0 0.0
  %2004 = vmatpush1.msra.mxu0 0.0
  %2005 = vmatprep.subr.mxu0 0.0
  %2006 = vmatpush1.msra.mxu0 0.0
  %2007 = vmatprep.subr.mxu0 0.0
  %2008 = vmatpush1.msra.mxu0 0.0
  %2009 = vmatprep.subr.mxu0 0.0
  %2010 = vmatpush1.msra.mxu0 0.0
  %2011 = vmatprep.subr.mxu0 0.0
  %2012 = vmatpush1.msra.mxu0 0.0
  %2013 = vmatprep.subr.mxu0 0.0
  %2014 = vmatpush1.msra.mxu0 0.0
  %2015 = vmatprep.subr.mxu0 0.0
  %2016 = vmatpush1.msra.mxu0 0.0
  %2017 = vmatprep.subr.mxu0 0.0
  %2018 = vmatpush1.msra.mxu0 0.0
  %2019 = vmatprep.subr.mxu0 0.0
  %2020 = vmatpush1.msra.mxu0 0.0
  %2021 = vmatprep.subr.mxu0 0.0
  %2022 = vmatpush1.msra.mxu0 0.0
  %2023 = vmatprep.subr.mxu0 0.0
  %2024 = vmatpush1.msra.mxu0 0.0
  %2025 = vmatprep.subr.mxu0 0.0
  %2026 = vmatpush1.msra.mxu0 0.0
  %2027 = vmatprep.subr.mxu0 0.0
  %2028 = vmatpush1.msra.mxu0 0.0
  %2029 = vmatprep.subr.mxu0 0.0
  %2030 = vmatpush1.msra.mxu0 0.0
  %2031 = vmatprep.subr.mxu0 0.0
  %2032 = vmatpush1.msra.mxu0 0.0
  %2033 = vmatprep.subr.mxu0 0.0
  %2034 = vmatpush1.msra.mxu0 0.0
  %2035 = vmatprep.subr.mxu0 0.0
  %2036 = vmatpush1.msra.mxu0 0.0
  %2037 = vmatprep.subr.mxu0 0.0
  %2038 = vmatpush1.msra.mxu0 0.0
  %2039 = vmatprep.subr.mxu0 0.0
  %2040 = vmatpush1.msra.mxu0 0.0
  %2041 = vmatprep.subr.mxu0 0.0
  %2042 = vmatpush1.msra.mxu0 0.0
  %2043 = vmatprep.subr.mxu0 0.0
  %2044 = vmatpush1.msra.mxu0 0.0
  %2045 = vmatprep.subr.mxu0 0.0
  %2046 = vmatpush1.msra.mxu0 0.0
  %2047 = vmatprep.subr.mxu0 0.0
  %2048 = vmatpush1.msra.mxu0 0.0
  %2049 = vmatprep.subr.mxu0 0.0
  %2050 = vmatpush1.msra.mxu0 0.0
  %2051 = vmatprep.subr.mxu0 0.0
  %2052 = vmatpush1.msra.mxu0 0.0
  %2053 = vmatprep.mubr.f32.mxu0 0.0
  %2054 = vmatmul.mubr.f32.gmra.mrb[0].mxu0 %v1536
  %v2055 = vpop.f32.mrb[0].mxu0
  %v2056 = vadd.f32 %v1988, %v2055
  %v2057 = vpop.f32.mrb[0].mxu0
  %2058 = vmatprep.mubr.f32.mxu0 0.0
  %2059 = vmatmul.mubr.f32.gmra.mrb[0].mxu0 %v1539
  %v2060 = vpop.f32.mrb[0].mxu0
  %v2061 = vadd.f32 %v1988, %v2060
  %v2062 = vpop.f32.mrb[0].mxu0
  %2063 = vdwg.mxu0
  %v2064 = vld [vmem:[%s5 + $0x230] sm:$0xff]
  %v2065 = vld [vmem:[%s5 + $0x238] sm:$0xff]
  %v2066 = vld [vmem:[%s5 + $0x240] sm:$0xff]
  %v2067 = vld [vmem:[%s5 + $0x248] sm:$0xff]
  %v2068 = vld [vmem:[%s5 + $0x250] sm:$0x1]
  %v2069 = vlaneseq
  %v2070 = vshrl.u32 %v2069, 7
  %v2071 = vsub.s32 0, %v2070
  %v2072 = vrot.slane %v2068, %v2071
  %2073 = vmatprep.subr.mxu0 0.0
  %2074 = vmatpush1.msra.mxu0 %v2064
  %2075 = vmatprep.subr.mxu0 0.0
  %2076 = vmatpush1.msra.mxu0 %v2065
  %2077 = vmatprep.subr.mxu0 0.0
  %2078 = vmatpush1.msra.mxu0 %v2066
  %2079 = vmatprep.subr.mxu0 0.0
  %2080 = vmatpush1.msra.mxu0 %v2067
  %2081 = vmatprep.subr.mxu0 0.0
  %2082 = vmatpush1.msra.mxu0 0.0
  %2083 = vmatprep.subr.mxu0 0.0
  %2084 = vmatpush1.msra.mxu0 0.0
  %2085 = vmatprep.subr.mxu0 0.0
  %2086 = vmatpush1.msra.mxu0 0.0
  %2087 = vmatprep.subr.mxu0 0.0
  %2088 = vmatpush1.msra.mxu0 0.0
  %2089 = vmatprep.subr.mxu0 0.0
  %2090 = vmatpush1.msra.mxu0 0.0
  %2091 = vmatprep.subr.mxu0 0.0
  %2092 = vmatpush1.msra.mxu0 0.0
  %2093 = vmatprep.subr.mxu0 0.0
  %2094 = vmatpush1.msra.mxu0 0.0
  %2095 = vmatprep.subr.mxu0 0.0
  %2096 = vmatpush1.msra.mxu0 0.0
  %2097 = vmatprep.subr.mxu0 0.0
  %2098 = vmatpush1.msra.mxu0 0.0
  %2099 = vmatprep.subr.mxu0 0.0
  %2100 = vmatpush1.msra.mxu0 0.0
  %2101 = vmatprep.subr.mxu0 0.0
  %2102 = vmatpush1.msra.mxu0 0.0
  %2103 = vmatprep.subr.mxu0 0.0
  %2104 = vmatpush1.msra.mxu0 0.0
  %2105 = vmatprep.subr.mxu0 0.0
  %2106 = vmatpush1.msra.mxu0 0.0
  %2107 = vmatprep.subr.mxu0 0.0
  %2108 = vmatpush1.msra.mxu0 0.0
  %2109 = vmatprep.subr.mxu0 0.0
  %2110 = vmatpush1.msra.mxu0 0.0
  %2111 = vmatprep.subr.mxu0 0.0
  %2112 = vmatpush1.msra.mxu0 0.0
  %2113 = vmatprep.subr.mxu0 0.0
  %2114 = vmatpush1.msra.mxu0 0.0
  %2115 = vmatprep.subr.mxu0 0.0
  %2116 = vmatpush1.msra.mxu0 0.0
  %2117 = vmatprep.subr.mxu0 0.0
  %2118 = vmatpush1.msra.mxu0 0.0
  %2119 = vmatprep.subr.mxu0 0.0
  %2120 = vmatpush1.msra.mxu0 0.0
  %2121 = vmatprep.subr.mxu0 0.0
  %2122 = vmatpush1.msra.mxu0 0.0
  %2123 = vmatprep.subr.mxu0 0.0
  %2124 = vmatpush1.msra.mxu0 0.0
  %2125 = vmatprep.subr.mxu0 0.0
  %2126 = vmatpush1.msra.mxu0 0.0
  %2127 = vmatprep.subr.mxu0 0.0
  %2128 = vmatpush1.msra.mxu0 0.0
  %2129 = vmatprep.subr.mxu0 0.0
  %2130 = vmatpush1.msra.mxu0 0.0
  %2131 = vmatprep.subr.mxu0 0.0
  %2132 = vmatpush1.msra.mxu0 0.0
  %2133 = vmatprep.subr.mxu0 0.0
  %2134 = vmatpush1.msra.mxu0 0.0
  %2135 = vmatprep.subr.mxu0 0.0
  %2136 = vmatpush1.msra.mxu0 0.0
  %2137 = vmatprep.mubr.f32.mxu0 0.0
  %2138 = vmatmul.mubr.f32.gmra.mrb[0].mxu0 %v1536
  %v2139 = vpop.f32.mrb[0].mxu0
  %v2140 = vadd.f32 %v2072, %v2139
  %v2141 = vpop.f32.mrb[0].mxu0
  %2142 = vmatprep.mubr.f32.mxu0 0.0
  %2143 = vmatmul.mubr.f32.gmra.mrb[0].mxu0 %v1539
  %v2144 = vpop.f32.mrb[0].mxu0
  %v2145 = vadd.f32 %v2072, %v2144
  %v2146 = vpop.f32.mrb[0].mxu0
  %2147 = vdwg.mxu0
  %v2148 = vld [vmem:[%s5 + $0x280] sm:$0xff]
  %v2149 = vld [vmem:[%s5 + $0x288] sm:$0xff]
  %v2150 = vld [vmem:[%s5 + $0x290] sm:$0xff]
  %v2151 = vld [vmem:[%s5 + $0x298] sm:$0xff]
  %v2152 = vld [vmem:[%s5 + $0x2a0] sm:$0x1]
  %v2153 = vlaneseq
  %v2154 = vshrl.u32 %v2153, 7
  %v2155 = vsub.s32 0, %v2154
  %v2156 = vrot.slane %v2152, %v2155
  %2157 = vmatprep.subr.mxu0 0.0
  %2158 = vmatpush1.msra.mxu0 %v2148
  %2159 = vmatprep.subr.mxu0 0.0
  %2160 = vmatpush1.msra.mxu0 %v2149
  %2161 = vmatprep.subr.mxu0 0.0
  %2162 = vmatpush1.msra.mxu0 %v2150
  %2163 = vmatprep.subr.mxu0 0.0
  %2164 = vmatpush1.msra.mxu0 %v2151
  %2165 = vmatprep.subr.mxu0 0.0
  %2166 = vmatpush1.msra.mxu0 0.0
  %2167 = vmatprep.subr.mxu0 0.0
  %2168 = vmatpush1.msra.mxu0 0.0
  %2169 = vmatprep.subr.mxu0 0.0
  %2170 = vmatpush1.msra.mxu0 0.0
  %2171 = vmatprep.subr.mxu0 0.0
  %2172 = vmatpush1.msra.mxu0 0.0
  %2173 = vmatprep.subr.mxu0 0.0
  %2174 = vmatpush1.msra.mxu0 0.0
  %2175 = vmatprep.subr.mxu0 0.0
  %2176 = vmatpush1.msra.mxu0 0.0
  %2177 = vmatprep.subr.mxu0 0.0
  %2178 = vmatpush1.msra.mxu0 0.0
  %2179 = vmatprep.subr.mxu0 0.0
  %2180 = vmatpush1.msra.mxu0 0.0
  %2181 = vmatprep.subr.mxu0 0.0
  %2182 = vmatpush1.msra.mxu0 0.0
  %2183 = vmatprep.subr.mxu0 0.0
  %2184 = vmatpush1.msra.mxu0 0.0
  %2185 = vmatprep.subr.mxu0 0.0
  %2186 = vmatpush1.msra.mxu0 0.0
  %2187 = vmatprep.subr.mxu0 0.0
  %2188 = vmatpush1.msra.mxu0 0.0
  %2189 = vmatprep.subr.mxu0 0.0
  %2190 = vmatpush1.msra.mxu0 0.0
  %2191 = vmatprep.subr.mxu0 0.0
  %2192 = vmatpush1.msra.mxu0 0.0
  %2193 = vmatprep.subr.mxu0 0.0
  %2194 = vmatpush1.msra.mxu0 0.0
  %2195 = vmatprep.subr.mxu0 0.0
  %2196 = vmatpush1.msra.mxu0 0.0
  %2197 = vmatprep.subr.mxu0 0.0
  %2198 = vmatpush1.msra.mxu0 0.0
  %2199 = vmatprep.subr.mxu0 0.0
  %2200 = vmatpush1.msra.mxu0 0.0
  %2201 = vmatprep.subr.mxu0 0.0
  %2202 = vmatpush1.msra.mxu0 0.0
  %2203 = vmatprep.subr.mxu0 0.0
  %2204 = vmatpush1.msra.mxu0 0.0
  %2205 = vmatprep.subr.mxu0 0.0
  %2206 = vmatpush1.msra.mxu0 0.0
  %2207 = vmatprep.subr.mxu0 0.0
  %2208 = vmatpush1.msra.mxu0 0.0
  %2209 = vmatprep.subr.mxu0 0.0
  %2210 = vmatpush1.msra.mxu0 0.0
  %2211 = vmatprep.subr.mxu0 0.0
  %2212 = vmatpush1.msra.mxu0 0.0
  %2213 = vmatprep.subr.mxu0 0.0
  %2214 = vmatpush1.msra.mxu0 0.0
  %2215 = vmatprep.subr.mxu0 0.0
  %2216 = vmatpush1.msra.mxu0 0.0
  %2217 = vmatprep.subr.mxu0 0.0
  %2218 = vmatpush1.msra.mxu0 0.0
  %2219 = vmatprep.subr.mxu0 0.0
  %2220 = vmatpush1.msra.mxu0 0.0
  %2221 = vmatprep.mubr.f32.mxu0 0.0
  %2222 = vmatmul.mubr.f32.gmra.mrb[0].mxu0 %v1536
  %v2223 = vpop.f32.mrb[0].mxu0
  %v2224 = vadd.f32 %v2156, %v2223
  %v2225 = vpop.f32.mrb[0].mxu0
  %2226 = vmatprep.mubr.f32.mxu0 0.0
  %2227 = vmatmul.mubr.f32.gmra.mrb[0].mxu0 %v1539
  %v2228 = vpop.f32.mrb[0].mxu0
  %v2229 = vadd.f32 %v2156, %v2228
  %v2230 = vpop.f32.mrb[0].mxu0
  %2231 = vdwg.mxu0
  %v2233 = vsel %vm425, %v2056, 0
  %v2236 = vsel %vm425, %v2061, 0
  %v2239 = vsel %vm425, %v2140, 0
  %v2242 = vsel %vm425, %v2145, 0
  %2244 = vmatprep.subr.mxu0 0.0
  %2245 = vmatpush1.xpose.msra.mxu0 %v2239
  %2246 = vmatprep.subr.mxu0 0.0
  %2247 = vmatpush1.xpose.msra.mxu0 %v2242
  %2248 = vmatprep.subr.mxu0 0.0
  %2249 = vmatpush1.xpose.msra.mxu0 0.0
  %2250 = vmatprep.subr.mxu0 0.0
  %2251 = vmatpush1.xpose.msra.mxu0 0.0
  %2252 = vmatprep.subr.mxu0 0.0
  %2253 = vmatpush1.xpose.msra.mxu0 0.0
  %2254 = vmatprep.subr.mxu0 0.0
  %2255 = vmatpush1.xpose.msra.mxu0 0.0
  %2256 = vmatprep.subr.mxu0 0.0
  %2257 = vmatpush1.xpose.msra.mxu0 0.0
  %2258 = vmatprep.subr.mxu0 0.0
  %2259 = vmatpush1.xpose.msra.mxu0 0.0
  %2260 = vmatprep.subr.mxu0 0.0
  %2261 = vmatpush1.xpose.msra.mxu0 0.0
  %2262 = vmatprep.subr.mxu0 0.0
  %2263 = vmatpush1.xpose.msra.mxu0 0.0
  %2264 = vmatprep.subr.mxu0 0.0
  %2265 = vmatpush1.xpose.msra.mxu0 0.0
  %2266 = vmatprep.subr.mxu0 0.0
  %2267 = vmatpush1.xpose.msra.mxu0 0.0
  %2268 = vmatprep.subr.mxu0 0.0
  %2269 = vmatpush1.xpose.msra.mxu0 0.0
  %2270 = vmatprep.subr.mxu0 0.0
  %2271 = vmatpush1.xpose.msra.mxu0 0.0
  %2272 = vmatprep.subr.mxu0 0.0
  %2273 = vmatpush1.xpose.msra.mxu0 0.0
  %2274 = vmatprep.subr.mxu0 0.0
  %2275 = vmatpush1.xpose.msra.mxu0 0.0
  %2276 = vmatprep.subr.mxu0 0.0
  %2277 = vmatpush1.xpose.msra.mxu0 0.0
  %2278 = vmatprep.subr.mxu0 0.0
  %2279 = vmatpush1.xpose.msra.mxu0 0.0
  %2280 = vmatprep.subr.mxu0 0.0
  %2281 = vmatpush1.xpose.msra.mxu0 0.0
  %2282 = vmatprep.subr.mxu0 0.0
  %2283 = vmatpush1.xpose.msra.mxu0 0.0
  %2284 = vmatprep.subr.mxu0 0.0
  %2285 = vmatpush1.xpose.msra.mxu0 0.0
  %2286 = vmatprep.subr.mxu0 0.0
  %2287 = vmatpush1.xpose.msra.mxu0 0.0
  %2288 = vmatprep.subr.mxu0 0.0
  %2289 = vmatpush1.xpose.msra.mxu0 0.0
  %2290 = vmatprep.subr.mxu0 0.0
  %2291 = vmatpush1.xpose.msra.mxu0 0.0
  %2292 = vmatprep.subr.mxu0 0.0
  %2293 = vmatpush1.xpose.msra.mxu0 0.0
  %2294 = vmatprep.subr.mxu0 0.0
  %2295 = vmatpush1.xpose.msra.mxu0 0.0
  %2296 = vmatprep.subr.mxu0 0.0
  %2297 = vmatpush1.xpose.msra.mxu0 0.0
  %2298 = vmatprep.subr.mxu0 0.0
  %2299 = vmatpush1.xpose.msra.mxu0 0.0
  %2300 = vmatprep.subr.mxu0 0.0
  %2301 = vmatpush1.xpose.msra.mxu0 0.0
  %2302 = vmatprep.subr.mxu0 0.0
  %2303 = vmatpush1.xpose.msra.mxu0 0.0
  %2304 = vmatprep.subr.mxu0 0.0
  %2305 = vmatpush1.xpose.msra.mxu0 0.0
  %2306 = vmatprep.subr.mxu0 0.0
  %2307 = vmatpush1.xpose.msra.mxu0 0.0
  %2308 = vmatprep.mubr.f32.mxu0 0.0
  %2309 = vmatmul.mubr.f32.gmra.mrb[0].mxu0 %v2233
  %v2310 = vpop.f32.mrb[0].mxu0
  %v2311 = vadd.f32 0.0, %v2310
  %v2312 = vpop.f32.mrb[0].mxu0
  %2313 = vmatprep.mubr.f32.mxu0 0.0
  %2314 = vmatmul.mubr.f32.gmra.mrb[0].mxu0 %v2236
  %v2315 = vpop.f32.mrb[0].mxu0
  %v2316 = vadd.f32 0.0, %v2315
  %v2317 = vpop.f32.mrb[0].mxu0
  %2318 = vdwg.mxu0
  %v2319 = vmul.f32 %v2311, 0.25
  %v2320 = vmul.f32 %v2316, 0.25
  %v2321 = vadd.f32 %v2319, %v123
  %v2322 = vadd.f32 %v2320, %v124
  %v2323 = vsel %vm425, %v2321, -inf
  %2324 = vmax.xlane.f32.xlu0 %v2323
  %v2325 = vpop.xlane.xlu0 %2324
  %v2326 = vsel %vm425, %v2322, -inf
  %2327 = vmax.xlane.f32.xlu0 %v2326
  %v2328 = vpop.xlane.xlu0 %2327
  %v2329 = vsub.f32 %v2321, %v2325
  %v2330 = vsub.f32 %v2322, %v2328
  %v2331 = vmul.f32 %v2329, 1.442695
  %v2332 = vpow.pop %v2331
  %v2333 = vmul.f32 %v2330, 1.442695
  %v2334 = vpow.pop %v2333
  %v2335 = vsel %vm425, %v2332, 0.0
  %2336 = vadd.xlane.f32.xlu0 %v2335
  %v2337 = vpop.xlane.xlu0 %2336
  %v2338 = vsel %vm425, %v2334, 0.0
  %2339 = vadd.xlane.f32.xlu0 %v2338
  %v2340 = vpop.xlane.xlu0 %2339
  %v2341 = vrcp.pop %v2337
  %v2342 = vrcp.pop %v2340
  %v2343 = vmul.f32 %v2332, %v2341
  %v2344 = vmul.f32 %v2334, %v2342
  %v2346 = vsel %vm425, %v2343, 0
  %v2349 = vsel %vm425, %v2344, 0
  %2351 = vmatprep.subr.mxu0 0.0
  %2352 = vmatpush1.msra.mxu0 %v2224
  %2353 = vmatprep.subr.mxu0 0.0
  %2354 = vmatpush1.msra.mxu0 %v2229
  %2355 = vmatprep.subr.mxu0 0.0
  %2356 = vmatpush1.msra.mxu0 0.0
  %2357 = vmatprep.subr.mxu0 0.0
  %2358 = vmatpush1.msra.mxu0 0.0
  %2359 = vmatprep.subr.mxu0 0.0
  %2360 = vmatpush1.msra.mxu0 0.0
  %2361 = vmatprep.subr.mxu0 0.0
  %2362 = vmatpush1.msra.mxu0 0.0
  %2363 = vmatprep.subr.mxu0 0.0
  %2364 = vmatpush1.msra.mxu0 0.0
  %2365 = vmatprep.subr.mxu0 0.0
  %2366 = vmatpush1.msra.mxu0 0.0
  %2367 = vmatprep.subr.mxu0 0.0
  %2368 = vmatpush1.msra.mxu0 0.0
  %2369 = vmatprep.subr.mxu0 0.0
  %2370 = vmatpush1.msra.mxu0 0.0
  %2371 = vmatprep.subr.mxu0 0.0
  %2372 = vmatpush1.msra.mxu0 0.0
  %2373 = vmatprep.subr.mxu0 0.0
  %2374 = vmatpush1.msra.mxu0 0.0
  %2375 = vmatprep.subr.mxu0 0.0
  %2376 = vmatpush1.msra.mxu0 0.0
  %2377 = vmatprep.subr.mxu0 0.0
  %2378 = vmatpush1.msra.mxu0 0.0
  %2379 = vmatprep.subr.mxu0 0.0
  %2380 = vmatpush1.msra.mxu0 0.0
  %2381 = vmatprep.subr.mxu0 0.0
  %2382 = vmatpush1.msra.mxu0 0.0
  %2383 = vmatprep.subr.mxu0 0.0
  %2384 = vmatpush1.msra.mxu0 0.0
  %2385 = vmatprep.subr.mxu0 0.0
  %2386 = vmatpush1.msra.mxu0 0.0
  %2387 = vmatprep.subr.mxu0 0.0
  %2388 = vmatpush1.msra.mxu0 0.0
  %2389 = vmatprep.subr.mxu0 0.0
  %2390 = vmatpush1.msra.mxu0 0.0
  %2391 = vmatprep.subr.mxu0 0.0
  %2392 = vmatpush1.msra.mxu0 0.0
  %2393 = vmatprep.subr.mxu0 0.0
  %2394 = vmatpush1.msra.mxu0 0.0
  %2395 = vmatprep.subr.mxu0 0.0
  %2396 = vmatpush1.msra.mxu0 0.0
  %2397 = vmatprep.subr.mxu0 0.0
  %2398 = vmatpush1.msra.mxu0 0.0
  %2399 = vmatprep.subr.mxu0 0.0
  %2400 = vmatpush1.msra.mxu0 0.0
  %2401 = vmatprep.subr.mxu0 0.0
  %2402 = vmatpush1.msra.mxu0 0.0
  %2403 = vmatprep.subr.mxu0 0.0
  %2404 = vmatpush1.msra.mxu0 0.0
  %2405 = vmatprep.subr.mxu0 0.0
  %2406 = vmatpush1.msra.mxu0 0.0
  %2407 = vmatprep.subr.mxu0 0.0
  %2408 = vmatpush1.msra.mxu0 0.0
  %2409 = vmatprep.subr.mxu0 0.0
  %2410 = vmatpush1.msra.mxu0 0.0
  %2411 = vmatprep.subr.mxu0 0.0
  %2412 = vmatpush1.msra.mxu0 0.0
  %2413 = vmatprep.subr.mxu0 0.0
  %2414 = vmatpush1.msra.mxu0 0.0
  %2415 = vmatprep.mubr.f32.mxu0 0.0
  %2416 = vmatmul.mubr.f32.gmra.mrb[0].mxu0 %v2346
  %v2417 = vpop.f32.mrb[0].mxu0
  %v2418 = vadd.f32 0.0, %v2417
  %v2419 = vpop.f32.mrb[0].mxu0
  %2420 = vmatprep.mubr.f32.mxu0 0.0
  %2421 = vmatmul.mubr.f32.gmra.mrb[0].mxu0 %v2349
  %v2422 = vpop.f32.mrb[0].mxu0
  %v2423 = vadd.f32 0.0, %v2422
  %v2424 = vpop.f32.mrb[0].mxu0
  %2425 = vdwg.mxu0
  %v2426 = vld [vmem:[%s5 + $0x2b8] sm:$0xff]
  %v2427 = vld [vmem:[%s5 + $0x2c0] sm:$0xff]
  %v2429 = vsel %vm425, %v2418, 0
  %v2432 = vsel %vm425, %v2423, 0
  %2434 = vmatprep.subr.mxu0 0.0
  %2435 = vmatpush1.msra.mxu0 %v2426
  %2436 = vmatprep.subr.mxu0 0.0
  %2437 = vmatpush1.msra.mxu0 %v2427
  %2438 = vmatprep.subr.mxu0 0.0
  %2439 = vmatpush1.msra.mxu0 0.0
  %2440 = vmatprep.subr.mxu0 0.0
  %2441 = vmatpush1.msra.mxu0 0.0
  %2442 = vmatprep.subr.mxu0 0.0
  %2443 = vmatpush1.msra.mxu0 0.0
  %2444 = vmatprep.subr.mxu0 0.0
  %2445 = vmatpush1.msra.mxu0 0.0
  %2446 = vmatprep.subr.mxu0 0.0
  %2447 = vmatpush1.msra.mxu0 0.0
  %2448 = vmatprep.subr.mxu0 0.0
  %2449 = vmatpush1.msra.mxu0 0.0
  %2450 = vmatprep.subr.mxu0 0.0
  %2451 = vmatpush1.msra.mxu0 0.0
  %2452 = vmatprep.subr.mxu0 0.0
  %2453 = vmatpush1.msra.mxu0 0.0
  %2454 = vmatprep.subr.mxu0 0.0
  %2455 = vmatpush1.msra.mxu0 0.0
  %2456 = vmatprep.subr.mxu0 0.0
  %2457 = vmatpush1.msra.mxu0 0.0
  %2458 = vmatprep.subr.mxu0 0.0
  %2459 = vmatpush1.msra.mxu0 0.0
  %2460 = vmatprep.subr.mxu0 0.0
  %2461 = vmatpush1.msra.mxu0 0.0
  %2462 = vmatprep.subr.mxu0 0.0
  %2463 = vmatpush1.msra.mxu0 0.0
  %2464 = vmatprep.subr.mxu0 0.0
  %2465 = vmatpush1.msra.mxu0 0.0
  %2466 = vmatprep.subr.mxu0 0.0
  %2467 = vmatpush1.msra.mxu0 0.0
  %2468 = vmatprep.subr.mxu0 0.0
  %2469 = vmatpush1.msra.mxu0 0.0
  %2470 = vmatprep.subr.mxu0 0.0
  %2471 = vmatpush1.msra.mxu0 0.0
  %2472 = vmatprep.subr.mxu0 0.0
  %2473 = vmatpush1.msra.mxu0 0.0
  %2474 = vmatprep.subr.mxu0 0.0
  %2475 = vmatpush1.msra.mxu0 0.0
  %2476 = vmatprep.subr.mxu0 0.0
  %2477 = vmatpush1.msra.mxu0 0.0
  %2478 = vmatprep.subr.mxu0 0.0
  %2479 = vmatpush1.msra.mxu0 0.0
  %2480 = vmatprep.subr.mxu0 0.0
  %2481 = vmatpush1.msra.mxu0 0.0
  %2482 = vmatprep.subr.mxu0 0.0
  %2483 = vmatpush1.msra.mxu0 0.0
  %2484 = vmatprep.subr.mxu0 0.0
  %2485 = vmatpush1.msra.mxu0 0.0
  %2486 = vmatprep.subr.mxu0 0.0
  %2487 = vmatpush1.msra.mxu0 0.0
  %2488 = vmatprep.subr.mxu0 0.0
  %2489 = vmatpush1.msra.mxu0 0.0
  %2490 = vmatprep.subr.mxu0 0.0
  %2491 = vmatpush1.msra.mxu0 0.0
  %2492 = vmatprep.subr.mxu0 0.0
  %2493 = vmatpush1.msra.mxu0 0.0
  %2494 = vmatprep.subr.mxu0 0.0
  %2495 = vmatpush1.msra.mxu0 0.0
  %2496 = vmatprep.subr.mxu0 0.0
  %2497 = vmatpush1.msra.mxu0 0.0
  %2498 = vmatprep.mubr.f32.mxu0 0.0
  %2499 = vmatmul.mubr.f32.gmra.mrb[0].mxu0 %v2429
  %v2500 = vpop.f32.mrb[0].mxu0
  %v2501 = vadd.f32 0.0, %v2500
  %v2502 = vpop.f32.mrb[0].mxu0
  %2503 = vmatprep.mubr.f32.mxu0 0.0
  %2504 = vmatmul.mubr.f32.gmra.mrb[0].mxu0 %v2432
  %v2505 = vpop.f32.mrb[0].mxu0
  %v2506 = vadd.f32 0.0, %v2505
  %v2507 = vpop.f32.mrb[0].mxu0
  %2508 = vdwg.mxu0
  %v2510 = vsel %vm425, %v1970, 0
  %v2513 = vsel %vm425, %v1975, 0
  %2515 = vmatprep.subr.mxu0 0.0
  %2516 = vmatpush1.msra.mxu0 %v1978
  %2517 = vmatprep.subr.mxu0 0.0
  %2518 = vmatpush1.msra.mxu0 %v1979
  %2519 = vmatprep.subr.mxu0 0.0
  %2520 = vmatpush1.msra.mxu0 0.0
  %2521 = vmatprep.subr.mxu0 0.0
  %2522 = vmatpush1.msra.mxu0 0.0
  %2523 = vmatprep.subr.mxu0 0.0
  %2524 = vmatpush1.msra.mxu0 0.0
  %2525 = vmatprep.subr.mxu0 0.0
  %2526 = vmatpush1.msra.mxu0 0.0
  %2527 = vmatprep.subr.mxu0 0.0
  %2528 = vmatpush1.msra.mxu0 0.0
  %2529 = vmatprep.subr.mxu0 0.0
  %2530 = vmatpush1.msra.mxu0 0.0
  %2531 = vmatprep.subr.mxu0 0.0
  %2532 = vmatpush1.msra.mxu0 0.0
  %2533 = vmatprep.subr.mxu0 0.0
  %2534 = vmatpush1.msra.mxu0 0.0
  %2535 = vmatprep.subr.mxu0 0.0
  %2536 = vmatpush1.msra.mxu0 0.0
  %2537 = vmatprep.subr.mxu0 0.0
  %2538 = vmatpush1.msra.mxu0 0.0
  %2539 = vmatprep.subr.mxu0 0.0
  %2540 = vmatpush1.msra.mxu0 0.0
  %2541 = vmatprep.subr.mxu0 0.0
  %2542 = vmatpush1.msra.mxu0 0.0
  %2543 = vmatprep.subr.mxu0 0.0
  %2544 = vmatpush1.msra.mxu0 0.0
  %2545 = vmatprep.subr.mxu0 0.0
  %2546 = vmatpush1.msra.mxu0 0.0
  %2547 = vmatprep.subr.mxu0 0.0
  %2548 = vmatpush1.msra.mxu0 0.0
  %2549 = vmatprep.subr.mxu0 0.0
  %2550 = vmatpush1.msra.mxu0 0.0
  %2551 = vmatprep.subr.mxu0 0.0
  %2552 = vmatpush1.msra.mxu0 0.0
  %2553 = vmatprep.subr.mxu0 0.0
  %2554 = vmatpush1.msra.mxu0 0.0
  %2555 = vmatprep.subr.mxu0 0.0
  %2556 = vmatpush1.msra.mxu0 0.0
  %2557 = vmatprep.subr.mxu0 0.0
  %2558 = vmatpush1.msra.mxu0 0.0
  %2559 = vmatprep.subr.mxu0 0.0
  %2560 = vmatpush1.msra.mxu0 0.0
  %2561 = vmatprep.subr.mxu0 0.0
  %2562 = vmatpush1.msra.mxu0 0.0
  %2563 = vmatprep.subr.mxu0 0.0
  %2564 = vmatpush1.msra.mxu0 0.0
  %2565 = vmatprep.subr.mxu0 0.0
  %2566 = vmatpush1.msra.mxu0 0.0
  %2567 = vmatprep.subr.mxu0 0.0
  %2568 = vmatpush1.msra.mxu0 0.0
  %2569 = vmatprep.subr.mxu0 0.0
  %2570 = vmatpush1.msra.mxu0 0.0
  %2571 = vmatprep.subr.mxu0 0.0
  %2572 = vmatpush1.msra.mxu0 0.0
  %2573 = vmatprep.subr.mxu0 0.0
  %2574 = vmatpush1.msra.mxu0 0.0
  %2575 = vmatprep.subr.mxu0 0.0
  %2576 = vmatpush1.msra.mxu0 0.0
  %2577 = vmatprep.subr.mxu0 0.0
  %2578 = vmatpush1.msra.mxu0 0.0
  %2579 = vmatprep.mubr.f32.mxu0 0.0
  %2580 = vmatmul.mubr.f32.gmra.mrb[0].mxu0 %v2510
  %v2581 = vpop.f32.mrb[0].mxu0
  %v2582 = vadd.f32 %v2501, %v2581
  %v2583 = vpop.f32.mrb[0].mxu0
  %2584 = vmatprep.mubr.f32.mxu0 0.0
  %2585 = vmatmul.mubr.f32.gmra.mrb[0].mxu0 %v2513
  %v2586 = vpop.f32.mrb[0].mxu0
  %v2587 = vadd.f32 %v2506, %v2586
  %v2588 = vpop.f32.mrb[0].mxu0
  %2589 = vdwg.mxu0
  %v2590 = vld [vmem:[%s5 + $0x2c8] sm:$0x1]
  %v2591 = vlaneseq
  %v2592 = vshrl.u32 %v2591, 7
  %v2593 = vsub.s32 0, %v2592
  %v2594 = vrot.slane %v2590, %v2593
  %v2595 = vadd.f32 %v2582, %v2594
  %v2596 = vadd.f32 %v2587, %v2594
  %v2597 = vadd.f32 %v2595, %v1524
  %v2598 = vadd.f32 %v2596, %v1525
  %v2599 = vld [vmem:[%s5 + $0x2d0] sm:$0x1]
  %v2600 = vld [vmem:[%s5 + $0x2d8] sm:$0x1]
  %v2601 = vsel %vm127, %v2597, 0.0
  %2602 = vadd.xlane.f32.xlu0 %v2601
  %v2603 = vpop.xlane.xlu0 %2602
  %v2604 = vsel %vm127, %v2598, 0.0
  %2605 = vadd.xlane.f32.xlu0 %v2604
  %v2606 = vpop.xlane.xlu0 %2605
  %v2607 = vmul.f32 %v2603, %v134
  %v2608 = vmul.f32 %v2606, %v134
  %v2609 = vsub.f32 %v2597, %v2607
  %v2610 = vsub.f32 %v2598, %v2608
  %v2611 = vmul.f32 %v2609, %v2609
  %v2612 = vmul.f32 %v2610, %v2610
  %v2613 = vsel %vm127, %v2611, 0.0
  %2614 = vadd.xlane.f32.xlu0 %v2613
  %v2615 = vpop.xlane.xlu0 %2614
  %v2616 = vsel %vm127, %v2612, 0.0
  %2617 = vadd.xlane.f32.xlu0 %v2616
  %v2618 = vpop.xlane.xlu0 %2617
  %v2619 = vmul.f32 %v2615, %v134
  %v2620 = vmul.f32 %v2618, %v134
  %v2621 = vadd.f32 %v2619, 1e-05
  %v2622 = vadd.f32 %v2620, 1e-05
  %v2623 = vrsqrt.pop %v2621
  %v2624 = vrsqrt.pop %v2622
  %v2625 = vmul.f32 %v2609, %v2623
  %v2626 = vmul.f32 %v2610, %v2624
  %v2627 = vlaneseq
  %v2628 = vshrl.u32 %v2627, 7
  %v2629 = vsub.s32 0, %v2628
  %v2630 = vrot.slane %v2599, %v2629
  %v2631 = vmul.f32 %v2625, %v2630
  %v2632 = vmul.f32 %v2626, %v2630
  %v2633 = vlaneseq
  %v2634 = vshrl.u32 %v2633, 7
  %v2635 = vsub.s32 0, %v2634
  %v2636 = vrot.slane %v2600, %v2635
  %v2637 = vadd.f32 %v2631, %v2636
  %v2638 = vadd.f32 %v2632, %v2636
  %v2639 = vld [vmem:[%s5 + $0x2e0] sm:$0xff]
  %v2640 = vld [vmem:[%s5 + $0x2e8] sm:$0xff]
  %v2641 = vld [vmem:[%s5 + $0x2f0] sm:$0xff]
  %v2642 = vld [vmem:[%s5 + $0x2f8] sm:$0xff]
  %v2643 = vld [vmem:[%s5 + $0x300] sm:$0x1]
  %v2644 = vlaneseq
  %v2645 = vshrl.u32 %v2644, 7
  %v2646 = vsub.s32 0, %v2645
  %v2647 = vrot.slane %v2643, %v2646
  %v2649 = vsel %vm127, %v2637, 0
  %v2652 = vsel %vm127, %v2638, 0
  %2654 = vmatprep.subr.mxu0 0.0
  %2655 = vmatpush1.msra.mxu0 %v2639
  %2656 = vmatprep.subr.mxu0 0.0
  %2657 = vmatpush1.msra.mxu0 %v2640
  %2658 = vmatprep.subr.mxu0 0.0
  %2659 = vmatpush1.msra.mxu0 %v2641
  %2660 = vmatprep.subr.mxu0 0.0
  %2661 = vmatpush1.msra.mxu0 %v2642
  %2662 = vmatprep.subr.mxu0 0.0
  %2663 = vmatpush1.msra.mxu0 0.0
  %2664 = vmatprep.subr.mxu0 0.0
  %2665 = vmatpush1.msra.mxu0 0.0
  %2666 = vmatprep.subr.mxu0 0.0
  %2667 = vmatpush1.msra.mxu0 0.0
  %2668 = vmatprep.subr.mxu0 0.0
  %2669 = vmatpush1.msra.mxu0 0.0
  %2670 = vmatprep.subr.mxu0 0.0
  %2671 = vmatpush1.msra.mxu0 0.0
  %2672 = vmatprep.subr.mxu0 0.0
  %2673 = vmatpush1.msra.mxu0 0.0
  %2674 = vmatprep.subr.mxu0 0.0
  %2675 = vmatpush1.msra.mxu0 0.0
  %2676 = vmatprep.subr.mxu0 0.0
  %2677 = vmatpush1.msra.mxu0 0.0
  %2678 = vmatprep.subr.mxu0 0.0
  %2679 = vmatpush1.msra.mxu0 0.0
  %2680 = vmatprep.subr.mxu0 0.0
  %2681 = vmatpush1.msra.mxu0 0.0
  %2682 = vmatprep.subr.mxu0 0.0
  %2683 = vmatpush1.msra.mxu0 0.0
  %2684 = vmatprep.subr.mxu0 0.0
  %2685 = vmatpush1.msra.mxu0 0.0
  %2686 = vmatprep.subr.mxu0 0.0
  %2687 = vmatpush1.msra.mxu0 0.0
  %2688 = vmatprep.subr.mxu0 0.0
  %2689 = vmatpush1.msra.mxu0 0.0
  %2690 = vmatprep.subr.mxu0 0.0
  %2691 = vmatpush1.msra.mxu0 0.0
  %2692 = vmatprep.subr.mxu0 0.0
  %2693 = vmatpush1.msra.mxu0 0.0
  %2694 = vmatprep.subr.mxu0 0.0
  %2695 = vmatpush1.msra.mxu0 0.0
  %2696 = vmatprep.subr.mxu0 0.0
  %2697 = vmatpush1.msra.mxu0 0.0
  %2698 = vmatprep.subr.mxu0 0.0
  %2699 = vmatpush1.msra.mxu0 0.0
  %2700 = vmatprep.subr.mxu0 0.0
  %2701 = vmatpush1.msra.mxu0 0.0
  %2702 = vmatprep.subr.mxu0 0.0
  %2703 = vmatpush1.msra.mxu0 0.0
  %2704 = vmatprep.subr.mxu0 0.0
  %2705 = vmatpush1.msra.mxu0 0.0
  %2706 = vmatprep.subr.mxu0 0.0
  %2707 = vmatpush1.msra.mxu0 0.0
  %2708 = vmatprep.subr.mxu0 0.0
  %2709 = vmatpush1.msra.mxu0 0.0
  %2710 = vmatprep.subr.mxu0 0.0
  %2711 = vmatpush1.msra.mxu0 0.0
  %2712 = vmatprep.subr.mxu0 0.0
  %2713 = vmatpush1.msra.mxu0 0.0
  %2714 = vmatprep.subr.mxu0 0.0
  %2715 = vmatpush1.msra.mxu0 0.0
  %2716 = vmatprep.subr.mxu0 0.0
  %2717 = vmatpush1.msra.mxu0 0.0
  %2718 = vmatprep.mubr.f32.mxu0 0.0
  %2719 = vmatmul.mubr.f32.gmra.mrb[0].mxu0 %v2649
  %v2720 = vpop.f32.mrb[0].mxu0
  %v2721 = vadd.f32 %v2647, %v2720
  %v2722 = vpop.f32.mrb[0].mxu0
  %2723 = vmatprep.mubr.f32.mxu0 0.0
  %2724 = vmatmul.mubr.f32.gmra.mrb[0].mxu0 %v2652
  %v2725 = vpop.f32.mrb[0].mxu0
  %v2726 = vadd.f32 %v2647, %v2725
  %v2727 = vpop.f32.mrb[0].mxu0
  %2728 = vdwg.mxu0
  %v2729 = vmul.f32 %v2721, 0.5
  %v2730 = vmul.f32 %v2726, 0.5
  %v2731 = vmul.f32 %v2721, 0.044715
  %v2732 = vmul.f32 %v2726, 0.044715
  %v2733 = vmul.f32 %v2731, %v2721
  %v2734 = vmul.f32 %v2732, %v2726
  %v2735 = vmul.f32 %v2733, %v2721
  %v2736 = vmul.f32 %v2734, %v2726
  %v2737 = vadd.f32 %v2721, %v2735
  %v2738 = vadd.f32 %v2726, %v2736
  %v2739 = vmul.f32 %v2737, 0.7978846
  %v2740 = vmul.f32 %v2738, 0.7978846
  %v2741 = vtanh.pop %v2739
  %v2742 = vtanh.pop %v2740
  %v2743 = vadd.f32 %v2741, 1.0
  %v2744 = vadd.f32 %v2742, 1.0
  %v2745 = vmul.f32 %v2729, %v2743
  %v2746 = vmul.f32 %v2730, %v2744
  %v2747 = vld [vmem:[%s5 + $0x308] sm:$0xff]
  %v2748 = vld [vmem:[%s5 + $0x310] sm:$0xff]
  %v2749 = vld [vmem:[%s5 + $0x318] sm:$0xff]
  %v2750 = vld [vmem:[%s5 + $0x320] sm:$0xff]
  %v2751 = vld [vmem:[%s5 + $0x328] sm:$0xff]
  %v2752 = vld [vmem:[%s5 + $0x330] sm:$0xff]
  %v2753 = vld [vmem:[%s5 + $0x338] sm:$0xff]
  %v2754 = vld [vmem:[%s5 + $0x340] sm:$0xff]
  %v2755 = vld [vmem:[%s5 + $0x348] sm:$0x1]
  %v2756 = vlaneseq
  %v2757 = vshrl.u32 %v2756, 7
  %v2758 = vsub.s32 0, %v2757
  %v2759 = vrot.slane %v2755, %v2758
  %v2761 = vsel %vm1402, %v2745, 0
  %v2764 = vsel %vm1402, %v2746, 0
  %2766 = vmatprep.subr.mxu0 0.0
  %2767 = vmatpush1.msra.mxu0 %v2747
  %2768 = vmatprep.subr.mxu0 0.0
  %2769 = vmatpush1.msra.mxu0 %v2748
  %2770 = vmatprep.subr.mxu0 0.0
  %2771 = vmatpush1.msra.mxu0 %v2749
  %2772 = vmatprep.subr.mxu0 0.0
  %2773 = vmatpush1.msra.mxu0 %v2750
  %2774 = vmatprep.subr.mxu0 0.0
  %2775 = vmatpush1.msra.mxu0 %v2751
  %2776 = vmatprep.subr.mxu0 0.0
  %2777 = vmatpush1.msra.mxu0 %v2752
  %2778 = vmatprep.subr.mxu0 0.0
  %2779 = vmatpush1.msra.mxu0 %v2753
  %2780 = vmatprep.subr.mxu0 0.0
  %2781 = vmatpush1.msra.mxu0 %v2754
  %2782 = vmatprep.subr.mxu0 0.0
  %2783 = vmatpush1.msra.mxu0 0.0
  %2784 = vmatprep.subr.mxu0 0.0
  %2785 = vmatpush1.msra.mxu0 0.0
  %2786 = vmatprep.subr.mxu0 0.0
  %2787 = vmatpush1.msra.mxu0 0.0
  %2788 = vmatprep.subr.mxu0 0.0
  %2789 = vmatpush1.msra.mxu0 0.0
  %2790 = vmatprep.subr.mxu0 0.0
  %2791 = vmatpush1.msra.mxu0 0.0
  %2792 = vmatprep.subr.mxu0 0.0
  %2793 = vmatpush1.msra.mxu0 0.0
  %2794 = vmatprep.subr.mxu0 0.0
  %2795 = vmatpush1.msra.mxu0 0.0
  %2796 = vmatprep.subr.mxu0 0.0
  %2797 = vmatpush1.msra.mxu0 0.0
  %2798 = vmatprep.subr.mxu0 0.0
  %2799 = vmatpush1.msra.mxu0 0.0
  %2800 = vmatprep.subr.mxu0 0.0
  %2801 = vmatpush1.msra.mxu0 0.0
  %2802 = vmatprep.subr.mxu0 0.0
  %2803 = vmatpush1.msra.mxu0 0.0
  %2804 = vmatprep.subr.mxu0 0.0
  %2805 = vmatpush1.msra.mxu0 0.0
  %2806 = vmatprep.subr.mxu0 0.0
  %2807 = vmatpush1.msra.mxu0 0.0
  %2808 = vmatprep.subr.mxu0 0.0
  %2809 = vmatpush1.msra.mxu0 0.0
  %2810 = vmatprep.subr.mxu0 0.0
  %2811 = vmatpush1.msra.mxu0 0.0
  %2812 = vmatprep.subr.mxu0 0.0
  %2813 = vmatpush1.msra.mxu0 0.0
  %2814 = vmatprep.subr.mxu0 0.0
  %2815 = vmatpush1.msra.mxu0 0.0
  %2816 = vmatprep.subr.mxu0 0.0
  %2817 = vmatpush1.msra.mxu0 0.0
  %2818 = vmatprep.subr.mxu0 0.0
  %2819 = vmatpush1.msra.mxu0 0.0
  %2820 = vmatprep.subr.mxu0 0.0
  %2821 = vmatpush1.msra.mxu0 0.0
  %2822 = vmatprep.subr.mxu0 0.0
  %2823 = vmatpush1.msra.mxu0 0.0
  %2824 = vmatprep.subr.mxu0 0.0
  %2825 = vmatpush1.msra.mxu0 0.0
  %2826 = vmatprep.subr.mxu0 0.0
  %2827 = vmatpush1.msra.mxu0 0.0
  %2828 = vmatprep.subr.mxu0 0.0
  %2829 = vmatpush1.msra.mxu0 0.0
  %2830 = vmatprep.mubr.f32.mxu0 0.0
  %2831 = vmatmul.mubr.f32.gmra.mrb[0].mxu0 %v2761
  %v2832 = vpop.f32.mrb[0].mxu0
  %v2833 = vadd.f32 %v2759, %v2832
  %v2834 = vpop.f32.mrb[0].mxu0
  %2835 = vmatprep.mubr.f32.mxu0 0.0
  %2836 = vmatmul.mubr.f32.gmra.mrb[0].mxu0 %v2764
  %v2837 = vpop.f32.mrb[0].mxu0
  %v2838 = vadd.f32 %v2759, %v2837
  %v2839 = vpop.f32.mrb[0].mxu0
  %2840 = vdwg.mxu0
  %v2841 = vadd.f32 %v2833, %v2637
  %v2842 = vadd.f32 %v2838, %v2638
  %v2843 = vld [vmem:[%s5 + $0x350] sm:$0x1]
  %v2844 = vld [vmem:[%s5 + $0x358] sm:$0x1]
  %v2845 = vsel %vm127, %v2841, 0.0
  %2846 = vadd.xlane.f32.xlu0 %v2845
  %v2847 = vpop.xlane.xlu0 %2846
  %v2848 = vsel %vm127, %v2842, 0.0
  %2849 = vadd.xlane.f32.xlu0 %v2848
  %v2850 = vpop.xlane.xlu0 %2849
  %v2851 = vmul.f32 %v2847, %v134
  %v2852 = vmul.f32 %v2850, %v134
  %v2853 = vsub.f32 %v2841, %v2851
  %v2854 = vsub.f32 %v2842, %v2852
  %v2855 = vmul.f32 %v2853, %v2853
  %v2856 = vmul.f32 %v2854, %v2854
  %v2857 = vsel %vm127, %v2855, 0.0
  %2858 = vadd.xlane.f32.xlu0 %v2857
  %v2859 = vpop.xlane.xlu0 %2858
  %v2860 = vsel %vm127, %v2856, 0.0
  %2861 = vadd.xlane.f32.xlu0 %v2860
  %v2862 = vpop.xlane.xlu0 %2861
  %v2863 = vmul.f32 %v2859, %v134
  %v2864 = vmul.f32 %v2862, %v134
  %v2865 = vadd.f32 %v2863, 1e-05
  %v2866 = vadd.f32 %v2864, 1e-05
  %v2867 = vrsqrt.pop %v2865
  %v2868 = vrsqrt.pop %v2866
  %v2869 = vmul.f32 %v2853, %v2867
  %v2870 = vmul.f32 %v2854, %v2868
  %v2871 = vlaneseq
  %v2872 = vshrl.u32 %v2871, 7
  %v2873 = vsub.s32 0, %v2872
  %v2874 = vrot.slane %v2843, %v2873
  %v2875 = vmul.f32 %v2869, %v2874
  %v2876 = vmul.f32 %v2870, %v2874
  %v2877 = vlaneseq
  %v2878 = vshrl.u32 %v2877, 7
  %v2879 = vsub.s32 0, %v2878
  %v2880 = vrot.slane %v2844, %v2879
  %v2881 = vadd.f32 %v2875, %v2880
  %v2882 = vadd.f32 %v2876, %v2880
  %v2883 = vld [vmem:[%s5 + $0x360] sm:$0xff]
  %v2884 = vld [vmem:[%s5 + $0x368] sm:$0xff]
  %v2885 = vld [vmem:[%s5 + $0x370] sm:$0xff]
  %v2886 = vld [vmem:[%s5 + $0x378] sm:$0xff]
  %v2887 = vld [vmem:[%s5 + $0x380] sm:$0x1]
  %v2888 = vlaneseq
  %v2889 = vshrl.u32 %v2888, 7
  %v2890 = vsub.s32 0, %v2889
  %v2891 = vrot.slane %v2887, %v2890
  %v2893 = vsel %vm127, %v2881, 0
  %v2896 = vsel %vm127, %v2882, 0
  %2898 = vmatprep.subr.mxu0 0.0
  %2899 = vmatpush1.msra.mxu0 %v2883
  %2900 = vmatprep.subr.mxu0 0.0
  %2901 = vmatpush1.msra.mxu0 %v2884
  %2902 = vmatprep.subr.mxu0 0.0
  %2903 = vmatpush1.msra.mxu0 %v2885
  %2904 = vmatprep.subr.mxu0 0.0
  %2905 = vmatpush1.msra.mxu0 %v2886
  %2906 = vmatprep.subr.mxu0 0.0
  %2907 = vmatpush1.msra.mxu0 0.0
  %2908 = vmatprep.subr.mxu0 0.0
  %2909 = vmatpush1.msra.mxu0 0.0
  %2910 = vmatprep.subr.mxu0 0.0
  %2911 = vmatpush1.msra.mxu0 0.0
  %2912 = vmatprep.subr.mxu0 0.0
  %2913 = vmatpush1.msra.mxu0 0.0
  %2914 = vmatprep.subr.mxu0 0.0
  %2915 = vmatpush1.msra.mxu0 0.0
  %2916 = vmatprep.subr.mxu0 0.0
  %2917 = vmatpush1.msra.mxu0 0.0
  %2918 = vmatprep.subr.mxu0 0.0
  %2919 = vmatpush1.msra.mxu0 0.0
  %2920 = vmatprep.subr.mxu0 0.0
  %2921 = vmatpush1.msra.mxu0 0.0
  %2922 = vmatprep.subr.mxu0 0.0
  %2923 = vmatpush1.msra.mxu0 0.0
  %2924 = vmatprep.subr.mxu0 0.0
  %2925 = vmatpush1.msra.mxu0 0.0
  %2926 = vmatprep.subr.mxu0 0.0
  %2927 = vmatpush1.msra.mxu0 0.0
  %2928 = vmatprep.subr.mxu0 0.0
  %2929 = vmatpush1.msra.mxu0 0.0
  %2930 = vmatprep.subr.mxu0 0.0
  %2931 = vmatpush1.msra.mxu0 0.0
  %2932 = vmatprep.subr.mxu0 0.0
  %2933 = vmatpush1.msra.mxu0 0.0
  %2934 = vmatprep.subr.mxu0 0.0
  %2935 = vmatpush1.msra.mxu0 0.0
  %2936 = vmatprep.subr.mxu0 0.0
  %2937 = vmatpush1.msra.mxu0 0.0
  %2938 = vmatprep.subr.mxu0 0.0
  %2939 = vmatpush1.msra.mxu0 0.0
  %2940 = vmatprep.subr.mxu0 0.0
  %2941 = vmatpush1.msra.mxu0 0.0
  %2942 = vmatprep.subr.mxu0 0.0
  %2943 = vmatpush1.msra.mxu0 0.0
  %2944 = vmatprep.subr.mxu0 0.0
  %2945 = vmatpush1.msra.mxu0 0.0
  %2946 = vmatprep.subr.mxu0 0.0
  %2947 = vmatpush1.msra.mxu0 0.0
  %2948 = vmatprep.subr.mxu0 0.0
  %2949 = vmatpush1.msra.mxu0 0.0
  %2950 = vmatprep.subr.mxu0 0.0
  %2951 = vmatpush1.msra.mxu0 0.0
  %2952 = vmatprep.subr.mxu0 0.0
  %2953 = vmatpush1.msra.mxu0 0.0
  %2954 = vmatprep.subr.mxu0 0.0
  %2955 = vmatpush1.msra.mxu0 0.0
  %2956 = vmatprep.subr.mxu0 0.0
  %2957 = vmatpush1.msra.mxu0 0.0
  %2958 = vmatprep.subr.mxu0 0.0
  %2959 = vmatpush1.msra.mxu0 0.0
  %2960 = vmatprep.subr.mxu0 0.0
  %2961 = vmatpush1.msra.mxu0 0.0
  %2962 = vmatprep.mubr.f32.mxu0 0.0
  %2963 = vmatmul.mubr.f32.gmra.mrb[0].mxu0 %v2893
  %v2964 = vpop.f32.mrb[0].mxu0
  %v2965 = vadd.f32 %v2891, %v2964
  %v2966 = vpop.f32.mrb[0].mxu0
  %2967 = vmatprep.mubr.f32.mxu0 0.0
  %2968 = vmatmul.mubr.f32.gmra.mrb[0].mxu0 %v2896
  %v2969 = vpop.f32.mrb[0].mxu0
  %v2970 = vadd.f32 %v2891, %v2969
  %v2971 = vpop.f32.mrb[0].mxu0
  %2972 = vdwg.mxu0
  %v2973 = vtanh.pop %v2965
  %v2974 = vtanh.pop %v2970
  %v2975 = vld [vmem:[%s5 + $0x388] sm:$0xff]
  %v2976 = vld [vmem:[%s5 + $0x390] sm:$0xff]
  %v2977 = vld [vmem:[%s5 + $0x398] sm:$0xff]
  %v2978 = vld [vmem:[%s5 + $0x3a0] sm:$0xff]
  %v2979 = vld [vmem:[%s5 + $0x3a8] sm:$0x1]
  %v2980 = vlaneseq
  %v2981 = vshrl.u32 %v2980, 7
  %v2982 = vsub.s32 0, %v2981
  %v2983 = vrot.slane %v2979, %v2982
  %v2985 = vsel %vm127, %v2973, 0
  %v2988 = vsel %vm127, %v2974, 0
  %2990 = vmatprep.subr.mxu0 0.0
  %2991 = vmatpush1.msra.mxu0 %v2975
  %2992 = vmatprep.subr.mxu0 0.0
  %2993 = vmatpush1.msra.mxu0 %v2976
  %2994 = vmatprep.subr.mxu0 0.0
  %2995 = vmatpush1.msra.mxu0 %v2977
  %2996 = vmatprep.subr.mxu0 0.0
  %2997 = vmatpush1.msra.mxu0 %v2978
  %2998 = vmatprep.subr.mxu0 0.0
  %2999 = vmatpush1.msra.mxu0 0.0
  %3000 = vmatprep.subr.mxu0 0.0
  %3001 = vmatpush1.msra.mxu0 0.0
  %3002 = vmatprep.subr.mxu0 0.0
  %3003 = vmatpush1.msra.mxu0 0.0
  %3004 = vmatprep.subr.mxu0 0.0
  %3005 = vmatpush1.msra.mxu0 0.0
  %3006 = vmatprep.subr.mxu0 0.0
  %3007 = vmatpush1.msra.mxu0 0.0
  %3008 = vmatprep.subr.mxu0 0.0
  %3009 = vmatpush1.msra.mxu0 0.0
  %3010 = vmatprep.subr.mxu0 0.0
  %3011 = vmatpush1.msra.mxu0 0.0
  %3012 = vmatprep.subr.mxu0 0.0
  %3013 = vmatpush1.msra.mxu0 0.0
  %3014 = vmatprep.subr.mxu0 0.0
  %3015 = vmatpush1.msra.mxu0 0.0
  %3016 = vmatprep.subr.mxu0 0.0
  %3017 = vmatpush1.msra.mxu0 0.0
  %3018 = vmatprep.subr.mxu0 0.0
  %3019 = vmatpush1.msra.mxu0 0.0
  %3020 = vmatprep.subr.mxu0 0.0
  %3021 = vmatpush1.msra.mxu0 0.0
  %3022 = vmatprep.subr.mxu0 0.0
  %3023 = vmatpush1.msra.mxu0 0.0
  %3024 = vmatprep.subr.mxu0 0.0
  %3025 = vmatpush1.msra.mxu0 0.0
  %3026 = vmatprep.subr.mxu0 0.0
  %3027 = vmatpush1.msra.mxu0 0.0
  %3028 = vmatprep.subr.mxu0 0.0
  %3029 = vmatpush1.msra.mxu0 0.0
  %3030 = vmatprep.subr.mxu0 0.0
  %3031 = vmatpush1.msra.mxu0 0.0
  %3032 = vmatprep.subr.mxu0 0.0
  %3033 = vmatpush1.msra.mxu0 0.0
  %3034 = vmatprep.subr.mxu0 0.0
  %3035 = vmatpush1.msra.mxu0 0.0
  %3036 = vmatprep.subr.mxu0 0.0
  %3037 = vmatpush1.msra.mxu0 0.0
  %3038 = vmatprep.subr.mxu0 0.0
  %3039 = vmatpush1.msra.mxu0 0.0
  %3040 = vmatprep.subr.mxu0 0.0
  %3041 = vmatpush1.msra.mxu0 0.0
  %3042 = vmatprep.subr.mxu0 0.0
  %3043 = vmatpush1.msra.mxu0 0.0
  %3044 = vmatprep.subr.mxu0 0.0
  %3045 = vmatpush1.msra.mxu0 0.0
  %3046 = vmatprep.subr.mxu0 0.0
  %3047 = vmatpush1.msra.mxu0 0.0
  %3048 = vmatprep.subr.mxu0 0.0
  %3049 = vmatpush1.msra.mxu0 0.0
  %3050 = vmatprep.subr.mxu0 0.0
  %3051 = vmatpush1.msra.mxu0 0.0
  %3052 = vmatprep.subr.mxu0 0.0
  %3053 = vmatpush1.msra.mxu0 0.0
  %3054 = vmatprep.mubr.f32.mxu0 0.0
  %3055 = vmatmul.mubr.f32.gmra.mrb[0].mxu0 %v2985
  %v3056 = vpop.f32.mrb[0].mxu0
  %v3057 = vadd.f32 %v2983, %v3056
  %v3058 = vpop.f32.mrb[0].mxu0
  %3059 = vmatprep.mubr.f32.mxu0 0.0
  %3060 = vmatmul.mubr.f32.gmra.mrb[0].mxu0 %v2988
  %v3061 = vpop.f32.mrb[0].mxu0
  %v3062 = vadd.f32 %v2983, %v3061
  %v3063 = vpop.f32.mrb[0].mxu0
  %3064 = vdwg.mxu0
  %vm3065 = vcmask 15360
  %3066 = vst.msk [vmem:[%s6] sm:$0xff] %vm3065, %v3057
  %3067 = vst.msk [vmem:[%s6 + $0x8] sm:$0xff] %vm3065, %v3062
  // Predicated region
  $region26: #{ascc_forward.3} parent=0 // pred_check
    _
  $region27: #{ascc_forward.3} parent=0 // pred_check_branch
    %3069 = sbr.rel (0) target = $region29
  $region28: #{ascc_forward.3} parent=0 // pred_region
    _
  $region29: #{ascc_forward.3} parent=0 // pred_fallthru
    _
  // Predicated region
  $region30: #{ascc_forward.3} parent=0 // pred_check
    _
  $region31: #{ascc_forward.3} parent=0 // pred_check_branch
    %3071 = sbr.rel (0) target = $region33
  $region32: #{ascc_forward.3} parent=0 // pred_region
    _
  $region33: #{ascc_forward.3} parent=0 // pred_fallthru
    _

</llo_original>
